<compile_context>
chip_gen: v5e
topology: v5e:2x2
jax: 0.10.0
libtpu: 0.0.40
codegen_flags: <defaults>
</compile_context>

<pallas_src>
import jax
import jax.numpy as jnp
from jax.experimental import pallas as pl
from jax.experimental.pallas import tpu as pltpu

BN_EPS = 1e-5
LEAKY_SLOPE = 0.2


# ---------------------------------------------------------------------------
# Fused kernel: conv1+BN+LReLU -> conv2+BN+LReLU -> conv3+BN+LReLU, all in VMEM
# ---------------------------------------------------------------------------
def _disc_kernel(x_ref, t1_ref, t2_ref, t3_ref, r3_ref,
                 s1_ref, s1t_ref, g1_ref, b1_ref,
                 s2_ref, s2t_ref, g2_ref, b2_ref,
                 s3_ref, s3t_ref, g3_ref, b3_ref,
                 o_ref, act1_ref, act2_ref):
    n = x_ref.shape[0]
    f32 = jnp.float32

    def conv_bn_lrelu(inp_ref, t_ref, sel_ref, selT_ref, g_ref, b_ref, out_ref,
                      row_sel_ref=None):
        kh = t_ref.shape[0]
        rows = out_ref.shape[1]            # Ho of this layer
        lanes = out_ref.shape[2]           # Wo * Cout (lane-dense slab)
        cout = sel_ref.shape[1]
        m_count = float(n * rows * (lanes // cout))   # N * Ho * Wo

        # --- conv (per image) + single-pass BN statistics --------------------
        s1 = jnp.zeros((1, lanes), f32)
        s2 = jnp.zeros((1, lanes), f32)
        for b in range(n):                         # N is tiny & static: unrolled
            full = inp_ref[b] if row_sel_ref is not None else None
            acc = jnp.zeros((rows, lanes), f32)
            for i in range(kh):                    # kh row-taps
                if row_sel_ref is None:
                    xi = inp_ref[b, i:i + rows, :]           # contiguous H taps
                else:
                    # stride-2 H taps via tiny 0/1 selector matmul
                    xi = jnp.dot(row_sel_ref[i], full,
                                 preferred_element_type=f32)
                acc = acc + jnp.dot(xi, t_ref[i], preferred_element_type=f32)
            out_ref[b] = acc                                   # pre-BN stash
            s1 = s1 + jnp.sum(acc, axis=0, keepdims=True)
            s2 = s2 + jnp.sum(acc * acc, axis=0, keepdims=True)

        # --- per-channel biased batch statistics (training-mode BN) ---------
        sum_c = jnp.dot(s1, sel_ref[...], preferred_element_type=f32)    # (1,C)
        sumsq_c = jnp.dot(s2, sel_ref[...], preferred_element_type=f32)  # (1,C)
        mean_row = jnp.dot(sum_c, selT_ref[...],
                           preferred_element_type=f32) * (1.0 / m_count)
        ex2_row = jnp.dot(sumsq_c, selT_ref[...],
                          preferred_element_type=f32) * (1.0 / m_count)
        var_row = ex2_row - mean_row * mean_row                # E[x^2] - E[x]^2
        scale_row = g_ref[...] * jax.lax.rsqrt(var_row + BN_EPS)
        shift_row = b_ref[...] - mean_row * scale_row

        # --- normalize + LeakyReLU(0.2) --------------------------------------
        for b in range(n):
            y = out_ref[b] * scale_row + shift_row
            out_ref[b] = jnp.where(y > 0, y, LEAKY_SLOPE * y)

    # layer 1: 3x3, stride 1, 1 -> 8
    conv_bn_lrelu(x_ref, t1_ref, s1_ref, s1t_ref, g1_ref, b1_ref, act1_ref)
    # layer 2: 5x5, stride 1, 8 -> 16
    conv_bn_lrelu(act1_ref, t2_ref, s2_ref, s2t_ref, g2_ref, b2_ref, act2_ref)
    # layer 3: 5x5, stride 2, 16 -> 16 (W-stride folded into t3, H-stride via r3)
    conv_bn_lrelu(act2_ref, t3_ref, s3_ref, s3t_ref, g3_ref, b3_ref, o_ref,
                  row_sel_ref=r3_ref)


# ---------------------------------------------------------------------------
# Weight-side constants (batch independent; compute once per parameter set)
# ---------------------------------------------------------------------------
def _toeplitz_slabs(w_hwio, w_in, stride):
    """(kh, W_in*Cin, Wo*Cout): fold the (kw, Cin)->Cout contraction of a whole
    output row into a dense block-Toeplitz matmul per kh row-tap."""
    kh, kw, cin, cout = w_hwio.shape
    wo = (w_in - kw) // stride + 1
    r = jnp.arange(w_in)[:, None]
    c = jnp.arange(wo)[None, :] * stride
    slabs = []
    for i in range(kh):
        t = jnp.zeros((w_in * cin, wo * cout), jnp.float32)
        for j in range(kw):
            m = (r == c + j).astype(jnp.float32)               # (W_in, Wo)
            t = t + jnp.kron(m, w_hwio[i, j].astype(jnp.float32))
        slabs.append(t)
    return jnp.stack(slabs, axis=0)


def _row_selectors(kh, h_out, h_in, stride):
    hh = jnp.arange(h_in)[None, None, :]
    ho = jnp.arange(h_out)[None, :, None]
    ii = jnp.arange(kh)[:, None, None]
    return (hh == ho * stride + ii).astype(jnp.float32)        # (kh, Ho, H_in)


def _channel_selector(w_out, cout):
    return jnp.tile(jnp.eye(cout, dtype=jnp.float32), (w_out, 1))  # (Wo*C, C)


def precompute_constants(params, in_hw=(28, 28)):
    h_i, w_i = in_hw
    weights = (params["w1"], params["w2"], params["w3"])
    strides = (1, 1, 2)
    gammas = (params["g1"], params["g2"], params["g3"])
    betas = (params["b1"], params["b2"], params["b3"])

    consts = {}
    geoms = []
    for idx, (wt, st) in enumerate(zip(weights, strides), start=1):
        kh, kw, cin, cout = wt.shape
        h_o = (h_i - kh) // st + 1
        w_o = (w_i - kw) // st + 1
        geoms.append((h_i, w_i, h_o, w_o, cin, cout, st))
        consts[f"t{idx}"] = _toeplitz_slabs(wt, w_i, st)
        sel = _channel_selector(w_o, cout)
        consts[f"sel{idx}"] = sel
        consts[f"selT{idx}"] = sel.T
        consts[f"grow{idx}"] = jnp.tile(gammas[idx - 1].astype(jnp.float32), w_o)[None, :]
        consts[f"brow{idx}"] = jnp.tile(betas[idx - 1].astype(jnp.float32), w_o)[None, :]
        h_i, w_i = h_o, w_o
    # stride-2 H selector for layer 3
    consts["r3"] = _row_selectors(weights[2].shape[0], geoms[2][2], geoms[2][0], 2)
    consts["geoms"] = tuple(geoms)
    return consts


# ---------------------------------------------------------------------------
# Public forward (matches Discriminator.forward: the conv stack)
# ---------------------------------------------------------------------------
def discriminator_forward(x_nchw, params, consts=None):
    if consts is None:
        consts = precompute_constants(params, in_hw=(x_nchw.shape[2], x_nchw.shape[3]))
    n, cin0, h0, w0 = x_nchw.shape
    geoms = consts["geoms"]
    (_, _, h1, w1o, _, c1, _) = geoms[0]
    (_, _, h2, w2o, _, c2, _) = geoms[1]
    (_, _, h3, w3o, _, c3, _) = geoms[2]

    # NCHW -> lane-dense (N, H, W*Cin) slab
    x = jnp.transpose(x_nchw, (0, 2, 3, 1)).reshape(n, h0, w0 * cin0).astype(jnp.float32)

    args = (x,
            consts["t1"], consts["t2"], consts["t3"], consts["r3"],
            consts["sel1"], consts["selT1"], consts["grow1"], consts["brow1"],
            consts["sel2"], consts["selT2"], consts["grow2"], consts["brow2"],
            consts["sel3"], consts["selT3"], consts["grow3"], consts["brow3"])

    out = pl.pallas_call(
        _disc_kernel,
        out_shape=jax.ShapeDtypeStruct((n, h3, w3o * c3), jnp.float32),
        in_specs=[pl.BlockSpec(memory_space=pltpu.MemorySpace.VMEM)] * len(args),
        out_specs=pl.BlockSpec(memory_space=pltpu.MemorySpace.VMEM),
        scratch_shapes=[
            pltpu.VMEM((n, h1, w1o * c1), jnp.float32),   # layer-1 activations
            pltpu.VMEM((n, h2, w2o * c2), jnp.float32),   # layer-2 activations
        ],
        compiler_params=pltpu.CompilerParams(vmem_limit_bytes=32 * 1024 * 1024),
    )(*args)
    # TODO(synk): add an M-tiled grid (two-pass BN) if batch grows beyond what a
    # single VMEM-resident invocation supports (relevant for v7x's 64 MiB VMEM).

    out = out.reshape(n, h3, w3o, c3)
    # TODO(synk): forward() also calls print(input.shape); side-effect print omitted.
    return jnp.transpose(out, (0, 3, 1, 2))   # back to NCHW, matching PyTorch output


def init_params(key):
    k1, k2, k3 = jax.random.split(key, 3)
    return {
        # conv weights stored as (KH, KW, Cin, Cout); deterministic synthetic init.
        "w1": jax.random.normal(k1, (3, 3, 1, 8), jnp.float32) * 0.2,
        "w2": jax.random.normal(k2, (5, 5, 8, 16), jnp.float32) * 0.1,
        "w3": jax.random.normal(k3, (5, 5, 16, 16), jnp.float32) * 0.1,
        # BatchNorm2d defaults: weight=1, bias=0.
        "g1": jnp.ones((8,), jnp.float32), "b1": jnp.zeros((8,), jnp.float32),
        "g2": jnp.ones((16,), jnp.float32), "b2": jnp.zeros((16,), jnp.float32),
        "g3": jnp.ones((16,), jnp.float32), "b3": jnp.zeros((16,), jnp.float32),
    }


def _reference_forward(x_nchw, params):
    """Pure-JAX reference (lax conv + training-mode BN + LeakyReLU)."""
    def block(x, w, g, b, stride):
        y = jax.lax.conv_general_dilated(
            x, w, (stride, stride), "VALID",
            dimension_numbers=("NHWC", "HWIO", "NHWC"))
        mean = y.mean(axis=(0, 1, 2), keepdims=True)
        var = ((y - mean) ** 2).mean(axis=(0, 1, 2), keepdims=True)
        y = (y - mean) / jnp.sqrt(var + BN_EPS) * g + b
        return jnp.where(y > 0, y, LEAKY_SLOPE * y)

    x = jnp.transpose(x_nchw, (0, 2, 3, 1))
    x = block(x, params["w1"], params["g1"], params["b1"], 1)
    x = block(x, params["w2"], params["g2"], params["b2"], 1)
    x = block(x, params["w3"], params["g3"], params["b3"], 2)
    return jnp.transpose(x, (0, 3, 1, 2))


if __name__ == "__main__":
    key = jax.random.PRNGKey(0)
    k_in, k_par = jax.random.split(key)
    # 28x28 input so the conv stack yields (N, 16, 9, 9) = 1296 features,
    # consistent with the module's Linear(1296, ...) head.
    x = jax.random.normal(k_in, (2, 1, 28, 28), jnp.float32)
    params = init_params(k_par)
    consts = precompute_constants(params, in_hw=(28, 28))   # weight-only, done once

    out = jax.block_until_ready(discriminator_forward(x, params, consts))
    ref = jax.block_until_ready(_reference_forward(x, params))

    assert out.shape == (2, 16, 9, 9), out.shape
    max_err = float(jnp.max(jnp.abs(out - ref)))
    assert jnp.allclose(out, ref, atol=1e-3, rtol=1e-3), max_err

    print("KERNEL_OK")
</pallas_src>

<mosaic_0001>
module attributes {stable_mosaic.version = 11 : i64} {
  func.func @_disc_kernel(%arg0: memref<2x28x28xf32, #tpu.memory_space<vmem>>, %arg1: memref<3x28x208xf32, #tpu.memory_space<vmem>>, %arg2: memref<5x208x352xf32, #tpu.memory_space<vmem>>, %arg3: memref<5x352x144xf32, #tpu.memory_space<vmem>>, %arg4: memref<5x9x22xf32, #tpu.memory_space<vmem>>, %arg5: memref<208x8xf32, #tpu.memory_space<vmem>>, %arg6: memref<8x208xf32, #tpu.memory_space<vmem>>, %arg7: memref<1x208xf32, #tpu.memory_space<vmem>>, %arg8: memref<1x208xf32, #tpu.memory_space<vmem>>, %arg9: memref<352x16xf32, #tpu.memory_space<vmem>>, %arg10: memref<16x352xf32, #tpu.memory_space<vmem>>, %arg11: memref<1x352xf32, #tpu.memory_space<vmem>>, %arg12: memref<1x352xf32, #tpu.memory_space<vmem>>, %arg13: memref<144x16xf32, #tpu.memory_space<vmem>>, %arg14: memref<16x144xf32, #tpu.memory_space<vmem>>, %arg15: memref<1x144xf32, #tpu.memory_space<vmem>>, %arg16: memref<1x144xf32, #tpu.memory_space<vmem>>, %arg17: memref<2x9x144xf32, #tpu.memory_space<vmem>>, %arg18: memref<2x26x208xf32, #tpu.memory_space<vmem>>, %arg19: memref<2x22x352xf32, #tpu.memory_space<vmem>>) attributes {dimension_semantics = [], scalar_prefetch = 0 : i64, scratch_operands = 2 : i64, tpu.core_type = #tpu.core_type<tc>} {
    %cst = arith.constant 0.000000e+00 : f32
    %0 = vector.broadcast %cst : f32 to vector<1x208xf32>
    %cst_0 = arith.constant 0.000000e+00 : f32
    %1 = vector.broadcast %cst_0 : f32 to vector<1x208xf32>
    %cst_1 = arith.constant 0.000000e+00 : f32
    %2 = vector.broadcast %cst_1 : f32 to vector<26x208xf32>
    %c0 = arith.constant 0 : index
    %c0_2 = arith.constant 0 : index
    %c0_3 = arith.constant 0 : index
    %3 = vector.load %arg0[%c0, %c0_2, %c0_3] : memref<2x28x28xf32, #tpu.memory_space<vmem>>, vector<1x26x28xf32>
    %4 = vector.shape_cast %3 : vector<1x26x28xf32> to vector<26x28xf32>
    %c0_4 = arith.constant 0 : index
    %c0_5 = arith.constant 0 : index
    %c0_6 = arith.constant 0 : index
    %5 = vector.load %arg1[%c0_4, %c0_5, %c0_6] : memref<3x28x208xf32, #tpu.memory_space<vmem>>, vector<1x28x208xf32>
    %6 = vector.shape_cast %5 : vector<1x28x208xf32> to vector<28x208xf32>
    %cst_7 = arith.constant dense<0.000000e+00> : vector<26x208xf32>
    %7 = tpu.matmul %4, %6, %cst_7 {dimension_numbers = #tpu.dot_dimension_numbers<[1], [0], [0], [1], [0, 0, 1, 1], [], []>} : vector<26x28xf32>, vector<28x208xf32>, vector<26x208xf32> -> vector<26x208xf32>
    %8 = arith.addf %2, %7 : vector<26x208xf32>
    %c0_8 = arith.constant 0 : index
    %c1 = arith.constant 1 : index
    %c0_9 = arith.constant 0 : index
    %9 = vector.load %arg0[%c0_8, %c1, %c0_9] : memref<2x28x28xf32, #tpu.memory_space<vmem>>, vector<1x26x28xf32>
    %10 = vector.shape_cast %9 : vector<1x26x28xf32> to vector<26x28xf32>
    %c1_10 = arith.constant 1 : index
    %c0_11 = arith.constant 0 : index
    %c0_12 = arith.constant 0 : index
    %11 = vector.load %arg1[%c1_10, %c0_11, %c0_12] : memref<3x28x208xf32, #tpu.memory_space<vmem>>, vector<1x28x208xf32>
    %12 = vector.shape_cast %11 : vector<1x28x208xf32> to vector<28x208xf32>
    %cst_13 = arith.constant dense<0.000000e+00> : vector<26x208xf32>
    %13 = tpu.matmul %10, %12, %cst_13 {dimension_numbers = #tpu.dot_dimension_numbers<[1], [0], [0], [1], [0, 0, 1, 1], [], []>} : vector<26x28xf32>, vector<28x208xf32>, vector<26x208xf32> -> vector<26x208xf32>
    %14 = arith.addf %8, %13 : vector<26x208xf32>
    %c0_14 = arith.constant 0 : index
    %c2 = arith.constant 2 : index
    %c0_15 = arith.constant 0 : index
    %15 = vector.load %arg0[%c0_14, %c2, %c0_15] : memref<2x28x28xf32, #tpu.memory_space<vmem>>, vector<1x26x28xf32>
    %16 = vector.shape_cast %15 : vector<1x26x28xf32> to vector<26x28xf32>
    %c2_16 = arith.constant 2 : index
    %c0_17 = arith.constant 0 : index
    %c0_18 = arith.constant 0 : index
    %17 = vector.load %arg1[%c2_16, %c0_17, %c0_18] : memref<3x28x208xf32, #tpu.memory_space<vmem>>, vector<1x28x208xf32>
    %18 = vector.shape_cast %17 : vector<1x28x208xf32> to vector<28x208xf32>
    %cst_19 = arith.constant dense<0.000000e+00> : vector<26x208xf32>
    %19 = tpu.matmul %16, %18, %cst_19 {dimension_numbers = #tpu.dot_dimension_numbers<[1], [0], [0], [1], [0, 0, 1, 1], [], []>} : vector<26x28xf32>, vector<28x208xf32>, vector<26x208xf32> -> vector<26x208xf32>
    %20 = arith.addf %14, %19 : vector<26x208xf32>
    %c0_20 = arith.constant 0 : index
    %c0_21 = arith.constant 0 : index
    %c0_22 = arith.constant 0 : index
    %21 = vector.load %arg18[%c0_20, %c0_21, %c0_22] : memref<2x26x208xf32, #tpu.memory_space<vmem>>, vector<1x26x208xf32>
    %22 = vector.shape_cast %21 : vector<1x26x208xf32> to vector<26x208xf32>
    %23 = vector.shape_cast %20 : vector<26x208xf32> to vector<1x26x208xf32>
    tpu.vector_store %arg18[%c0_20, %c0_21, %c0_22], %23 {strides = array<i32>} : memref<2x26x208xf32, #tpu.memory_space<vmem>>, vector<1x26x208xf32>,
    %cst_23 = arith.constant dense<0.000000e+00> : vector<208xf32>
    %24 = vector.multi_reduction <add>, %20, %cst_23 [0] : vector<26x208xf32> to vector<208xf32>
    %25 = vector.shape_cast %24 : vector<208xf32> to vector<1x208xf32>
    %26 = arith.addf %0, %25 : vector<1x208xf32>
    %27 = arith.mulf %20, %20 : vector<26x208xf32>
    %cst_24 = arith.constant dense<0.000000e+00> : vector<208xf32>
    %28 = vector.multi_reduction <add>, %27, %cst_24 [0] : vector<26x208xf32> to vector<208xf32>
    %29 = vector.shape_cast %28 : vector<208xf32> to vector<1x208xf32>
    %30 = arith.addf %1, %29 : vector<1x208xf32>
    %cst_25 = arith.constant 0.000000e+00 : f32
    %31 = vector.broadcast %cst_25 : f32 to vector<26x208xf32>
    %c1_26 = arith.constant 1 : index
    %c0_27 = arith.constant 0 : index
    %c0_28 = arith.constant 0 : index
    %32 = vector.load %arg0[%c1_26, %c0_27, %c0_28] : memref<2x28x28xf32, #tpu.memory_space<vmem>>, vector<1x26x28xf32>
    %33 = vector.shape_cast %32 : vector<1x26x28xf32> to vector<26x28xf32>
    %c0_29 = arith.constant 0 : index
    %c0_30 = arith.constant 0 : index
    %c0_31 = arith.constant 0 : index
    %34 = vector.load %arg1[%c0_29, %c0_30, %c0_31] : memref<3x28x208xf32, #tpu.memory_space<vmem>>, vector<1x28x208xf32>
    %35 = vector.shape_cast %34 : vector<1x28x208xf32> to vector<28x208xf32>
    %cst_32 = arith.constant dense<0.000000e+00> : vector<26x208xf32>
    %36 = tpu.matmul %33, %35, %cst_32 {dimension_numbers = #tpu.dot_dimension_numbers<[1], [0], [0], [1], [0, 0, 1, 1], [], []>} : vector<26x28xf32>, vector<28x208xf32>, vector<26x208xf32> -> vector<26x208xf32>
    %37 = arith.addf %31, %36 : vector<26x208xf32>
    %c1_33 = arith.constant 1 : index
    %c1_34 = arith.constant 1 : index
    %c0_35 = arith.constant 0 : index
    %38 = vector.load %arg0[%c1_33, %c1_34, %c0_35] : memref<2x28x28xf32, #tpu.memory_space<vmem>>, vector<1x26x28xf32>
    %39 = vector.shape_cast %38 : vector<1x26x28xf32> to vector<26x28xf32>
    %c1_36 = arith.constant 1 : index
    %c0_37 = arith.constant 0 : index
    %c0_38 = arith.constant 0 : index
    %40 = vector.load %arg1[%c1_36, %c0_37, %c0_38] : memref<3x28x208xf32, #tpu.memory_space<vmem>>, vector<1x28x208xf32>
    %41 = vector.shape_cast %40 : vector<1x28x208xf32> to vector<28x208xf32>
    %cst_39 = arith.constant dense<0.000000e+00> : vector<26x208xf32>
    %42 = tpu.matmul %39, %41, %cst_39 {dimension_numbers = #tpu.dot_dimension_numbers<[1], [0], [0], [1], [0, 0, 1, 1], [], []>} : vector<26x28xf32>, vector<28x208xf32>, vector<26x208xf32> -> vector<26x208xf32>
    %43 = arith.addf %37, %42 : vector<26x208xf32>
    %c1_40 = arith.constant 1 : index
    %c2_41 = arith.constant 2 : index
    %c0_42 = arith.constant 0 : index
    %44 = vector.load %arg0[%c1_40, %c2_41, %c0_42] : memref<2x28x28xf32, #tpu.memory_space<vmem>>, vector<1x26x28xf32>
    %45 = vector.shape_cast %44 : vector<1x26x28xf32> to vector<26x28xf32>
    %c2_43 = arith.constant 2 : index
    %c0_44 = arith.constant 0 : index
    %c0_45 = arith.constant 0 : index
    %46 = vector.load %arg1[%c2_43, %c0_44, %c0_45] : memref<3x28x208xf32, #tpu.memory_space<vmem>>, vector<1x28x208xf32>
    %47 = vector.shape_cast %46 : vector<1x28x208xf32> to vector<28x208xf32>
    %cst_46 = arith.constant dense<0.000000e+00> : vector<26x208xf32>
    %48 = tpu.matmul %45, %47, %cst_46 {dimension_numbers = #tpu.dot_dimension_numbers<[1], [0], [0], [1], [0, 0, 1, 1], [], []>} : vector<26x28xf32>, vector<28x208xf32>, vector<26x208xf32> -> vector<26x208xf32>
    %49 = arith.addf %43, %48 : vector<26x208xf32>
    %c1_47 = arith.constant 1 : index
    %c0_48 = arith.constant 0 : index
    %c0_49 = arith.constant 0 : index
    %50 = vector.load %arg18[%c1_47, %c0_48, %c0_49] : memref<2x26x208xf32, #tpu.memory_space<vmem>>, vector<1x26x208xf32>
    %51 = vector.shape_cast %50 : vector<1x26x208xf32> to vector<26x208xf32>
    %52 = vector.shape_cast %49 : vector<26x208xf32> to vector<1x26x208xf32>
    tpu.vector_store %arg18[%c1_47, %c0_48, %c0_49], %52 {strides = array<i32>} : memref<2x26x208xf32, #tpu.memory_space<vmem>>, vector<1x26x208xf32>,
    %cst_50 = arith.constant dense<0.000000e+00> : vector<208xf32>
    %53 = vector.multi_reduction <add>, %49, %cst_50 [0] : vector<26x208xf32> to vector<208xf32>
    %54 = vector.shape_cast %53 : vector<208xf32> to vector<1x208xf32>
    %55 = arith.addf %26, %54 : vector<1x208xf32>
    %56 = arith.mulf %49, %49 : vector<26x208xf32>
    %cst_51 = arith.constant dense<0.000000e+00> : vector<208xf32>
    %57 = vector.multi_reduction <add>, %56, %cst_51 [0] : vector<26x208xf32> to vector<208xf32>
    %58 = vector.shape_cast %57 : vector<208xf32> to vector<1x208xf32>
    %59 = arith.addf %30, %58 : vector<1x208xf32>
    %c0_52 = arith.constant 0 : index
    %c0_53 = arith.constant 0 : index
    %60 = vector.load %arg5[%c0_52, %c0_53] : memref<208x8xf32, #tpu.memory_space<vmem>>, vector<208x8xf32>
    %cst_54 = arith.constant dense<0.000000e+00> : vector<1x8xf32>
    %61 = tpu.matmul %55, %60, %cst_54 {dimension_numbers = #tpu.dot_dimension_numbers<[1], [0], [0], [1], [0, 0, 1, 1], [], []>} : vector<1x208xf32>, vector<208x8xf32>, vector<1x8xf32> -> vector<1x8xf32>
    %c0_55 = arith.constant 0 : index
    %c0_56 = arith.constant 0 : index
    %62 = vector.load %arg5[%c0_55, %c0_56] : memref<208x8xf32, #tpu.memory_space<vmem>>, vector<208x8xf32>
    %cst_57 = arith.constant dense<0.000000e+00> : vector<1x8xf32>
    %63 = tpu.matmul %59, %62, %cst_57 {dimension_numbers = #tpu.dot_dimension_numbers<[1], [0], [0], [1], [0, 0, 1, 1], [], []>} : vector<1x208xf32>, vector<208x8xf32>, vector<1x8xf32> -> vector<1x8xf32>
    %c0_58 = arith.constant 0 : index
    %c0_59 = arith.constant 0 : index
    %64 = vector.load %arg6[%c0_58, %c0_59] : memref<8x208xf32, #tpu.memory_space<vmem>>, vector<8x208xf32>
    %cst_60 = arith.constant dense<0.000000e+00> : vector<1x208xf32>
    %65 = tpu.matmul %61, %64, %cst_60 {dimension_numbers = #tpu.dot_dimension_numbers<[1], [0], [0], [1], [0, 0, 1, 1], [], []>} : vector<1x8xf32>, vector<8x208xf32>, vector<1x208xf32> -> vector<1x208xf32>
    %cst_61 = arith.constant 7.396450e-04 : f32
    %66 = vector.broadcast %cst_61 : f32 to vector<1x208xf32>
    %67 = arith.mulf %65, %66 : vector<1x208xf32>
    %c0_62 = arith.constant 0 : index
    %c0_63 = arith.constant 0 : index
    %68 = vector.load %arg6[%c0_62, %c0_63] : memref<8x208xf32, #tpu.memory_space<vmem>>, vector<8x208xf32>
    %cst_64 = arith.constant dense<0.000000e+00> : vector<1x208xf32>
    %69 = tpu.matmul %63, %68, %cst_64 {dimension_numbers = #tpu.dot_dimension_numbers<[1], [0], [0], [1], [0, 0, 1, 1], [], []>} : vector<1x8xf32>, vector<8x208xf32>, vector<1x208xf32> -> vector<1x208xf32>
    %cst_65 = arith.constant 7.396450e-04 : f32
    %70 = vector.broadcast %cst_65 : f32 to vector<1x208xf32>
    %71 = arith.mulf %69, %70 : vector<1x208xf32>
    %72 = arith.mulf %67, %67 : vector<1x208xf32>
    %73 = arith.subf %71, %72 : vector<1x208xf32>
    %c0_66 = arith.constant 0 : index
    %c0_67 = arith.constant 0 : index
    %74 = vector.load %arg7[%c0_66, %c0_67] : memref<1x208xf32, #tpu.memory_space<vmem>>, vector<1x208xf32>
    %cst_68 = arith.constant 9.99999974E-6 : f32
    %75 = vector.broadcast %cst_68 : f32 to vector<1x208xf32>
    %76 = arith.addf %73, %75 : vector<1x208xf32>
    %77 = math.rsqrt %76 : vector<1x208xf32>
    %78 = arith.mulf %74, %77 : vector<1x208xf32>
    %c0_69 = arith.constant 0 : index
    %c0_70 = arith.constant 0 : index
    %79 = vector.load %arg8[%c0_69, %c0_70] : memref<1x208xf32, #tpu.memory_space<vmem>>, vector<1x208xf32>
    %80 = arith.mulf %67, %78 : vector<1x208xf32>
    %81 = arith.subf %79, %80 : vector<1x208xf32>
    %c0_71 = arith.constant 0 : index
    %c0_72 = arith.constant 0 : index
    %c0_73 = arith.constant 0 : index
    %82 = vector.load %arg18[%c0_71, %c0_72, %c0_73] : memref<2x26x208xf32, #tpu.memory_space<vmem>>, vector<1x26x208xf32>
    %83 = vector.shape_cast %82 : vector<1x26x208xf32> to vector<26x208xf32>
    %84 = vector.broadcast %78 : vector<1x208xf32> to vector<26x208xf32>
    %85 = arith.mulf %83, %84 : vector<26x208xf32>
    %86 = vector.broadcast %81 : vector<1x208xf32> to vector<26x208xf32>
    %87 = arith.addf %85, %86 : vector<26x208xf32>
    %cst_74 = arith.constant 0.000000e+00 : f32
    %88 = vector.broadcast %cst_74 : f32 to vector<26x208xf32>
    %89 = arith.cmpf ogt, %87, %88 : vector<26x208xf32>
    %cst_75 = arith.constant 2.000000e-01 : f32
    %90 = vector.broadcast %cst_75 : f32 to vector<26x208xf32>
    %91 = arith.mulf %90, %87 : vector<26x208xf32>
    %92 = arith.select %89, %87, %91 : vector<26x208xi1>, vector<26x208xf32>
    %c0_76 = arith.constant 0 : index
    %c0_77 = arith.constant 0 : index
    %c0_78 = arith.constant 0 : index
    %93 = vector.load %arg18[%c0_76, %c0_77, %c0_78] : memref<2x26x208xf32, #tpu.memory_space<vmem>>, vector<1x26x208xf32>
    %94 = vector.shape_cast %93 : vector<1x26x208xf32> to vector<26x208xf32>
    %95 = vector.shape_cast %92 : vector<26x208xf32> to vector<1x26x208xf32>
    tpu.vector_store %arg18[%c0_76, %c0_77, %c0_78], %95 {strides = array<i32>} : memref<2x26x208xf32, #tpu.memory_space<vmem>>, vector<1x26x208xf32>,
    %c1_79 = arith.constant 1 : index
    %c0_80 = arith.constant 0 : index
    %c0_81 = arith.constant 0 : index
    %96 = vector.load %arg18[%c1_79, %c0_80, %c0_81] : memref<2x26x208xf32, #tpu.memory_space<vmem>>, vector<1x26x208xf32>
    %97 = vector.shape_cast %96 : vector<1x26x208xf32> to vector<26x208xf32>
    %98 = vector.broadcast %78 : vector<1x208xf32> to vector<26x208xf32>
    %99 = arith.mulf %97, %98 : vector<26x208xf32>
    %100 = vector.broadcast %81 : vector<1x208xf32> to vector<26x208xf32>
    %101 = arith.addf %99, %100 : vector<26x208xf32>
    %cst_82 = arith.constant 0.000000e+00 : f32
    %102 = vector.broadcast %cst_82 : f32 to vector<26x208xf32>
    %103 = arith.cmpf ogt, %101, %102 : vector<26x208xf32>
    %cst_83 = arith.constant 2.000000e-01 : f32
    %104 = vector.broadcast %cst_83 : f32 to vector<26x208xf32>
    %105 = arith.mulf %104, %101 : vector<26x208xf32>
    %106 = arith.select %103, %101, %105 : vector<26x208xi1>, vector<26x208xf32>
    %c1_84 = arith.constant 1 : index
    %c0_85 = arith.constant 0 : index
    %c0_86 = arith.constant 0 : index
    %107 = vector.load %arg18[%c1_84, %c0_85, %c0_86] : memref<2x26x208xf32, #tpu.memory_space<vmem>>, vector<1x26x208xf32>
    %108 = vector.shape_cast %107 : vector<1x26x208xf32> to vector<26x208xf32>
    %109 = vector.shape_cast %106 : vector<26x208xf32> to vector<1x26x208xf32>
    tpu.vector_store %arg18[%c1_84, %c0_85, %c0_86], %109 {strides = array<i32>} : memref<2x26x208xf32, #tpu.memory_space<vmem>>, vector<1x26x208xf32>,
    %cst_87 = arith.constant 0.000000e+00 : f32
    %110 = vector.broadcast %cst_87 : f32 to vector<1x352xf32>
    %cst_88 = arith.constant 0.000000e+00 : f32
    %111 = vector.broadcast %cst_88 : f32 to vector<1x352xf32>
    %cst_89 = arith.constant 0.000000e+00 : f32
    %112 = vector.broadcast %cst_89 : f32 to vector<22x352xf32>
    %c0_90 = arith.constant 0 : index
    %c0_91 = arith.constant 0 : index
    %c0_92 = arith.constant 0 : index
    %113 = vector.load %arg18[%c0_90, %c0_91, %c0_92] : memref<2x26x208xf32, #tpu.memory_space<vmem>>, vector<1x22x208xf32>
    %114 = vector.shape_cast %113 : vector<1x22x208xf32> to vector<22x208xf32>
    %c0_93 = arith.constant 0 : index
    %c0_94 = arith.constant 0 : index
    %c0_95 = arith.constant 0 : index
    %115 = vector.load %arg2[%c0_93, %c0_94, %c0_95] : memref<5x208x352xf32, #tpu.memory_space<vmem>>, vector<1x208x352xf32>
    %116 = vector.shape_cast %115 : vector<1x208x352xf32> to vector<208x352xf32>
    %cst_96 = arith.constant dense<0.000000e+00> : vector<22x352xf32>
    %117 = tpu.matmul %114, %116, %cst_96 {dimension_numbers = #tpu.dot_dimension_numbers<[1], [0], [0], [1], [0, 0, 1, 1], [], []>} : vector<22x208xf32>, vector<208x352xf32>, vector<22x352xf32> -> vector<22x352xf32>
    %118 = arith.addf %112, %117 : vector<22x352xf32>
    %c0_97 = arith.constant 0 : index
    %c1_98 = arith.constant 1 : index
    %c0_99 = arith.constant 0 : index
    %119 = vector.load %arg18[%c0_97, %c1_98, %c0_99] : memref<2x26x208xf32, #tpu.memory_space<vmem>>, vector<1x22x208xf32>
    %120 = vector.shape_cast %119 : vector<1x22x208xf32> to vector<22x208xf32>
    %c1_100 = arith.constant 1 : index
    %c0_101 = arith.constant 0 : index
    %c0_102 = arith.constant 0 : index
    %121 = vector.load %arg2[%c1_100, %c0_101, %c0_102] : memref<5x208x352xf32, #tpu.memory_space<vmem>>, vector<1x208x352xf32>
    %122 = vector.shape_cast %121 : vector<1x208x352xf32> to vector<208x352xf32>
    %cst_103 = arith.constant dense<0.000000e+00> : vector<22x352xf32>
    %123 = tpu.matmul %120, %122, %cst_103 {dimension_numbers = #tpu.dot_dimension_numbers<[1], [0], [0], [1], [0, 0, 1, 1], [], []>} : vector<22x208xf32>, vector<208x352xf32>, vector<22x352xf32> -> vector<22x352xf32>
    %124 = arith.addf %118, %123 : vector<22x352xf32>
    %c0_104 = arith.constant 0 : index
    %c2_105 = arith.constant 2 : index
    %c0_106 = arith.constant 0 : index
    %125 = vector.load %arg18[%c0_104, %c2_105, %c0_106] : memref<2x26x208xf32, #tpu.memory_space<vmem>>, vector<1x22x208xf32>
    %126 = vector.shape_cast %125 : vector<1x22x208xf32> to vector<22x208xf32>
    %c2_107 = arith.constant 2 : index
    %c0_108 = arith.constant 0 : index
    %c0_109 = arith.constant 0 : index
    %127 = vector.load %arg2[%c2_107, %c0_108, %c0_109] : memref<5x208x352xf32, #tpu.memory_space<vmem>>, vector<1x208x352xf32>
    %128 = vector.shape_cast %127 : vector<1x208x352xf32> to vector<208x352xf32>
    %cst_110 = arith.constant dense<0.000000e+00> : vector<22x352xf32>
    %129 = tpu.matmul %126, %128, %cst_110 {dimension_numbers = #tpu.dot_dimension_numbers<[1], [0], [0], [1], [0, 0, 1, 1], [], []>} : vector<22x208xf32>, vector<208x352xf32>, vector<22x352xf32> -> vector<22x352xf32>
    %130 = arith.addf %124, %129 : vector<22x352xf32>
    %c0_111 = arith.constant 0 : index
    %c3 = arith.constant 3 : index
    %c0_112 = arith.constant 0 : index
    %131 = vector.load %arg18[%c0_111, %c3, %c0_112] : memref<2x26x208xf32, #tpu.memory_space<vmem>>, vector<1x22x208xf32>
    %132 = vector.shape_cast %131 : vector<1x22x208xf32> to vector<22x208xf32>
    %c3_113 = arith.constant 3 : index
    %c0_114 = arith.constant 0 : index
    %c0_115 = arith.constant 0 : index
    %133 = vector.load %arg2[%c3_113, %c0_114, %c0_115] : memref<5x208x352xf32, #tpu.memory_space<vmem>>, vector<1x208x352xf32>
    %134 = vector.shape_cast %133 : vector<1x208x352xf32> to vector<208x352xf32>
    %cst_116 = arith.constant dense<0.000000e+00> : vector<22x352xf32>
    %135 = tpu.matmul %132, %134, %cst_116 {dimension_numbers = #tpu.dot_dimension_numbers<[1], [0], [0], [1], [0, 0, 1, 1], [], []>} : vector<22x208xf32>, vector<208x352xf32>, vector<22x352xf32> -> vector<22x352xf32>
    %136 = arith.addf %130, %135 : vector<22x352xf32>
    %c0_117 = arith.constant 0 : index
    %c4 = arith.constant 4 : index
    %c0_118 = arith.constant 0 : index
    %137 = vector.load %arg18[%c0_117, %c4, %c0_118] : memref<2x26x208xf32, #tpu.memory_space<vmem>>, vector<1x22x208xf32>
    %138 = vector.shape_cast %137 : vector<1x22x208xf32> to vector<22x208xf32>
    %c4_119 = arith.constant 4 : index
    %c0_120 = arith.constant 0 : index
    %c0_121 = arith.constant 0 : index
    %139 = vector.load %arg2[%c4_119, %c0_120, %c0_121] : memref<5x208x352xf32, #tpu.memory_space<vmem>>, vector<1x208x352xf32>
    %140 = vector.shape_cast %139 : vector<1x208x352xf32> to vector<208x352xf32>
    %cst_122 = arith.constant dense<0.000000e+00> : vector<22x352xf32>
    %141 = tpu.matmul %138, %140, %cst_122 {dimension_numbers = #tpu.dot_dimension_numbers<[1], [0], [0], [1], [0, 0, 1, 1], [], []>} : vector<22x208xf32>, vector<208x352xf32>, vector<22x352xf32> -> vector<22x352xf32>
    %142 = arith.addf %136, %141 : vector<22x352xf32>
    %c0_123 = arith.constant 0 : index
    %c0_124 = arith.constant 0 : index
    %c0_125 = arith.constant 0 : index
    %143 = vector.load %arg19[%c0_123, %c0_124, %c0_125] : memref<2x22x352xf32, #tpu.memory_space<vmem>>, vector<1x22x352xf32>
    %144 = vector.shape_cast %143 : vector<1x22x352xf32> to vector<22x352xf32>
    %145 = vector.shape_cast %142 : vector<22x352xf32> to vector<1x22x352xf32>
    tpu.vector_store %arg19[%c0_123, %c0_124, %c0_125], %145 {strides = array<i32>} : memref<2x22x352xf32, #tpu.memory_space<vmem>>, vector<1x22x352xf32>,
    %cst_126 = arith.constant dense<0.000000e+00> : vector<352xf32>
    %146 = vector.multi_reduction <add>, %142, %cst_126 [0] : vector<22x352xf32> to vector<352xf32>
    %147 = vector.shape_cast %146 : vector<352xf32> to vector<1x352xf32>
    %148 = arith.addf %110, %147 : vector<1x352xf32>
    %149 = arith.mulf %142, %142 : vector<22x352xf32>
    %cst_127 = arith.constant dense<0.000000e+00> : vector<352xf32>
    %150 = vector.multi_reduction <add>, %149, %cst_127 [0] : vector<22x352xf32> to vector<352xf32>
    %151 = vector.shape_cast %150 : vector<352xf32> to vector<1x352xf32>
    %152 = arith.addf %111, %151 : vector<1x352xf32>
    %cst_128 = arith.constant 0.000000e+00 : f32
    %153 = vector.broadcast %cst_128 : f32 to vector<22x352xf32>
    %c1_129 = arith.constant 1 : index
    %c0_130 = arith.constant 0 : index
    %c0_131 = arith.constant 0 : index
    %154 = vector.load %arg18[%c1_129, %c0_130, %c0_131] : memref<2x26x208xf32, #tpu.memory_space<vmem>>, vector<1x22x208xf32>
    %155 = vector.shape_cast %154 : vector<1x22x208xf32> to vector<22x208xf32>
    %c0_132 = arith.constant 0 : index
    %c0_133 = arith.constant 0 : index
    %c0_134 = arith.constant 0 : index
    %156 = vector.load %arg2[%c0_132, %c0_133, %c0_134] : memref<5x208x352xf32, #tpu.memory_space<vmem>>, vector<1x208x352xf32>
    %157 = vector.shape_cast %156 : vector<1x208x352xf32> to vector<208x352xf32>
    %cst_135 = arith.constant dense<0.000000e+00> : vector<22x352xf32>
    %158 = tpu.matmul %155, %157, %cst_135 {dimension_numbers = #tpu.dot_dimension_numbers<[1], [0], [0], [1], [0, 0, 1, 1], [], []>} : vector<22x208xf32>, vector<208x352xf32>, vector<22x352xf32> -> vector<22x352xf32>
    %159 = arith.addf %153, %158 : vector<22x352xf32>
    %c1_136 = arith.constant 1 : index
    %c1_137 = arith.constant 1 : index
    %c0_138 = arith.constant 0 : index
    %160 = vector.load %arg18[%c1_136, %c1_137, %c0_138] : memref<2x26x208xf32, #tpu.memory_space<vmem>>, vector<1x22x208xf32>
    %161 = vector.shape_cast %160 : vector<1x22x208xf32> to vector<22x208xf32>
    %c1_139 = arith.constant 1 : index
    %c0_140 = arith.constant 0 : index
    %c0_141 = arith.constant 0 : index
    %162 = vector.load %arg2[%c1_139, %c0_140, %c0_141] : memref<5x208x352xf32, #tpu.memory_space<vmem>>, vector<1x208x352xf32>
    %163 = vector.shape_cast %162 : vector<1x208x352xf32> to vector<208x352xf32>
    %cst_142 = arith.constant dense<0.000000e+00> : vector<22x352xf32>
    %164 = tpu.matmul %161, %163, %cst_142 {dimension_numbers = #tpu.dot_dimension_numbers<[1], [0], [0], [1], [0, 0, 1, 1], [], []>} : vector<22x208xf32>, vector<208x352xf32>, vector<22x352xf32> -> vector<22x352xf32>
    %165 = arith.addf %159, %164 : vector<22x352xf32>
    %c1_143 = arith.constant 1 : index
    %c2_144 = arith.constant 2 : index
    %c0_145 = arith.constant 0 : index
    %166 = vector.load %arg18[%c1_143, %c2_144, %c0_145] : memref<2x26x208xf32, #tpu.memory_space<vmem>>, vector<1x22x208xf32>
    %167 = vector.shape_cast %166 : vector<1x22x208xf32> to vector<22x208xf32>
    %c2_146 = arith.constant 2 : index
    %c0_147 = arith.constant 0 : index
    %c0_148 = arith.constant 0 : index
    %168 = vector.load %arg2[%c2_146, %c0_147, %c0_148] : memref<5x208x352xf32, #tpu.memory_space<vmem>>, vector<1x208x352xf32>
    %169 = vector.shape_cast %168 : vector<1x208x352xf32> to vector<208x352xf32>
    %cst_149 = arith.constant dense<0.000000e+00> : vector<22x352xf32>
    %170 = tpu.matmul %167, %169, %cst_149 {dimension_numbers = #tpu.dot_dimension_numbers<[1], [0], [0], [1], [0, 0, 1, 1], [], []>} : vector<22x208xf32>, vector<208x352xf32>, vector<22x352xf32> -> vector<22x352xf32>
    %171 = arith.addf %165, %170 : vector<22x352xf32>
    %c1_150 = arith.constant 1 : index
    %c3_151 = arith.constant 3 : index
    %c0_152 = arith.constant 0 : index
    %172 = vector.load %arg18[%c1_150, %c3_151, %c0_152] : memref<2x26x208xf32, #tpu.memory_space<vmem>>, vector<1x22x208xf32>
    %173 = vector.shape_cast %172 : vector<1x22x208xf32> to vector<22x208xf32>
    %c3_153 = arith.constant 3 : index
    %c0_154 = arith.constant 0 : index
    %c0_155 = arith.constant 0 : index
    %174 = vector.load %arg2[%c3_153, %c0_154, %c0_155] : memref<5x208x352xf32, #tpu.memory_space<vmem>>, vector<1x208x352xf32>
    %175 = vector.shape_cast %174 : vector<1x208x352xf32> to vector<208x352xf32>
    %cst_156 = arith.constant dense<0.000000e+00> : vector<22x352xf32>
    %176 = tpu.matmul %173, %175, %cst_156 {dimension_numbers = #tpu.dot_dimension_numbers<[1], [0], [0], [1], [0, 0, 1, 1], [], []>} : vector<22x208xf32>, vector<208x352xf32>, vector<22x352xf32> -> vector<22x352xf32>
    %177 = arith.addf %171, %176 : vector<22x352xf32>
    %c1_157 = arith.constant 1 : index
    %c4_158 = arith.constant 4 : index
    %c0_159 = arith.constant 0 : index
    %178 = vector.load %arg18[%c1_157, %c4_158, %c0_159] : memref<2x26x208xf32, #tpu.memory_space<vmem>>, vector<1x22x208xf32>
    %179 = vector.shape_cast %178 : vector<1x22x208xf32> to vector<22x208xf32>
    %c4_160 = arith.constant 4 : index
    %c0_161 = arith.constant 0 : index
    %c0_162 = arith.constant 0 : index
    %180 = vector.load %arg2[%c4_160, %c0_161, %c0_162] : memref<5x208x352xf32, #tpu.memory_space<vmem>>, vector<1x208x352xf32>
    %181 = vector.shape_cast %180 : vector<1x208x352xf32> to vector<208x352xf32>
    %cst_163 = arith.constant dense<0.000000e+00> : vector<22x352xf32>
    %182 = tpu.matmul %179, %181, %cst_163 {dimension_numbers = #tpu.dot_dimension_numbers<[1], [0], [0], [1], [0, 0, 1, 1], [], []>} : vector<22x208xf32>, vector<208x352xf32>, vector<22x352xf32> -> vector<22x352xf32>
    %183 = arith.addf %177, %182 : vector<22x352xf32>
    %c1_164 = arith.constant 1 : index
    %c0_165 = arith.constant 0 : index
    %c0_166 = arith.constant 0 : index
    %184 = vector.load %arg19[%c1_164, %c0_165, %c0_166] : memref<2x22x352xf32, #tpu.memory_space<vmem>>, vector<1x22x352xf32>
    %185 = vector.shape_cast %184 : vector<1x22x352xf32> to vector<22x352xf32>
    %186 = vector.shape_cast %183 : vector<22x352xf32> to vector<1x22x352xf32>
    tpu.vector_store %arg19[%c1_164, %c0_165, %c0_166], %186 {strides = array<i32>} : memref<2x22x352xf32, #tpu.memory_space<vmem>>, vector<1x22x352xf32>,
    %cst_167 = arith.constant dense<0.000000e+00> : vector<352xf32>
    %187 = vector.multi_reduction <add>, %183, %cst_167 [0] : vector<22x352xf32> to vector<352xf32>
    %188 = vector.shape_cast %187 : vector<352xf32> to vector<1x352xf32>
    %189 = arith.addf %148, %188 : vector<1x352xf32>
    %190 = arith.mulf %183, %183 : vector<22x352xf32>
    %cst_168 = arith.constant dense<0.000000e+00> : vector<352xf32>
    %191 = vector.multi_reduction <add>, %190, %cst_168 [0] : vector<22x352xf32> to vector<352xf32>
    %192 = vector.shape_cast %191 : vector<352xf32> to vector<1x352xf32>
    %193 = arith.addf %152, %192 : vector<1x352xf32>
    %c0_169 = arith.constant 0 : index
    %c0_170 = arith.constant 0 : index
    %194 = vector.load %arg9[%c0_169, %c0_170] : memref<352x16xf32, #tpu.memory_space<vmem>>, vector<352x16xf32>
    %cst_171 = arith.constant dense<0.000000e+00> : vector<1x16xf32>
    %195 = tpu.matmul %189, %194, %cst_171 {dimension_numbers = #tpu.dot_dimension_numbers<[1], [0], [0], [1], [0, 0, 1, 1], [], []>} : vector<1x352xf32>, vector<352x16xf32>, vector<1x16xf32> -> vector<1x16xf32>
    %c0_172 = arith.constant 0 : index
    %c0_173 = arith.constant 0 : index
    %196 = vector.load %arg9[%c0_172, %c0_173] : memref<352x16xf32, #tpu.memory_space<vmem>>, vector<352x16xf32>
    %cst_174 = arith.constant dense<0.000000e+00> : vector<1x16xf32>
    %197 = tpu.matmul %193, %196, %cst_174 {dimension_numbers = #tpu.dot_dimension_numbers<[1], [0], [0], [1], [0, 0, 1, 1], [], []>} : vector<1x352xf32>, vector<352x16xf32>, vector<1x16xf32> -> vector<1x16xf32>
    %c0_175 = arith.constant 0 : index
    %c0_176 = arith.constant 0 : index
    %198 = vector.load %arg10[%c0_175, %c0_176] : memref<16x352xf32, #tpu.memory_space<vmem>>, vector<16x352xf32>
    %cst_177 = arith.constant dense<0.000000e+00> : vector<1x352xf32>
    %199 = tpu.matmul %195, %198, %cst_177 {dimension_numbers = #tpu.dot_dimension_numbers<[1], [0], [0], [1], [0, 0, 1, 1], [], []>} : vector<1x16xf32>, vector<16x352xf32>, vector<1x352xf32> -> vector<1x352xf32>
    %cst_178 = arith.constant 0.00103305781 : f32
    %200 = vector.broadcast %cst_178 : f32 to vector<1x352xf32>
    %201 = arith.mulf %199, %200 : vector<1x352xf32>
    %c0_179 = arith.constant 0 : index
    %c0_180 = arith.constant 0 : index
    %202 = vector.load %arg10[%c0_179, %c0_180] : memref<16x352xf32, #tpu.memory_space<vmem>>, vector<16x352xf32>
    %cst_181 = arith.constant dense<0.000000e+00> : vector<1x352xf32>
    %203 = tpu.matmul %197, %202, %cst_181 {dimension_numbers = #tpu.dot_dimension_numbers<[1], [0], [0], [1], [0, 0, 1, 1], [], []>} : vector<1x16xf32>, vector<16x352xf32>, vector<1x352xf32> -> vector<1x352xf32>
    %cst_182 = arith.constant 0.00103305781 : f32
    %204 = vector.broadcast %cst_182 : f32 to vector<1x352xf32>
    %205 = arith.mulf %203, %204 : vector<1x352xf32>
    %206 = arith.mulf %201, %201 : vector<1x352xf32>
    %207 = arith.subf %205, %206 : vector<1x352xf32>
    %c0_183 = arith.constant 0 : index
    %c0_184 = arith.constant 0 : index
    %208 = vector.load %arg11[%c0_183, %c0_184] : memref<1x352xf32, #tpu.memory_space<vmem>>, vector<1x352xf32>
    %cst_185 = arith.constant 9.99999974E-6 : f32
    %209 = vector.broadcast %cst_185 : f32 to vector<1x352xf32>
    %210 = arith.addf %207, %209 : vector<1x352xf32>
    %211 = math.rsqrt %210 : vector<1x352xf32>
    %212 = arith.mulf %208, %211 : vector<1x352xf32>
    %c0_186 = arith.constant 0 : index
    %c0_187 = arith.constant 0 : index
    %213 = vector.load %arg12[%c0_186, %c0_187] : memref<1x352xf32, #tpu.memory_space<vmem>>, vector<1x352xf32>
    %214 = arith.mulf %201, %212 : vector<1x352xf32>
    %215 = arith.subf %213, %214 : vector<1x352xf32>
    %c0_188 = arith.constant 0 : index
    %c0_189 = arith.constant 0 : index
    %c0_190 = arith.constant 0 : index
    %216 = vector.load %arg19[%c0_188, %c0_189, %c0_190] : memref<2x22x352xf32, #tpu.memory_space<vmem>>, vector<1x22x352xf32>
    %217 = vector.shape_cast %216 : vector<1x22x352xf32> to vector<22x352xf32>
    %218 = vector.broadcast %212 : vector<1x352xf32> to vector<22x352xf32>
    %219 = arith.mulf %217, %218 : vector<22x352xf32>
    %220 = vector.broadcast %215 : vector<1x352xf32> to vector<22x352xf32>
    %221 = arith.addf %219, %220 : vector<22x352xf32>
    %cst_191 = arith.constant 0.000000e+00 : f32
    %222 = vector.broadcast %cst_191 : f32 to vector<22x352xf32>
    %223 = arith.cmpf ogt, %221, %222 : vector<22x352xf32>
    %cst_192 = arith.constant 2.000000e-01 : f32
    %224 = vector.broadcast %cst_192 : f32 to vector<22x352xf32>
    %225 = arith.mulf %224, %221 : vector<22x352xf32>
    %226 = arith.select %223, %221, %225 : vector<22x352xi1>, vector<22x352xf32>
    %c0_193 = arith.constant 0 : index
    %c0_194 = arith.constant 0 : index
    %c0_195 = arith.constant 0 : index
    %227 = vector.load %arg19[%c0_193, %c0_194, %c0_195] : memref<2x22x352xf32, #tpu.memory_space<vmem>>, vector<1x22x352xf32>
    %228 = vector.shape_cast %227 : vector<1x22x352xf32> to vector<22x352xf32>
    %229 = vector.shape_cast %226 : vector<22x352xf32> to vector<1x22x352xf32>
    tpu.vector_store %arg19[%c0_193, %c0_194, %c0_195], %229 {strides = array<i32>} : memref<2x22x352xf32, #tpu.memory_space<vmem>>, vector<1x22x352xf32>,
    %c1_196 = arith.constant 1 : index
    %c0_197 = arith.constant 0 : index
    %c0_198 = arith.constant 0 : index
    %230 = vector.load %arg19[%c1_196, %c0_197, %c0_198] : memref<2x22x352xf32, #tpu.memory_space<vmem>>, vector<1x22x352xf32>
    %231 = vector.shape_cast %230 : vector<1x22x352xf32> to vector<22x352xf32>
    %232 = vector.broadcast %212 : vector<1x352xf32> to vector<22x352xf32>
    %233 = arith.mulf %231, %232 : vector<22x352xf32>
    %234 = vector.broadcast %215 : vector<1x352xf32> to vector<22x352xf32>
    %235 = arith.addf %233, %234 : vector<22x352xf32>
    %cst_199 = arith.constant 0.000000e+00 : f32
    %236 = vector.broadcast %cst_199 : f32 to vector<22x352xf32>
    %237 = arith.cmpf ogt, %235, %236 : vector<22x352xf32>
    %cst_200 = arith.constant 2.000000e-01 : f32
    %238 = vector.broadcast %cst_200 : f32 to vector<22x352xf32>
    %239 = arith.mulf %238, %235 : vector<22x352xf32>
    %240 = arith.select %237, %235, %239 : vector<22x352xi1>, vector<22x352xf32>
    %c1_201 = arith.constant 1 : index
    %c0_202 = arith.constant 0 : index
    %c0_203 = arith.constant 0 : index
    %241 = vector.load %arg19[%c1_201, %c0_202, %c0_203] : memref<2x22x352xf32, #tpu.memory_space<vmem>>, vector<1x22x352xf32>
    %242 = vector.shape_cast %241 : vector<1x22x352xf32> to vector<22x352xf32>
    %243 = vector.shape_cast %240 : vector<22x352xf32> to vector<1x22x352xf32>
    tpu.vector_store %arg19[%c1_201, %c0_202, %c0_203], %243 {strides = array<i32>} : memref<2x22x352xf32, #tpu.memory_space<vmem>>, vector<1x22x352xf32>,
    %cst_204 = arith.constant 0.000000e+00 : f32
    %244 = vector.broadcast %cst_204 : f32 to vector<1x144xf32>
    %cst_205 = arith.constant 0.000000e+00 : f32
    %245 = vector.broadcast %cst_205 : f32 to vector<1x144xf32>
    %c0_206 = arith.constant 0 : index
    %c0_207 = arith.constant 0 : index
    %c0_208 = arith.constant 0 : index
    %246 = vector.load %arg19[%c0_206, %c0_207, %c0_208] : memref<2x22x352xf32, #tpu.memory_space<vmem>>, vector<1x22x352xf32>
    %247 = vector.shape_cast %246 : vector<1x22x352xf32> to vector<22x352xf32>
    %cst_209 = arith.constant 0.000000e+00 : f32
    %248 = vector.broadcast %cst_209 : f32 to vector<9x144xf32>
    %c0_210 = arith.constant 0 : index
    %c0_211 = arith.constant 0 : index
    %c0_212 = arith.constant 0 : index
    %249 = vector.load %arg4[%c0_210, %c0_211, %c0_212] : memref<5x9x22xf32, #tpu.memory_space<vmem>>, vector<1x9x22xf32>
    %250 = vector.shape_cast %249 : vector<1x9x22xf32> to vector<9x22xf32>
    %cst_213 = arith.constant dense<0.000000e+00> : vector<9x352xf32>
    %251 = tpu.matmul %250, %247, %cst_213 {dimension_numbers = #tpu.dot_dimension_numbers<[1], [0], [0], [1], [0, 0, 1, 1], [], []>} : vector<9x22xf32>, vector<22x352xf32>, vector<9x352xf32> -> vector<9x352xf32>
    %c0_214 = arith.constant 0 : index
    %c0_215 = arith.constant 0 : index
    %c0_216 = arith.constant 0 : index
    %252 = vector.load %arg3[%c0_214, %c0_215, %c0_216] : memref<5x352x144xf32, #tpu.memory_space<vmem>>, vector<1x352x144xf32>
    %253 = vector.shape_cast %252 : vector<1x352x144xf32> to vector<352x144xf32>
    %cst_217 = arith.constant dense<0.000000e+00> : vector<9x144xf32>
    %254 = tpu.matmul %251, %253, %cst_217 {dimension_numbers = #tpu.dot_dimension_numbers<[1], [0], [0], [1], [0, 0, 1, 1], [], []>} : vector<9x352xf32>, vector<352x144xf32>, vector<9x144xf32> -> vector<9x144xf32>
    %255 = arith.addf %248, %254 : vector<9x144xf32>
    %c1_218 = arith.constant 1 : index
    %c0_219 = arith.constant 0 : index
    %c0_220 = arith.constant 0 : index
    %256 = vector.load %arg4[%c1_218, %c0_219, %c0_220] : memref<5x9x22xf32, #tpu.memory_space<vmem>>, vector<1x9x22xf32>
    %257 = vector.shape_cast %256 : vector<1x9x22xf32> to vector<9x22xf32>
    %cst_221 = arith.constant dense<0.000000e+00> : vector<9x352xf32>
    %258 = tpu.matmul %257, %247, %cst_221 {dimension_numbers = #tpu.dot_dimension_numbers<[1], [0], [0], [1], [0, 0, 1, 1], [], []>} : vector<9x22xf32>, vector<22x352xf32>, vector<9x352xf32> -> vector<9x352xf32>
    %c1_222 = arith.constant 1 : index
    %c0_223 = arith.constant 0 : index
    %c0_224 = arith.constant 0 : index
    %259 = vector.load %arg3[%c1_222, %c0_223, %c0_224] : memref<5x352x144xf32, #tpu.memory_space<vmem>>, vector<1x352x144xf32>
    %260 = vector.shape_cast %259 : vector<1x352x144xf32> to vector<352x144xf32>
    %cst_225 = arith.constant dense<0.000000e+00> : vector<9x144xf32>
    %261 = tpu.matmul %258, %260, %cst_225 {dimension_numbers = #tpu.dot_dimension_numbers<[1], [0], [0], [1], [0, 0, 1, 1], [], []>} : vector<9x352xf32>, vector<352x144xf32>, vector<9x144xf32> -> vector<9x144xf32>
    %262 = arith.addf %255, %261 : vector<9x144xf32>
    %c2_226 = arith.constant 2 : index
    %c0_227 = arith.constant 0 : index
    %c0_228 = arith.constant 0 : index
    %263 = vector.load %arg4[%c2_226, %c0_227, %c0_228] : memref<5x9x22xf32, #tpu.memory_space<vmem>>, vector<1x9x22xf32>
    %264 = vector.shape_cast %263 : vector<1x9x22xf32> to vector<9x22xf32>
    %cst_229 = arith.constant dense<0.000000e+00> : vector<9x352xf32>
    %265 = tpu.matmul %264, %247, %cst_229 {dimension_numbers = #tpu.dot_dimension_numbers<[1], [0], [0], [1], [0, 0, 1, 1], [], []>} : vector<9x22xf32>, vector<22x352xf32>, vector<9x352xf32> -> vector<9x352xf32>
    %c2_230 = arith.constant 2 : index
    %c0_231 = arith.constant 0 : index
    %c0_232 = arith.constant 0 : index
    %266 = vector.load %arg3[%c2_230, %c0_231, %c0_232] : memref<5x352x144xf32, #tpu.memory_space<vmem>>, vector<1x352x144xf32>
    %267 = vector.shape_cast %266 : vector<1x352x144xf32> to vector<352x144xf32>
    %cst_233 = arith.constant dense<0.000000e+00> : vector<9x144xf32>
    %268 = tpu.matmul %265, %267, %cst_233 {dimension_numbers = #tpu.dot_dimension_numbers<[1], [0], [0], [1], [0, 0, 1, 1], [], []>} : vector<9x352xf32>, vector<352x144xf32>, vector<9x144xf32> -> vector<9x144xf32>
    %269 = arith.addf %262, %268 : vector<9x144xf32>
    %c3_234 = arith.constant 3 : index
    %c0_235 = arith.constant 0 : index
    %c0_236 = arith.constant 0 : index
    %270 = vector.load %arg4[%c3_234, %c0_235, %c0_236] : memref<5x9x22xf32, #tpu.memory_space<vmem>>, vector<1x9x22xf32>
    %271 = vector.shape_cast %270 : vector<1x9x22xf32> to vector<9x22xf32>
    %cst_237 = arith.constant dense<0.000000e+00> : vector<9x352xf32>
    %272 = tpu.matmul %271, %247, %cst_237 {dimension_numbers = #tpu.dot_dimension_numbers<[1], [0], [0], [1], [0, 0, 1, 1], [], []>} : vector<9x22xf32>, vector<22x352xf32>, vector<9x352xf32> -> vector<9x352xf32>
    %c3_238 = arith.constant 3 : index
    %c0_239 = arith.constant 0 : index
    %c0_240 = arith.constant 0 : index
    %273 = vector.load %arg3[%c3_238, %c0_239, %c0_240] : memref<5x352x144xf32, #tpu.memory_space<vmem>>, vector<1x352x144xf32>
    %274 = vector.shape_cast %273 : vector<1x352x144xf32> to vector<352x144xf32>
    %cst_241 = arith.constant dense<0.000000e+00> : vector<9x144xf32>
    %275 = tpu.matmul %272, %274, %cst_241 {dimension_numbers = #tpu.dot_dimension_numbers<[1], [0], [0], [1], [0, 0, 1, 1], [], []>} : vector<9x352xf32>, vector<352x144xf32>, vector<9x144xf32> -> vector<9x144xf32>
    %276 = arith.addf %269, %275 : vector<9x144xf32>
    %c4_242 = arith.constant 4 : index
    %c0_243 = arith.constant 0 : index
    %c0_244 = arith.constant 0 : index
    %277 = vector.load %arg4[%c4_242, %c0_243, %c0_244] : memref<5x9x22xf32, #tpu.memory_space<vmem>>, vector<1x9x22xf32>
    %278 = vector.shape_cast %277 : vector<1x9x22xf32> to vector<9x22xf32>
    %cst_245 = arith.constant dense<0.000000e+00> : vector<9x352xf32>
    %279 = tpu.matmul %278, %247, %cst_245 {dimension_numbers = #tpu.dot_dimension_numbers<[1], [0], [0], [1], [0, 0, 1, 1], [], []>} : vector<9x22xf32>, vector<22x352xf32>, vector<9x352xf32> -> vector<9x352xf32>
    %c4_246 = arith.constant 4 : index
    %c0_247 = arith.constant 0 : index
    %c0_248 = arith.constant 0 : index
    %280 = vector.load %arg3[%c4_246, %c0_247, %c0_248] : memref<5x352x144xf32, #tpu.memory_space<vmem>>, vector<1x352x144xf32>
    %281 = vector.shape_cast %280 : vector<1x352x144xf32> to vector<352x144xf32>
    %cst_249 = arith.constant dense<0.000000e+00> : vector<9x144xf32>
    %282 = tpu.matmul %279, %281, %cst_249 {dimension_numbers = #tpu.dot_dimension_numbers<[1], [0], [0], [1], [0, 0, 1, 1], [], []>} : vector<9x352xf32>, vector<352x144xf32>, vector<9x144xf32> -> vector<9x144xf32>
    %283 = arith.addf %276, %282 : vector<9x144xf32>
    %c0_250 = arith.constant 0 : index
    %c0_251 = arith.constant 0 : index
    %c0_252 = arith.constant 0 : index
    %284 = vector.load %arg17[%c0_250, %c0_251, %c0_252] : memref<2x9x144xf32, #tpu.memory_space<vmem>>, vector<1x9x144xf32>
    %285 = vector.shape_cast %284 : vector<1x9x144xf32> to vector<9x144xf32>
    %286 = vector.shape_cast %283 : vector<9x144xf32> to vector<1x9x144xf32>
    tpu.vector_store %arg17[%c0_250, %c0_251, %c0_252], %286 {strides = array<i32>} : memref<2x9x144xf32, #tpu.memory_space<vmem>>, vector<1x9x144xf32>,
    %cst_253 = arith.constant dense<0.000000e+00> : vector<144xf32>
    %287 = vector.multi_reduction <add>, %283, %cst_253 [0] : vector<9x144xf32> to vector<144xf32>
    %288 = vector.shape_cast %287 : vector<144xf32> to vector<1x144xf32>
    %289 = arith.addf %244, %288 : vector<1x144xf32>
    %290 = arith.mulf %283, %283 : vector<9x144xf32>
    %cst_254 = arith.constant dense<0.000000e+00> : vector<144xf32>
    %291 = vector.multi_reduction <add>, %290, %cst_254 [0] : vector<9x144xf32> to vector<144xf32>
    %292 = vector.shape_cast %291 : vector<144xf32> to vector<1x144xf32>
    %293 = arith.addf %245, %292 : vector<1x144xf32>
    %c1_255 = arith.constant 1 : index
    %c0_256 = arith.constant 0 : index
    %c0_257 = arith.constant 0 : index
    %294 = vector.load %arg19[%c1_255, %c0_256, %c0_257] : memref<2x22x352xf32, #tpu.memory_space<vmem>>, vector<1x22x352xf32>
    %295 = vector.shape_cast %294 : vector<1x22x352xf32> to vector<22x352xf32>
    %cst_258 = arith.constant 0.000000e+00 : f32
    %296 = vector.broadcast %cst_258 : f32 to vector<9x144xf32>
    %c0_259 = arith.constant 0 : index
    %c0_260 = arith.constant 0 : index
    %c0_261 = arith.constant 0 : index
    %297 = vector.load %arg4[%c0_259, %c0_260, %c0_261] : memref<5x9x22xf32, #tpu.memory_space<vmem>>, vector<1x9x22xf32>
    %298 = vector.shape_cast %297 : vector<1x9x22xf32> to vector<9x22xf32>
    %cst_262 = arith.constant dense<0.000000e+00> : vector<9x352xf32>
    %299 = tpu.matmul %298, %295, %cst_262 {dimension_numbers = #tpu.dot_dimension_numbers<[1], [0], [0], [1], [0, 0, 1, 1], [], []>} : vector<9x22xf32>, vector<22x352xf32>, vector<9x352xf32> -> vector<9x352xf32>
    %c0_263 = arith.constant 0 : index
    %c0_264 = arith.constant 0 : index
    %c0_265 = arith.constant 0 : index
    %300 = vector.load %arg3[%c0_263, %c0_264, %c0_265] : memref<5x352x144xf32, #tpu.memory_space<vmem>>, vector<1x352x144xf32>
    %301 = vector.shape_cast %300 : vector<1x352x144xf32> to vector<352x144xf32>
    %cst_266 = arith.constant dense<0.000000e+00> : vector<9x144xf32>
    %302 = tpu.matmul %299, %301, %cst_266 {dimension_numbers = #tpu.dot_dimension_numbers<[1], [0], [0], [1], [0, 0, 1, 1], [], []>} : vector<9x352xf32>, vector<352x144xf32>, vector<9x144xf32> -> vector<9x144xf32>
    %303 = arith.addf %296, %302 : vector<9x144xf32>
    %c1_267 = arith.constant 1 : index
    %c0_268 = arith.constant 0 : index
    %c0_269 = arith.constant 0 : index
    %304 = vector.load %arg4[%c1_267, %c0_268, %c0_269] : memref<5x9x22xf32, #tpu.memory_space<vmem>>, vector<1x9x22xf32>
    %305 = vector.shape_cast %304 : vector<1x9x22xf32> to vector<9x22xf32>
    %cst_270 = arith.constant dense<0.000000e+00> : vector<9x352xf32>
    %306 = tpu.matmul %305, %295, %cst_270 {dimension_numbers = #tpu.dot_dimension_numbers<[1], [0], [0], [1], [0, 0, 1, 1], [], []>} : vector<9x22xf32>, vector<22x352xf32>, vector<9x352xf32> -> vector<9x352xf32>
    %c1_271 = arith.constant 1 : index
    %c0_272 = arith.constant 0 : index
    %c0_273 = arith.constant 0 : index
    %307 = vector.load %arg3[%c1_271, %c0_272, %c0_273] : memref<5x352x144xf32, #tpu.memory_space<vmem>>, vector<1x352x144xf32>
    %308 = vector.shape_cast %307 : vector<1x352x144xf32> to vector<352x144xf32>
    %cst_274 = arith.constant dense<0.000000e+00> : vector<9x144xf32>
    %309 = tpu.matmul %306, %308, %cst_274 {dimension_numbers = #tpu.dot_dimension_numbers<[1], [0], [0], [1], [0, 0, 1, 1], [], []>} : vector<9x352xf32>, vector<352x144xf32>, vector<9x144xf32> -> vector<9x144xf32>
    %310 = arith.addf %303, %309 : vector<9x144xf32>
    %c2_275 = arith.constant 2 : index
    %c0_276 = arith.constant 0 : index
    %c0_277 = arith.constant 0 : index
    %311 = vector.load %arg4[%c2_275, %c0_276, %c0_277] : memref<5x9x22xf32, #tpu.memory_space<vmem>>, vector<1x9x22xf32>
    %312 = vector.shape_cast %311 : vector<1x9x22xf32> to vector<9x22xf32>
    %cst_278 = arith.constant dense<0.000000e+00> : vector<9x352xf32>
    %313 = tpu.matmul %312, %295, %cst_278 {dimension_numbers = #tpu.dot_dimension_numbers<[1], [0], [0], [1], [0, 0, 1, 1], [], []>} : vector<9x22xf32>, vector<22x352xf32>, vector<9x352xf32> -> vector<9x352xf32>
    %c2_279 = arith.constant 2 : index
    %c0_280 = arith.constant 0 : index
    %c0_281 = arith.constant 0 : index
    %314 = vector.load %arg3[%c2_279, %c0_280, %c0_281] : memref<5x352x144xf32, #tpu.memory_space<vmem>>, vector<1x352x144xf32>
    %315 = vector.shape_cast %314 : vector<1x352x144xf32> to vector<352x144xf32>
    %cst_282 = arith.constant dense<0.000000e+00> : vector<9x144xf32>
    %316 = tpu.matmul %313, %315, %cst_282 {dimension_numbers = #tpu.dot_dimension_numbers<[1], [0], [0], [1], [0, 0, 1, 1], [], []>} : vector<9x352xf32>, vector<352x144xf32>, vector<9x144xf32> -> vector<9x144xf32>
    %317 = arith.addf %310, %316 : vector<9x144xf32>
    %c3_283 = arith.constant 3 : index
    %c0_284 = arith.constant 0 : index
    %c0_285 = arith.constant 0 : index
    %318 = vector.load %arg4[%c3_283, %c0_284, %c0_285] : memref<5x9x22xf32, #tpu.memory_space<vmem>>, vector<1x9x22xf32>
    %319 = vector.shape_cast %318 : vector<1x9x22xf32> to vector<9x22xf32>
    %cst_286 = arith.constant dense<0.000000e+00> : vector<9x352xf32>
    %320 = tpu.matmul %319, %295, %cst_286 {dimension_numbers = #tpu.dot_dimension_numbers<[1], [0], [0], [1], [0, 0, 1, 1], [], []>} : vector<9x22xf32>, vector<22x352xf32>, vector<9x352xf32> -> vector<9x352xf32>
    %c3_287 = arith.constant 3 : index
    %c0_288 = arith.constant 0 : index
    %c0_289 = arith.constant 0 : index
    %321 = vector.load %arg3[%c3_287, %c0_288, %c0_289] : memref<5x352x144xf32, #tpu.memory_space<vmem>>, vector<1x352x144xf32>
    %322 = vector.shape_cast %321 : vector<1x352x144xf32> to vector<352x144xf32>
    %cst_290 = arith.constant dense<0.000000e+00> : vector<9x144xf32>
    %323 = tpu.matmul %320, %322, %cst_290 {dimension_numbers = #tpu.dot_dimension_numbers<[1], [0], [0], [1], [0, 0, 1, 1], [], []>} : vector<9x352xf32>, vector<352x144xf32>, vector<9x144xf32> -> vector<9x144xf32>
    %324 = arith.addf %317, %323 : vector<9x144xf32>
    %c4_291 = arith.constant 4 : index
    %c0_292 = arith.constant 0 : index
    %c0_293 = arith.constant 0 : index
    %325 = vector.load %arg4[%c4_291, %c0_292, %c0_293] : memref<5x9x22xf32, #tpu.memory_space<vmem>>, vector<1x9x22xf32>
    %326 = vector.shape_cast %325 : vector<1x9x22xf32> to vector<9x22xf32>
    %cst_294 = arith.constant dense<0.000000e+00> : vector<9x352xf32>
    %327 = tpu.matmul %326, %295, %cst_294 {dimension_numbers = #tpu.dot_dimension_numbers<[1], [0], [0], [1], [0, 0, 1, 1], [], []>} : vector<9x22xf32>, vector<22x352xf32>, vector<9x352xf32> -> vector<9x352xf32>
    %c4_295 = arith.constant 4 : index
    %c0_296 = arith.constant 0 : index
    %c0_297 = arith.constant 0 : index
    %328 = vector.load %arg3[%c4_295, %c0_296, %c0_297] : memref<5x352x144xf32, #tpu.memory_space<vmem>>, vector<1x352x144xf32>
    %329 = vector.shape_cast %328 : vector<1x352x144xf32> to vector<352x144xf32>
    %cst_298 = arith.constant dense<0.000000e+00> : vector<9x144xf32>
    %330 = tpu.matmul %327, %329, %cst_298 {dimension_numbers = #tpu.dot_dimension_numbers<[1], [0], [0], [1], [0, 0, 1, 1], [], []>} : vector<9x352xf32>, vector<352x144xf32>, vector<9x144xf32> -> vector<9x144xf32>
    %331 = arith.addf %324, %330 : vector<9x144xf32>
    %c1_299 = arith.constant 1 : index
    %c0_300 = arith.constant 0 : index
    %c0_301 = arith.constant 0 : index
    %332 = vector.load %arg17[%c1_299, %c0_300, %c0_301] : memref<2x9x144xf32, #tpu.memory_space<vmem>>, vector<1x9x144xf32>
    %333 = vector.shape_cast %332 : vector<1x9x144xf32> to vector<9x144xf32>
    %334 = vector.shape_cast %331 : vector<9x144xf32> to vector<1x9x144xf32>
    tpu.vector_store %arg17[%c1_299, %c0_300, %c0_301], %334 {strides = array<i32>} : memref<2x9x144xf32, #tpu.memory_space<vmem>>, vector<1x9x144xf32>,
    %cst_302 = arith.constant dense<0.000000e+00> : vector<144xf32>
    %335 = vector.multi_reduction <add>, %331, %cst_302 [0] : vector<9x144xf32> to vector<144xf32>
    %336 = vector.shape_cast %335 : vector<144xf32> to vector<1x144xf32>
    %337 = arith.addf %289, %336 : vector<1x144xf32>
    %338 = arith.mulf %331, %331 : vector<9x144xf32>
    %cst_303 = arith.constant dense<0.000000e+00> : vector<144xf32>
    %339 = vector.multi_reduction <add>, %338, %cst_303 [0] : vector<9x144xf32> to vector<144xf32>
    %340 = vector.shape_cast %339 : vector<144xf32> to vector<1x144xf32>
    %341 = arith.addf %293, %340 : vector<1x144xf32>
    %c0_304 = arith.constant 0 : index
    %c0_305 = arith.constant 0 : index
    %342 = vector.load %arg13[%c0_304, %c0_305] : memref<144x16xf32, #tpu.memory_space<vmem>>, vector<144x16xf32>
    %cst_306 = arith.constant dense<0.000000e+00> : vector<1x16xf32>
    %343 = tpu.matmul %337, %342, %cst_306 {dimension_numbers = #tpu.dot_dimension_numbers<[1], [0], [0], [1], [0, 0, 1, 1], [], []>} : vector<1x144xf32>, vector<144x16xf32>, vector<1x16xf32> -> vector<1x16xf32>
    %c0_307 = arith.constant 0 : index
    %c0_308 = arith.constant 0 : index
    %344 = vector.load %arg13[%c0_307, %c0_308] : memref<144x16xf32, #tpu.memory_space<vmem>>, vector<144x16xf32>
    %cst_309 = arith.constant dense<0.000000e+00> : vector<1x16xf32>
    %345 = tpu.matmul %341, %344, %cst_309 {dimension_numbers = #tpu.dot_dimension_numbers<[1], [0], [0], [1], [0, 0, 1, 1], [], []>} : vector<1x144xf32>, vector<144x16xf32>, vector<1x16xf32> -> vector<1x16xf32>
    %c0_310 = arith.constant 0 : index
    %c0_311 = arith.constant 0 : index
    %346 = vector.load %arg14[%c0_310, %c0_311] : memref<16x144xf32, #tpu.memory_space<vmem>>, vector<16x144xf32>
    %cst_312 = arith.constant dense<0.000000e+00> : vector<1x144xf32>
    %347 = tpu.matmul %343, %346, %cst_312 {dimension_numbers = #tpu.dot_dimension_numbers<[1], [0], [0], [1], [0, 0, 1, 1], [], []>} : vector<1x16xf32>, vector<16x144xf32>, vector<1x144xf32> -> vector<1x144xf32>
    %cst_313 = arith.constant 0.00617283955 : f32
    %348 = vector.broadcast %cst_313 : f32 to vector<1x144xf32>
    %349 = arith.mulf %347, %348 : vector<1x144xf32>
    %c0_314 = arith.constant 0 : index
    %c0_315 = arith.constant 0 : index
    %350 = vector.load %arg14[%c0_314, %c0_315] : memref<16x144xf32, #tpu.memory_space<vmem>>, vector<16x144xf32>
    %cst_316 = arith.constant dense<0.000000e+00> : vector<1x144xf32>
    %351 = tpu.matmul %345, %350, %cst_316 {dimension_numbers = #tpu.dot_dimension_numbers<[1], [0], [0], [1], [0, 0, 1, 1], [], []>} : vector<1x16xf32>, vector<16x144xf32>, vector<1x144xf32> -> vector<1x144xf32>
    %cst_317 = arith.constant 0.00617283955 : f32
    %352 = vector.broadcast %cst_317 : f32 to vector<1x144xf32>
    %353 = arith.mulf %351, %352 : vector<1x144xf32>
    %354 = arith.mulf %349, %349 : vector<1x144xf32>
    %355 = arith.subf %353, %354 : vector<1x144xf32>
    %c0_318 = arith.constant 0 : index
    %c0_319 = arith.constant 0 : index
    %356 = vector.load %arg15[%c0_318, %c0_319] : memref<1x144xf32, #tpu.memory_space<vmem>>, vector<1x144xf32>
    %cst_320 = arith.constant 9.99999974E-6 : f32
    %357 = vector.broadcast %cst_320 : f32 to vector<1x144xf32>
    %358 = arith.addf %355, %357 : vector<1x144xf32>
    %359 = math.rsqrt %358 : vector<1x144xf32>
    %360 = arith.mulf %356, %359 : vector<1x144xf32>
    %c0_321 = arith.constant 0 : index
    %c0_322 = arith.constant 0 : index
    %361 = vector.load %arg16[%c0_321, %c0_322] : memref<1x144xf32, #tpu.memory_space<vmem>>, vector<1x144xf32>
    %362 = arith.mulf %349, %360 : vector<1x144xf32>
    %363 = arith.subf %361, %362 : vector<1x144xf32>
    %c0_323 = arith.constant 0 : index
    %c0_324 = arith.constant 0 : index
    %c0_325 = arith.constant 0 : index
    %364 = vector.load %arg17[%c0_323, %c0_324, %c0_325] : memref<2x9x144xf32, #tpu.memory_space<vmem>>, vector<1x9x144xf32>
    %365 = vector.shape_cast %364 : vector<1x9x144xf32> to vector<9x144xf32>
    %366 = vector.broadcast %360 : vector<1x144xf32> to vector<9x144xf32>
    %367 = arith.mulf %365, %366 : vector<9x144xf32>
    %368 = vector.broadcast %363 : vector<1x144xf32> to vector<9x144xf32>
    %369 = arith.addf %367, %368 : vector<9x144xf32>
    %cst_326 = arith.constant 0.000000e+00 : f32
    %370 = vector.broadcast %cst_326 : f32 to vector<9x144xf32>
    %371 = arith.cmpf ogt, %369, %370 : vector<9x144xf32>
    %cst_327 = arith.constant 2.000000e-01 : f32
    %372 = vector.broadcast %cst_327 : f32 to vector<9x144xf32>
    %373 = arith.mulf %372, %369 : vector<9x144xf32>
    %374 = arith.select %371, %369, %373 : vector<9x144xi1>, vector<9x144xf32>
    %c0_328 = arith.constant 0 : index
    %c0_329 = arith.constant 0 : index
    %c0_330 = arith.constant 0 : index
    %375 = vector.load %arg17[%c0_328, %c0_329, %c0_330] : memref<2x9x144xf32, #tpu.memory_space<vmem>>, vector<1x9x144xf32>
    %376 = vector.shape_cast %375 : vector<1x9x144xf32> to vector<9x144xf32>
    %377 = vector.shape_cast %374 : vector<9x144xf32> to vector<1x9x144xf32>
    tpu.vector_store %arg17[%c0_328, %c0_329, %c0_330], %377 {strides = array<i32>} : memref<2x9x144xf32, #tpu.memory_space<vmem>>, vector<1x9x144xf32>,
    %c1_331 = arith.constant 1 : index
    %c0_332 = arith.constant 0 : index
    %c0_333 = arith.constant 0 : index
    %378 = vector.load %arg17[%c1_331, %c0_332, %c0_333] : memref<2x9x144xf32, #tpu.memory_space<vmem>>, vector<1x9x144xf32>
    %379 = vector.shape_cast %378 : vector<1x9x144xf32> to vector<9x144xf32>
    %380 = vector.broadcast %360 : vector<1x144xf32> to vector<9x144xf32>
    %381 = arith.mulf %379, %380 : vector<9x144xf32>
    %382 = vector.broadcast %363 : vector<1x144xf32> to vector<9x144xf32>
    %383 = arith.addf %381, %382 : vector<9x144xf32>
    %cst_334 = arith.constant 0.000000e+00 : f32
    %384 = vector.broadcast %cst_334 : f32 to vector<9x144xf32>
    %385 = arith.cmpf ogt, %383, %384 : vector<9x144xf32>
    %cst_335 = arith.constant 2.000000e-01 : f32
    %386 = vector.broadcast %cst_335 : f32 to vector<9x144xf32>
    %387 = arith.mulf %386, %383 : vector<9x144xf32>
    %388 = arith.select %385, %383, %387 : vector<9x144xi1>, vector<9x144xf32>
    %c1_336 = arith.constant 1 : index
    %c0_337 = arith.constant 0 : index
    %c0_338 = arith.constant 0 : index
    %389 = vector.load %arg17[%c1_336, %c0_337, %c0_338] : memref<2x9x144xf32, #tpu.memory_space<vmem>>, vector<1x9x144xf32>
    %390 = vector.shape_cast %389 : vector<1x9x144xf32> to vector<9x144xf32>
    %391 = vector.shape_cast %388 : vector<9x144xf32> to vector<1x9x144xf32>
    tpu.vector_store %arg17[%c1_336, %c0_337, %c0_338], %391 {strides = array<i32>} : memref<2x9x144xf32, #tpu.memory_space<vmem>>, vector<1x9x144xf32>,
    return
  }
}

</mosaic_0001>

<llo_original>
// kernel: tpu_custom_call.1
$region0: #{tpu_custom_call.1}
  #allocation0 [shape = 'u32[]', space=smem, size = 0x4, offset = 0x4, fixed_abs, tag = 'smem constant byte address 0x4 - core index']
  #allocation1 [shape = 'u32[72,128]{1,0:T(1,128)}', space=vmem, size = 0x9000, scoped, tag = 'internal scratch']
  #allocation2 [shape = 'f32[2,26,208]{2,1,0:T(8,128)}', space=vmem, size = 0x10000, scoped, tag = 'scratch operand']
  #allocation3 [shape = 'f32[2,22,352]{2,1,0:T(8,128)}', space=vmem, size = 0x12000, scoped, tag = 'scratch operand']
  %s0 = inlined_call_operand.vmem [shape: f32[2,28,28], index: 0, kind: input, shape index: {}]
  %s1 = inlined_call_operand.vmem [shape: f32[3,28,208], index: 1, kind: input, shape index: {}]
  %s2 = inlined_call_operand.vmem [shape: f32[5,208,352], index: 2, kind: input, shape index: {}]
  %s3 = inlined_call_operand.vmem [shape: f32[5,352,144], index: 3, kind: input, shape index: {}]
  %s4 = inlined_call_operand.vmem [shape: f32[5,9,22], index: 4, kind: input, shape index: {}]
  %s5 = inlined_call_operand.vmem [shape: f32[208,8], index: 5, kind: input, shape index: {}]
  %s6 = inlined_call_operand.vmem [shape: f32[8,208], index: 6, kind: input, shape index: {}]
  %s7 = inlined_call_operand.vmem [shape: f32[1,208], index: 7, kind: input, shape index: {}]
  %s8 = inlined_call_operand.vmem [shape: f32[1,208], index: 8, kind: input, shape index: {}]
  %s9 = inlined_call_operand.vmem [shape: f32[352,16], index: 9, kind: input, shape index: {}]
  %s10 = inlined_call_operand.vmem [shape: f32[16,352], index: 10, kind: input, shape index: {}]
  %s11 = inlined_call_operand.vmem [shape: f32[1,352], index: 11, kind: input, shape index: {}]
  %s12 = inlined_call_operand.vmem [shape: f32[1,352], index: 12, kind: input, shape index: {}]
  %s13 = inlined_call_operand.vmem [shape: f32[144,16], index: 13, kind: input, shape index: {}]
  %s14 = inlined_call_operand.vmem [shape: f32[16,144], index: 14, kind: input, shape index: {}]
  %s15 = inlined_call_operand.vmem [shape: f32[1,144], index: 15, kind: input, shape index: {}]
  %s16 = inlined_call_operand.vmem [shape: f32[1,144], index: 16, kind: input, shape index: {}]
  %s17 = inlined_call_operand.vmem [shape: f32[2,9,144], index: 17, kind: output, shape index: {}]
  %s18 = sld [smem:[#allocation0]]
  $region78: #{tpu_custom_call.1} parent=0
    _
  %s20 = ssub.s32 1, %s18
  %s21 = scalar_select 0, %s20, %s18
  // Predicated region
  $region2: #{tpu_custom_call.1} parent=0 // pred_check
    _
  $region3: #{tpu_custom_call.1} parent=0 // pred_check_branch
    %23 = sbr.rel (0) target = $region5
  $region4: #{tpu_custom_call.1} parent=0 // pred_region
    _
  $region5: #{tpu_custom_call.1} parent=0 // pred_fallthru
    _
  // Predicated region
  $region6: #{tpu_custom_call.1} parent=0 // pred_check
    _
  $region7: #{tpu_custom_call.1} parent=0 // pred_check_branch
    %25 = sbr.rel (0) target = $region9
  $region8: #{tpu_custom_call.1} parent=0 // pred_region
    _
  $region9: #{tpu_custom_call.1} parent=0 // pred_fallthru
    _
  // Predicated region
  $region10: #{tpu_custom_call.1} parent=0 // pred_check
    _
  $region11: #{tpu_custom_call.1} parent=0 // pred_check_branch
    %27 = sbr.rel (0) target = $region13
  $region12: #{tpu_custom_call.1} parent=0 // pred_region
    _
  $region13: #{tpu_custom_call.1} parent=0 // pred_fallthru
    _
  // Predicated region
  $region14: #{tpu_custom_call.1} parent=0 // pred_check
    _
  $region15: #{tpu_custom_call.1} parent=0 // pred_check_branch
    %29 = sbr.rel (0) target = $region17
  $region16: #{tpu_custom_call.1} parent=0 // pred_region
    _
  $region17: #{tpu_custom_call.1} parent=0 // pred_fallthru
    _
  // Predicated region
  $region18: #{tpu_custom_call.1} parent=0 // pred_check
    _
  $region19: #{tpu_custom_call.1} parent=0 // pred_check_branch
    %31 = sbr.rel (0) target = $region21
  $region20: #{tpu_custom_call.1} parent=0 // pred_region
    _
  $region21: #{tpu_custom_call.1} parent=0 // pred_fallthru
    _
  // Predicated region
  $region22: #{tpu_custom_call.1} parent=0 // pred_check
    _
  $region23: #{tpu_custom_call.1} parent=0 // pred_check_branch
    %33 = sbr.rel (0) target = $region25
  $region24: #{tpu_custom_call.1} parent=0 // pred_region
    _
  $region25: #{tpu_custom_call.1} parent=0 // pred_fallthru
    _
  // Predicated region
  $region26: #{tpu_custom_call.1} parent=0 // pred_check
    _
  $region27: #{tpu_custom_call.1} parent=0 // pred_check_branch
    %35 = sbr.rel (0) target = $region29
  $region28: #{tpu_custom_call.1} parent=0 // pred_region
    _
  $region29: #{tpu_custom_call.1} parent=0 // pred_fallthru
    _
  // Predicated region
  $region30: #{tpu_custom_call.1} parent=0 // pred_check
    _
  $region31: #{tpu_custom_call.1} parent=0 // pred_check_branch
    %37 = sbr.rel (0) target = $region33
  $region32: #{tpu_custom_call.1} parent=0 // pred_region
    _
  $region33: #{tpu_custom_call.1} parent=0 // pred_fallthru
    _
  // Predicated region
  $region34: #{tpu_custom_call.1} parent=0 // pred_check
    _
  $region35: #{tpu_custom_call.1} parent=0 // pred_check_branch
    %39 = sbr.rel (0) target = $region37
  $region36: #{tpu_custom_call.1} parent=0 // pred_region
    _
  $region37: #{tpu_custom_call.1} parent=0 // pred_fallthru
    _
  // Predicated region
  $region38: #{tpu_custom_call.1} parent=0 // pred_check
    _
  $region39: #{tpu_custom_call.1} parent=0 // pred_check_branch
    %41 = sbr.rel (0) target = $region41
  $region40: #{tpu_custom_call.1} parent=0 // pred_region
    _
  $region41: #{tpu_custom_call.1} parent=0 // pred_fallthru
    _
  // Predicated region
  $region42: #{tpu_custom_call.1} parent=0 // pred_check
    _
  $region43: #{tpu_custom_call.1} parent=0 // pred_check_branch
    %43 = sbr.rel (0) target = $region45
  $region44: #{tpu_custom_call.1} parent=0 // pred_region
    _
  $region45: #{tpu_custom_call.1} parent=0 // pred_fallthru
    _
  // Predicated region
  $region46: #{tpu_custom_call.1} parent=0 // pred_check
    _
  $region47: #{tpu_custom_call.1} parent=0 // pred_check_branch
    %45 = sbr.rel (0) target = $region49
  $region48: #{tpu_custom_call.1} parent=0 // pred_region
    _
  $region49: #{tpu_custom_call.1} parent=0 // pred_fallthru
    _
  // Predicated region
  $region50: #{tpu_custom_call.1} parent=0 // pred_check
    _
  $region51: #{tpu_custom_call.1} parent=0 // pred_check_branch
    %47 = sbr.rel (0) target = $region53
  $region52: #{tpu_custom_call.1} parent=0 // pred_region
    _
  $region53: #{tpu_custom_call.1} parent=0 // pred_fallthru
    _
  // Predicated region
  $region54: #{tpu_custom_call.1} parent=0 // pred_check
    _
  $region55: #{tpu_custom_call.1} parent=0 // pred_check_branch
    %49 = sbr.rel (0) target = $region57
  $region56: #{tpu_custom_call.1} parent=0 // pred_region
    _
  $region57: #{tpu_custom_call.1} parent=0 // pred_fallthru
    _
  // Predicated region
  $region58: #{tpu_custom_call.1} parent=0 // pred_check
    _
  $region59: #{tpu_custom_call.1} parent=0 // pred_check_branch
    %51 = sbr.rel (0) target = $region61
  $region60: #{tpu_custom_call.1} parent=0 // pred_region
    _
  $region61: #{tpu_custom_call.1} parent=0 // pred_fallthru
    _
  // Predicated region
  $region62: #{tpu_custom_call.1} parent=0 // pred_check
    _
  $region63: #{tpu_custom_call.1} parent=0 // pred_check_branch
    %53 = sbr.rel (0) target = $region65
  $region64: #{tpu_custom_call.1} parent=0 // pred_region
    _
  $region65: #{tpu_custom_call.1} parent=0 // pred_fallthru
    _
  // Predicated region
  $region66: #{tpu_custom_call.1} parent=0 // pred_check
    _
  $region67: #{tpu_custom_call.1} parent=0 // pred_check_branch
    %55 = sbr.rel (0) target = $region69
  $region68: #{tpu_custom_call.1} parent=0 // pred_region
    _
  $region69: #{tpu_custom_call.1} parent=0 // pred_fallthru
    _
  %v56 = vld [vmem:[%s0] sm:$0xff]
  %v57 = vld [vmem:[%s0 + $0x8] sm:$0xff]
  %v58 = vld [vmem:[%s0 + $0x10] sm:$0xff]
  %v59 = vld [vmem:[%s0 + $0x18] sm:$0x3]
  %v60 = vld [vmem:[%s1] sm:$0xff]
  %v61 = vld [vmem:[%s1 + $0x8] sm:$0xff]
  %v62 = vld [vmem:[%s1 + $0x10] sm:$0xff]
  %v63 = vld [vmem:[%s1 + $0x18] sm:$0xff]
  %v64 = vld [vmem:[%s1 + $0x20] sm:$0xff]
  %v65 = vld [vmem:[%s1 + $0x28] sm:$0xff]
  %v66 = vld [vmem:[%s1 + $0x30] sm:$0xf]
  %v67 = vld [vmem:[%s1 + $0x38] sm:$0xf]
  %v68 = vld [vmem:[%s0 + $0x1] sm:$0xff]
  %v69 = vld [vmem:[%s0 + $0x9] sm:$0xff]
  %v70 = vld [vmem:[%s0 + $0x11] sm:$0xff]
  %v71 = vld [vmem:[%s0 + $0x19] sm:$0x3]
  %s72 = scalar_lea.vmem %s1, 64
  %v73 = vld [vmem:[%s72] sm:$0xff]
  %v74 = vld [vmem:[%s72 + $0x8] sm:$0xff]
  %v75 = vld [vmem:[%s72 + $0x10] sm:$0xff]
  %v76 = vld [vmem:[%s72 + $0x18] sm:$0xff]
  %v77 = vld [vmem:[%s72 + $0x20] sm:$0xff]
  %v78 = vld [vmem:[%s72 + $0x28] sm:$0xff]
  %v79 = vld [vmem:[%s72 + $0x30] sm:$0xf]
  %v80 = vld [vmem:[%s72 + $0x38] sm:$0xf]
  %vm81 = vcmask 228352
  %v83 = vsel %vm81, %v68, 0
  %v86 = vsel %vm81, %v69, 0
  %v89 = vsel %vm81, %v70, 0
  %v92 = vsel %vm81, %v71, 0
  %vm94 = vcmask 1043456
  %v96 = vsel %vm94, %v79, 0
  %v99 = vsel %vm94, %v80, 0
  %101 = vmatpush.msra.mxu0 0.0
  %102 = vmatpush.msra.mxu0 0.0
  %103 = vmatpush.msra.mxu0 0.0
  %104 = vmatpush.msra.mxu0 0.0
  %105 = vmatpush.msra.mxu0 0.0
  %106 = vmatpush.msra.mxu0 0.0
  %107 = vmatpush.msra.mxu0 0.0
  %108 = vmatpush.msra.mxu0 0.0
  %109 = vmatpush.msra.mxu0 0.0
  %110 = vmatpush.msra.mxu0 0.0
  %111 = vmatpush.msra.mxu0 0.0
  %112 = vmatpush.msra.mxu0 0.0
  %113 = vmatpush.msra.mxu0 %v96
  %114 = vmatpush.msra.mxu0 %v77
  %115 = vmatpush.msra.mxu0 %v75
  %116 = vmatpush.msra.mxu0 %v73
  %117 = vmatmul.f32.gmra.mxu0 %v83
  %v118 = vpop.f32.mrf.mxu0
  %v119 = vadd.f32 0.0, %v118
  %120 = vmatmul.f32.gmra.mxu0 %v86
  %v121 = vpop.f32.mrf.mxu0
  %v122 = vadd.f32 0.0, %v121
  %123 = vmatmul.f32.gmra.mxu0 %v89
  %v124 = vpop.f32.mrf.mxu0
  %v125 = vadd.f32 0.0, %v124
  %126 = vmatmul.f32.gmra.mxu0 %v92
  %v127 = vpop.f32.mrf.mxu0
  %v128 = vadd.f32 0.0, %v127
  %129 = vdwg.mxu0
  %130 = vmatpush.msra.mxu0 0.0
  %131 = vmatpush.msra.mxu0 0.0
  %132 = vmatpush.msra.mxu0 0.0
  %133 = vmatpush.msra.mxu0 0.0
  %134 = vmatpush.msra.mxu0 0.0
  %135 = vmatpush.msra.mxu0 0.0
  %136 = vmatpush.msra.mxu0 0.0
  %137 = vmatpush.msra.mxu0 0.0
  %138 = vmatpush.msra.mxu0 0.0
  %139 = vmatpush.msra.mxu0 0.0
  %140 = vmatpush.msra.mxu0 0.0
  %141 = vmatpush.msra.mxu0 0.0
  %142 = vmatpush.msra.mxu0 %v99
  %143 = vmatpush.msra.mxu0 %v78
  %144 = vmatpush.msra.mxu0 %v76
  %145 = vmatpush.msra.mxu0 %v74
  %146 = vmatmul.f32.gmra.mxu0 %v83
  %v147 = vpop.f32.mrf.mxu0
  %v148 = vadd.f32 0.0, %v147
  %149 = vmatmul.f32.gmra.mxu0 %v86
  %v150 = vpop.f32.mrf.mxu0
  %v151 = vadd.f32 0.0, %v150
  %152 = vmatmul.f32.gmra.mxu0 %v89
  %v153 = vpop.f32.mrf.mxu0
  %v154 = vadd.f32 0.0, %v153
  %155 = vmatmul.f32.gmra.mxu0 %v92
  %v156 = vpop.f32.mrf.mxu0
  %v157 = vadd.f32 0.0, %v156
  %158 = vdwg.mxu0
  %v160 = vsel %vm81, %v56, 0
  %v163 = vsel %vm81, %v57, 0
  %v166 = vsel %vm81, %v58, 0
  %v169 = vsel %vm81, %v59, 0
  %v172 = vsel %vm94, %v66, 0
  %v175 = vsel %vm94, %v67, 0
  %177 = vmatpush.msra.mxu0 0.0
  %178 = vmatpush.msra.mxu0 0.0
  %179 = vmatpush.msra.mxu0 0.0
  %180 = vmatpush.msra.mxu0 0.0
  %181 = vmatpush.msra.mxu0 0.0
  %182 = vmatpush.msra.mxu0 0.0
  %183 = vmatpush.msra.mxu0 0.0
  %184 = vmatpush.msra.mxu0 0.0
  %185 = vmatpush.msra.mxu0 0.0
  %186 = vmatpush.msra.mxu0 0.0
  %187 = vmatpush.msra.mxu0 0.0
  %188 = vmatpush.msra.mxu0 0.0
  %189 = vmatpush.msra.mxu0 %v172
  %190 = vmatpush.msra.mxu0 %v64
  %191 = vmatpush.msra.mxu0 %v62
  %192 = vmatpush.msra.mxu0 %v60
  %193 = vmatmul.f32.gmra.mxu0 %v160
  %v194 = vpop.f32.mrf.mxu0
  %v195 = vadd.f32 %v119, %v194
  %196 = vmatmul.f32.gmra.mxu0 %v163
  %v197 = vpop.f32.mrf.mxu0
  %v198 = vadd.f32 %v122, %v197
  %199 = vmatmul.f32.gmra.mxu0 %v166
  %v200 = vpop.f32.mrf.mxu0
  %v201 = vadd.f32 %v125, %v200
  %202 = vmatmul.f32.gmra.mxu0 %v169
  %v203 = vpop.f32.mrf.mxu0
  %v204 = vadd.f32 %v128, %v203
  %205 = vdwg.mxu0
  %206 = vmatpush.msra.mxu0 0.0
  %207 = vmatpush.msra.mxu0 0.0
  %208 = vmatpush.msra.mxu0 0.0
  %209 = vmatpush.msra.mxu0 0.0
  %210 = vmatpush.msra.mxu0 0.0
  %211 = vmatpush.msra.mxu0 0.0
  %212 = vmatpush.msra.mxu0 0.0
  %213 = vmatpush.msra.mxu0 0.0
  %214 = vmatpush.msra.mxu0 0.0
  %215 = vmatpush.msra.mxu0 0.0
  %216 = vmatpush.msra.mxu0 0.0
  %217 = vmatpush.msra.mxu0 0.0
  %218 = vmatpush.msra.mxu0 %v175
  %219 = vmatpush.msra.mxu0 %v65
  %220 = vmatpush.msra.mxu0 %v63
  %221 = vmatpush.msra.mxu0 %v61
  %222 = vmatmul.f32.gmra.mxu0 %v160
  %v223 = vpop.f32.mrf.mxu0
  %v224 = vadd.f32 %v148, %v223
  %225 = vmatmul.f32.gmra.mxu0 %v163
  %v226 = vpop.f32.mrf.mxu0
  %v227 = vadd.f32 %v151, %v226
  %228 = vmatmul.f32.gmra.mxu0 %v166
  %v229 = vpop.f32.mrf.mxu0
  %v230 = vadd.f32 %v154, %v229
  %231 = vmatmul.f32.gmra.mxu0 %v169
  %v232 = vpop.f32.mrf.mxu0
  %v233 = vadd.f32 %v157, %v232
  %234 = vdwg.mxu0
  %v235 = vld [vmem:[%s0 + $0x2] sm:$0xff]
  %v236 = vld [vmem:[%s0 + $0xa] sm:$0xff]
  %v237 = vld [vmem:[%s0 + $0x12] sm:$0xff]
  %v238 = vld [vmem:[%s0 + $0x1a] sm:$0x3]
  %s239 = scalar_lea.vmem %s1, 128
  %v240 = vld [vmem:[%s239] sm:$0xff]
  %v241 = vld [vmem:[%s239 + $0x8] sm:$0xff]
  %v242 = vld [vmem:[%s239 + $0x10] sm:$0xff]
  %v243 = vld [vmem:[%s239 + $0x18] sm:$0xff]
  %v244 = vld [vmem:[%s239 + $0x20] sm:$0xff]
  %v245 = vld [vmem:[%s239 + $0x28] sm:$0xff]
  %v246 = vld [vmem:[%s239 + $0x30] sm:$0xf]
  %v247 = vld [vmem:[%s239 + $0x38] sm:$0xf]
  %v249 = vsel %vm81, %v235, 0
  %v252 = vsel %vm81, %v236, 0
  %v255 = vsel %vm81, %v237, 0
  %v258 = vsel %vm81, %v238, 0
  %v261 = vsel %vm94, %v246, 0
  %v264 = vsel %vm94, %v247, 0
  %266 = vmatpush.msra.mxu0 0.0
  %267 = vmatpush.msra.mxu0 0.0
  %268 = vmatpush.msra.mxu0 0.0
  %269 = vmatpush.msra.mxu0 0.0
  %270 = vmatpush.msra.mxu0 0.0
  %271 = vmatpush.msra.mxu0 0.0
  %272 = vmatpush.msra.mxu0 0.0
  %273 = vmatpush.msra.mxu0 0.0
  %274 = vmatpush.msra.mxu0 0.0
  %275 = vmatpush.msra.mxu0 0.0
  %276 = vmatpush.msra.mxu0 0.0
  %277 = vmatpush.msra.mxu0 0.0
  %278 = vmatpush.msra.mxu0 %v261
  %279 = vmatpush.msra.mxu0 %v244
  %280 = vmatpush.msra.mxu0 %v242
  %281 = vmatpush.msra.mxu0 %v240
  %282 = vmatmul.f32.gmra.mxu0 %v249
  %v283 = vpop.f32.mrf.mxu0
  %v284 = vadd.f32 0.0, %v283
  %285 = vmatmul.f32.gmra.mxu0 %v252
  %v286 = vpop.f32.mrf.mxu0
  %v287 = vadd.f32 0.0, %v286
  %288 = vmatmul.f32.gmra.mxu0 %v255
  %v289 = vpop.f32.mrf.mxu0
  %v290 = vadd.f32 0.0, %v289
  %291 = vmatmul.f32.gmra.mxu0 %v258
  %v292 = vpop.f32.mrf.mxu0
  %v293 = vadd.f32 0.0, %v292
  %294 = vdwg.mxu0
  %295 = vmatpush.msra.mxu0 0.0
  %296 = vmatpush.msra.mxu0 0.0
  %297 = vmatpush.msra.mxu0 0.0
  %298 = vmatpush.msra.mxu0 0.0
  %299 = vmatpush.msra.mxu0 0.0
  %300 = vmatpush.msra.mxu0 0.0
  %301 = vmatpush.msra.mxu0 0.0
  %302 = vmatpush.msra.mxu0 0.0
  %303 = vmatpush.msra.mxu0 0.0
  %304 = vmatpush.msra.mxu0 0.0
  %305 = vmatpush.msra.mxu0 0.0
  %306 = vmatpush.msra.mxu0 0.0
  %307 = vmatpush.msra.mxu0 %v264
  %308 = vmatpush.msra.mxu0 %v245
  %309 = vmatpush.msra.mxu0 %v243
  %310 = vmatpush.msra.mxu0 %v241
  %311 = vmatmul.f32.gmra.mxu0 %v249
  %v312 = vpop.f32.mrf.mxu0
  %v313 = vadd.f32 0.0, %v312
  %314 = vmatmul.f32.gmra.mxu0 %v252
  %v315 = vpop.f32.mrf.mxu0
  %v316 = vadd.f32 0.0, %v315
  %317 = vmatmul.f32.gmra.mxu0 %v255
  %v318 = vpop.f32.mrf.mxu0
  %v319 = vadd.f32 0.0, %v318
  %320 = vmatmul.f32.gmra.mxu0 %v258
  %v321 = vpop.f32.mrf.mxu0
  %v322 = vadd.f32 0.0, %v321
  %323 = vdwg.mxu0
  %v324 = vadd.f32 %v195, %v284
  %v325 = vadd.f32 %v224, %v313
  %v326 = vadd.f32 %v198, %v287
  %v327 = vadd.f32 %v227, %v316
  %v328 = vadd.f32 %v201, %v290
  %v329 = vadd.f32 %v230, %v319
  %v330 = vadd.f32 %v204, %v293
  %v331 = vadd.f32 %v233, %v322
  %332 = vst [vmem:[#allocation2] sm:$0xff] %v324
  %vm333 = vcmask 654336
  %334 = vst.msk [vmem:[#allocation2 + $0x8] sm:$0xff] %vm333, %v325
  %335 = vst [vmem:[#allocation2 + $0x10] sm:$0xff] %v326
  %336 = vst.msk [vmem:[#allocation2 + $0x18] sm:$0xff] %vm333, %v327
  %337 = vst [vmem:[#allocation2 + $0x20] sm:$0xff] %v328
  %338 = vst.msk [vmem:[#allocation2 + $0x28] sm:$0xff] %vm333, %v329
  %339 = vst [vmem:[#allocation2 + $0x30] sm:$0x3] %v330
  %vm340 = vcmask 648192
  %341 = vst.msk [vmem:[#allocation2 + $0x38] sm:$0x3] %vm340, %v331
  %v342 = vadd.f32 %v324, %v326
  %v343 = vadd.f32 %v342, %v328
  %vm344 = vcmask 1041408
  %v345 = vsel %vm344, %v330, 0.0
  %v346 = vadd.f32 %v343, %v345
  %v347 = vrot.slane %v346, 4
  %v348 = vadd.f32 %v346, %v347
  %v349 = vrot.slane %v348, 2
  %v350 = vadd.f32 %v348, %v349
  %v351 = vrot.slane %v350, 1
  %v352 = vadd.f32 %v350, %v351
  %v353 = vsel %vm333, %v325, 0.0
  %v354 = vsel %vm333, %v327, 0.0
  %v355 = vadd.f32 %v353, %v354
  %v356 = vsel %vm333, %v329, 0.0
  %v357 = vadd.f32 %v355, %v356
  %v358 = vsel %vm340, %v331, 0.0
  %v359 = vadd.f32 %v357, %v358
  %v360 = vrot.slane %v359, 4
  %v361 = vadd.f32 %v359, %v360
  %v362 = vrot.slane %v361, 2
  %v363 = vadd.f32 %v361, %v362
  %v364 = vrot.slane %v363, 1
  %v365 = vadd.f32 %v363, %v364
  %v366 = vadd.f32 %v352, 0.0
  %v367 = vadd.f32 %v365, 0.0
  %v368 = vmul.f32 %v324, %v324
  %v369 = vmul.f32 %v325, %v325
  %v370 = vmul.f32 %v326, %v326
  %v371 = vmul.f32 %v327, %v327
  %v372 = vmul.f32 %v328, %v328
  %v373 = vmul.f32 %v329, %v329
  %v374 = vmul.f32 %v330, %v330
  %v375 = vmul.f32 %v331, %v331
  %v376 = vadd.f32 %v368, %v370
  %v377 = vadd.f32 %v376, %v372
  %v378 = vsel %vm344, %v374, 0.0
  %v379 = vadd.f32 %v377, %v378
  %v380 = vrot.slane %v379, 4
  %v381 = vadd.f32 %v379, %v380
  %v382 = vrot.slane %v381, 2
  %v383 = vadd.f32 %v381, %v382
  %v384 = vrot.slane %v383, 1
  %v385 = vadd.f32 %v383, %v384
  %v386 = vsel %vm333, %v369, 0.0
  %v387 = vsel %vm333, %v371, 0.0
  %v388 = vadd.f32 %v386, %v387
  %v389 = vsel %vm333, %v373, 0.0
  %v390 = vadd.f32 %v388, %v389
  %v391 = vsel %vm340, %v375, 0.0
  %v392 = vadd.f32 %v390, %v391
  %v393 = vrot.slane %v392, 4
  %v394 = vadd.f32 %v392, %v393
  %v395 = vrot.slane %v394, 2
  %v396 = vadd.f32 %v394, %v395
  %v397 = vrot.slane %v396, 1
  %v398 = vadd.f32 %v396, %v397
  %v399 = vadd.f32 %v385, 0.0
  %v400 = vadd.f32 %v398, 0.0
  %s401 = scalar_lea.vmem %s0, 32
  %v402 = vld [vmem:[%s401] sm:$0xff]
  %v403 = vld [vmem:[%s401 + $0x8] sm:$0xff]
  %v404 = vld [vmem:[%s401 + $0x10] sm:$0xff]
  %v405 = vld [vmem:[%s401 + $0x18] sm:$0x3]
  %v406 = vld [vmem:[%s1] sm:$0xff]
  %v407 = vld [vmem:[%s1 + $0x8] sm:$0xff]
  %v408 = vld [vmem:[%s1 + $0x10] sm:$0xff]
  %v409 = vld [vmem:[%s1 + $0x18] sm:$0xff]
  %v410 = vld [vmem:[%s1 + $0x20] sm:$0xff]
  %v411 = vld [vmem:[%s1 + $0x28] sm:$0xff]
  %v412 = vld [vmem:[%s1 + $0x30] sm:$0xf]
  %v413 = vld [vmem:[%s1 + $0x38] sm:$0xf]
  %v414 = vld [vmem:[%s401 + $0x1] sm:$0xff]
  %v415 = vld [vmem:[%s401 + $0x9] sm:$0xff]
  %v416 = vld [vmem:[%s401 + $0x11] sm:$0xff]
  %v417 = vld [vmem:[%s401 + $0x19] sm:$0x3]
  %v418 = vld [vmem:[%s72] sm:$0xff]
  %v419 = vld [vmem:[%s72 + $0x8] sm:$0xff]
  %v420 = vld [vmem:[%s72 + $0x10] sm:$0xff]
  %v421 = vld [vmem:[%s72 + $0x18] sm:$0xff]
  %v422 = vld [vmem:[%s72 + $0x20] sm:$0xff]
  %v423 = vld [vmem:[%s72 + $0x28] sm:$0xff]
  %v424 = vld [vmem:[%s72 + $0x30] sm:$0xf]
  %v425 = vld [vmem:[%s72 + $0x38] sm:$0xf]
  %v427 = vsel %vm81, %v414, 0
  %v430 = vsel %vm81, %v415, 0
  %v433 = vsel %vm81, %v416, 0
  %v436 = vsel %vm81, %v417, 0
  %v439 = vsel %vm94, %v424, 0
  %v442 = vsel %vm94, %v425, 0
  %444 = vmatpush.msra.mxu0 0.0
  %445 = vmatpush.msra.mxu0 0.0
  %446 = vmatpush.msra.mxu0 0.0
  %447 = vmatpush.msra.mxu0 0.0
  %448 = vmatpush.msra.mxu0 0.0
  %449 = vmatpush.msra.mxu0 0.0
  %450 = vmatpush.msra.mxu0 0.0
  %451 = vmatpush.msra.mxu0 0.0
  %452 = vmatpush.msra.mxu0 0.0
  %453 = vmatpush.msra.mxu0 0.0
  %454 = vmatpush.msra.mxu0 0.0
  %455 = vmatpush.msra.mxu0 0.0
  %456 = vmatpush.msra.mxu0 %v439
  %457 = vmatpush.msra.mxu0 %v422
  %458 = vmatpush.msra.mxu0 %v420
  %459 = vmatpush.msra.mxu0 %v418
  %460 = vmatmul.f32.gmra.mxu0 %v427
  %v461 = vpop.f32.mrf.mxu0
  %v462 = vadd.f32 0.0, %v461
  %463 = vmatmul.f32.gmra.mxu0 %v430
  %v464 = vpop.f32.mrf.mxu0
  %v465 = vadd.f32 0.0, %v464
  %466 = vmatmul.f32.gmra.mxu0 %v433
  %v467 = vpop.f32.mrf.mxu0
  %v468 = vadd.f32 0.0, %v467
  %469 = vmatmul.f32.gmra.mxu0 %v436
  %v470 = vpop.f32.mrf.mxu0
  %v471 = vadd.f32 0.0, %v470
  %472 = vdwg.mxu0
  %473 = vmatpush.msra.mxu0 0.0
  %474 = vmatpush.msra.mxu0 0.0
  %475 = vmatpush.msra.mxu0 0.0
  %476 = vmatpush.msra.mxu0 0.0
  %477 = vmatpush.msra.mxu0 0.0
  %478 = vmatpush.msra.mxu0 0.0
  %479 = vmatpush.msra.mxu0 0.0
  %480 = vmatpush.msra.mxu0 0.0
  %481 = vmatpush.msra.mxu0 0.0
  %482 = vmatpush.msra.mxu0 0.0
  %483 = vmatpush.msra.mxu0 0.0
  %484 = vmatpush.msra.mxu0 0.0
  %485 = vmatpush.msra.mxu0 %v442
  %486 = vmatpush.msra.mxu0 %v423
  %487 = vmatpush.msra.mxu0 %v421
  %488 = vmatpush.msra.mxu0 %v419
  %489 = vmatmul.f32.gmra.mxu0 %v427
  %v490 = vpop.f32.mrf.mxu0
  %v491 = vadd.f32 0.0, %v490
  %492 = vmatmul.f32.gmra.mxu0 %v430
  %v493 = vpop.f32.mrf.mxu0
  %v494 = vadd.f32 0.0, %v493
  %495 = vmatmul.f32.gmra.mxu0 %v433
  %v496 = vpop.f32.mrf.mxu0
  %v497 = vadd.f32 0.0, %v496
  %498 = vmatmul.f32.gmra.mxu0 %v436
  %v499 = vpop.f32.mrf.mxu0
  %v500 = vadd.f32 0.0, %v499
  %501 = vdwg.mxu0
  %v503 = vsel %vm81, %v402, 0
  %v506 = vsel %vm81, %v403, 0
  %v509 = vsel %vm81, %v404, 0
  %v512 = vsel %vm81, %v405, 0
  %v515 = vsel %vm94, %v412, 0
  %v518 = vsel %vm94, %v413, 0
  %520 = vmatpush.msra.mxu0 0.0
  %521 = vmatpush.msra.mxu0 0.0
  %522 = vmatpush.msra.mxu0 0.0
  %523 = vmatpush.msra.mxu0 0.0
  %524 = vmatpush.msra.mxu0 0.0
  %525 = vmatpush.msra.mxu0 0.0
  %526 = vmatpush.msra.mxu0 0.0
  %527 = vmatpush.msra.mxu0 0.0
  %528 = vmatpush.msra.mxu0 0.0
  %529 = vmatpush.msra.mxu0 0.0
  %530 = vmatpush.msra.mxu0 0.0
  %531 = vmatpush.msra.mxu0 0.0
  %532 = vmatpush.msra.mxu0 %v515
  %533 = vmatpush.msra.mxu0 %v410
  %534 = vmatpush.msra.mxu0 %v408
  %535 = vmatpush.msra.mxu0 %v406
  %536 = vmatmul.f32.gmra.mxu0 %v503
  %v537 = vpop.f32.mrf.mxu0
  %v538 = vadd.f32 %v462, %v537
  %539 = vmatmul.f32.gmra.mxu0 %v506
  %v540 = vpop.f32.mrf.mxu0
  %v541 = vadd.f32 %v465, %v540
  %542 = vmatmul.f32.gmra.mxu0 %v509
  %v543 = vpop.f32.mrf.mxu0
  %v544 = vadd.f32 %v468, %v543
  %545 = vmatmul.f32.gmra.mxu0 %v512
  %v546 = vpop.f32.mrf.mxu0
  %v547 = vadd.f32 %v471, %v546
  %548 = vdwg.mxu0
  %549 = vmatpush.msra.mxu0 0.0
  %550 = vmatpush.msra.mxu0 0.0
  %551 = vmatpush.msra.mxu0 0.0
  %552 = vmatpush.msra.mxu0 0.0
  %553 = vmatpush.msra.mxu0 0.0
  %554 = vmatpush.msra.mxu0 0.0
  %555 = vmatpush.msra.mxu0 0.0
  %556 = vmatpush.msra.mxu0 0.0
  %557 = vmatpush.msra.mxu0 0.0
  %558 = vmatpush.msra.mxu0 0.0
  %559 = vmatpush.msra.mxu0 0.0
  %560 = vmatpush.msra.mxu0 0.0
  %561 = vmatpush.msra.mxu0 %v518
  %562 = vmatpush.msra.mxu0 %v411
  %563 = vmatpush.msra.mxu0 %v409
  %564 = vmatpush.msra.mxu0 %v407
  %565 = vmatmul.f32.gmra.mxu0 %v503
  %v566 = vpop.f32.mrf.mxu0
  %v567 = vadd.f32 %v491, %v566
  %568 = vmatmul.f32.gmra.mxu0 %v506
  %v569 = vpop.f32.mrf.mxu0
  %v570 = vadd.f32 %v494, %v569
  %571 = vmatmul.f32.gmra.mxu0 %v509
  %v572 = vpop.f32.mrf.mxu0
  %v573 = vadd.f32 %v497, %v572
  %574 = vmatmul.f32.gmra.mxu0 %v512
  %v575 = vpop.f32.mrf.mxu0
  %v576 = vadd.f32 %v500, %v575
  %577 = vdwg.mxu0
  %v578 = vld [vmem:[%s401 + $0x2] sm:$0xff]
  %v579 = vld [vmem:[%s401 + $0xa] sm:$0xff]
  %v580 = vld [vmem:[%s401 + $0x12] sm:$0xff]
  %v581 = vld [vmem:[%s401 + $0x1a] sm:$0x3]
  %v582 = vld [vmem:[%s239] sm:$0xff]
  %v583 = vld [vmem:[%s239 + $0x8] sm:$0xff]
  %v584 = vld [vmem:[%s239 + $0x10] sm:$0xff]
  %v585 = vld [vmem:[%s239 + $0x18] sm:$0xff]
  %v586 = vld [vmem:[%s239 + $0x20] sm:$0xff]
  %v587 = vld [vmem:[%s239 + $0x28] sm:$0xff]
  %v588 = vld [vmem:[%s239 + $0x30] sm:$0xf]
  %v589 = vld [vmem:[%s239 + $0x38] sm:$0xf]
  %v591 = vsel %vm81, %v578, 0
  %v594 = vsel %vm81, %v579, 0
  %v597 = vsel %vm81, %v580, 0
  %v600 = vsel %vm81, %v581, 0
  %v603 = vsel %vm94, %v588, 0
  %v606 = vsel %vm94, %v589, 0
  %608 = vmatpush.msra.mxu0 0.0
  %609 = vmatpush.msra.mxu0 0.0
  %610 = vmatpush.msra.mxu0 0.0
  %611 = vmatpush.msra.mxu0 0.0
  %612 = vmatpush.msra.mxu0 0.0
  %613 = vmatpush.msra.mxu0 0.0
  %614 = vmatpush.msra.mxu0 0.0
  %615 = vmatpush.msra.mxu0 0.0
  %616 = vmatpush.msra.mxu0 0.0
  %617 = vmatpush.msra.mxu0 0.0
  %618 = vmatpush.msra.mxu0 0.0
  %619 = vmatpush.msra.mxu0 0.0
  %620 = vmatpush.msra.mxu0 %v603
  %621 = vmatpush.msra.mxu0 %v586
  %622 = vmatpush.msra.mxu0 %v584
  %623 = vmatpush.msra.mxu0 %v582
  %624 = vmatmul.f32.gmra.mxu0 %v591
  %v625 = vpop.f32.mrf.mxu0
  %v626 = vadd.f32 0.0, %v625
  %627 = vmatmul.f32.gmra.mxu0 %v594
  %v628 = vpop.f32.mrf.mxu0
  %v629 = vadd.f32 0.0, %v628
  %630 = vmatmul.f32.gmra.mxu0 %v597
  %v631 = vpop.f32.mrf.mxu0
  %v632 = vadd.f32 0.0, %v631
  %633 = vmatmul.f32.gmra.mxu0 %v600
  %v634 = vpop.f32.mrf.mxu0
  %v635 = vadd.f32 0.0, %v634
  %636 = vdwg.mxu0
  %637 = vmatpush.msra.mxu0 0.0
  %638 = vmatpush.msra.mxu0 0.0
  %639 = vmatpush.msra.mxu0 0.0
  %640 = vmatpush.msra.mxu0 0.0
  %641 = vmatpush.msra.mxu0 0.0
  %642 = vmatpush.msra.mxu0 0.0
  %643 = vmatpush.msra.mxu0 0.0
  %644 = vmatpush.msra.mxu0 0.0
  %645 = vmatpush.msra.mxu0 0.0
  %646 = vmatpush.msra.mxu0 0.0
  %647 = vmatpush.msra.mxu0 0.0
  %648 = vmatpush.msra.mxu0 0.0
  %649 = vmatpush.msra.mxu0 %v606
  %650 = vmatpush.msra.mxu0 %v587
  %651 = vmatpush.msra.mxu0 %v585
  %652 = vmatpush.msra.mxu0 %v583
  %653 = vmatmul.f32.gmra.mxu0 %v591
  %v654 = vpop.f32.mrf.mxu0
  %v655 = vadd.f32 0.0, %v654
  %656 = vmatmul.f32.gmra.mxu0 %v594
  %v657 = vpop.f32.mrf.mxu0
  %v658 = vadd.f32 0.0, %v657
  %659 = vmatmul.f32.gmra.mxu0 %v597
  %v660 = vpop.f32.mrf.mxu0
  %v661 = vadd.f32 0.0, %v660
  %662 = vmatmul.f32.gmra.mxu0 %v600
  %v663 = vpop.f32.mrf.mxu0
  %v664 = vadd.f32 0.0, %v663
  %665 = vdwg.mxu0
  %v666 = vadd.f32 %v538, %v626
  %v667 = vadd.f32 %v567, %v655
  %v668 = vadd.f32 %v541, %v629
  %v669 = vadd.f32 %v570, %v658
  %v670 = vadd.f32 %v544, %v632
  %v671 = vadd.f32 %v573, %v661
  %v672 = vadd.f32 %v547, %v635
  %v673 = vadd.f32 %v576, %v664
  %s674 = scalar_lea.vmem [#allocation2], 64
  %675 = vst [vmem:[%s674] sm:$0xff] %v666
  %676 = vst.msk [vmem:[%s674 + $0x8] sm:$0xff] %vm333, %v667
  %677 = vst [vmem:[%s674 + $0x10] sm:$0xff] %v668
  %678 = vst.msk [vmem:[%s674 + $0x18] sm:$0xff] %vm333, %v669
  %679 = vst [vmem:[%s674 + $0x20] sm:$0xff] %v670
  %680 = vst.msk [vmem:[%s674 + $0x28] sm:$0xff] %vm333, %v671
  %681 = vst [vmem:[%s674 + $0x30] sm:$0x3] %v672
  %682 = vst.msk [vmem:[%s674 + $0x38] sm:$0x3] %vm340, %v673
  %v683 = vadd.f32 %v666, %v668
  %v684 = vadd.f32 %v683, %v670
  %v685 = vsel %vm344, %v672, 0.0
  %v686 = vadd.f32 %v684, %v685
  %v687 = vrot.slane %v686, 4
  %v688 = vadd.f32 %v686, %v687
  %v689 = vrot.slane %v688, 2
  %v690 = vadd.f32 %v688, %v689
  %v691 = vrot.slane %v690, 1
  %v692 = vadd.f32 %v690, %v691
  %v693 = vsel %vm333, %v667, 0.0
  %v694 = vsel %vm333, %v669, 0.0
  %v695 = vadd.f32 %v693, %v694
  %v696 = vsel %vm333, %v671, 0.0
  %v697 = vadd.f32 %v695, %v696
  %v698 = vsel %vm340, %v673, 0.0
  %v699 = vadd.f32 %v697, %v698
  %v700 = vrot.slane %v699, 4
  %v701 = vadd.f32 %v699, %v700
  %v702 = vrot.slane %v701, 2
  %v703 = vadd.f32 %v701, %v702
  %v704 = vrot.slane %v703, 1
  %v705 = vadd.f32 %v703, %v704
  %v706 = vadd.f32 %v366, %v692
  %v707 = vadd.f32 %v367, %v705
  %v708 = vmul.f32 %v666, %v666
  %v709 = vmul.f32 %v667, %v667
  %v710 = vmul.f32 %v668, %v668
  %v711 = vmul.f32 %v669, %v669
  %v712 = vmul.f32 %v670, %v670
  %v713 = vmul.f32 %v671, %v671
  %v714 = vmul.f32 %v672, %v672
  %v715 = vmul.f32 %v673, %v673
  %v716 = vadd.f32 %v708, %v710
  %v717 = vadd.f32 %v716, %v712
  %v718 = vsel %vm344, %v714, 0.0
  %v719 = vadd.f32 %v717, %v718
  %v720 = vrot.slane %v719, 4
  %v721 = vadd.f32 %v719, %v720
  %v722 = vrot.slane %v721, 2
  %v723 = vadd.f32 %v721, %v722
  %v724 = vrot.slane %v723, 1
  %v725 = vadd.f32 %v723, %v724
  %v726 = vsel %vm333, %v709, 0.0
  %v727 = vsel %vm333, %v711, 0.0
  %v728 = vadd.f32 %v726, %v727
  %v729 = vsel %vm333, %v713, 0.0
  %v730 = vadd.f32 %v728, %v729
  %v731 = vsel %vm340, %v715, 0.0
  %v732 = vadd.f32 %v730, %v731
  %v733 = vrot.slane %v732, 4
  %v734 = vadd.f32 %v732, %v733
  %v735 = vrot.slane %v734, 2
  %v736 = vadd.f32 %v734, %v735
  %v737 = vrot.slane %v736, 1
  %v738 = vadd.f32 %v736, %v737
  %v739 = vadd.f32 %v399, %v725
  %v740 = vadd.f32 %v400, %v738
  %v741 = vld [vmem:[%s5] sm:$0xff]
  %v742 = vld [vmem:[%s5 + $0x8] sm:$0xff]
  %v743 = vld [vmem:[%s5 + $0x10] sm:$0xff]
  %v744 = vld [vmem:[%s5 + $0x18] sm:$0xff]
  %v745 = vld [vmem:[%s5 + $0x20] sm:$0xff]
  %v746 = vld [vmem:[%s5 + $0x28] sm:$0xff]
  %v747 = vld [vmem:[%s5 + $0x30] sm:$0xff]
  %v748 = vld [vmem:[%s5 + $0x38] sm:$0xff]
  %v749 = vld [vmem:[%s5 + $0x40] sm:$0xff]
  %v750 = vld [vmem:[%s5 + $0x48] sm:$0xff]
  %v751 = vld [vmem:[%s5 + $0x50] sm:$0xff]
  %v752 = vld [vmem:[%s5 + $0x58] sm:$0xff]
  %v753 = vld [vmem:[%s5 + $0x60] sm:$0xff]
  %v754 = vld [vmem:[%s5 + $0x68] sm:$0xff]
  %v755 = vld [vmem:[%s5 + $0x70] sm:$0xff]
  %v756 = vld [vmem:[%s5 + $0x78] sm:$0xff]
  %v757 = vld [vmem:[%s5 + $0x80] sm:$0xff]
  %v758 = vld [vmem:[%s5 + $0x88] sm:$0xff]
  %v759 = vld [vmem:[%s5 + $0x90] sm:$0xff]
  %v760 = vld [vmem:[%s5 + $0x98] sm:$0xff]
  %v761 = vld [vmem:[%s5 + $0xa0] sm:$0xff]
  %v762 = vld [vmem:[%s5 + $0xa8] sm:$0xff]
  %v763 = vld [vmem:[%s5 + $0xb0] sm:$0xff]
  %v764 = vld [vmem:[%s5 + $0xb8] sm:$0xff]
  %v765 = vld [vmem:[%s5 + $0xc0] sm:$0xff]
  %v766 = vld [vmem:[%s5 + $0xc8] sm:$0xff]
  %v768 = vsel %vm333, %v707, 0
  %770 = vmatpush.msra.mxu0 %v756
  %771 = vmatpush.msra.mxu0 %v755
  %772 = vmatpush.msra.mxu0 %v754
  %773 = vmatpush.msra.mxu0 %v753
  %774 = vmatpush.msra.mxu0 %v752
  %775 = vmatpush.msra.mxu0 %v751
  %776 = vmatpush.msra.mxu0 %v750
  %777 = vmatpush.msra.mxu0 %v749
  %778 = vmatpush.msra.mxu0 %v748
  %779 = vmatpush.msra.mxu0 %v747
  %780 = vmatpush.msra.mxu0 %v746
  %781 = vmatpush.msra.mxu0 %v745
  %782 = vmatpush.msra.mxu0 %v744
  %783 = vmatpush.msra.mxu0 %v743
  %784 = vmatpush.msra.mxu0 %v742
  %785 = vmatpush.msra.mxu0 %v741
  %786 = vmatmul.f32.gmra.mxu0 %v706
  %v787 = vpop.f32.mrf.mxu0
  %v788 = vadd.f32 0.0, %v787
  %789 = vdwg.mxu0
  %790 = vmatpush.msra.mxu0 0.0
  %791 = vmatpush.msra.mxu0 0.0
  %792 = vmatpush.msra.mxu0 0.0
  %793 = vmatpush.msra.mxu0 0.0
  %794 = vmatpush.msra.mxu0 0.0
  %795 = vmatpush.msra.mxu0 0.0
  %796 = vmatpush.msra.mxu0 %v766
  %797 = vmatpush.msra.mxu0 %v765
  %798 = vmatpush.msra.mxu0 %v764
  %799 = vmatpush.msra.mxu0 %v763
  %800 = vmatpush.msra.mxu0 %v762
  %801 = vmatpush.msra.mxu0 %v761
  %802 = vmatpush.msra.mxu0 %v760
  %803 = vmatpush.msra.mxu0 %v759
  %804 = vmatpush.msra.mxu0 %v758
  %805 = vmatpush.msra.mxu0 %v757
  %806 = vmatmul.f32.gmra.mxu0 %v768
  %v807 = vpop.f32.mrf.mxu0
  %v808 = vadd.f32 %v788, %v807
  %809 = vdwg.mxu0
  %v811 = vsel %vm333, %v740, 0
  %813 = vmatpush.msra.mxu0 %v756
  %814 = vmatpush.msra.mxu0 %v755
  %815 = vmatpush.msra.mxu0 %v754
  %816 = vmatpush.msra.mxu0 %v753
  %817 = vmatpush.msra.mxu0 %v752
  %818 = vmatpush.msra.mxu0 %v751
  %819 = vmatpush.msra.mxu0 %v750
  %820 = vmatpush.msra.mxu0 %v749
  %821 = vmatpush.msra.mxu0 %v748
  %822 = vmatpush.msra.mxu0 %v747
  %823 = vmatpush.msra.mxu0 %v746
  %824 = vmatpush.msra.mxu0 %v745
  %825 = vmatpush.msra.mxu0 %v744
  %826 = vmatpush.msra.mxu0 %v743
  %827 = vmatpush.msra.mxu0 %v742
  %828 = vmatpush.msra.mxu0 %v741
  %829 = vmatmul.f32.gmra.mxu0 %v739
  %v830 = vpop.f32.mrf.mxu0
  %v831 = vadd.f32 0.0, %v830
  %832 = vdwg.mxu0
  %833 = vmatpush.msra.mxu0 0.0
  %834 = vmatpush.msra.mxu0 0.0
  %835 = vmatpush.msra.mxu0 0.0
  %836 = vmatpush.msra.mxu0 0.0
  %837 = vmatpush.msra.mxu0 0.0
  %838 = vmatpush.msra.mxu0 0.0
  %839 = vmatpush.msra.mxu0 %v766
  %840 = vmatpush.msra.mxu0 %v765
  %841 = vmatpush.msra.mxu0 %v764
  %842 = vmatpush.msra.mxu0 %v763
  %843 = vmatpush.msra.mxu0 %v762
  %844 = vmatpush.msra.mxu0 %v761
  %845 = vmatpush.msra.mxu0 %v760
  %846 = vmatpush.msra.mxu0 %v759
  %847 = vmatpush.msra.mxu0 %v758
  %848 = vmatpush.msra.mxu0 %v757
  %849 = vmatmul.f32.gmra.mxu0 %v811
  %v850 = vpop.f32.mrf.mxu0
  %v851 = vadd.f32 %v831, %v850
  %852 = vdwg.mxu0
  %v853 = vld [vmem:[%s6] sm:$0xff]
  %v854 = vld [vmem:[%s6 + $0x8] sm:$0xff]
  %vm855 = vcmask 64512
  %v857 = vsel %vm855, %v808, 0
  %859 = vmatpush.msra.mxu0 0.0
  %860 = vmatpush.msra.mxu0 0.0
  %861 = vmatpush.msra.mxu0 0.0
  %862 = vmatpush.msra.mxu0 0.0
  %863 = vmatpush.msra.mxu0 0.0
  %864 = vmatpush.msra.mxu0 0.0
  %865 = vmatpush.msra.mxu0 0.0
  %866 = vmatpush.msra.mxu0 0.0
  %867 = vmatpush.msra.mxu0 0.0
  %868 = vmatpush.msra.mxu0 0.0
  %869 = vmatpush.msra.mxu0 0.0
  %870 = vmatpush.msra.mxu0 0.0
  %871 = vmatpush.msra.mxu0 0.0
  %872 = vmatpush.msra.mxu0 0.0
  %873 = vmatpush.msra.mxu0 0.0
  %874 = vmatpush.msra.mxu0 %v853
  %875 = vmatmul.f32.gmra.mxu0 %v857
  %v876 = vpop.f32.mrf.mxu0
  %v877 = vadd.f32 0.0, %v876
  %878 = vdwg.mxu0
  %879 = vmatpush.msra.mxu0 0.0
  %880 = vmatpush.msra.mxu0 0.0
  %881 = vmatpush.msra.mxu0 0.0
  %882 = vmatpush.msra.mxu0 0.0
  %883 = vmatpush.msra.mxu0 0.0
  %884 = vmatpush.msra.mxu0 0.0
  %885 = vmatpush.msra.mxu0 0.0
  %886 = vmatpush.msra.mxu0 0.0
  %887 = vmatpush.msra.mxu0 0.0
  %888 = vmatpush.msra.mxu0 0.0
  %889 = vmatpush.msra.mxu0 0.0
  %890 = vmatpush.msra.mxu0 0.0
  %891 = vmatpush.msra.mxu0 0.0
  %892 = vmatpush.msra.mxu0 0.0
  %893 = vmatpush.msra.mxu0 0.0
  %894 = vmatpush.msra.mxu0 %v854
  %895 = vmatmul.f32.gmra.mxu0 %v857
  %v896 = vpop.f32.mrf.mxu0
  %v897 = vadd.f32 0.0, %v896
  %898 = vdwg.mxu0
  %v899 = vmul.f32 %v877, 0.000739645
  %v900 = vmul.f32 %v897, 0.000739645
  %v902 = vsel %vm855, %v851, 0
  %904 = vmatpush.msra.mxu0 0.0
  %905 = vmatpush.msra.mxu0 0.0
  %906 = vmatpush.msra.mxu0 0.0
  %907 = vmatpush.msra.mxu0 0.0
  %908 = vmatpush.msra.mxu0 0.0
  %909 = vmatpush.msra.mxu0 0.0
  %910 = vmatpush.msra.mxu0 0.0
  %911 = vmatpush.msra.mxu0 0.0
  %912 = vmatpush.msra.mxu0 0.0
  %913 = vmatpush.msra.mxu0 0.0
  %914 = vmatpush.msra.mxu0 0.0
  %915 = vmatpush.msra.mxu0 0.0
  %916 = vmatpush.msra.mxu0 0.0
  %917 = vmatpush.msra.mxu0 0.0
  %918 = vmatpush.msra.mxu0 0.0
  %919 = vmatpush.msra.mxu0 %v853
  %920 = vmatmul.f32.gmra.mxu0 %v902
  %v921 = vpop.f32.mrf.mxu0
  %v922 = vadd.f32 0.0, %v921
  %923 = vdwg.mxu0
  %924 = vmatpush.msra.mxu0 0.0
  %925 = vmatpush.msra.mxu0 0.0
  %926 = vmatpush.msra.mxu0 0.0
  %927 = vmatpush.msra.mxu0 0.0
  %928 = vmatpush.msra.mxu0 0.0
  %929 = vmatpush.msra.mxu0 0.0
  %930 = vmatpush.msra.mxu0 0.0
  %931 = vmatpush.msra.mxu0 0.0
  %932 = vmatpush.msra.mxu0 0.0
  %933 = vmatpush.msra.mxu0 0.0
  %934 = vmatpush.msra.mxu0 0.0
  %935 = vmatpush.msra.mxu0 0.0
  %936 = vmatpush.msra.mxu0 0.0
  %937 = vmatpush.msra.mxu0 0.0
  %938 = vmatpush.msra.mxu0 0.0
  %939 = vmatpush.msra.mxu0 %v854
  %940 = vmatmul.f32.gmra.mxu0 %v902
  %v941 = vpop.f32.mrf.mxu0
  %v942 = vadd.f32 0.0, %v941
  %943 = vdwg.mxu0
  %v944 = vmul.f32 %v922, 0.000739645
  %v945 = vmul.f32 %v942, 0.000739645
  %v946 = vmul.f32 %v899, %v899
  %v947 = vmul.f32 %v900, %v900
  %v948 = vsub.f32 %v944, %v946
  %v949 = vsub.f32 %v945, %v947
  %v950 = vld [vmem:[%s7] sm:$0x3]
  %v951 = vadd.f32 %v948, 1e-05
  %v952 = vadd.f32 %v949, 1e-05
  %v953 = vrsqrt.pop %v951
  %v954 = vmul.f32 %v953, %v951
  %v955 = vmul.f32 %v954, %v953
  %v956 = vmul.f32 0.5, %v955
  %v957 = vsub.f32 1.5, %v956
  %v958 = vmul.f32 %v953, %v957
  %vm959 = vweird.f32 %v951
  %vm960 = vweird.f32 %v953
  %vm961 = vmor %vm959, %vm960
  %v962 = vsel %vm961, %v953, %v958
  %v963 = vrsqrt.pop %v952
  %v964 = vmul.f32 %v963, %v952
  %v965 = vmul.f32 %v964, %v963
  %v966 = vmul.f32 0.5, %v965
  %v967 = vsub.f32 1.5, %v966
  %v968 = vmul.f32 %v963, %v967
  %vm969 = vweird.f32 %v952
  %vm970 = vweird.f32 %v963
  %vm971 = vmor %vm969, %vm970
  %v972 = vsel %vm971, %v963, %v968
  %v975 = vrot.slane %v972, 7
  %vm976 = vcmask 1040384
  %v977 = vsel %vm976, %v962, %v975
  %v979 = vmul.f32 %v950, %v977
  %v980 = vld [vmem:[%s8] sm:$0x3]
  %v982 = vperm.slane %v979, 0
  %v983 = vperm.slane %v979, 1
  %v986 = vmul.f32 %v899, %v982
  %v987 = vmul.f32 %v900, %v983
  %v990 = vrot.slane %v987, 7
  %v991 = vsel %vm976, %v986, %v990
  %v993 = vsub.f32 %v980, %v991
  %v994 = vld [vmem:[#allocation2] sm:$0xff]
  %v995 = vld [vmem:[#allocation2 + $0x8] sm:$0xff]
  %v996 = vld [vmem:[#allocation2 + $0x10] sm:$0xff]
  %v997 = vld [vmem:[#allocation2 + $0x18] sm:$0xff]
  %v998 = vld [vmem:[#allocation2 + $0x20] sm:$0xff]
  %v999 = vld [vmem:[#allocation2 + $0x28] sm:$0xff]
  %v1000 = vld [vmem:[#allocation2 + $0x30] sm:$0x3]
  %v1001 = vld [vmem:[#allocation2 + $0x38] sm:$0x3]
  %v1002 = vmul.f32 %v994, %v982
  %v1003 = vmul.f32 %v995, %v983
  %v1004 = vmul.f32 %v996, %v982
  %v1005 = vmul.f32 %v997, %v983
  %v1006 = vmul.f32 %v998, %v982
  %v1007 = vmul.f32 %v999, %v983
  %v1008 = vmul.f32 %v1000, %v982
  %v1009 = vmul.f32 %v1001, %v983
  %v1011 = vperm.slane %v993, 0
  %v1012 = vperm.slane %v993, 1
  %v1015 = vadd.f32 %v1002, %v1011
  %v1016 = vadd.f32 %v1003, %v1012
  %v1017 = vadd.f32 %v1004, %v1011
  %v1018 = vadd.f32 %v1005, %v1012
  %v1019 = vadd.f32 %v1006, %v1011
  %v1020 = vadd.f32 %v1007, %v1012
  %v1021 = vadd.f32 %v1008, %v1011
  %v1022 = vadd.f32 %v1009, %v1012
  %vm1023 = vcmp.gt.f32.partialorder %v1015, 0.0
  %vm1024 = vcmp.gt.f32.partialorder %v1016, 0.0
  %vm1025 = vcmp.gt.f32.partialorder %v1017, 0.0
  %vm1026 = vcmp.gt.f32.partialorder %v1018, 0.0
  %vm1027 = vcmp.gt.f32.partialorder %v1019, 0.0
  %vm1028 = vcmp.gt.f32.partialorder %v1020, 0.0
  %vm1029 = vcmp.gt.f32.partialorder %v1021, 0.0
  %vm1030 = vcmp.gt.f32.partialorder %v1022, 0.0
  %v1031 = vmul.f32 %v1015, 0.2
  %v1032 = vmul.f32 %v1016, 0.2
  %v1033 = vmul.f32 %v1017, 0.2
  %v1034 = vmul.f32 %v1018, 0.2
  %v1035 = vmul.f32 %v1019, 0.2
  %v1036 = vmul.f32 %v1020, 0.2
  %v1037 = vmul.f32 %v1021, 0.2
  %v1038 = vmul.f32 %v1022, 0.2
  %v1039 = vsel %vm1023, %v1015, %v1031
  %v1040 = vsel %vm1024, %v1016, %v1032
  %v1041 = vsel %vm1025, %v1017, %v1033
  %v1042 = vsel %vm1026, %v1018, %v1034
  %v1043 = vsel %vm1027, %v1019, %v1035
  %v1044 = vsel %vm1028, %v1020, %v1036
  %v1045 = vsel %vm1029, %v1021, %v1037
  %v1046 = vsel %vm1030, %v1022, %v1038
  %1047 = vst [vmem:[#allocation2] sm:$0xff] %v1039
  %1048 = vst.msk [vmem:[#allocation2 + $0x8] sm:$0xff] %vm333, %v1040
  %1049 = vst [vmem:[#allocation2 + $0x10] sm:$0xff] %v1041
  %1050 = vst.msk [vmem:[#allocation2 + $0x18] sm:$0xff] %vm333, %v1042
  %1051 = vst [vmem:[#allocation2 + $0x20] sm:$0xff] %v1043
  %1052 = vst.msk [vmem:[#allocation2 + $0x28] sm:$0xff] %vm333, %v1044
  %1053 = vst [vmem:[#allocation2 + $0x30] sm:$0x3] %v1045
  %1054 = vst.msk [vmem:[#allocation2 + $0x38] sm:$0x3] %vm340, %v1046
  %v1055 = vld [vmem:[%s674] sm:$0xff]
  %v1056 = vld [vmem:[%s674 + $0x8] sm:$0xff]
  %v1057 = vld [vmem:[%s674 + $0x10] sm:$0xff]
  %v1058 = vld [vmem:[%s674 + $0x18] sm:$0xff]
  %v1059 = vld [vmem:[%s674 + $0x20] sm:$0xff]
  %v1060 = vld [vmem:[%s674 + $0x28] sm:$0xff]
  %v1061 = vld [vmem:[%s674 + $0x30] sm:$0x3]
  %v1062 = vld [vmem:[%s674 + $0x38] sm:$0x3]
  %v1063 = vmul.f32 %v1055, %v982
  %v1064 = vmul.f32 %v1056, %v983
  %v1065 = vmul.f32 %v1057, %v982
  %v1066 = vmul.f32 %v1058, %v983
  %v1067 = vmul.f32 %v1059, %v982
  %v1068 = vmul.f32 %v1060, %v983
  %v1069 = vmul.f32 %v1061, %v982
  %v1070 = vmul.f32 %v1062, %v983
  %v1071 = vadd.f32 %v1063, %v1011
  %v1072 = vadd.f32 %v1064, %v1012
  %v1073 = vadd.f32 %v1065, %v1011
  %v1074 = vadd.f32 %v1066, %v1012
  %v1075 = vadd.f32 %v1067, %v1011
  %v1076 = vadd.f32 %v1068, %v1012
  %v1077 = vadd.f32 %v1069, %v1011
  %v1078 = vadd.f32 %v1070, %v1012
  %vm1079 = vcmp.gt.f32.partialorder %v1071, 0.0
  %vm1080 = vcmp.gt.f32.partialorder %v1072, 0.0
  %vm1081 = vcmp.gt.f32.partialorder %v1073, 0.0
  %vm1082 = vcmp.gt.f32.partialorder %v1074, 0.0
  %vm1083 = vcmp.gt.f32.partialorder %v1075, 0.0
  %vm1084 = vcmp.gt.f32.partialorder %v1076, 0.0
  %vm1085 = vcmp.gt.f32.partialorder %v1077, 0.0
  %vm1086 = vcmp.gt.f32.partialorder %v1078, 0.0
  %v1087 = vmul.f32 %v1071, 0.2
  %v1088 = vmul.f32 %v1072, 0.2
  %v1089 = vmul.f32 %v1073, 0.2
  %v1090 = vmul.f32 %v1074, 0.2
  %v1091 = vmul.f32 %v1075, 0.2
  %v1092 = vmul.f32 %v1076, 0.2
  %v1093 = vmul.f32 %v1077, 0.2
  %v1094 = vmul.f32 %v1078, 0.2
  %v1095 = vsel %vm1079, %v1071, %v1087
  %v1096 = vsel %vm1080, %v1072, %v1088
  %v1097 = vsel %vm1081, %v1073, %v1089
  %v1098 = vsel %vm1082, %v1074, %v1090
  %v1099 = vsel %vm1083, %v1075, %v1091
  %v1100 = vsel %vm1084, %v1076, %v1092
  %v1101 = vsel %vm1085, %v1077, %v1093
  %v1102 = vsel %vm1086, %v1078, %v1094
  %1103 = vst [vmem:[%s674] sm:$0xff] %v1095
  %1104 = vst.msk [vmem:[%s674 + $0x8] sm:$0xff] %vm333, %v1096
  %1105 = vst [vmem:[%s674 + $0x10] sm:$0xff] %v1097
  %1106 = vst.msk [vmem:[%s674 + $0x18] sm:$0xff] %vm333, %v1098
  %1107 = vst [vmem:[%s674 + $0x20] sm:$0xff] %v1099
  %1108 = vst.msk [vmem:[%s674 + $0x28] sm:$0xff] %vm333, %v1100
  %1109 = vst [vmem:[%s674 + $0x30] sm:$0x3] %v1101
  %1110 = vst.msk [vmem:[%s674 + $0x38] sm:$0x3] %vm340, %v1102
  %v1111 = vld [vmem:[#allocation2] sm:$0xff]
  %v1112 = vld [vmem:[#allocation2 + $0x8] sm:$0xff]
  %v1113 = vld [vmem:[#allocation2 + $0x10] sm:$0xff]
  %v1114 = vld [vmem:[#allocation2 + $0x18] sm:$0xff]
  %v1115 = vld [vmem:[#allocation2 + $0x20] sm:$0x3f]
  %v1116 = vld [vmem:[#allocation2 + $0x28] sm:$0x3f]
  %v1117 = vld [vmem:[%s2] sm:$0xff]
  %v1118 = vld [vmem:[%s2 + $0x8] sm:$0xff]
  %v1119 = vld [vmem:[%s2 + $0x10] sm:$0xff]
  %v1120 = vld [vmem:[%s2 + $0x18] sm:$0xff]
  %v1121 = vld [vmem:[%s2 + $0x20] sm:$0xff]
  %v1122 = vld [vmem:[%s2 + $0x28] sm:$0xff]
  %v1123 = vld [vmem:[%s2 + $0x30] sm:$0xff]
  %v1124 = vld [vmem:[%s2 + $0x38] sm:$0xff]
  %v1125 = vld [vmem:[%s2 + $0x40] sm:$0xff]
  %v1126 = vld [vmem:[%s2 + $0x48] sm:$0xff]
  %v1127 = vld [vmem:[%s2 + $0x50] sm:$0xff]
  %v1128 = vld [vmem:[%s2 + $0x58] sm:$0xff]
  %v1129 = vld [vmem:[%s2 + $0x60] sm:$0xff]
  %v1130 = vld [vmem:[%s2 + $0x68] sm:$0xff]
  %v1131 = vld [vmem:[%s2 + $0x70] sm:$0xff]
  %v1132 = vld [vmem:[%s2 + $0x78] sm:$0xff]
  %v1133 = vld [vmem:[%s2 + $0x80] sm:$0xff]
  %v1134 = vld [vmem:[%s2 + $0x88] sm:$0xff]
  %v1135 = vld [vmem:[%s2 + $0x90] sm:$0xff]
  %v1136 = vld [vmem:[%s2 + $0x98] sm:$0xff]
  %v1137 = vld [vmem:[%s2 + $0xa0] sm:$0xff]
  %v1138 = vld [vmem:[%s2 + $0xa8] sm:$0xff]
  %v1139 = vld [vmem:[%s2 + $0xb0] sm:$0xff]
  %v1140 = vld [vmem:[%s2 + $0xb8] sm:$0xff]
  %v1141 = vld [vmem:[%s2 + $0xc0] sm:$0xff]
  %v1142 = vld [vmem:[%s2 + $0xc8] sm:$0xff]
  %v1143 = vld [vmem:[%s2 + $0xd0] sm:$0xff]
  %v1144 = vld [vmem:[%s2 + $0xd8] sm:$0xff]
  %v1145 = vld [vmem:[%s2 + $0xe0] sm:$0xff]
  %v1146 = vld [vmem:[%s2 + $0xe8] sm:$0xff]
  %v1147 = vld [vmem:[%s2 + $0xf0] sm:$0xff]
  %v1148 = vld [vmem:[%s2 + $0xf8] sm:$0xff]
  %v1149 = vld [vmem:[%s2 + $0x100] sm:$0xff]
  %v1150 = vld [vmem:[%s2 + $0x108] sm:$0xff]
  %v1151 = vld [vmem:[%s2 + $0x110] sm:$0xff]
  %v1152 = vld [vmem:[%s2 + $0x118] sm:$0xff]
  %v1153 = vld [vmem:[%s2 + $0x120] sm:$0xff]
  %v1154 = vld [vmem:[%s2 + $0x128] sm:$0xff]
  %v1155 = vld [vmem:[%s2 + $0x130] sm:$0xff]
  %v1156 = vld [vmem:[%s2 + $0x138] sm:$0xff]
  %v1157 = vld [vmem:[%s2 + $0x140] sm:$0xff]
  %v1158 = vld [vmem:[%s2 + $0x148] sm:$0xff]
  %v1159 = vld [vmem:[%s2 + $0x150] sm:$0xff]
  %v1160 = vld [vmem:[%s2 + $0x158] sm:$0xff]
  %v1161 = vld [vmem:[%s2 + $0x160] sm:$0xff]
  %v1162 = vld [vmem:[%s2 + $0x168] sm:$0xff]
  %v1163 = vld [vmem:[%s2 + $0x170] sm:$0xff]
  %v1164 = vld [vmem:[%s2 + $0x178] sm:$0xff]
  %v1165 = vld [vmem:[%s2 + $0x180] sm:$0xff]
  %v1166 = vld [vmem:[%s2 + $0x188] sm:$0xff]
  %v1167 = vld [vmem:[%s2 + $0x190] sm:$0xff]
  %v1168 = vld [vmem:[%s2 + $0x198] sm:$0xff]
  %v1169 = vld [vmem:[%s2 + $0x1a0] sm:$0xff]
  %v1170 = vld [vmem:[%s2 + $0x1a8] sm:$0xff]
  %v1171 = vld [vmem:[%s2 + $0x1b0] sm:$0xff]
  %v1172 = vld [vmem:[%s2 + $0x1b8] sm:$0xff]
  %v1173 = vld [vmem:[%s2 + $0x1c0] sm:$0xff]
  %v1174 = vld [vmem:[%s2 + $0x1c8] sm:$0xff]
  %v1175 = vld [vmem:[%s2 + $0x1d0] sm:$0xff]
  %v1176 = vld [vmem:[%s2 + $0x1d8] sm:$0xff]
  %v1177 = vld [vmem:[%s2 + $0x1e0] sm:$0xff]
  %v1178 = vld [vmem:[%s2 + $0x1e8] sm:$0xff]
  %v1179 = vld [vmem:[%s2 + $0x1f0] sm:$0xff]
  %v1180 = vld [vmem:[%s2 + $0x1f8] sm:$0xff]
  %v1181 = vld [vmem:[%s2 + $0x200] sm:$0xff]
  %v1182 = vld [vmem:[%s2 + $0x208] sm:$0xff]
  %v1183 = vld [vmem:[%s2 + $0x210] sm:$0xff]
  %v1184 = vld [vmem:[%s2 + $0x218] sm:$0xff]
  %v1185 = vld [vmem:[%s2 + $0x220] sm:$0xff]
  %v1186 = vld [vmem:[%s2 + $0x228] sm:$0xff]
  %v1187 = vld [vmem:[%s2 + $0x230] sm:$0xff]
  %v1188 = vld [vmem:[%s2 + $0x238] sm:$0xff]
  %v1189 = vld [vmem:[%s2 + $0x240] sm:$0xff]
  %v1190 = vld [vmem:[%s2 + $0x248] sm:$0xff]
  %v1191 = vld [vmem:[%s2 + $0x250] sm:$0xff]
  %v1192 = vld [vmem:[%s2 + $0x258] sm:$0xff]
  %v1193 = vld [vmem:[%s2 + $0x260] sm:$0xff]
  %v1194 = vld [vmem:[%s2 + $0x268] sm:$0xff]
  %v1195 = vld [vmem:[#allocation2] sm:$0xfe]
  %v1196 = vld [vmem:[#allocation2 + $0x8] sm:$0xfe]
  %v1197 = vld [vmem:[#allocation2 + $0x20] sm:$0x7f]
  %v1198 = vld [vmem:[#allocation2 + $0x28] sm:$0x7f]
  %s1199 = scalar_lea.vmem %s2, 624
  %v1200 = vld [vmem:[%s1199] sm:$0xff]
  %v1201 = vld [vmem:[%s1199 + $0x8] sm:$0xff]
  %v1202 = vld [vmem:[%s1199 + $0x10] sm:$0xff]
  %v1203 = vld [vmem:[%s1199 + $0x18] sm:$0xff]
  %v1204 = vld [vmem:[%s1199 + $0x20] sm:$0xff]
  %v1205 = vld [vmem:[%s1199 + $0x28] sm:$0xff]
  %v1206 = vld [vmem:[%s1199 + $0x30] sm:$0xff]
  %v1207 = vld [vmem:[%s1199 + $0x38] sm:$0xff]
  %v1208 = vld [vmem:[%s1199 + $0x40] sm:$0xff]
  %v1209 = vld [vmem:[%s1199 + $0x48] sm:$0xff]
  %v1210 = vld [vmem:[%s1199 + $0x50] sm:$0xff]
  %v1211 = vld [vmem:[%s1199 + $0x58] sm:$0xff]
  %v1212 = vld [vmem:[%s1199 + $0x60] sm:$0xff]
  %v1213 = vld [vmem:[%s1199 + $0x68] sm:$0xff]
  %v1214 = vld [vmem:[%s1199 + $0x70] sm:$0xff]
  %v1215 = vld [vmem:[%s1199 + $0x78] sm:$0xff]
  %v1216 = vld [vmem:[%s1199 + $0x80] sm:$0xff]
  %v1217 = vld [vmem:[%s1199 + $0x88] sm:$0xff]
  %v1218 = vld [vmem:[%s1199 + $0x90] sm:$0xff]
  %v1219 = vld [vmem:[%s1199 + $0x98] sm:$0xff]
  %v1220 = vld [vmem:[%s1199 + $0xa0] sm:$0xff]
  %v1221 = vld [vmem:[%s1199 + $0xa8] sm:$0xff]
  %v1222 = vld [vmem:[%s1199 + $0xb0] sm:$0xff]
  %v1223 = vld [vmem:[%s1199 + $0xb8] sm:$0xff]
  %v1224 = vld [vmem:[%s1199 + $0xc0] sm:$0xff]
  %v1225 = vld [vmem:[%s1199 + $0xc8] sm:$0xff]
  %v1226 = vld [vmem:[%s1199 + $0xd0] sm:$0xff]
  %v1227 = vld [vmem:[%s1199 + $0xd8] sm:$0xff]
  %v1228 = vld [vmem:[%s1199 + $0xe0] sm:$0xff]
  %v1229 = vld [vmem:[%s1199 + $0xe8] sm:$0xff]
  %v1230 = vld [vmem:[%s1199 + $0xf0] sm:$0xff]
  %v1231 = vld [vmem:[%s1199 + $0xf8] sm:$0xff]
  %v1232 = vld [vmem:[%s1199 + $0x100] sm:$0xff]
  %v1233 = vld [vmem:[%s1199 + $0x108] sm:$0xff]
  %v1234 = vld [vmem:[%s1199 + $0x110] sm:$0xff]
  %v1235 = vld [vmem:[%s1199 + $0x118] sm:$0xff]
  %v1236 = vld [vmem:[%s1199 + $0x120] sm:$0xff]
  %v1237 = vld [vmem:[%s1199 + $0x128] sm:$0xff]
  %v1238 = vld [vmem:[%s1199 + $0x130] sm:$0xff]
  %v1239 = vld [vmem:[%s1199 + $0x138] sm:$0xff]
  %v1240 = vld [vmem:[%s1199 + $0x140] sm:$0xff]
  %v1241 = vld [vmem:[%s1199 + $0x148] sm:$0xff]
  %v1242 = vld [vmem:[%s1199 + $0x150] sm:$0xff]
  %v1243 = vld [vmem:[%s1199 + $0x158] sm:$0xff]
  %v1244 = vld [vmem:[%s1199 + $0x160] sm:$0xff]
  %v1245 = vld [vmem:[%s1199 + $0x168] sm:$0xff]
  %v1246 = vld [vmem:[%s1199 + $0x170] sm:$0xff]
  %v1247 = vld [vmem:[%s1199 + $0x178] sm:$0xff]
  %v1248 = vld [vmem:[%s1199 + $0x180] sm:$0xff]
  %v1249 = vld [vmem:[%s1199 + $0x188] sm:$0xff]
  %v1250 = vld [vmem:[%s1199 + $0x190] sm:$0xff]
  %v1251 = vld [vmem:[%s1199 + $0x198] sm:$0xff]
  %v1252 = vld [vmem:[%s1199 + $0x1a0] sm:$0xff]
  %v1253 = vld [vmem:[%s1199 + $0x1a8] sm:$0xff]
  %v1254 = vld [vmem:[%s1199 + $0x1b0] sm:$0xff]
  %v1255 = vld [vmem:[%s1199 + $0x1b8] sm:$0xff]
  %v1256 = vld [vmem:[%s1199 + $0x1c0] sm:$0xff]
  %v1257 = vld [vmem:[%s1199 + $0x1c8] sm:$0xff]
  %v1258 = vld [vmem:[%s1199 + $0x1d0] sm:$0xff]
  %v1259 = vld [vmem:[%s1199 + $0x1d8] sm:$0xff]
  %v1260 = vld [vmem:[%s1199 + $0x1e0] sm:$0xff]
  %v1261 = vld [vmem:[%s1199 + $0x1e8] sm:$0xff]
  %v1262 = vld [vmem:[%s1199 + $0x1f0] sm:$0xff]
  %v1263 = vld [vmem:[%s1199 + $0x1f8] sm:$0xff]
  %v1264 = vld [vmem:[%s1199 + $0x200] sm:$0xff]
  %v1265 = vld [vmem:[%s1199 + $0x208] sm:$0xff]
  %v1266 = vld [vmem:[%s1199 + $0x210] sm:$0xff]
  %v1267 = vld [vmem:[%s1199 + $0x218] sm:$0xff]
  %v1268 = vld [vmem:[%s1199 + $0x220] sm:$0xff]
  %v1269 = vld [vmem:[%s1199 + $0x228] sm:$0xff]
  %v1270 = vld [vmem:[%s1199 + $0x230] sm:$0xff]
  %v1271 = vld [vmem:[%s1199 + $0x238] sm:$0xff]
  %v1272 = vld [vmem:[%s1199 + $0x240] sm:$0xff]
  %v1273 = vld [vmem:[%s1199 + $0x248] sm:$0xff]
  %v1274 = vld [vmem:[%s1199 + $0x250] sm:$0xff]
  %v1275 = vld [vmem:[%s1199 + $0x258] sm:$0xff]
  %v1276 = vld [vmem:[%s1199 + $0x260] sm:$0xff]
  %v1277 = vld [vmem:[%s1199 + $0x268] sm:$0xff]
  %vm1284 = vcmask 1046528
  %v1285 = vrot.slane %v1195, 1
  %v1286 = vrot.slane %v1113, 1
  %v1287 = vsel %vm1284, %v1285, %v1286
  %v1288 = vrot.slane %v1196, 1
  %v1289 = vrot.slane %v1114, 1
  %v1290 = vsel %vm1284, %v1288, %v1289
  %v1291 = vrot.slane %v1197, 1
  %v1292 = vsel %vm1284, %v1286, %v1291
  %v1293 = vrot.slane %v1198, 1
  %v1294 = vsel %vm1284, %v1289, %v1293
  %v1298 = vsel %vm333, %v1290, 0
  %v1300 = vsel %vm333, %v1294, 0
  %v1302 = vsel %vm333, %v1293, 0
  %1304 = vmatpush.msra.mxu0 %v1245
  %1305 = vmatpush.msra.mxu0 %v1242
  %1306 = vmatpush.msra.mxu0 %v1239
  %1307 = vmatpush.msra.mxu0 %v1236
  %1308 = vmatpush.msra.mxu0 %v1233
  %1309 = vmatpush.msra.mxu0 %v1230
  %1310 = vmatpush.msra.mxu0 %v1227
  %1311 = vmatpush.msra.mxu0 %v1224
  %1312 = vmatpush.msra.mxu0 %v1221
  %1313 = vmatpush.msra.mxu0 %v1218
  %1314 = vmatpush.msra.mxu0 %v1215
  %1315 = vmatpush.msra.mxu0 %v1212
  %1316 = vmatpush.msra.mxu0 %v1209
  %1317 = vmatpush.msra.mxu0 %v1206
  %1318 = vmatpush.msra.mxu0 %v1203
  %1319 = vmatpush.msra.mxu0 %v1200
  %1320 = vmatmul.f32.gmra.mxu0 %v1287
  %v1321 = vpop.f32.mrf.mxu0
  %v1322 = vadd.f32 0.0, %v1321
  %1323 = vmatmul.f32.gmra.mxu0 %v1292
  %v1324 = vpop.f32.mrf.mxu0
  %v1325 = vadd.f32 0.0, %v1324
  %1326 = vmatmul.f32.gmra.mxu0 %v1291
  %v1327 = vpop.f32.mrf.mxu0
  %v1328 = vadd.f32 0.0, %v1327
  %1329 = vdwg.mxu0
  %1330 = vmatpush.msra.mxu0 0.0
  %1331 = vmatpush.msra.mxu0 0.0
  %1332 = vmatpush.msra.mxu0 0.0
  %1333 = vmatpush.msra.mxu0 0.0
  %1334 = vmatpush.msra.mxu0 0.0
  %1335 = vmatpush.msra.mxu0 0.0
  %1336 = vmatpush.msra.mxu0 %v1275
  %1337 = vmatpush.msra.mxu0 %v1272
  %1338 = vmatpush.msra.mxu0 %v1269
  %1339 = vmatpush.msra.mxu0 %v1266
  %1340 = vmatpush.msra.mxu0 %v1263
  %1341 = vmatpush.msra.mxu0 %v1260
  %1342 = vmatpush.msra.mxu0 %v1257
  %1343 = vmatpush.msra.mxu0 %v1254
  %1344 = vmatpush.msra.mxu0 %v1251
  %1345 = vmatpush.msra.mxu0 %v1248
  %1346 = vmatmul.f32.gmra.mxu0 %v1298
  %v1347 = vpop.f32.mrf.mxu0
  %v1348 = vadd.f32 %v1322, %v1347
  %1349 = vmatmul.f32.gmra.mxu0 %v1300
  %v1350 = vpop.f32.mrf.mxu0
  %v1351 = vadd.f32 %v1325, %v1350
  %1352 = vmatmul.f32.gmra.mxu0 %v1302
  %v1353 = vpop.f32.mrf.mxu0
  %v1354 = vadd.f32 %v1328, %v1353
  %1355 = vdwg.mxu0
  %1356 = vmatpush.msra.mxu0 %v1246
  %1357 = vmatpush.msra.mxu0 %v1243
  %1358 = vmatpush.msra.mxu0 %v1240
  %1359 = vmatpush.msra.mxu0 %v1237
  %1360 = vmatpush.msra.mxu0 %v1234
  %1361 = vmatpush.msra.mxu0 %v1231
  %1362 = vmatpush.msra.mxu0 %v1228
  %1363 = vmatpush.msra.mxu0 %v1225
  %1364 = vmatpush.msra.mxu0 %v1222
  %1365 = vmatpush.msra.mxu0 %v1219
  %1366 = vmatpush.msra.mxu0 %v1216
  %1367 = vmatpush.msra.mxu0 %v1213
  %1368 = vmatpush.msra.mxu0 %v1210
  %1369 = vmatpush.msra.mxu0 %v1207
  %1370 = vmatpush.msra.mxu0 %v1204
  %1371 = vmatpush.msra.mxu0 %v1201
  %1372 = vmatmul.f32.gmra.mxu0 %v1287
  %v1373 = vpop.f32.mrf.mxu0
  %v1374 = vadd.f32 0.0, %v1373
  %1375 = vmatmul.f32.gmra.mxu0 %v1292
  %v1376 = vpop.f32.mrf.mxu0
  %v1377 = vadd.f32 0.0, %v1376
  %1378 = vmatmul.f32.gmra.mxu0 %v1291
  %v1379 = vpop.f32.mrf.mxu0
  %v1380 = vadd.f32 0.0, %v1379
  %1381 = vdwg.mxu0
  %1382 = vmatpush.msra.mxu0 0.0
  %1383 = vmatpush.msra.mxu0 0.0
  %1384 = vmatpush.msra.mxu0 0.0
  %1385 = vmatpush.msra.mxu0 0.0
  %1386 = vmatpush.msra.mxu0 0.0
  %1387 = vmatpush.msra.mxu0 0.0
  %1388 = vmatpush.msra.mxu0 %v1276
  %1389 = vmatpush.msra.mxu0 %v1273
  %1390 = vmatpush.msra.mxu0 %v1270
  %1391 = vmatpush.msra.mxu0 %v1267
  %1392 = vmatpush.msra.mxu0 %v1264
  %1393 = vmatpush.msra.mxu0 %v1261
  %1394 = vmatpush.msra.mxu0 %v1258
  %1395 = vmatpush.msra.mxu0 %v1255
  %1396 = vmatpush.msra.mxu0 %v1252
  %1397 = vmatpush.msra.mxu0 %v1249
  %1398 = vmatmul.f32.gmra.mxu0 %v1298
  %v1399 = vpop.f32.mrf.mxu0
  %v1400 = vadd.f32 %v1374, %v1399
  %1401 = vmatmul.f32.gmra.mxu0 %v1300
  %v1402 = vpop.f32.mrf.mxu0
  %v1403 = vadd.f32 %v1377, %v1402
  %1404 = vmatmul.f32.gmra.mxu0 %v1302
  %v1405 = vpop.f32.mrf.mxu0
  %v1406 = vadd.f32 %v1380, %v1405
  %1407 = vdwg.mxu0
  %1408 = vmatpush.msra.mxu0 %v1247
  %1409 = vmatpush.msra.mxu0 %v1244
  %1410 = vmatpush.msra.mxu0 %v1241
  %1411 = vmatpush.msra.mxu0 %v1238
  %1412 = vmatpush.msra.mxu0 %v1235
  %1413 = vmatpush.msra.mxu0 %v1232
  %1414 = vmatpush.msra.mxu0 %v1229
  %1415 = vmatpush.msra.mxu0 %v1226
  %1416 = vmatpush.msra.mxu0 %v1223
  %1417 = vmatpush.msra.mxu0 %v1220
  %1418 = vmatpush.msra.mxu0 %v1217
  %1419 = vmatpush.msra.mxu0 %v1214
  %1420 = vmatpush.msra.mxu0 %v1211
  %1421 = vmatpush.msra.mxu0 %v1208
  %1422 = vmatpush.msra.mxu0 %v1205
  %1423 = vmatpush.msra.mxu0 %v1202
  %1424 = vmatmul.f32.gmra.mxu0 %v1287
  %v1425 = vpop.f32.mrf.mxu0
  %v1426 = vadd.f32 0.0, %v1425
  %1427 = vmatmul.f32.gmra.mxu0 %v1292
  %v1428 = vpop.f32.mrf.mxu0
  %v1429 = vadd.f32 0.0, %v1428
  %1430 = vmatmul.f32.gmra.mxu0 %v1291
  %v1431 = vpop.f32.mrf.mxu0
  %v1432 = vadd.f32 0.0, %v1431
  %1433 = vdwg.mxu0
  %1434 = vmatpush.msra.mxu0 0.0
  %1435 = vmatpush.msra.mxu0 0.0
  %1436 = vmatpush.msra.mxu0 0.0
  %1437 = vmatpush.msra.mxu0 0.0
  %1438 = vmatpush.msra.mxu0 0.0
  %1439 = vmatpush.msra.mxu0 0.0
  %1440 = vmatpush.msra.mxu0 %v1277
  %1441 = vmatpush.msra.mxu0 %v1274
  %1442 = vmatpush.msra.mxu0 %v1271
  %1443 = vmatpush.msra.mxu0 %v1268
  %1444 = vmatpush.msra.mxu0 %v1265
  %1445 = vmatpush.msra.mxu0 %v1262
  %1446 = vmatpush.msra.mxu0 %v1259
  %1447 = vmatpush.msra.mxu0 %v1256
  %1448 = vmatpush.msra.mxu0 %v1253
  %1449 = vmatpush.msra.mxu0 %v1250
  %1450 = vmatmul.f32.gmra.mxu0 %v1298
  %v1451 = vpop.f32.mrf.mxu0
  %v1452 = vadd.f32 %v1426, %v1451
  %1453 = vmatmul.f32.gmra.mxu0 %v1300
  %v1454 = vpop.f32.mrf.mxu0
  %v1455 = vadd.f32 %v1429, %v1454
  %1456 = vmatmul.f32.gmra.mxu0 %v1302
  %v1457 = vpop.f32.mrf.mxu0
  %v1458 = vadd.f32 %v1432, %v1457
  %1459 = vdwg.mxu0
  %v1461 = vsel %vm333, %v1112, 0
  %v1463 = vsel %vm333, %v1114, 0
  %v1466 = vsel %vm333, %v1116, 0
  %1468 = vmatpush.msra.mxu0 %v1162
  %1469 = vmatpush.msra.mxu0 %v1159
  %1470 = vmatpush.msra.mxu0 %v1156
  %1471 = vmatpush.msra.mxu0 %v1153
  %1472 = vmatpush.msra.mxu0 %v1150
  %1473 = vmatpush.msra.mxu0 %v1147
  %1474 = vmatpush.msra.mxu0 %v1144
  %1475 = vmatpush.msra.mxu0 %v1141
  %1476 = vmatpush.msra.mxu0 %v1138
  %1477 = vmatpush.msra.mxu0 %v1135
  %1478 = vmatpush.msra.mxu0 %v1132
  %1479 = vmatpush.msra.mxu0 %v1129
  %1480 = vmatpush.msra.mxu0 %v1126
  %1481 = vmatpush.msra.mxu0 %v1123
  %1482 = vmatpush.msra.mxu0 %v1120
  %1483 = vmatpush.msra.mxu0 %v1117
  %1484 = vmatmul.f32.gmra.mxu0 %v1111
  %v1485 = vpop.f32.mrf.mxu0
  %v1486 = vadd.f32 %v1348, %v1485
  %1487 = vmatmul.f32.gmra.mxu0 %v1113
  %v1488 = vpop.f32.mrf.mxu0
  %v1489 = vadd.f32 %v1351, %v1488
  %1490 = vmatmul.f32.gmra.mxu0 %v1115
  %v1491 = vpop.f32.mrf.mxu0
  %v1492 = vadd.f32 %v1354, %v1491
  %1493 = vdwg.mxu0
  %1494 = vmatpush.msra.mxu0 0.0
  %1495 = vmatpush.msra.mxu0 0.0
  %1496 = vmatpush.msra.mxu0 0.0
  %1497 = vmatpush.msra.mxu0 0.0
  %1498 = vmatpush.msra.mxu0 0.0
  %1499 = vmatpush.msra.mxu0 0.0
  %1500 = vmatpush.msra.mxu0 %v1192
  %1501 = vmatpush.msra.mxu0 %v1189
  %1502 = vmatpush.msra.mxu0 %v1186
  %1503 = vmatpush.msra.mxu0 %v1183
  %1504 = vmatpush.msra.mxu0 %v1180
  %1505 = vmatpush.msra.mxu0 %v1177
  %1506 = vmatpush.msra.mxu0 %v1174
  %1507 = vmatpush.msra.mxu0 %v1171
  %1508 = vmatpush.msra.mxu0 %v1168
  %1509 = vmatpush.msra.mxu0 %v1165
  %1510 = vmatmul.f32.gmra.mxu0 %v1461
  %v1511 = vpop.f32.mrf.mxu0
  %v1512 = vadd.f32 %v1486, %v1511
  %1513 = vmatmul.f32.gmra.mxu0 %v1463
  %v1514 = vpop.f32.mrf.mxu0
  %v1515 = vadd.f32 %v1489, %v1514
  %1516 = vmatmul.f32.gmra.mxu0 %v1466
  %v1517 = vpop.f32.mrf.mxu0
  %v1518 = vadd.f32 %v1492, %v1517
  %1519 = vdwg.mxu0
  %1520 = vmatpush.msra.mxu0 %v1163
  %1521 = vmatpush.msra.mxu0 %v1160
  %1522 = vmatpush.msra.mxu0 %v1157
  %1523 = vmatpush.msra.mxu0 %v1154
  %1524 = vmatpush.msra.mxu0 %v1151
  %1525 = vmatpush.msra.mxu0 %v1148
  %1526 = vmatpush.msra.mxu0 %v1145
  %1527 = vmatpush.msra.mxu0 %v1142
  %1528 = vmatpush.msra.mxu0 %v1139
  %1529 = vmatpush.msra.mxu0 %v1136
  %1530 = vmatpush.msra.mxu0 %v1133
  %1531 = vmatpush.msra.mxu0 %v1130
  %1532 = vmatpush.msra.mxu0 %v1127
  %1533 = vmatpush.msra.mxu0 %v1124
  %1534 = vmatpush.msra.mxu0 %v1121
  %1535 = vmatpush.msra.mxu0 %v1118
  %1536 = vmatmul.f32.gmra.mxu0 %v1111
  %v1537 = vpop.f32.mrf.mxu0
  %v1538 = vadd.f32 %v1400, %v1537
  %1539 = vmatmul.f32.gmra.mxu0 %v1113
  %v1540 = vpop.f32.mrf.mxu0
  %v1541 = vadd.f32 %v1403, %v1540
  %1542 = vmatmul.f32.gmra.mxu0 %v1115
  %v1543 = vpop.f32.mrf.mxu0
  %v1544 = vadd.f32 %v1406, %v1543
  %1545 = vdwg.mxu0
  %1546 = vmatpush.msra.mxu0 0.0
  %1547 = vmatpush.msra.mxu0 0.0
  %1548 = vmatpush.msra.mxu0 0.0
  %1549 = vmatpush.msra.mxu0 0.0
  %1550 = vmatpush.msra.mxu0 0.0
  %1551 = vmatpush.msra.mxu0 0.0
  %1552 = vmatpush.msra.mxu0 %v1193
  %1553 = vmatpush.msra.mxu0 %v1190
  %1554 = vmatpush.msra.mxu0 %v1187
  %1555 = vmatpush.msra.mxu0 %v1184
  %1556 = vmatpush.msra.mxu0 %v1181
  %1557 = vmatpush.msra.mxu0 %v1178
  %1558 = vmatpush.msra.mxu0 %v1175
  %1559 = vmatpush.msra.mxu0 %v1172
  %1560 = vmatpush.msra.mxu0 %v1169
  %1561 = vmatpush.msra.mxu0 %v1166
  %1562 = vmatmul.f32.gmra.mxu0 %v1461
  %v1563 = vpop.f32.mrf.mxu0
  %v1564 = vadd.f32 %v1538, %v1563
  %1565 = vmatmul.f32.gmra.mxu0 %v1463
  %v1566 = vpop.f32.mrf.mxu0
  %v1567 = vadd.f32 %v1541, %v1566
  %1568 = vmatmul.f32.gmra.mxu0 %v1466
  %v1569 = vpop.f32.mrf.mxu0
  %v1570 = vadd.f32 %v1544, %v1569
  %1571 = vdwg.mxu0
  %1572 = vmatpush.msra.mxu0 %v1164
  %1573 = vmatpush.msra.mxu0 %v1161
  %1574 = vmatpush.msra.mxu0 %v1158
  %1575 = vmatpush.msra.mxu0 %v1155
  %1576 = vmatpush.msra.mxu0 %v1152
  %1577 = vmatpush.msra.mxu0 %v1149
  %1578 = vmatpush.msra.mxu0 %v1146
  %1579 = vmatpush.msra.mxu0 %v1143
  %1580 = vmatpush.msra.mxu0 %v1140
  %1581 = vmatpush.msra.mxu0 %v1137
  %1582 = vmatpush.msra.mxu0 %v1134
  %1583 = vmatpush.msra.mxu0 %v1131
  %1584 = vmatpush.msra.mxu0 %v1128
  %1585 = vmatpush.msra.mxu0 %v1125
  %1586 = vmatpush.msra.mxu0 %v1122
  %1587 = vmatpush.msra.mxu0 %v1119
  %1588 = vmatmul.f32.gmra.mxu0 %v1111
  %v1589 = vpop.f32.mrf.mxu0
  %v1590 = vadd.f32 %v1452, %v1589
  %1591 = vmatmul.f32.gmra.mxu0 %v1113
  %v1592 = vpop.f32.mrf.mxu0
  %v1593 = vadd.f32 %v1455, %v1592
  %1594 = vmatmul.f32.gmra.mxu0 %v1115
  %v1595 = vpop.f32.mrf.mxu0
  %v1596 = vadd.f32 %v1458, %v1595
  %1597 = vdwg.mxu0
  %1598 = vmatpush.msra.mxu0 0.0
  %1599 = vmatpush.msra.mxu0 0.0
  %1600 = vmatpush.msra.mxu0 0.0
  %1601 = vmatpush.msra.mxu0 0.0
  %1602 = vmatpush.msra.mxu0 0.0
  %1603 = vmatpush.msra.mxu0 0.0
  %1604 = vmatpush.msra.mxu0 %v1194
  %1605 = vmatpush.msra.mxu0 %v1191
  %1606 = vmatpush.msra.mxu0 %v1188
  %1607 = vmatpush.msra.mxu0 %v1185
  %1608 = vmatpush.msra.mxu0 %v1182
  %1609 = vmatpush.msra.mxu0 %v1179
  %1610 = vmatpush.msra.mxu0 %v1176
  %1611 = vmatpush.msra.mxu0 %v1173
  %1612 = vmatpush.msra.mxu0 %v1170
  %1613 = vmatpush.msra.mxu0 %v1167
  %1614 = vmatmul.f32.gmra.mxu0 %v1461
  %v1615 = vpop.f32.mrf.mxu0
  %v1616 = vadd.f32 %v1590, %v1615
  %1617 = vmatmul.f32.gmra.mxu0 %v1463
  %v1618 = vpop.f32.mrf.mxu0
  %v1619 = vadd.f32 %v1593, %v1618
  %1620 = vmatmul.f32.gmra.mxu0 %v1466
  %v1621 = vpop.f32.mrf.mxu0
  %v1622 = vadd.f32 %v1596, %v1621
  %1623 = vdwg.mxu0
  %v1624 = vld [vmem:[#allocation2] sm:$0xfc]
  %v1625 = vld [vmem:[#allocation2 + $0x8] sm:$0xfc]
  %v1626 = vld [vmem:[#allocation2 + $0x20] sm:$0xff]
  %v1627 = vld [vmem:[#allocation2 + $0x28] sm:$0xff]
  %s1628 = scalar_lea.vmem %s2, 1248
  %v1629 = vld [vmem:[%s1628] sm:$0xff]
  %v1630 = vld [vmem:[%s1628 + $0x8] sm:$0xff]
  %v1631 = vld [vmem:[%s1628 + $0x10] sm:$0xff]
  %v1632 = vld [vmem:[%s1628 + $0x18] sm:$0xff]
  %v1633 = vld [vmem:[%s1628 + $0x20] sm:$0xff]
  %v1634 = vld [vmem:[%s1628 + $0x28] sm:$0xff]
  %v1635 = vld [vmem:[%s1628 + $0x30] sm:$0xff]
  %v1636 = vld [vmem:[%s1628 + $0x38] sm:$0xff]
  %v1637 = vld [vmem:[%s1628 + $0x40] sm:$0xff]
  %v1638 = vld [vmem:[%s1628 + $0x48] sm:$0xff]
  %v1639 = vld [vmem:[%s1628 + $0x50] sm:$0xff]
  %v1640 = vld [vmem:[%s1628 + $0x58] sm:$0xff]
  %v1641 = vld [vmem:[%s1628 + $0x60] sm:$0xff]
  %v1642 = vld [vmem:[%s1628 + $0x68] sm:$0xff]
  %v1643 = vld [vmem:[%s1628 + $0x70] sm:$0xff]
  %v1644 = vld [vmem:[%s1628 + $0x78] sm:$0xff]
  %v1645 = vld [vmem:[%s1628 + $0x80] sm:$0xff]
  %v1646 = vld [vmem:[%s1628 + $0x88] sm:$0xff]
  %v1647 = vld [vmem:[%s1628 + $0x90] sm:$0xff]
  %v1648 = vld [vmem:[%s1628 + $0x98] sm:$0xff]
  %v1649 = vld [vmem:[%s1628 + $0xa0] sm:$0xff]
  %v1650 = vld [vmem:[%s1628 + $0xa8] sm:$0xff]
  %v1651 = vld [vmem:[%s1628 + $0xb0] sm:$0xff]
  %v1652 = vld [vmem:[%s1628 + $0xb8] sm:$0xff]
  %v1653 = vld [vmem:[%s1628 + $0xc0] sm:$0xff]
  %v1654 = vld [vmem:[%s1628 + $0xc8] sm:$0xff]
  %v1655 = vld [vmem:[%s1628 + $0xd0] sm:$0xff]
  %v1656 = vld [vmem:[%s1628 + $0xd8] sm:$0xff]
  %v1657 = vld [vmem:[%s1628 + $0xe0] sm:$0xff]
  %v1658 = vld [vmem:[%s1628 + $0xe8] sm:$0xff]
  %v1659 = vld [vmem:[%s1628 + $0xf0] sm:$0xff]
  %v1660 = vld [vmem:[%s1628 + $0xf8] sm:$0xff]
  %v1661 = vld [vmem:[%s1628 + $0x100] sm:$0xff]
  %v1662 = vld [vmem:[%s1628 + $0x108] sm:$0xff]
  %v1663 = vld [vmem:[%s1628 + $0x110] sm:$0xff]
  %v1664 = vld [vmem:[%s1628 + $0x118] sm:$0xff]
  %v1665 = vld [vmem:[%s1628 + $0x120] sm:$0xff]
  %v1666 = vld [vmem:[%s1628 + $0x128] sm:$0xff]
  %v1667 = vld [vmem:[%s1628 + $0x130] sm:$0xff]
  %v1668 = vld [vmem:[%s1628 + $0x138] sm:$0xff]
  %v1669 = vld [vmem:[%s1628 + $0x140] sm:$0xff]
  %v1670 = vld [vmem:[%s1628 + $0x148] sm:$0xff]
  %v1671 = vld [vmem:[%s1628 + $0x150] sm:$0xff]
  %v1672 = vld [vmem:[%s1628 + $0x158] sm:$0xff]
  %v1673 = vld [vmem:[%s1628 + $0x160] sm:$0xff]
  %v1674 = vld [vmem:[%s1628 + $0x168] sm:$0xff]
  %v1675 = vld [vmem:[%s1628 + $0x170] sm:$0xff]
  %v1676 = vld [vmem:[%s1628 + $0x178] sm:$0xff]
  %v1677 = vld [vmem:[%s1628 + $0x180] sm:$0xff]
  %v1678 = vld [vmem:[%s1628 + $0x188] sm:$0xff]
  %v1679 = vld [vmem:[%s1628 + $0x190] sm:$0xff]
  %v1680 = vld [vmem:[%s1628 + $0x198] sm:$0xff]
  %v1681 = vld [vmem:[%s1628 + $0x1a0] sm:$0xff]
  %v1682 = vld [vmem:[%s1628 + $0x1a8] sm:$0xff]
  %v1683 = vld [vmem:[%s1628 + $0x1b0] sm:$0xff]
  %v1684 = vld [vmem:[%s1628 + $0x1b8] sm:$0xff]
  %v1685 = vld [vmem:[%s1628 + $0x1c0] sm:$0xff]
  %v1686 = vld [vmem:[%s1628 + $0x1c8] sm:$0xff]
  %v1687 = vld [vmem:[%s1628 + $0x1d0] sm:$0xff]
  %v1688 = vld [vmem:[%s1628 + $0x1d8] sm:$0xff]
  %v1689 = vld [vmem:[%s1628 + $0x1e0] sm:$0xff]
  %v1690 = vld [vmem:[%s1628 + $0x1e8] sm:$0xff]
  %v1691 = vld [vmem:[%s1628 + $0x1f0] sm:$0xff]
  %v1692 = vld [vmem:[%s1628 + $0x1f8] sm:$0xff]
  %v1693 = vld [vmem:[%s1628 + $0x200] sm:$0xff]
  %v1694 = vld [vmem:[%s1628 + $0x208] sm:$0xff]
  %v1695 = vld [vmem:[%s1628 + $0x210] sm:$0xff]
  %v1696 = vld [vmem:[%s1628 + $0x218] sm:$0xff]
  %v1697 = vld [vmem:[%s1628 + $0x220] sm:$0xff]
  %v1698 = vld [vmem:[%s1628 + $0x228] sm:$0xff]
  %v1699 = vld [vmem:[%s1628 + $0x230] sm:$0xff]
  %v1700 = vld [vmem:[%s1628 + $0x238] sm:$0xff]
  %v1701 = vld [vmem:[%s1628 + $0x240] sm:$0xff]
  %v1702 = vld [vmem:[%s1628 + $0x248] sm:$0xff]
  %v1703 = vld [vmem:[%s1628 + $0x250] sm:$0xff]
  %v1704 = vld [vmem:[%s1628 + $0x258] sm:$0xff]
  %v1705 = vld [vmem:[%s1628 + $0x260] sm:$0xff]
  %v1706 = vld [vmem:[%s1628 + $0x268] sm:$0xff]
  %vm1711 = vcmask 1045504
  %v1712 = vrot.slane %v1624, 2
  %v1713 = vrot.slane %v1113, 2
  %v1714 = vsel %vm1711, %v1712, %v1713
  %v1715 = vrot.slane %v1625, 2
  %v1716 = vrot.slane %v1114, 2
  %v1717 = vsel %vm1711, %v1715, %v1716
  %v1718 = vrot.slane %v1626, 2
  %v1719 = vsel %vm1711, %v1713, %v1718
  %v1720 = vrot.slane %v1627, 2
  %v1721 = vsel %vm1711, %v1716, %v1720
  %v1725 = vsel %vm333, %v1717, 0
  %v1727 = vsel %vm333, %v1721, 0
  %v1729 = vsel %vm333, %v1720, 0
  %1731 = vmatpush.msra.mxu0 %v1674
  %1732 = vmatpush.msra.mxu0 %v1671
  %1733 = vmatpush.msra.mxu0 %v1668
  %1734 = vmatpush.msra.mxu0 %v1665
  %1735 = vmatpush.msra.mxu0 %v1662
  %1736 = vmatpush.msra.mxu0 %v1659
  %1737 = vmatpush.msra.mxu0 %v1656
  %1738 = vmatpush.msra.mxu0 %v1653
  %1739 = vmatpush.msra.mxu0 %v1650
  %1740 = vmatpush.msra.mxu0 %v1647
  %1741 = vmatpush.msra.mxu0 %v1644
  %1742 = vmatpush.msra.mxu0 %v1641
  %1743 = vmatpush.msra.mxu0 %v1638
  %1744 = vmatpush.msra.mxu0 %v1635
  %1745 = vmatpush.msra.mxu0 %v1632
  %1746 = vmatpush.msra.mxu0 %v1629
  %1747 = vmatmul.f32.gmra.mxu0 %v1714
  %v1748 = vpop.f32.mrf.mxu0
  %v1749 = vadd.f32 0.0, %v1748
  %1750 = vmatmul.f32.gmra.mxu0 %v1719
  %v1751 = vpop.f32.mrf.mxu0
  %v1752 = vadd.f32 0.0, %v1751
  %1753 = vmatmul.f32.gmra.mxu0 %v1718
  %v1754 = vpop.f32.mrf.mxu0
  %v1755 = vadd.f32 0.0, %v1754
  %1756 = vdwg.mxu0
  %1757 = vmatpush.msra.mxu0 0.0
  %1758 = vmatpush.msra.mxu0 0.0
  %1759 = vmatpush.msra.mxu0 0.0
  %1760 = vmatpush.msra.mxu0 0.0
  %1761 = vmatpush.msra.mxu0 0.0
  %1762 = vmatpush.msra.mxu0 0.0
  %1763 = vmatpush.msra.mxu0 %v1704
  %1764 = vmatpush.msra.mxu0 %v1701
  %1765 = vmatpush.msra.mxu0 %v1698
  %1766 = vmatpush.msra.mxu0 %v1695
  %1767 = vmatpush.msra.mxu0 %v1692
  %1768 = vmatpush.msra.mxu0 %v1689
  %1769 = vmatpush.msra.mxu0 %v1686
  %1770 = vmatpush.msra.mxu0 %v1683
  %1771 = vmatpush.msra.mxu0 %v1680
  %1772 = vmatpush.msra.mxu0 %v1677
  %1773 = vmatmul.f32.gmra.mxu0 %v1725
  %v1774 = vpop.f32.mrf.mxu0
  %v1775 = vadd.f32 %v1749, %v1774
  %1776 = vmatmul.f32.gmra.mxu0 %v1727
  %v1777 = vpop.f32.mrf.mxu0
  %v1778 = vadd.f32 %v1752, %v1777
  %1779 = vmatmul.f32.gmra.mxu0 %v1729
  %v1780 = vpop.f32.mrf.mxu0
  %v1781 = vadd.f32 %v1755, %v1780
  %1782 = vdwg.mxu0
  %1783 = vmatpush.msra.mxu0 %v1675
  %1784 = vmatpush.msra.mxu0 %v1672
  %1785 = vmatpush.msra.mxu0 %v1669
  %1786 = vmatpush.msra.mxu0 %v1666
  %1787 = vmatpush.msra.mxu0 %v1663
  %1788 = vmatpush.msra.mxu0 %v1660
  %1789 = vmatpush.msra.mxu0 %v1657
  %1790 = vmatpush.msra.mxu0 %v1654
  %1791 = vmatpush.msra.mxu0 %v1651
  %1792 = vmatpush.msra.mxu0 %v1648
  %1793 = vmatpush.msra.mxu0 %v1645
  %1794 = vmatpush.msra.mxu0 %v1642
  %1795 = vmatpush.msra.mxu0 %v1639
  %1796 = vmatpush.msra.mxu0 %v1636
  %1797 = vmatpush.msra.mxu0 %v1633
  %1798 = vmatpush.msra.mxu0 %v1630
  %1799 = vmatmul.f32.gmra.mxu0 %v1714
  %v1800 = vpop.f32.mrf.mxu0
  %v1801 = vadd.f32 0.0, %v1800
  %1802 = vmatmul.f32.gmra.mxu0 %v1719
  %v1803 = vpop.f32.mrf.mxu0
  %v1804 = vadd.f32 0.0, %v1803
  %1805 = vmatmul.f32.gmra.mxu0 %v1718
  %v1806 = vpop.f32.mrf.mxu0
  %v1807 = vadd.f32 0.0, %v1806
  %1808 = vdwg.mxu0
  %1809 = vmatpush.msra.mxu0 0.0
  %1810 = vmatpush.msra.mxu0 0.0
  %1811 = vmatpush.msra.mxu0 0.0
  %1812 = vmatpush.msra.mxu0 0.0
  %1813 = vmatpush.msra.mxu0 0.0
  %1814 = vmatpush.msra.mxu0 0.0
  %1815 = vmatpush.msra.mxu0 %v1705
  %1816 = vmatpush.msra.mxu0 %v1702
  %1817 = vmatpush.msra.mxu0 %v1699
  %1818 = vmatpush.msra.mxu0 %v1696
  %1819 = vmatpush.msra.mxu0 %v1693
  %1820 = vmatpush.msra.mxu0 %v1690
  %1821 = vmatpush.msra.mxu0 %v1687
  %1822 = vmatpush.msra.mxu0 %v1684
  %1823 = vmatpush.msra.mxu0 %v1681
  %1824 = vmatpush.msra.mxu0 %v1678
  %1825 = vmatmul.f32.gmra.mxu0 %v1725
  %v1826 = vpop.f32.mrf.mxu0
  %v1827 = vadd.f32 %v1801, %v1826
  %1828 = vmatmul.f32.gmra.mxu0 %v1727
  %v1829 = vpop.f32.mrf.mxu0
  %v1830 = vadd.f32 %v1804, %v1829
  %1831 = vmatmul.f32.gmra.mxu0 %v1729
  %v1832 = vpop.f32.mrf.mxu0
  %v1833 = vadd.f32 %v1807, %v1832
  %1834 = vdwg.mxu0
  %1835 = vmatpush.msra.mxu0 %v1676
  %1836 = vmatpush.msra.mxu0 %v1673
  %1837 = vmatpush.msra.mxu0 %v1670
  %1838 = vmatpush.msra.mxu0 %v1667
  %1839 = vmatpush.msra.mxu0 %v1664
  %1840 = vmatpush.msra.mxu0 %v1661
  %1841 = vmatpush.msra.mxu0 %v1658
  %1842 = vmatpush.msra.mxu0 %v1655
  %1843 = vmatpush.msra.mxu0 %v1652
  %1844 = vmatpush.msra.mxu0 %v1649
  %1845 = vmatpush.msra.mxu0 %v1646
  %1846 = vmatpush.msra.mxu0 %v1643
  %1847 = vmatpush.msra.mxu0 %v1640
  %1848 = vmatpush.msra.mxu0 %v1637
  %1849 = vmatpush.msra.mxu0 %v1634
  %1850 = vmatpush.msra.mxu0 %v1631
  %1851 = vmatmul.f32.gmra.mxu0 %v1714
  %v1852 = vpop.f32.mrf.mxu0
  %v1853 = vadd.f32 0.0, %v1852
  %1854 = vmatmul.f32.gmra.mxu0 %v1719
  %v1855 = vpop.f32.mrf.mxu0
  %v1856 = vadd.f32 0.0, %v1855
  %1857 = vmatmul.f32.gmra.mxu0 %v1718
  %v1858 = vpop.f32.mrf.mxu0
  %v1859 = vadd.f32 0.0, %v1858
  %1860 = vdwg.mxu0
  %1861 = vmatpush.msra.mxu0 0.0
  %1862 = vmatpush.msra.mxu0 0.0
  %1863 = vmatpush.msra.mxu0 0.0
  %1864 = vmatpush.msra.mxu0 0.0
  %1865 = vmatpush.msra.mxu0 0.0
  %1866 = vmatpush.msra.mxu0 0.0
  %1867 = vmatpush.msra.mxu0 %v1706
  %1868 = vmatpush.msra.mxu0 %v1703
  %1869 = vmatpush.msra.mxu0 %v1700
  %1870 = vmatpush.msra.mxu0 %v1697
  %1871 = vmatpush.msra.mxu0 %v1694
  %1872 = vmatpush.msra.mxu0 %v1691
  %1873 = vmatpush.msra.mxu0 %v1688
  %1874 = vmatpush.msra.mxu0 %v1685
  %1875 = vmatpush.msra.mxu0 %v1682
  %1876 = vmatpush.msra.mxu0 %v1679
  %1877 = vmatmul.f32.gmra.mxu0 %v1725
  %v1878 = vpop.f32.mrf.mxu0
  %v1879 = vadd.f32 %v1853, %v1878
  %1880 = vmatmul.f32.gmra.mxu0 %v1727
  %v1881 = vpop.f32.mrf.mxu0
  %v1882 = vadd.f32 %v1856, %v1881
  %1883 = vmatmul.f32.gmra.mxu0 %v1729
  %v1884 = vpop.f32.mrf.mxu0
  %v1885 = vadd.f32 %v1859, %v1884
  %1886 = vdwg.mxu0
  %v1887 = vadd.f32 %v1512, %v1775
  %v1888 = vadd.f32 %v1564, %v1827
  %v1889 = vadd.f32 %v1616, %v1879
  %v1890 = vadd.f32 %v1515, %v1778
  %v1891 = vadd.f32 %v1567, %v1830
  %v1892 = vadd.f32 %v1619, %v1882
  %v1893 = vadd.f32 %v1518, %v1781
  %v1894 = vadd.f32 %v1570, %v1833
  %v1895 = vadd.f32 %v1622, %v1885
  %v1896 = vld [vmem:[#allocation2] sm:$0xf8]
  %v1897 = vld [vmem:[#allocation2 + $0x8] sm:$0xf8]
  %v1898 = vld [vmem:[#allocation2 + $0x10] sm:$0xff]
  %v1899 = vld [vmem:[#allocation2 + $0x18] sm:$0xff]
  %v1900 = vld [vmem:[#allocation2 + $0x20] sm:$0xff]
  %v1901 = vld [vmem:[#allocation2 + $0x28] sm:$0xff]
  %v1902 = vld [vmem:[#allocation2 + $0x30] sm:$0x1]
  %v1903 = vld [vmem:[#allocation2 + $0x38] sm:$0x1]
  %s1904 = scalar_lea.vmem %s2, 1872
  %v1905 = vld [vmem:[%s1904] sm:$0xff]
  %v1906 = vld [vmem:[%s1904 + $0x8] sm:$0xff]
  %v1907 = vld [vmem:[%s1904 + $0x10] sm:$0xff]
  %v1908 = vld [vmem:[%s1904 + $0x18] sm:$0xff]
  %v1909 = vld [vmem:[%s1904 + $0x20] sm:$0xff]
  %v1910 = vld [vmem:[%s1904 + $0x28] sm:$0xff]
  %v1911 = vld [vmem:[%s1904 + $0x30] sm:$0xff]
  %v1912 = vld [vmem:[%s1904 + $0x38] sm:$0xff]
  %v1913 = vld [vmem:[%s1904 + $0x40] sm:$0xff]
  %v1914 = vld [vmem:[%s1904 + $0x48] sm:$0xff]
  %v1915 = vld [vmem:[%s1904 + $0x50] sm:$0xff]
  %v1916 = vld [vmem:[%s1904 + $0x58] sm:$0xff]
  %v1917 = vld [vmem:[%s1904 + $0x60] sm:$0xff]
  %v1918 = vld [vmem:[%s1904 + $0x68] sm:$0xff]
  %v1919 = vld [vmem:[%s1904 + $0x70] sm:$0xff]
  %v1920 = vld [vmem:[%s1904 + $0x78] sm:$0xff]
  %v1921 = vld [vmem:[%s1904 + $0x80] sm:$0xff]
  %v1922 = vld [vmem:[%s1904 + $0x88] sm:$0xff]
  %v1923 = vld [vmem:[%s1904 + $0x90] sm:$0xff]
  %v1924 = vld [vmem:[%s1904 + $0x98] sm:$0xff]
  %v1925 = vld [vmem:[%s1904 + $0xa0] sm:$0xff]
  %v1926 = vld [vmem:[%s1904 + $0xa8] sm:$0xff]
  %v1927 = vld [vmem:[%s1904 + $0xb0] sm:$0xff]
  %v1928 = vld [vmem:[%s1904 + $0xb8] sm:$0xff]
  %v1929 = vld [vmem:[%s1904 + $0xc0] sm:$0xff]
  %v1930 = vld [vmem:[%s1904 + $0xc8] sm:$0xff]
  %v1931 = vld [vmem:[%s1904 + $0xd0] sm:$0xff]
  %v1932 = vld [vmem:[%s1904 + $0xd8] sm:$0xff]
  %v1933 = vld [vmem:[%s1904 + $0xe0] sm:$0xff]
  %v1934 = vld [vmem:[%s1904 + $0xe8] sm:$0xff]
  %v1935 = vld [vmem:[%s1904 + $0xf0] sm:$0xff]
  %v1936 = vld [vmem:[%s1904 + $0xf8] sm:$0xff]
  %v1937 = vld [vmem:[%s1904 + $0x100] sm:$0xff]
  %v1938 = vld [vmem:[%s1904 + $0x108] sm:$0xff]
  %v1939 = vld [vmem:[%s1904 + $0x110] sm:$0xff]
  %v1940 = vld [vmem:[%s1904 + $0x118] sm:$0xff]
  %v1941 = vld [vmem:[%s1904 + $0x120] sm:$0xff]
  %v1942 = vld [vmem:[%s1904 + $0x128] sm:$0xff]
  %v1943 = vld [vmem:[%s1904 + $0x130] sm:$0xff]
  %v1944 = vld [vmem:[%s1904 + $0x138] sm:$0xff]
  %v1945 = vld [vmem:[%s1904 + $0x140] sm:$0xff]
  %v1946 = vld [vmem:[%s1904 + $0x148] sm:$0xff]
  %v1947 = vld [vmem:[%s1904 + $0x150] sm:$0xff]
  %v1948 = vld [vmem:[%s1904 + $0x158] sm:$0xff]
  %v1949 = vld [vmem:[%s1904 + $0x160] sm:$0xff]
  %v1950 = vld [vmem:[%s1904 + $0x168] sm:$0xff]
  %v1951 = vld [vmem:[%s1904 + $0x170] sm:$0xff]
  %v1952 = vld [vmem:[%s1904 + $0x178] sm:$0xff]
  %v1953 = vld [vmem:[%s1904 + $0x180] sm:$0xff]
  %v1954 = vld [vmem:[%s1904 + $0x188] sm:$0xff]
  %v1955 = vld [vmem:[%s1904 + $0x190] sm:$0xff]
  %v1956 = vld [vmem:[%s1904 + $0x198] sm:$0xff]
  %v1957 = vld [vmem:[%s1904 + $0x1a0] sm:$0xff]
  %v1958 = vld [vmem:[%s1904 + $0x1a8] sm:$0xff]
  %v1959 = vld [vmem:[%s1904 + $0x1b0] sm:$0xff]
  %v1960 = vld [vmem:[%s1904 + $0x1b8] sm:$0xff]
  %v1961 = vld [vmem:[%s1904 + $0x1c0] sm:$0xff]
  %v1962 = vld [vmem:[%s1904 + $0x1c8] sm:$0xff]
  %v1963 = vld [vmem:[%s1904 + $0x1d0] sm:$0xff]
  %v1964 = vld [vmem:[%s1904 + $0x1d8] sm:$0xff]
  %v1965 = vld [vmem:[%s1904 + $0x1e0] sm:$0xff]
  %v1966 = vld [vmem:[%s1904 + $0x1e8] sm:$0xff]
  %v1967 = vld [vmem:[%s1904 + $0x1f0] sm:$0xff]
  %v1968 = vld [vmem:[%s1904 + $0x1f8] sm:$0xff]
  %v1969 = vld [vmem:[%s1904 + $0x200] sm:$0xff]
  %v1970 = vld [vmem:[%s1904 + $0x208] sm:$0xff]
  %v1971 = vld [vmem:[%s1904 + $0x210] sm:$0xff]
  %v1972 = vld [vmem:[%s1904 + $0x218] sm:$0xff]
  %v1973 = vld [vmem:[%s1904 + $0x220] sm:$0xff]
  %v1974 = vld [vmem:[%s1904 + $0x228] sm:$0xff]
  %v1975 = vld [vmem:[%s1904 + $0x230] sm:$0xff]
  %v1976 = vld [vmem:[%s1904 + $0x238] sm:$0xff]
  %v1977 = vld [vmem:[%s1904 + $0x240] sm:$0xff]
  %v1978 = vld [vmem:[%s1904 + $0x248] sm:$0xff]
  %v1979 = vld [vmem:[%s1904 + $0x250] sm:$0xff]
  %v1980 = vld [vmem:[%s1904 + $0x258] sm:$0xff]
  %v1981 = vld [vmem:[%s1904 + $0x260] sm:$0xff]
  %v1982 = vld [vmem:[%s1904 + $0x268] sm:$0xff]
  %vm1991 = vcmask 1044480
  %v1992 = vrot.slane %v1896, 3
  %v1993 = vrot.slane %v1898, 3
  %v1994 = vsel %vm1991, %v1992, %v1993
  %v1995 = vrot.slane %v1897, 3
  %v1996 = vrot.slane %v1899, 3
  %v1997 = vsel %vm1991, %v1995, %v1996
  %v1998 = vrot.slane %v1900, 3
  %v1999 = vsel %vm1991, %v1993, %v1998
  %v2000 = vrot.slane %v1901, 3
  %v2001 = vsel %vm1991, %v1996, %v2000
  %v2002 = vrot.slane %v1902, 3
  %v2003 = vsel %vm1991, %v1998, %v2002
  %v2004 = vrot.slane %v1903, 3
  %v2005 = vsel %vm1991, %v2000, %v2004
  %v2009 = vsel %vm333, %v1997, 0
  %v2011 = vsel %vm333, %v2001, 0
  %v2013 = vsel %vm333, %v2005, 0
  %2015 = vmatpush.msra.mxu0 %v1950
  %2016 = vmatpush.msra.mxu0 %v1947
  %2017 = vmatpush.msra.mxu0 %v1944
  %2018 = vmatpush.msra.mxu0 %v1941
  %2019 = vmatpush.msra.mxu0 %v1938
  %2020 = vmatpush.msra.mxu0 %v1935
  %2021 = vmatpush.msra.mxu0 %v1932
  %2022 = vmatpush.msra.mxu0 %v1929
  %2023 = vmatpush.msra.mxu0 %v1926
  %2024 = vmatpush.msra.mxu0 %v1923
  %2025 = vmatpush.msra.mxu0 %v1920
  %2026 = vmatpush.msra.mxu0 %v1917
  %2027 = vmatpush.msra.mxu0 %v1914
  %2028 = vmatpush.msra.mxu0 %v1911
  %2029 = vmatpush.msra.mxu0 %v1908
  %2030 = vmatpush.msra.mxu0 %v1905
  %2031 = vmatmul.f32.gmra.mxu0 %v1994
  %v2032 = vpop.f32.mrf.mxu0
  %v2033 = vadd.f32 0.0, %v2032
  %2034 = vmatmul.f32.gmra.mxu0 %v1999
  %v2035 = vpop.f32.mrf.mxu0
  %v2036 = vadd.f32 0.0, %v2035
  %2037 = vmatmul.f32.gmra.mxu0 %v2003
  %v2038 = vpop.f32.mrf.mxu0
  %v2039 = vadd.f32 0.0, %v2038
  %2040 = vdwg.mxu0
  %2041 = vmatpush.msra.mxu0 0.0
  %2042 = vmatpush.msra.mxu0 0.0
  %2043 = vmatpush.msra.mxu0 0.0
  %2044 = vmatpush.msra.mxu0 0.0
  %2045 = vmatpush.msra.mxu0 0.0
  %2046 = vmatpush.msra.mxu0 0.0
  %2047 = vmatpush.msra.mxu0 %v1980
  %2048 = vmatpush.msra.mxu0 %v1977
  %2049 = vmatpush.msra.mxu0 %v1974
  %2050 = vmatpush.msra.mxu0 %v1971
  %2051 = vmatpush.msra.mxu0 %v1968
  %2052 = vmatpush.msra.mxu0 %v1965
  %2053 = vmatpush.msra.mxu0 %v1962
  %2054 = vmatpush.msra.mxu0 %v1959
  %2055 = vmatpush.msra.mxu0 %v1956
  %2056 = vmatpush.msra.mxu0 %v1953
  %2057 = vmatmul.f32.gmra.mxu0 %v2009
  %v2058 = vpop.f32.mrf.mxu0
  %v2059 = vadd.f32 %v2033, %v2058
  %2060 = vmatmul.f32.gmra.mxu0 %v2011
  %v2061 = vpop.f32.mrf.mxu0
  %v2062 = vadd.f32 %v2036, %v2061
  %2063 = vmatmul.f32.gmra.mxu0 %v2013
  %v2064 = vpop.f32.mrf.mxu0
  %v2065 = vadd.f32 %v2039, %v2064
  %2066 = vdwg.mxu0
  %2067 = vmatpush.msra.mxu0 %v1951
  %2068 = vmatpush.msra.mxu0 %v1948
  %2069 = vmatpush.msra.mxu0 %v1945
  %2070 = vmatpush.msra.mxu0 %v1942
  %2071 = vmatpush.msra.mxu0 %v1939
  %2072 = vmatpush.msra.mxu0 %v1936
  %2073 = vmatpush.msra.mxu0 %v1933
  %2074 = vmatpush.msra.mxu0 %v1930
  %2075 = vmatpush.msra.mxu0 %v1927
  %2076 = vmatpush.msra.mxu0 %v1924
  %2077 = vmatpush.msra.mxu0 %v1921
  %2078 = vmatpush.msra.mxu0 %v1918
  %2079 = vmatpush.msra.mxu0 %v1915
  %2080 = vmatpush.msra.mxu0 %v1912
  %2081 = vmatpush.msra.mxu0 %v1909
  %2082 = vmatpush.msra.mxu0 %v1906
  %2083 = vmatmul.f32.gmra.mxu0 %v1994
  %v2084 = vpop.f32.mrf.mxu0
  %v2085 = vadd.f32 0.0, %v2084
  %2086 = vmatmul.f32.gmra.mxu0 %v1999
  %v2087 = vpop.f32.mrf.mxu0
  %v2088 = vadd.f32 0.0, %v2087
  %2089 = vmatmul.f32.gmra.mxu0 %v2003
  %v2090 = vpop.f32.mrf.mxu0
  %v2091 = vadd.f32 0.0, %v2090
  %2092 = vdwg.mxu0
  %2093 = vmatpush.msra.mxu0 0.0
  %2094 = vmatpush.msra.mxu0 0.0
  %2095 = vmatpush.msra.mxu0 0.0
  %2096 = vmatpush.msra.mxu0 0.0
  %2097 = vmatpush.msra.mxu0 0.0
  %2098 = vmatpush.msra.mxu0 0.0
  %2099 = vmatpush.msra.mxu0 %v1981
  %2100 = vmatpush.msra.mxu0 %v1978
  %2101 = vmatpush.msra.mxu0 %v1975
  %2102 = vmatpush.msra.mxu0 %v1972
  %2103 = vmatpush.msra.mxu0 %v1969
  %2104 = vmatpush.msra.mxu0 %v1966
  %2105 = vmatpush.msra.mxu0 %v1963
  %2106 = vmatpush.msra.mxu0 %v1960
  %2107 = vmatpush.msra.mxu0 %v1957
  %2108 = vmatpush.msra.mxu0 %v1954
  %2109 = vmatmul.f32.gmra.mxu0 %v2009
  %v2110 = vpop.f32.mrf.mxu0
  %v2111 = vadd.f32 %v2085, %v2110
  %2112 = vmatmul.f32.gmra.mxu0 %v2011
  %v2113 = vpop.f32.mrf.mxu0
  %v2114 = vadd.f32 %v2088, %v2113
  %2115 = vmatmul.f32.gmra.mxu0 %v2013
  %v2116 = vpop.f32.mrf.mxu0
  %v2117 = vadd.f32 %v2091, %v2116
  %2118 = vdwg.mxu0
  %2119 = vmatpush.msra.mxu0 %v1952
  %2120 = vmatpush.msra.mxu0 %v1949
  %2121 = vmatpush.msra.mxu0 %v1946
  %2122 = vmatpush.msra.mxu0 %v1943
  %2123 = vmatpush.msra.mxu0 %v1940
  %2124 = vmatpush.msra.mxu0 %v1937
  %2125 = vmatpush.msra.mxu0 %v1934
  %2126 = vmatpush.msra.mxu0 %v1931
  %2127 = vmatpush.msra.mxu0 %v1928
  %2128 = vmatpush.msra.mxu0 %v1925
  %2129 = vmatpush.msra.mxu0 %v1922
  %2130 = vmatpush.msra.mxu0 %v1919
  %2131 = vmatpush.msra.mxu0 %v1916
  %2132 = vmatpush.msra.mxu0 %v1913
  %2133 = vmatpush.msra.mxu0 %v1910
  %2134 = vmatpush.msra.mxu0 %v1907
  %2135 = vmatmul.f32.gmra.mxu0 %v1994
  %v2136 = vpop.f32.mrf.mxu0
  %v2137 = vadd.f32 0.0, %v2136
  %2138 = vmatmul.f32.gmra.mxu0 %v1999
  %v2139 = vpop.f32.mrf.mxu0
  %v2140 = vadd.f32 0.0, %v2139
  %2141 = vmatmul.f32.gmra.mxu0 %v2003
  %v2142 = vpop.f32.mrf.mxu0
  %v2143 = vadd.f32 0.0, %v2142
  %2144 = vdwg.mxu0
  %2145 = vmatpush.msra.mxu0 0.0
  %2146 = vmatpush.msra.mxu0 0.0
  %2147 = vmatpush.msra.mxu0 0.0
  %2148 = vmatpush.msra.mxu0 0.0
  %2149 = vmatpush.msra.mxu0 0.0
  %2150 = vmatpush.msra.mxu0 0.0
  %2151 = vmatpush.msra.mxu0 %v1982
  %2152 = vmatpush.msra.mxu0 %v1979
  %2153 = vmatpush.msra.mxu0 %v1976
  %2154 = vmatpush.msra.mxu0 %v1973
  %2155 = vmatpush.msra.mxu0 %v1970
  %2156 = vmatpush.msra.mxu0 %v1967
  %2157 = vmatpush.msra.mxu0 %v1964
  %2158 = vmatpush.msra.mxu0 %v1961
  %2159 = vmatpush.msra.mxu0 %v1958
  %2160 = vmatpush.msra.mxu0 %v1955
  %2161 = vmatmul.f32.gmra.mxu0 %v2009
  %v2162 = vpop.f32.mrf.mxu0
  %v2163 = vadd.f32 %v2137, %v2162
  %2164 = vmatmul.f32.gmra.mxu0 %v2011
  %v2165 = vpop.f32.mrf.mxu0
  %v2166 = vadd.f32 %v2140, %v2165
  %2167 = vmatmul.f32.gmra.mxu0 %v2013
  %v2168 = vpop.f32.mrf.mxu0
  %v2169 = vadd.f32 %v2143, %v2168
  %2170 = vdwg.mxu0
  %v2171 = vadd.f32 %v1887, %v2059
  %v2172 = vadd.f32 %v1888, %v2111
  %v2173 = vadd.f32 %v1889, %v2163
  %v2174 = vadd.f32 %v1890, %v2062
  %v2175 = vadd.f32 %v1891, %v2114
  %v2176 = vadd.f32 %v1892, %v2166
  %v2177 = vadd.f32 %v1893, %v2065
  %v2178 = vadd.f32 %v1894, %v2117
  %v2179 = vadd.f32 %v1895, %v2169
  %v2180 = vld [vmem:[#allocation2] sm:$0xf0]
  %v2181 = vld [vmem:[#allocation2 + $0x8] sm:$0xf0]
  %v2182 = vld [vmem:[#allocation2 + $0x30] sm:$0x3]
  %v2183 = vld [vmem:[#allocation2 + $0x38] sm:$0x3]
  %s2184 = scalar_lea.vmem %s2, 2496
  %v2185 = vld [vmem:[%s2184] sm:$0xff]
  %v2186 = vld [vmem:[%s2184 + $0x8] sm:$0xff]
  %v2187 = vld [vmem:[%s2184 + $0x10] sm:$0xff]
  %v2188 = vld [vmem:[%s2184 + $0x18] sm:$0xff]
  %v2189 = vld [vmem:[%s2184 + $0x20] sm:$0xff]
  %v2190 = vld [vmem:[%s2184 + $0x28] sm:$0xff]
  %v2191 = vld [vmem:[%s2184 + $0x30] sm:$0xff]
  %v2192 = vld [vmem:[%s2184 + $0x38] sm:$0xff]
  %v2193 = vld [vmem:[%s2184 + $0x40] sm:$0xff]
  %v2194 = vld [vmem:[%s2184 + $0x48] sm:$0xff]
  %v2195 = vld [vmem:[%s2184 + $0x50] sm:$0xff]
  %v2196 = vld [vmem:[%s2184 + $0x58] sm:$0xff]
  %v2197 = vld [vmem:[%s2184 + $0x60] sm:$0xff]
  %v2198 = vld [vmem:[%s2184 + $0x68] sm:$0xff]
  %v2199 = vld [vmem:[%s2184 + $0x70] sm:$0xff]
  %v2200 = vld [vmem:[%s2184 + $0x78] sm:$0xff]
  %v2201 = vld [vmem:[%s2184 + $0x80] sm:$0xff]
  %v2202 = vld [vmem:[%s2184 + $0x88] sm:$0xff]
  %v2203 = vld [vmem:[%s2184 + $0x90] sm:$0xff]
  %v2204 = vld [vmem:[%s2184 + $0x98] sm:$0xff]
  %v2205 = vld [vmem:[%s2184 + $0xa0] sm:$0xff]
  %v2206 = vld [vmem:[%s2184 + $0xa8] sm:$0xff]
  %v2207 = vld [vmem:[%s2184 + $0xb0] sm:$0xff]
  %v2208 = vld [vmem:[%s2184 + $0xb8] sm:$0xff]
  %v2209 = vld [vmem:[%s2184 + $0xc0] sm:$0xff]
  %v2210 = vld [vmem:[%s2184 + $0xc8] sm:$0xff]
  %v2211 = vld [vmem:[%s2184 + $0xd0] sm:$0xff]
  %v2212 = vld [vmem:[%s2184 + $0xd8] sm:$0xff]
  %v2213 = vld [vmem:[%s2184 + $0xe0] sm:$0xff]
  %v2214 = vld [vmem:[%s2184 + $0xe8] sm:$0xff]
  %v2215 = vld [vmem:[%s2184 + $0xf0] sm:$0xff]
  %v2216 = vld [vmem:[%s2184 + $0xf8] sm:$0xff]
  %v2217 = vld [vmem:[%s2184 + $0x100] sm:$0xff]
  %v2218 = vld [vmem:[%s2184 + $0x108] sm:$0xff]
  %v2219 = vld [vmem:[%s2184 + $0x110] sm:$0xff]
  %v2220 = vld [vmem:[%s2184 + $0x118] sm:$0xff]
  %v2221 = vld [vmem:[%s2184 + $0x120] sm:$0xff]
  %v2222 = vld [vmem:[%s2184 + $0x128] sm:$0xff]
  %v2223 = vld [vmem:[%s2184 + $0x130] sm:$0xff]
  %v2224 = vld [vmem:[%s2184 + $0x138] sm:$0xff]
  %v2225 = vld [vmem:[%s2184 + $0x140] sm:$0xff]
  %v2226 = vld [vmem:[%s2184 + $0x148] sm:$0xff]
  %v2227 = vld [vmem:[%s2184 + $0x150] sm:$0xff]
  %v2228 = vld [vmem:[%s2184 + $0x158] sm:$0xff]
  %v2229 = vld [vmem:[%s2184 + $0x160] sm:$0xff]
  %v2230 = vld [vmem:[%s2184 + $0x168] sm:$0xff]
  %v2231 = vld [vmem:[%s2184 + $0x170] sm:$0xff]
  %v2232 = vld [vmem:[%s2184 + $0x178] sm:$0xff]
  %v2233 = vld [vmem:[%s2184 + $0x180] sm:$0xff]
  %v2234 = vld [vmem:[%s2184 + $0x188] sm:$0xff]
  %v2235 = vld [vmem:[%s2184 + $0x190] sm:$0xff]
  %v2236 = vld [vmem:[%s2184 + $0x198] sm:$0xff]
  %v2237 = vld [vmem:[%s2184 + $0x1a0] sm:$0xff]
  %v2238 = vld [vmem:[%s2184 + $0x1a8] sm:$0xff]
  %v2239 = vld [vmem:[%s2184 + $0x1b0] sm:$0xff]
  %v2240 = vld [vmem:[%s2184 + $0x1b8] sm:$0xff]
  %v2241 = vld [vmem:[%s2184 + $0x1c0] sm:$0xff]
  %v2242 = vld [vmem:[%s2184 + $0x1c8] sm:$0xff]
  %v2243 = vld [vmem:[%s2184 + $0x1d0] sm:$0xff]
  %v2244 = vld [vmem:[%s2184 + $0x1d8] sm:$0xff]
  %v2245 = vld [vmem:[%s2184 + $0x1e0] sm:$0xff]
  %v2246 = vld [vmem:[%s2184 + $0x1e8] sm:$0xff]
  %v2247 = vld [vmem:[%s2184 + $0x1f0] sm:$0xff]
  %v2248 = vld [vmem:[%s2184 + $0x1f8] sm:$0xff]
  %v2249 = vld [vmem:[%s2184 + $0x200] sm:$0xff]
  %v2250 = vld [vmem:[%s2184 + $0x208] sm:$0xff]
  %v2251 = vld [vmem:[%s2184 + $0x210] sm:$0xff]
  %v2252 = vld [vmem:[%s2184 + $0x218] sm:$0xff]
  %v2253 = vld [vmem:[%s2184 + $0x220] sm:$0xff]
  %v2254 = vld [vmem:[%s2184 + $0x228] sm:$0xff]
  %v2255 = vld [vmem:[%s2184 + $0x230] sm:$0xff]
  %v2256 = vld [vmem:[%s2184 + $0x238] sm:$0xff]
  %v2257 = vld [vmem:[%s2184 + $0x240] sm:$0xff]
  %v2258 = vld [vmem:[%s2184 + $0x248] sm:$0xff]
  %v2259 = vld [vmem:[%s2184 + $0x250] sm:$0xff]
  %v2260 = vld [vmem:[%s2184 + $0x258] sm:$0xff]
  %v2261 = vld [vmem:[%s2184 + $0x260] sm:$0xff]
  %v2262 = vld [vmem:[%s2184 + $0x268] sm:$0xff]
  %v2267 = vrot.slane %v2180, 4
  %v2268 = vrot.slane %v1898, 4
  %v2269 = vsel %vm94, %v2267, %v2268
  %v2270 = vrot.slane %v2181, 4
  %v2271 = vrot.slane %v1899, 4
  %v2272 = vsel %vm94, %v2270, %v2271
  %v2273 = vrot.slane %v1900, 4
  %v2274 = vsel %vm94, %v2268, %v2273
  %v2275 = vrot.slane %v1901, 4
  %v2276 = vsel %vm94, %v2271, %v2275
  %v2277 = vrot.slane %v2182, 4
  %v2278 = vsel %vm94, %v2273, %v2277
  %v2279 = vrot.slane %v2183, 4
  %v2280 = vsel %vm94, %v2275, %v2279
  %v2284 = vsel %vm333, %v2272, 0
  %v2286 = vsel %vm333, %v2276, 0
  %v2288 = vsel %vm333, %v2280, 0
  %2290 = vmatpush.msra.mxu0 %v2230
  %2291 = vmatpush.msra.mxu0 %v2227
  %2292 = vmatpush.msra.mxu0 %v2224
  %2293 = vmatpush.msra.mxu0 %v2221
  %2294 = vmatpush.msra.mxu0 %v2218
  %2295 = vmatpush.msra.mxu0 %v2215
  %2296 = vmatpush.msra.mxu0 %v2212
  %2297 = vmatpush.msra.mxu0 %v2209
  %2298 = vmatpush.msra.mxu0 %v2206
  %2299 = vmatpush.msra.mxu0 %v2203
  %2300 = vmatpush.msra.mxu0 %v2200
  %2301 = vmatpush.msra.mxu0 %v2197
  %2302 = vmatpush.msra.mxu0 %v2194
  %2303 = vmatpush.msra.mxu0 %v2191
  %2304 = vmatpush.msra.mxu0 %v2188
  %2305 = vmatpush.msra.mxu0 %v2185
  %2306 = vmatmul.f32.gmra.mxu0 %v2269
  %v2307 = vpop.f32.mrf.mxu0
  %v2308 = vadd.f32 0.0, %v2307
  %2309 = vmatmul.f32.gmra.mxu0 %v2274
  %v2310 = vpop.f32.mrf.mxu0
  %v2311 = vadd.f32 0.0, %v2310
  %2312 = vmatmul.f32.gmra.mxu0 %v2278
  %v2313 = vpop.f32.mrf.mxu0
  %v2314 = vadd.f32 0.0, %v2313
  %2315 = vdwg.mxu0
  %2316 = vmatpush.msra.mxu0 0.0
  %2317 = vmatpush.msra.mxu0 0.0
  %2318 = vmatpush.msra.mxu0 0.0
  %2319 = vmatpush.msra.mxu0 0.0
  %2320 = vmatpush.msra.mxu0 0.0
  %2321 = vmatpush.msra.mxu0 0.0
  %2322 = vmatpush.msra.mxu0 %v2260
  %2323 = vmatpush.msra.mxu0 %v2257
  %2324 = vmatpush.msra.mxu0 %v2254
  %2325 = vmatpush.msra.mxu0 %v2251
  %2326 = vmatpush.msra.mxu0 %v2248
  %2327 = vmatpush.msra.mxu0 %v2245
  %2328 = vmatpush.msra.mxu0 %v2242
  %2329 = vmatpush.msra.mxu0 %v2239
  %2330 = vmatpush.msra.mxu0 %v2236
  %2331 = vmatpush.msra.mxu0 %v2233
  %2332 = vmatmul.f32.gmra.mxu0 %v2284
  %v2333 = vpop.f32.mrf.mxu0
  %v2334 = vadd.f32 %v2308, %v2333
  %2335 = vmatmul.f32.gmra.mxu0 %v2286
  %v2336 = vpop.f32.mrf.mxu0
  %v2337 = vadd.f32 %v2311, %v2336
  %2338 = vmatmul.f32.gmra.mxu0 %v2288
  %v2339 = vpop.f32.mrf.mxu0
  %v2340 = vadd.f32 %v2314, %v2339
  %2341 = vdwg.mxu0
  %2342 = vmatpush.msra.mxu0 %v2231
  %2343 = vmatpush.msra.mxu0 %v2228
  %2344 = vmatpush.msra.mxu0 %v2225
  %2345 = vmatpush.msra.mxu0 %v2222
  %2346 = vmatpush.msra.mxu0 %v2219
  %2347 = vmatpush.msra.mxu0 %v2216
  %2348 = vmatpush.msra.mxu0 %v2213
  %2349 = vmatpush.msra.mxu0 %v2210
  %2350 = vmatpush.msra.mxu0 %v2207
  %2351 = vmatpush.msra.mxu0 %v2204
  %2352 = vmatpush.msra.mxu0 %v2201
  %2353 = vmatpush.msra.mxu0 %v2198
  %2354 = vmatpush.msra.mxu0 %v2195
  %2355 = vmatpush.msra.mxu0 %v2192
  %2356 = vmatpush.msra.mxu0 %v2189
  %2357 = vmatpush.msra.mxu0 %v2186
  %2358 = vmatmul.f32.gmra.mxu0 %v2269
  %v2359 = vpop.f32.mrf.mxu0
  %v2360 = vadd.f32 0.0, %v2359
  %2361 = vmatmul.f32.gmra.mxu0 %v2274
  %v2362 = vpop.f32.mrf.mxu0
  %v2363 = vadd.f32 0.0, %v2362
  %2364 = vmatmul.f32.gmra.mxu0 %v2278
  %v2365 = vpop.f32.mrf.mxu0
  %v2366 = vadd.f32 0.0, %v2365
  %2367 = vdwg.mxu0
  %2368 = vmatpush.msra.mxu0 0.0
  %2369 = vmatpush.msra.mxu0 0.0
  %2370 = vmatpush.msra.mxu0 0.0
  %2371 = vmatpush.msra.mxu0 0.0
  %2372 = vmatpush.msra.mxu0 0.0
  %2373 = vmatpush.msra.mxu0 0.0
  %2374 = vmatpush.msra.mxu0 %v2261
  %2375 = vmatpush.msra.mxu0 %v2258
  %2376 = vmatpush.msra.mxu0 %v2255
  %2377 = vmatpush.msra.mxu0 %v2252
  %2378 = vmatpush.msra.mxu0 %v2249
  %2379 = vmatpush.msra.mxu0 %v2246
  %2380 = vmatpush.msra.mxu0 %v2243
  %2381 = vmatpush.msra.mxu0 %v2240
  %2382 = vmatpush.msra.mxu0 %v2237
  %2383 = vmatpush.msra.mxu0 %v2234
  %2384 = vmatmul.f32.gmra.mxu0 %v2284
  %v2385 = vpop.f32.mrf.mxu0
  %v2386 = vadd.f32 %v2360, %v2385
  %2387 = vmatmul.f32.gmra.mxu0 %v2286
  %v2388 = vpop.f32.mrf.mxu0
  %v2389 = vadd.f32 %v2363, %v2388
  %2390 = vmatmul.f32.gmra.mxu0 %v2288
  %v2391 = vpop.f32.mrf.mxu0
  %v2392 = vadd.f32 %v2366, %v2391
  %2393 = vdwg.mxu0
  %2394 = vmatpush.msra.mxu0 %v2232
  %2395 = vmatpush.msra.mxu0 %v2229
  %2396 = vmatpush.msra.mxu0 %v2226
  %2397 = vmatpush.msra.mxu0 %v2223
  %2398 = vmatpush.msra.mxu0 %v2220
  %2399 = vmatpush.msra.mxu0 %v2217
  %2400 = vmatpush.msra.mxu0 %v2214
  %2401 = vmatpush.msra.mxu0 %v2211
  %2402 = vmatpush.msra.mxu0 %v2208
  %2403 = vmatpush.msra.mxu0 %v2205
  %2404 = vmatpush.msra.mxu0 %v2202
  %2405 = vmatpush.msra.mxu0 %v2199
  %2406 = vmatpush.msra.mxu0 %v2196
  %2407 = vmatpush.msra.mxu0 %v2193
  %2408 = vmatpush.msra.mxu0 %v2190
  %2409 = vmatpush.msra.mxu0 %v2187
  %2410 = vmatmul.f32.gmra.mxu0 %v2269
  %v2411 = vpop.f32.mrf.mxu0
  %v2412 = vadd.f32 0.0, %v2411
  %2413 = vmatmul.f32.gmra.mxu0 %v2274
  %v2414 = vpop.f32.mrf.mxu0
  %v2415 = vadd.f32 0.0, %v2414
  %2416 = vmatmul.f32.gmra.mxu0 %v2278
  %v2417 = vpop.f32.mrf.mxu0
  %v2418 = vadd.f32 0.0, %v2417
  %2419 = vdwg.mxu0
  %2420 = vmatpush.msra.mxu0 0.0
  %2421 = vmatpush.msra.mxu0 0.0
  %2422 = vmatpush.msra.mxu0 0.0
  %2423 = vmatpush.msra.mxu0 0.0
  %2424 = vmatpush.msra.mxu0 0.0
  %2425 = vmatpush.msra.mxu0 0.0
  %2426 = vmatpush.msra.mxu0 %v2262
  %2427 = vmatpush.msra.mxu0 %v2259
  %2428 = vmatpush.msra.mxu0 %v2256
  %2429 = vmatpush.msra.mxu0 %v2253
  %2430 = vmatpush.msra.mxu0 %v2250
  %2431 = vmatpush.msra.mxu0 %v2247
  %2432 = vmatpush.msra.mxu0 %v2244
  %2433 = vmatpush.msra.mxu0 %v2241
  %2434 = vmatpush.msra.mxu0 %v2238
  %2435 = vmatpush.msra.mxu0 %v2235
  %2436 = vmatmul.f32.gmra.mxu0 %v2284
  %v2437 = vpop.f32.mrf.mxu0
  %v2438 = vadd.f32 %v2412, %v2437
  %2439 = vmatmul.f32.gmra.mxu0 %v2286
  %v2440 = vpop.f32.mrf.mxu0
  %v2441 = vadd.f32 %v2415, %v2440
  %2442 = vmatmul.f32.gmra.mxu0 %v2288
  %v2443 = vpop.f32.mrf.mxu0
  %v2444 = vadd.f32 %v2418, %v2443
  %2445 = vdwg.mxu0
  %v2446 = vadd.f32 %v2171, %v2334
  %v2447 = vadd.f32 %v2172, %v2386
  %v2448 = vadd.f32 %v2173, %v2438
  %v2449 = vadd.f32 %v2174, %v2337
  %v2450 = vadd.f32 %v2175, %v2389
  %v2451 = vadd.f32 %v2176, %v2441
  %v2452 = vadd.f32 %v2177, %v2340
  %v2453 = vadd.f32 %v2178, %v2392
  %v2454 = vadd.f32 %v2179, %v2444
  %2455 = vst [vmem:[#allocation3] sm:$0xff] %v2446
  %2456 = vst [vmem:[#allocation3 + $0x8] sm:$0xff] %v2447
  %vm2457 = vcmask 785408
  %2458 = vst.msk [vmem:[#allocation3 + $0x10] sm:$0xff] %vm2457, %v2448
  %2459 = vst [vmem:[#allocation3 + $0x18] sm:$0xff] %v2449
  %2460 = vst [vmem:[#allocation3 + $0x20] sm:$0xff] %v2450
  %2461 = vst.msk [vmem:[#allocation3 + $0x28] sm:$0xff] %vm2457, %v2451
  %2462 = vst [vmem:[#allocation3 + $0x30] sm:$0x3f] %v2452
  %2463 = vst [vmem:[#allocation3 + $0x38] sm:$0x3f] %v2453
  %vm2464 = vcmask 783360
  %2465 = vst.msk [vmem:[#allocation3 + $0x40] sm:$0x3f] %vm2464, %v2454
  %v2466 = vadd.f32 %v2446, %v2449
  %v2467 = vsel %vm1711, %v2452, 0.0
  %v2468 = vadd.f32 %v2466, %v2467
  %v2469 = vrot.slane %v2468, 4
  %v2470 = vadd.f32 %v2468, %v2469
  %v2471 = vrot.slane %v2470, 2
  %v2472 = vadd.f32 %v2470, %v2471
  %v2473 = vrot.slane %v2472, 1
  %v2474 = vadd.f32 %v2472, %v2473
  %v2475 = vadd.f32 %v2447, %v2450
  %v2476 = vsel %vm1711, %v2453, 0.0
  %v2477 = vadd.f32 %v2475, %v2476
  %v2478 = vrot.slane %v2477, 4
  %v2479 = vadd.f32 %v2477, %v2478
  %v2480 = vrot.slane %v2479, 2
  %v2481 = vadd.f32 %v2479, %v2480
  %v2482 = vrot.slane %v2481, 1
  %v2483 = vadd.f32 %v2481, %v2482
  %v2484 = vsel %vm2457, %v2448, 0.0
  %v2485 = vsel %vm2457, %v2451, 0.0
  %v2486 = vadd.f32 %v2484, %v2485
  %v2487 = vsel %vm2464, %v2454, 0.0
  %v2488 = vadd.f32 %v2486, %v2487
  %v2489 = vrot.slane %v2488, 4
  %v2490 = vadd.f32 %v2488, %v2489
  %v2491 = vrot.slane %v2490, 2
  %v2492 = vadd.f32 %v2490, %v2491
  %v2493 = vrot.slane %v2492, 1
  %v2494 = vadd.f32 %v2492, %v2493
  %v2495 = vadd.f32 %v2474, 0.0
  %v2496 = vadd.f32 %v2483, 0.0
  %v2497 = vadd.f32 %v2494, 0.0
  %v2498 = vmul.f32 %v2446, %v2446
  %v2499 = vmul.f32 %v2447, %v2447
  %v2500 = vmul.f32 %v2448, %v2448
  %v2501 = vmul.f32 %v2449, %v2449
  %v2502 = vmul.f32 %v2450, %v2450
  %v2503 = vmul.f32 %v2451, %v2451
  %v2504 = vmul.f32 %v2452, %v2452
  %v2505 = vmul.f32 %v2453, %v2453
  %v2506 = vmul.f32 %v2454, %v2454
  %v2507 = vadd.f32 %v2498, %v2501
  %v2508 = vsel %vm1711, %v2504, 0.0
  %v2509 = vadd.f32 %v2507, %v2508
  %v2510 = vrot.slane %v2509, 4
  %v2511 = vadd.f32 %v2509, %v2510
  %v2512 = vrot.slane %v2511, 2
  %v2513 = vadd.f32 %v2511, %v2512
  %v2514 = vrot.slane %v2513, 1
  %v2515 = vadd.f32 %v2513, %v2514
  %v2516 = vadd.f32 %v2499, %v2502
  %v2517 = vsel %vm1711, %v2505, 0.0
  %v2518 = vadd.f32 %v2516, %v2517
  %v2519 = vrot.slane %v2518, 4
  %v2520 = vadd.f32 %v2518, %v2519
  %v2521 = vrot.slane %v2520, 2
  %v2522 = vadd.f32 %v2520, %v2521
  %v2523 = vrot.slane %v2522, 1
  %v2524 = vadd.f32 %v2522, %v2523
  %v2525 = vsel %vm2457, %v2500, 0.0
  %v2526 = vsel %vm2457, %v2503, 0.0
  %v2527 = vadd.f32 %v2525, %v2526
  %v2528 = vsel %vm2464, %v2506, 0.0
  %v2529 = vadd.f32 %v2527, %v2528
  %v2530 = vrot.slane %v2529, 4
  %v2531 = vadd.f32 %v2529, %v2530
  %v2532 = vrot.slane %v2531, 2
  %v2533 = vadd.f32 %v2531, %v2532
  %v2534 = vrot.slane %v2533, 1
  %v2535 = vadd.f32 %v2533, %v2534
  %v2536 = vadd.f32 %v2515, 0.0
  %v2537 = vadd.f32 %v2524, 0.0
  %v2538 = vadd.f32 %v2535, 0.0
  %v2539 = vld [vmem:[%s674] sm:$0xff]
  %v2540 = vld [vmem:[%s674 + $0x8] sm:$0xff]
  %v2541 = vld [vmem:[%s674 + $0x10] sm:$0xff]
  %v2542 = vld [vmem:[%s674 + $0x18] sm:$0xff]
  %v2543 = vld [vmem:[%s674 + $0x20] sm:$0x3f]
  %v2544 = vld [vmem:[%s674 + $0x28] sm:$0x3f]
  %v2545 = vld [vmem:[%s2] sm:$0xff]
  %v2546 = vld [vmem:[%s2 + $0x8] sm:$0xff]
  %v2547 = vld [vmem:[%s2 + $0x10] sm:$0xff]
  %v2548 = vld [vmem:[%s2 + $0x18] sm:$0xff]
  %v2549 = vld [vmem:[%s2 + $0x20] sm:$0xff]
  %v2550 = vld [vmem:[%s2 + $0x28] sm:$0xff]
  %v2551 = vld [vmem:[%s2 + $0x30] sm:$0xff]
  %v2552 = vld [vmem:[%s2 + $0x38] sm:$0xff]
  %v2553 = vld [vmem:[%s2 + $0x40] sm:$0xff]
  %v2554 = vld [vmem:[%s2 + $0x48] sm:$0xff]
  %v2555 = vld [vmem:[%s2 + $0x50] sm:$0xff]
  %v2556 = vld [vmem:[%s2 + $0x58] sm:$0xff]
  %v2557 = vld [vmem:[%s2 + $0x60] sm:$0xff]
  %v2558 = vld [vmem:[%s2 + $0x68] sm:$0xff]
  %v2559 = vld [vmem:[%s2 + $0x70] sm:$0xff]
  %v2560 = vld [vmem:[%s2 + $0x78] sm:$0xff]
  %v2561 = vld [vmem:[%s2 + $0x80] sm:$0xff]
  %v2562 = vld [vmem:[%s2 + $0x88] sm:$0xff]
  %v2563 = vld [vmem:[%s2 + $0x90] sm:$0xff]
  %v2564 = vld [vmem:[%s2 + $0x98] sm:$0xff]
  %v2565 = vld [vmem:[%s2 + $0xa0] sm:$0xff]
  %v2566 = vld [vmem:[%s2 + $0xa8] sm:$0xff]
  %v2567 = vld [vmem:[%s2 + $0xb0] sm:$0xff]
  %v2568 = vld [vmem:[%s2 + $0xb8] sm:$0xff]
  %v2569 = vld [vmem:[%s2 + $0xc0] sm:$0xff]
  %v2570 = vld [vmem:[%s2 + $0xc8] sm:$0xff]
  %v2571 = vld [vmem:[%s2 + $0xd0] sm:$0xff]
  %v2572 = vld [vmem:[%s2 + $0xd8] sm:$0xff]
  %v2573 = vld [vmem:[%s2 + $0xe0] sm:$0xff]
  %v2574 = vld [vmem:[%s2 + $0xe8] sm:$0xff]
  %v2575 = vld [vmem:[%s2 + $0xf0] sm:$0xff]
  %v2576 = vld [vmem:[%s2 + $0xf8] sm:$0xff]
  %v2577 = vld [vmem:[%s2 + $0x100] sm:$0xff]
  %v2578 = vld [vmem:[%s2 + $0x108] sm:$0xff]
  %v2579 = vld [vmem:[%s2 + $0x110] sm:$0xff]
  %v2580 = vld [vmem:[%s2 + $0x118] sm:$0xff]
  %v2581 = vld [vmem:[%s2 + $0x120] sm:$0xff]
  %v2582 = vld [vmem:[%s2 + $0x128] sm:$0xff]
  %v2583 = vld [vmem:[%s2 + $0x130] sm:$0xff]
  %v2584 = vld [vmem:[%s2 + $0x138] sm:$0xff]
  %v2585 = vld [vmem:[%s2 + $0x140] sm:$0xff]
  %v2586 = vld [vmem:[%s2 + $0x148] sm:$0xff]
  %v2587 = vld [vmem:[%s2 + $0x150] sm:$0xff]
  %v2588 = vld [vmem:[%s2 + $0x158] sm:$0xff]
  %v2589 = vld [vmem:[%s2 + $0x160] sm:$0xff]
  %v2590 = vld [vmem:[%s2 + $0x168] sm:$0xff]
  %v2591 = vld [vmem:[%s2 + $0x170] sm:$0xff]
  %v2592 = vld [vmem:[%s2 + $0x178] sm:$0xff]
  %v2593 = vld [vmem:[%s2 + $0x180] sm:$0xff]
  %v2594 = vld [vmem:[%s2 + $0x188] sm:$0xff]
  %v2595 = vld [vmem:[%s2 + $0x190] sm:$0xff]
  %v2596 = vld [vmem:[%s2 + $0x198] sm:$0xff]
  %v2597 = vld [vmem:[%s2 + $0x1a0] sm:$0xff]
  %v2598 = vld [vmem:[%s2 + $0x1a8] sm:$0xff]
  %v2599 = vld [vmem:[%s2 + $0x1b0] sm:$0xff]
  %v2600 = vld [vmem:[%s2 + $0x1b8] sm:$0xff]
  %v2601 = vld [vmem:[%s2 + $0x1c0] sm:$0xff]
  %v2602 = vld [vmem:[%s2 + $0x1c8] sm:$0xff]
  %v2603 = vld [vmem:[%s2 + $0x1d0] sm:$0xff]
  %v2604 = vld [vmem:[%s2 + $0x1d8] sm:$0xff]
  %v2605 = vld [vmem:[%s2 + $0x1e0] sm:$0xff]
  %v2606 = vld [vmem:[%s2 + $0x1e8] sm:$0xff]
  %v2607 = vld [vmem:[%s2 + $0x1f0] sm:$0xff]
  %v2608 = vld [vmem:[%s2 + $0x1f8] sm:$0xff]
  %v2609 = vld [vmem:[%s2 + $0x200] sm:$0xff]
  %v2610 = vld [vmem:[%s2 + $0x208] sm:$0xff]
  %v2611 = vld [vmem:[%s2 + $0x210] sm:$0xff]
  %v2612 = vld [vmem:[%s2 + $0x218] sm:$0xff]
  %v2613 = vld [vmem:[%s2 + $0x220] sm:$0xff]
  %v2614 = vld [vmem:[%s2 + $0x228] sm:$0xff]
  %v2615 = vld [vmem:[%s2 + $0x230] sm:$0xff]
  %v2616 = vld [vmem:[%s2 + $0x238] sm:$0xff]
  %v2617 = vld [vmem:[%s2 + $0x240] sm:$0xff]
  %v2618 = vld [vmem:[%s2 + $0x248] sm:$0xff]
  %v2619 = vld [vmem:[%s2 + $0x250] sm:$0xff]
  %v2620 = vld [vmem:[%s2 + $0x258] sm:$0xff]
  %v2621 = vld [vmem:[%s2 + $0x260] sm:$0xff]
  %v2622 = vld [vmem:[%s2 + $0x268] sm:$0xff]
  %v2623 = vld [vmem:[%s674] sm:$0xfe]
  %v2624 = vld [vmem:[%s674 + $0x8] sm:$0xfe]
  %v2625 = vld [vmem:[%s674 + $0x20] sm:$0x7f]
  %v2626 = vld [vmem:[%s674 + $0x28] sm:$0x7f]
  %v2627 = vld [vmem:[%s1199] sm:$0xff]
  %v2628 = vld [vmem:[%s1199 + $0x8] sm:$0xff]
  %v2629 = vld [vmem:[%s1199 + $0x10] sm:$0xff]
  %v2630 = vld [vmem:[%s1199 + $0x18] sm:$0xff]
  %v2631 = vld [vmem:[%s1199 + $0x20] sm:$0xff]
  %v2632 = vld [vmem:[%s1199 + $0x28] sm:$0xff]
  %v2633 = vld [vmem:[%s1199 + $0x30] sm:$0xff]
  %v2634 = vld [vmem:[%s1199 + $0x38] sm:$0xff]
  %v2635 = vld [vmem:[%s1199 + $0x40] sm:$0xff]
  %v2636 = vld [vmem:[%s1199 + $0x48] sm:$0xff]
  %v2637 = vld [vmem:[%s1199 + $0x50] sm:$0xff]
  %v2638 = vld [vmem:[%s1199 + $0x58] sm:$0xff]
  %v2639 = vld [vmem:[%s1199 + $0x60] sm:$0xff]
  %v2640 = vld [vmem:[%s1199 + $0x68] sm:$0xff]
  %v2641 = vld [vmem:[%s1199 + $0x70] sm:$0xff]
  %v2642 = vld [vmem:[%s1199 + $0x78] sm:$0xff]
  %v2643 = vld [vmem:[%s1199 + $0x80] sm:$0xff]
  %v2644 = vld [vmem:[%s1199 + $0x88] sm:$0xff]
  %v2645 = vld [vmem:[%s1199 + $0x90] sm:$0xff]
  %v2646 = vld [vmem:[%s1199 + $0x98] sm:$0xff]
  %v2647 = vld [vmem:[%s1199 + $0xa0] sm:$0xff]
  %v2648 = vld [vmem:[%s1199 + $0xa8] sm:$0xff]
  %v2649 = vld [vmem:[%s1199 + $0xb0] sm:$0xff]
  %v2650 = vld [vmem:[%s1199 + $0xb8] sm:$0xff]
  %v2651 = vld [vmem:[%s1199 + $0xc0] sm:$0xff]
  %v2652 = vld [vmem:[%s1199 + $0xc8] sm:$0xff]
  %v2653 = vld [vmem:[%s1199 + $0xd0] sm:$0xff]
  %v2654 = vld [vmem:[%s1199 + $0xd8] sm:$0xff]
  %v2655 = vld [vmem:[%s1199 + $0xe0] sm:$0xff]
  %v2656 = vld [vmem:[%s1199 + $0xe8] sm:$0xff]
  %v2657 = vld [vmem:[%s1199 + $0xf0] sm:$0xff]
  %v2658 = vld [vmem:[%s1199 + $0xf8] sm:$0xff]
  %v2659 = vld [vmem:[%s1199 + $0x100] sm:$0xff]
  %v2660 = vld [vmem:[%s1199 + $0x108] sm:$0xff]
  %v2661 = vld [vmem:[%s1199 + $0x110] sm:$0xff]
  %v2662 = vld [vmem:[%s1199 + $0x118] sm:$0xff]
  %v2663 = vld [vmem:[%s1199 + $0x120] sm:$0xff]
  %v2664 = vld [vmem:[%s1199 + $0x128] sm:$0xff]
  %v2665 = vld [vmem:[%s1199 + $0x130] sm:$0xff]
  %v2666 = vld [vmem:[%s1199 + $0x138] sm:$0xff]
  %v2667 = vld [vmem:[%s1199 + $0x140] sm:$0xff]
  %v2668 = vld [vmem:[%s1199 + $0x148] sm:$0xff]
  %v2669 = vld [vmem:[%s1199 + $0x150] sm:$0xff]
  %v2670 = vld [vmem:[%s1199 + $0x158] sm:$0xff]
  %v2671 = vld [vmem:[%s1199 + $0x160] sm:$0xff]
  %v2672 = vld [vmem:[%s1199 + $0x168] sm:$0xff]
  %v2673 = vld [vmem:[%s1199 + $0x170] sm:$0xff]
  %v2674 = vld [vmem:[%s1199 + $0x178] sm:$0xff]
  %v2675 = vld [vmem:[%s1199 + $0x180] sm:$0xff]
  %v2676 = vld [vmem:[%s1199 + $0x188] sm:$0xff]
  %v2677 = vld [vmem:[%s1199 + $0x190] sm:$0xff]
  %v2678 = vld [vmem:[%s1199 + $0x198] sm:$0xff]
  %v2679 = vld [vmem:[%s1199 + $0x1a0] sm:$0xff]
  %v2680 = vld [vmem:[%s1199 + $0x1a8] sm:$0xff]
  %v2681 = vld [vmem:[%s1199 + $0x1b0] sm:$0xff]
  %v2682 = vld [vmem:[%s1199 + $0x1b8] sm:$0xff]
  %v2683 = vld [vmem:[%s1199 + $0x1c0] sm:$0xff]
  %v2684 = vld [vmem:[%s1199 + $0x1c8] sm:$0xff]
  %v2685 = vld [vmem:[%s1199 + $0x1d0] sm:$0xff]
  %v2686 = vld [vmem:[%s1199 + $0x1d8] sm:$0xff]
  %v2687 = vld [vmem:[%s1199 + $0x1e0] sm:$0xff]
  %v2688 = vld [vmem:[%s1199 + $0x1e8] sm:$0xff]
  %v2689 = vld [vmem:[%s1199 + $0x1f0] sm:$0xff]
  %v2690 = vld [vmem:[%s1199 + $0x1f8] sm:$0xff]
  %v2691 = vld [vmem:[%s1199 + $0x200] sm:$0xff]
  %v2692 = vld [vmem:[%s1199 + $0x208] sm:$0xff]
  %v2693 = vld [vmem:[%s1199 + $0x210] sm:$0xff]
  %v2694 = vld [vmem:[%s1199 + $0x218] sm:$0xff]
  %v2695 = vld [vmem:[%s1199 + $0x220] sm:$0xff]
  %v2696 = vld [vmem:[%s1199 + $0x228] sm:$0xff]
  %v2697 = vld [vmem:[%s1199 + $0x230] sm:$0xff]
  %v2698 = vld [vmem:[%s1199 + $0x238] sm:$0xff]
  %v2699 = vld [vmem:[%s1199 + $0x240] sm:$0xff]
  %v2700 = vld [vmem:[%s1199 + $0x248] sm:$0xff]
  %v2701 = vld [vmem:[%s1199 + $0x250] sm:$0xff]
  %v2702 = vld [vmem:[%s1199 + $0x258] sm:$0xff]
  %v2703 = vld [vmem:[%s1199 + $0x260] sm:$0xff]
  %v2704 = vld [vmem:[%s1199 + $0x268] sm:$0xff]
  %v2711 = vrot.slane %v2623, 1
  %v2712 = vrot.slane %v2541, 1
  %v2713 = vsel %vm1284, %v2711, %v2712
  %v2714 = vrot.slane %v2624, 1
  %v2715 = vrot.slane %v2542, 1
  %v2716 = vsel %vm1284, %v2714, %v2715
  %v2717 = vrot.slane %v2625, 1
  %v2718 = vsel %vm1284, %v2712, %v2717
  %v2719 = vrot.slane %v2626, 1
  %v2720 = vsel %vm1284, %v2715, %v2719
  %v2724 = vsel %vm333, %v2716, 0
  %v2726 = vsel %vm333, %v2720, 0
  %v2728 = vsel %vm333, %v2719, 0
  %2730 = vmatpush.msra.mxu0 %v2672
  %2731 = vmatpush.msra.mxu0 %v2669
  %2732 = vmatpush.msra.mxu0 %v2666
  %2733 = vmatpush.msra.mxu0 %v2663
  %2734 = vmatpush.msra.mxu0 %v2660
  %2735 = vmatpush.msra.mxu0 %v2657
  %2736 = vmatpush.msra.mxu0 %v2654
  %2737 = vmatpush.msra.mxu0 %v2651
  %2738 = vmatpush.msra.mxu0 %v2648
  %2739 = vmatpush.msra.mxu0 %v2645
  %2740 = vmatpush.msra.mxu0 %v2642
  %2741 = vmatpush.msra.mxu0 %v2639
  %2742 = vmatpush.msra.mxu0 %v2636
  %2743 = vmatpush.msra.mxu0 %v2633
  %2744 = vmatpush.msra.mxu0 %v2630
  %2745 = vmatpush.msra.mxu0 %v2627
  %2746 = vmatmul.f32.gmra.mxu0 %v2713
  %v2747 = vpop.f32.mrf.mxu0
  %v2748 = vadd.f32 0.0, %v2747
  %2749 = vmatmul.f32.gmra.mxu0 %v2718
  %v2750 = vpop.f32.mrf.mxu0
  %v2751 = vadd.f32 0.0, %v2750
  %2752 = vmatmul.f32.gmra.mxu0 %v2717
  %v2753 = vpop.f32.mrf.mxu0
  %v2754 = vadd.f32 0.0, %v2753
  %2755 = vdwg.mxu0
  %2756 = vmatpush.msra.mxu0 0.0
  %2757 = vmatpush.msra.mxu0 0.0
  %2758 = vmatpush.msra.mxu0 0.0
  %2759 = vmatpush.msra.mxu0 0.0
  %2760 = vmatpush.msra.mxu0 0.0
  %2761 = vmatpush.msra.mxu0 0.0
  %2762 = vmatpush.msra.mxu0 %v2702
  %2763 = vmatpush.msra.mxu0 %v2699
  %2764 = vmatpush.msra.mxu0 %v2696
  %2765 = vmatpush.msra.mxu0 %v2693
  %2766 = vmatpush.msra.mxu0 %v2690
  %2767 = vmatpush.msra.mxu0 %v2687
  %2768 = vmatpush.msra.mxu0 %v2684
  %2769 = vmatpush.msra.mxu0 %v2681
  %2770 = vmatpush.msra.mxu0 %v2678
  %2771 = vmatpush.msra.mxu0 %v2675
  %2772 = vmatmul.f32.gmra.mxu0 %v2724
  %v2773 = vpop.f32.mrf.mxu0
  %v2774 = vadd.f32 %v2748, %v2773
  %2775 = vmatmul.f32.gmra.mxu0 %v2726
  %v2776 = vpop.f32.mrf.mxu0
  %v2777 = vadd.f32 %v2751, %v2776
  %2778 = vmatmul.f32.gmra.mxu0 %v2728
  %v2779 = vpop.f32.mrf.mxu0
  %v2780 = vadd.f32 %v2754, %v2779
  %2781 = vdwg.mxu0
  %2782 = vmatpush.msra.mxu0 %v2673
  %2783 = vmatpush.msra.mxu0 %v2670
  %2784 = vmatpush.msra.mxu0 %v2667
  %2785 = vmatpush.msra.mxu0 %v2664
  %2786 = vmatpush.msra.mxu0 %v2661
  %2787 = vmatpush.msra.mxu0 %v2658
  %2788 = vmatpush.msra.mxu0 %v2655
  %2789 = vmatpush.msra.mxu0 %v2652
  %2790 = vmatpush.msra.mxu0 %v2649
  %2791 = vmatpush.msra.mxu0 %v2646
  %2792 = vmatpush.msra.mxu0 %v2643
  %2793 = vmatpush.msra.mxu0 %v2640
  %2794 = vmatpush.msra.mxu0 %v2637
  %2795 = vmatpush.msra.mxu0 %v2634
  %2796 = vmatpush.msra.mxu0 %v2631
  %2797 = vmatpush.msra.mxu0 %v2628
  %2798 = vmatmul.f32.gmra.mxu0 %v2713
  %v2799 = vpop.f32.mrf.mxu0
  %v2800 = vadd.f32 0.0, %v2799
  %2801 = vmatmul.f32.gmra.mxu0 %v2718
  %v2802 = vpop.f32.mrf.mxu0
  %v2803 = vadd.f32 0.0, %v2802
  %2804 = vmatmul.f32.gmra.mxu0 %v2717
  %v2805 = vpop.f32.mrf.mxu0
  %v2806 = vadd.f32 0.0, %v2805
  %2807 = vdwg.mxu0
  %2808 = vmatpush.msra.mxu0 0.0
  %2809 = vmatpush.msra.mxu0 0.0
  %2810 = vmatpush.msra.mxu0 0.0
  %2811 = vmatpush.msra.mxu0 0.0
  %2812 = vmatpush.msra.mxu0 0.0
  %2813 = vmatpush.msra.mxu0 0.0
  %2814 = vmatpush.msra.mxu0 %v2703
  %2815 = vmatpush.msra.mxu0 %v2700
  %2816 = vmatpush.msra.mxu0 %v2697
  %2817 = vmatpush.msra.mxu0 %v2694
  %2818 = vmatpush.msra.mxu0 %v2691
  %2819 = vmatpush.msra.mxu0 %v2688
  %2820 = vmatpush.msra.mxu0 %v2685
  %2821 = vmatpush.msra.mxu0 %v2682
  %2822 = vmatpush.msra.mxu0 %v2679
  %2823 = vmatpush.msra.mxu0 %v2676
  %2824 = vmatmul.f32.gmra.mxu0 %v2724
  %v2825 = vpop.f32.mrf.mxu0
  %v2826 = vadd.f32 %v2800, %v2825
  %2827 = vmatmul.f32.gmra.mxu0 %v2726
  %v2828 = vpop.f32.mrf.mxu0
  %v2829 = vadd.f32 %v2803, %v2828
  %2830 = vmatmul.f32.gmra.mxu0 %v2728
  %v2831 = vpop.f32.mrf.mxu0
  %v2832 = vadd.f32 %v2806, %v2831
  %2833 = vdwg.mxu0
  %2834 = vmatpush.msra.mxu0 %v2674
  %2835 = vmatpush.msra.mxu0 %v2671
  %2836 = vmatpush.msra.mxu0 %v2668
  %2837 = vmatpush.msra.mxu0 %v2665
  %2838 = vmatpush.msra.mxu0 %v2662
  %2839 = vmatpush.msra.mxu0 %v2659
  %2840 = vmatpush.msra.mxu0 %v2656
  %2841 = vmatpush.msra.mxu0 %v2653
  %2842 = vmatpush.msra.mxu0 %v2650
  %2843 = vmatpush.msra.mxu0 %v2647
  %2844 = vmatpush.msra.mxu0 %v2644
  %2845 = vmatpush.msra.mxu0 %v2641
  %2846 = vmatpush.msra.mxu0 %v2638
  %2847 = vmatpush.msra.mxu0 %v2635
  %2848 = vmatpush.msra.mxu0 %v2632
  %2849 = vmatpush.msra.mxu0 %v2629
  %2850 = vmatmul.f32.gmra.mxu0 %v2713
  %v2851 = vpop.f32.mrf.mxu0
  %v2852 = vadd.f32 0.0, %v2851
  %2853 = vmatmul.f32.gmra.mxu0 %v2718
  %v2854 = vpop.f32.mrf.mxu0
  %v2855 = vadd.f32 0.0, %v2854
  %2856 = vmatmul.f32.gmra.mxu0 %v2717
  %v2857 = vpop.f32.mrf.mxu0
  %v2858 = vadd.f32 0.0, %v2857
  %2859 = vdwg.mxu0
  %2860 = vmatpush.msra.mxu0 0.0
  %2861 = vmatpush.msra.mxu0 0.0
  %2862 = vmatpush.msra.mxu0 0.0
  %2863 = vmatpush.msra.mxu0 0.0
  %2864 = vmatpush.msra.mxu0 0.0
  %2865 = vmatpush.msra.mxu0 0.0
  %2866 = vmatpush.msra.mxu0 %v2704
  %2867 = vmatpush.msra.mxu0 %v2701
  %2868 = vmatpush.msra.mxu0 %v2698
  %2869 = vmatpush.msra.mxu0 %v2695
  %2870 = vmatpush.msra.mxu0 %v2692
  %2871 = vmatpush.msra.mxu0 %v2689
  %2872 = vmatpush.msra.mxu0 %v2686
  %2873 = vmatpush.msra.mxu0 %v2683
  %2874 = vmatpush.msra.mxu0 %v2680
  %2875 = vmatpush.msra.mxu0 %v2677
  %2876 = vmatmul.f32.gmra.mxu0 %v2724
  %v2877 = vpop.f32.mrf.mxu0
  %v2878 = vadd.f32 %v2852, %v2877
  %2879 = vmatmul.f32.gmra.mxu0 %v2726
  %v2880 = vpop.f32.mrf.mxu0
  %v2881 = vadd.f32 %v2855, %v2880
  %2882 = vmatmul.f32.gmra.mxu0 %v2728
  %v2883 = vpop.f32.mrf.mxu0
  %v2884 = vadd.f32 %v2858, %v2883
  %2885 = vdwg.mxu0
  %v2887 = vsel %vm333, %v2540, 0
  %v2889 = vsel %vm333, %v2542, 0
  %v2892 = vsel %vm333, %v2544, 0
  %2894 = vmatpush.msra.mxu0 %v2590
  %2895 = vmatpush.msra.mxu0 %v2587
  %2896 = vmatpush.msra.mxu0 %v2584
  %2897 = vmatpush.msra.mxu0 %v2581
  %2898 = vmatpush.msra.mxu0 %v2578
  %2899 = vmatpush.msra.mxu0 %v2575
  %2900 = vmatpush.msra.mxu0 %v2572
  %2901 = vmatpush.msra.mxu0 %v2569
  %2902 = vmatpush.msra.mxu0 %v2566
  %2903 = vmatpush.msra.mxu0 %v2563
  %2904 = vmatpush.msra.mxu0 %v2560
  %2905 = vmatpush.msra.mxu0 %v2557
  %2906 = vmatpush.msra.mxu0 %v2554
  %2907 = vmatpush.msra.mxu0 %v2551
  %2908 = vmatpush.msra.mxu0 %v2548
  %2909 = vmatpush.msra.mxu0 %v2545
  %2910 = vmatmul.f32.gmra.mxu0 %v2539
  %v2911 = vpop.f32.mrf.mxu0
  %v2912 = vadd.f32 %v2774, %v2911
  %2913 = vmatmul.f32.gmra.mxu0 %v2541
  %v2914 = vpop.f32.mrf.mxu0
  %v2915 = vadd.f32 %v2777, %v2914
  %2916 = vmatmul.f32.gmra.mxu0 %v2543
  %v2917 = vpop.f32.mrf.mxu0
  %v2918 = vadd.f32 %v2780, %v2917
  %2919 = vdwg.mxu0
  %2920 = vmatpush.msra.mxu0 0.0
  %2921 = vmatpush.msra.mxu0 0.0
  %2922 = vmatpush.msra.mxu0 0.0
  %2923 = vmatpush.msra.mxu0 0.0
  %2924 = vmatpush.msra.mxu0 0.0
  %2925 = vmatpush.msra.mxu0 0.0
  %2926 = vmatpush.msra.mxu0 %v2620
  %2927 = vmatpush.msra.mxu0 %v2617
  %2928 = vmatpush.msra.mxu0 %v2614
  %2929 = vmatpush.msra.mxu0 %v2611
  %2930 = vmatpush.msra.mxu0 %v2608
  %2931 = vmatpush.msra.mxu0 %v2605
  %2932 = vmatpush.msra.mxu0 %v2602
  %2933 = vmatpush.msra.mxu0 %v2599
  %2934 = vmatpush.msra.mxu0 %v2596
  %2935 = vmatpush.msra.mxu0 %v2593
  %2936 = vmatmul.f32.gmra.mxu0 %v2887
  %v2937 = vpop.f32.mrf.mxu0
  %v2938 = vadd.f32 %v2912, %v2937
  %2939 = vmatmul.f32.gmra.mxu0 %v2889
  %v2940 = vpop.f32.mrf.mxu0
  %v2941 = vadd.f32 %v2915, %v2940
  %2942 = vmatmul.f32.gmra.mxu0 %v2892
  %v2943 = vpop.f32.mrf.mxu0
  %v2944 = vadd.f32 %v2918, %v2943
  %2945 = vdwg.mxu0
  %2946 = vmatpush.msra.mxu0 %v2591
  %2947 = vmatpush.msra.mxu0 %v2588
  %2948 = vmatpush.msra.mxu0 %v2585
  %2949 = vmatpush.msra.mxu0 %v2582
  %2950 = vmatpush.msra.mxu0 %v2579
  %2951 = vmatpush.msra.mxu0 %v2576
  %2952 = vmatpush.msra.mxu0 %v2573
  %2953 = vmatpush.msra.mxu0 %v2570
  %2954 = vmatpush.msra.mxu0 %v2567
  %2955 = vmatpush.msra.mxu0 %v2564
  %2956 = vmatpush.msra.mxu0 %v2561
  %2957 = vmatpush.msra.mxu0 %v2558
  %2958 = vmatpush.msra.mxu0 %v2555
  %2959 = vmatpush.msra.mxu0 %v2552
  %2960 = vmatpush.msra.mxu0 %v2549
  %2961 = vmatpush.msra.mxu0 %v2546
  %2962 = vmatmul.f32.gmra.mxu0 %v2539
  %v2963 = vpop.f32.mrf.mxu0
  %v2964 = vadd.f32 %v2826, %v2963
  %2965 = vmatmul.f32.gmra.mxu0 %v2541
  %v2966 = vpop.f32.mrf.mxu0
  %v2967 = vadd.f32 %v2829, %v2966
  %2968 = vmatmul.f32.gmra.mxu0 %v2543
  %v2969 = vpop.f32.mrf.mxu0
  %v2970 = vadd.f32 %v2832, %v2969
  %2971 = vdwg.mxu0
  %2972 = vmatpush.msra.mxu0 0.0
  %2973 = vmatpush.msra.mxu0 0.0
  %2974 = vmatpush.msra.mxu0 0.0
  %2975 = vmatpush.msra.mxu0 0.0
  %2976 = vmatpush.msra.mxu0 0.0
  %2977 = vmatpush.msra.mxu0 0.0
  %2978 = vmatpush.msra.mxu0 %v2621
  %2979 = vmatpush.msra.mxu0 %v2618
  %2980 = vmatpush.msra.mxu0 %v2615
  %2981 = vmatpush.msra.mxu0 %v2612
  %2982 = vmatpush.msra.mxu0 %v2609
  %2983 = vmatpush.msra.mxu0 %v2606
  %2984 = vmatpush.msra.mxu0 %v2603
  %2985 = vmatpush.msra.mxu0 %v2600
  %2986 = vmatpush.msra.mxu0 %v2597
  %2987 = vmatpush.msra.mxu0 %v2594
  %2988 = vmatmul.f32.gmra.mxu0 %v2887
  %v2989 = vpop.f32.mrf.mxu0
  %v2990 = vadd.f32 %v2964, %v2989
  %2991 = vmatmul.f32.gmra.mxu0 %v2889
  %v2992 = vpop.f32.mrf.mxu0
  %v2993 = vadd.f32 %v2967, %v2992
  %2994 = vmatmul.f32.gmra.mxu0 %v2892
  %v2995 = vpop.f32.mrf.mxu0
  %v2996 = vadd.f32 %v2970, %v2995
  %2997 = vdwg.mxu0
  %2998 = vmatpush.msra.mxu0 %v2592
  %2999 = vmatpush.msra.mxu0 %v2589
  %3000 = vmatpush.msra.mxu0 %v2586
  %3001 = vmatpush.msra.mxu0 %v2583
  %3002 = vmatpush.msra.mxu0 %v2580
  %3003 = vmatpush.msra.mxu0 %v2577
  %3004 = vmatpush.msra.mxu0 %v2574
  %3005 = vmatpush.msra.mxu0 %v2571
  %3006 = vmatpush.msra.mxu0 %v2568
  %3007 = vmatpush.msra.mxu0 %v2565
  %3008 = vmatpush.msra.mxu0 %v2562
  %3009 = vmatpush.msra.mxu0 %v2559
  %3010 = vmatpush.msra.mxu0 %v2556
  %3011 = vmatpush.msra.mxu0 %v2553
  %3012 = vmatpush.msra.mxu0 %v2550
  %3013 = vmatpush.msra.mxu0 %v2547
  %3014 = vmatmul.f32.gmra.mxu0 %v2539
  %v3015 = vpop.f32.mrf.mxu0
  %v3016 = vadd.f32 %v2878, %v3015
  %3017 = vmatmul.f32.gmra.mxu0 %v2541
  %v3018 = vpop.f32.mrf.mxu0
  %v3019 = vadd.f32 %v2881, %v3018
  %3020 = vmatmul.f32.gmra.mxu0 %v2543
  %v3021 = vpop.f32.mrf.mxu0
  %v3022 = vadd.f32 %v2884, %v3021
  %3023 = vdwg.mxu0
  %3024 = vmatpush.msra.mxu0 0.0
  %3025 = vmatpush.msra.mxu0 0.0
  %3026 = vmatpush.msra.mxu0 0.0
  %3027 = vmatpush.msra.mxu0 0.0
  %3028 = vmatpush.msra.mxu0 0.0
  %3029 = vmatpush.msra.mxu0 0.0
  %3030 = vmatpush.msra.mxu0 %v2622
  %3031 = vmatpush.msra.mxu0 %v2619
  %3032 = vmatpush.msra.mxu0 %v2616
  %3033 = vmatpush.msra.mxu0 %v2613
  %3034 = vmatpush.msra.mxu0 %v2610
  %3035 = vmatpush.msra.mxu0 %v2607
  %3036 = vmatpush.msra.mxu0 %v2604
  %3037 = vmatpush.msra.mxu0 %v2601
  %3038 = vmatpush.msra.mxu0 %v2598
  %3039 = vmatpush.msra.mxu0 %v2595
  %3040 = vmatmul.f32.gmra.mxu0 %v2887
  %v3041 = vpop.f32.mrf.mxu0
  %v3042 = vadd.f32 %v3016, %v3041
  %3043 = vmatmul.f32.gmra.mxu0 %v2889
  %v3044 = vpop.f32.mrf.mxu0
  %v3045 = vadd.f32 %v3019, %v3044
  %3046 = vmatmul.f32.gmra.mxu0 %v2892
  %v3047 = vpop.f32.mrf.mxu0
  %v3048 = vadd.f32 %v3022, %v3047
  %3049 = vdwg.mxu0
  %v3050 = vld [vmem:[%s674] sm:$0xfc]
  %v3051 = vld [vmem:[%s674 + $0x8] sm:$0xfc]
  %v3052 = vld [vmem:[%s674 + $0x20] sm:$0xff]
  %v3053 = vld [vmem:[%s674 + $0x28] sm:$0xff]
  %v3054 = vld [vmem:[%s1628] sm:$0xff]
  %v3055 = vld [vmem:[%s1628 + $0x8] sm:$0xff]
  %v3056 = vld [vmem:[%s1628 + $0x10] sm:$0xff]
  %v3057 = vld [vmem:[%s1628 + $0x18] sm:$0xff]
  %v3058 = vld [vmem:[%s1628 + $0x20] sm:$0xff]
  %v3059 = vld [vmem:[%s1628 + $0x28] sm:$0xff]
  %v3060 = vld [vmem:[%s1628 + $0x30] sm:$0xff]
  %v3061 = vld [vmem:[%s1628 + $0x38] sm:$0xff]
  %v3062 = vld [vmem:[%s1628 + $0x40] sm:$0xff]
  %v3063 = vld [vmem:[%s1628 + $0x48] sm:$0xff]
  %v3064 = vld [vmem:[%s1628 + $0x50] sm:$0xff]
  %v3065 = vld [vmem:[%s1628 + $0x58] sm:$0xff]
  %v3066 = vld [vmem:[%s1628 + $0x60] sm:$0xff]
  %v3067 = vld [vmem:[%s1628 + $0x68] sm:$0xff]
  %v3068 = vld [vmem:[%s1628 + $0x70] sm:$0xff]
  %v3069 = vld [vmem:[%s1628 + $0x78] sm:$0xff]
  %v3070 = vld [vmem:[%s1628 + $0x80] sm:$0xff]
  %v3071 = vld [vmem:[%s1628 + $0x88] sm:$0xff]
  %v3072 = vld [vmem:[%s1628 + $0x90] sm:$0xff]
  %v3073 = vld [vmem:[%s1628 + $0x98] sm:$0xff]
  %v3074 = vld [vmem:[%s1628 + $0xa0] sm:$0xff]
  %v3075 = vld [vmem:[%s1628 + $0xa8] sm:$0xff]
  %v3076 = vld [vmem:[%s1628 + $0xb0] sm:$0xff]
  %v3077 = vld [vmem:[%s1628 + $0xb8] sm:$0xff]
  %v3078 = vld [vmem:[%s1628 + $0xc0] sm:$0xff]
  %v3079 = vld [vmem:[%s1628 + $0xc8] sm:$0xff]
  %v3080 = vld [vmem:[%s1628 + $0xd0] sm:$0xff]
  %v3081 = vld [vmem:[%s1628 + $0xd8] sm:$0xff]
  %v3082 = vld [vmem:[%s1628 + $0xe0] sm:$0xff]
  %v3083 = vld [vmem:[%s1628 + $0xe8] sm:$0xff]
  %v3084 = vld [vmem:[%s1628 + $0xf0] sm:$0xff]
  %v3085 = vld [vmem:[%s1628 + $0xf8] sm:$0xff]
  %v3086 = vld [vmem:[%s1628 + $0x100] sm:$0xff]
  %v3087 = vld [vmem:[%s1628 + $0x108] sm:$0xff]
  %v3088 = vld [vmem:[%s1628 + $0x110] sm:$0xff]
  %v3089 = vld [vmem:[%s1628 + $0x118] sm:$0xff]
  %v3090 = vld [vmem:[%s1628 + $0x120] sm:$0xff]
  %v3091 = vld [vmem:[%s1628 + $0x128] sm:$0xff]
  %v3092 = vld [vmem:[%s1628 + $0x130] sm:$0xff]
  %v3093 = vld [vmem:[%s1628 + $0x138] sm:$0xff]
  %v3094 = vld [vmem:[%s1628 + $0x140] sm:$0xff]
  %v3095 = vld [vmem:[%s1628 + $0x148] sm:$0xff]
  %v3096 = vld [vmem:[%s1628 + $0x150] sm:$0xff]
  %v3097 = vld [vmem:[%s1628 + $0x158] sm:$0xff]
  %v3098 = vld [vmem:[%s1628 + $0x160] sm:$0xff]
  %v3099 = vld [vmem:[%s1628 + $0x168] sm:$0xff]
  %v3100 = vld [vmem:[%s1628 + $0x170] sm:$0xff]
  %v3101 = vld [vmem:[%s1628 + $0x178] sm:$0xff]
  %v3102 = vld [vmem:[%s1628 + $0x180] sm:$0xff]
  %v3103 = vld [vmem:[%s1628 + $0x188] sm:$0xff]
  %v3104 = vld [vmem:[%s1628 + $0x190] sm:$0xff]
  %v3105 = vld [vmem:[%s1628 + $0x198] sm:$0xff]
  %v3106 = vld [vmem:[%s1628 + $0x1a0] sm:$0xff]
  %v3107 = vld [vmem:[%s1628 + $0x1a8] sm:$0xff]
  %v3108 = vld [vmem:[%s1628 + $0x1b0] sm:$0xff]
  %v3109 = vld [vmem:[%s1628 + $0x1b8] sm:$0xff]
  %v3110 = vld [vmem:[%s1628 + $0x1c0] sm:$0xff]
  %v3111 = vld [vmem:[%s1628 + $0x1c8] sm:$0xff]
  %v3112 = vld [vmem:[%s1628 + $0x1d0] sm:$0xff]
  %v3113 = vld [vmem:[%s1628 + $0x1d8] sm:$0xff]
  %v3114 = vld [vmem:[%s1628 + $0x1e0] sm:$0xff]
  %v3115 = vld [vmem:[%s1628 + $0x1e8] sm:$0xff]
  %v3116 = vld [vmem:[%s1628 + $0x1f0] sm:$0xff]
  %v3117 = vld [vmem:[%s1628 + $0x1f8] sm:$0xff]
  %v3118 = vld [vmem:[%s1628 + $0x200] sm:$0xff]
  %v3119 = vld [vmem:[%s1628 + $0x208] sm:$0xff]
  %v3120 = vld [vmem:[%s1628 + $0x210] sm:$0xff]
  %v3121 = vld [vmem:[%s1628 + $0x218] sm:$0xff]
  %v3122 = vld [vmem:[%s1628 + $0x220] sm:$0xff]
  %v3123 = vld [vmem:[%s1628 + $0x228] sm:$0xff]
  %v3124 = vld [vmem:[%s1628 + $0x230] sm:$0xff]
  %v3125 = vld [vmem:[%s1628 + $0x238] sm:$0xff]
  %v3126 = vld [vmem:[%s1628 + $0x240] sm:$0xff]
  %v3127 = vld [vmem:[%s1628 + $0x248] sm:$0xff]
  %v3128 = vld [vmem:[%s1628 + $0x250] sm:$0xff]
  %v3129 = vld [vmem:[%s1628 + $0x258] sm:$0xff]
  %v3130 = vld [vmem:[%s1628 + $0x260] sm:$0xff]
  %v3131 = vld [vmem:[%s1628 + $0x268] sm:$0xff]
  %v3136 = vrot.slane %v3050, 2
  %v3137 = vrot.slane %v2541, 2
  %v3138 = vsel %vm1711, %v3136, %v3137
  %v3139 = vrot.slane %v3051, 2
  %v3140 = vrot.slane %v2542, 2
  %v3141 = vsel %vm1711, %v3139, %v3140
  %v3142 = vrot.slane %v3052, 2
  %v3143 = vsel %vm1711, %v3137, %v3142
  %v3144 = vrot.slane %v3053, 2
  %v3145 = vsel %vm1711, %v3140, %v3144
  %v3149 = vsel %vm333, %v3141, 0
  %v3151 = vsel %vm333, %v3145, 0
  %v3153 = vsel %vm333, %v3144, 0
  %3155 = vmatpush.msra.mxu0 %v3099
  %3156 = vmatpush.msra.mxu0 %v3096
  %3157 = vmatpush.msra.mxu0 %v3093
  %3158 = vmatpush.msra.mxu0 %v3090
  %3159 = vmatpush.msra.mxu0 %v3087
  %3160 = vmatpush.msra.mxu0 %v3084
  %3161 = vmatpush.msra.mxu0 %v3081
  %3162 = vmatpush.msra.mxu0 %v3078
  %3163 = vmatpush.msra.mxu0 %v3075
  %3164 = vmatpush.msra.mxu0 %v3072
  %3165 = vmatpush.msra.mxu0 %v3069
  %3166 = vmatpush.msra.mxu0 %v3066
  %3167 = vmatpush.msra.mxu0 %v3063
  %3168 = vmatpush.msra.mxu0 %v3060
  %3169 = vmatpush.msra.mxu0 %v3057
  %3170 = vmatpush.msra.mxu0 %v3054
  %3171 = vmatmul.f32.gmra.mxu0 %v3138
  %v3172 = vpop.f32.mrf.mxu0
  %v3173 = vadd.f32 0.0, %v3172
  %3174 = vmatmul.f32.gmra.mxu0 %v3143
  %v3175 = vpop.f32.mrf.mxu0
  %v3176 = vadd.f32 0.0, %v3175
  %3177 = vmatmul.f32.gmra.mxu0 %v3142
  %v3178 = vpop.f32.mrf.mxu0
  %v3179 = vadd.f32 0.0, %v3178
  %3180 = vdwg.mxu0
  %3181 = vmatpush.msra.mxu0 0.0
  %3182 = vmatpush.msra.mxu0 0.0
  %3183 = vmatpush.msra.mxu0 0.0
  %3184 = vmatpush.msra.mxu0 0.0
  %3185 = vmatpush.msra.mxu0 0.0
  %3186 = vmatpush.msra.mxu0 0.0
  %3187 = vmatpush.msra.mxu0 %v3129
  %3188 = vmatpush.msra.mxu0 %v3126
  %3189 = vmatpush.msra.mxu0 %v3123
  %3190 = vmatpush.msra.mxu0 %v3120
  %3191 = vmatpush.msra.mxu0 %v3117
  %3192 = vmatpush.msra.mxu0 %v3114
  %3193 = vmatpush.msra.mxu0 %v3111
  %3194 = vmatpush.msra.mxu0 %v3108
  %3195 = vmatpush.msra.mxu0 %v3105
  %3196 = vmatpush.msra.mxu0 %v3102
  %3197 = vmatmul.f32.gmra.mxu0 %v3149
  %v3198 = vpop.f32.mrf.mxu0
  %v3199 = vadd.f32 %v3173, %v3198
  %3200 = vmatmul.f32.gmra.mxu0 %v3151
  %v3201 = vpop.f32.mrf.mxu0
  %v3202 = vadd.f32 %v3176, %v3201
  %3203 = vmatmul.f32.gmra.mxu0 %v3153
  %v3204 = vpop.f32.mrf.mxu0
  %v3205 = vadd.f32 %v3179, %v3204
  %3206 = vdwg.mxu0
  %3207 = vmatpush.msra.mxu0 %v3100
  %3208 = vmatpush.msra.mxu0 %v3097
  %3209 = vmatpush.msra.mxu0 %v3094
  %3210 = vmatpush.msra.mxu0 %v3091
  %3211 = vmatpush.msra.mxu0 %v3088
  %3212 = vmatpush.msra.mxu0 %v3085
  %3213 = vmatpush.msra.mxu0 %v3082
  %3214 = vmatpush.msra.mxu0 %v3079
  %3215 = vmatpush.msra.mxu0 %v3076
  %3216 = vmatpush.msra.mxu0 %v3073
  %3217 = vmatpush.msra.mxu0 %v3070
  %3218 = vmatpush.msra.mxu0 %v3067
  %3219 = vmatpush.msra.mxu0 %v3064
  %3220 = vmatpush.msra.mxu0 %v3061
  %3221 = vmatpush.msra.mxu0 %v3058
  %3222 = vmatpush.msra.mxu0 %v3055
  %3223 = vmatmul.f32.gmra.mxu0 %v3138
  %v3224 = vpop.f32.mrf.mxu0
  %v3225 = vadd.f32 0.0, %v3224
  %3226 = vmatmul.f32.gmra.mxu0 %v3143
  %v3227 = vpop.f32.mrf.mxu0
  %v3228 = vadd.f32 0.0, %v3227
  %3229 = vmatmul.f32.gmra.mxu0 %v3142
  %v3230 = vpop.f32.mrf.mxu0
  %v3231 = vadd.f32 0.0, %v3230
  %3232 = vdwg.mxu0
  %3233 = vmatpush.msra.mxu0 0.0
  %3234 = vmatpush.msra.mxu0 0.0
  %3235 = vmatpush.msra.mxu0 0.0
  %3236 = vmatpush.msra.mxu0 0.0
  %3237 = vmatpush.msra.mxu0 0.0
  %3238 = vmatpush.msra.mxu0 0.0
  %3239 = vmatpush.msra.mxu0 %v3130
  %3240 = vmatpush.msra.mxu0 %v3127
  %3241 = vmatpush.msra.mxu0 %v3124
  %3242 = vmatpush.msra.mxu0 %v3121
  %3243 = vmatpush.msra.mxu0 %v3118
  %3244 = vmatpush.msra.mxu0 %v3115
  %3245 = vmatpush.msra.mxu0 %v3112
  %3246 = vmatpush.msra.mxu0 %v3109
  %3247 = vmatpush.msra.mxu0 %v3106
  %3248 = vmatpush.msra.mxu0 %v3103
  %3249 = vmatmul.f32.gmra.mxu0 %v3149
  %v3250 = vpop.f32.mrf.mxu0
  %v3251 = vadd.f32 %v3225, %v3250
  %3252 = vmatmul.f32.gmra.mxu0 %v3151
  %v3253 = vpop.f32.mrf.mxu0
  %v3254 = vadd.f32 %v3228, %v3253
  %3255 = vmatmul.f32.gmra.mxu0 %v3153
  %v3256 = vpop.f32.mrf.mxu0
  %v3257 = vadd.f32 %v3231, %v3256
  %3258 = vdwg.mxu0
  %3259 = vmatpush.msra.mxu0 %v3101
  %3260 = vmatpush.msra.mxu0 %v3098
  %3261 = vmatpush.msra.mxu0 %v3095
  %3262 = vmatpush.msra.mxu0 %v3092
  %3263 = vmatpush.msra.mxu0 %v3089
  %3264 = vmatpush.msra.mxu0 %v3086
  %3265 = vmatpush.msra.mxu0 %v3083
  %3266 = vmatpush.msra.mxu0 %v3080
  %3267 = vmatpush.msra.mxu0 %v3077
  %3268 = vmatpush.msra.mxu0 %v3074
  %3269 = vmatpush.msra.mxu0 %v3071
  %3270 = vmatpush.msra.mxu0 %v3068
  %3271 = vmatpush.msra.mxu0 %v3065
  %3272 = vmatpush.msra.mxu0 %v3062
  %3273 = vmatpush.msra.mxu0 %v3059
  %3274 = vmatpush.msra.mxu0 %v3056
  %3275 = vmatmul.f32.gmra.mxu0 %v3138
  %v3276 = vpop.f32.mrf.mxu0
  %v3277 = vadd.f32 0.0, %v3276
  %3278 = vmatmul.f32.gmra.mxu0 %v3143
  %v3279 = vpop.f32.mrf.mxu0
  %v3280 = vadd.f32 0.0, %v3279
  %3281 = vmatmul.f32.gmra.mxu0 %v3142
  %v3282 = vpop.f32.mrf.mxu0
  %v3283 = vadd.f32 0.0, %v3282
  %3284 = vdwg.mxu0
  %3285 = vmatpush.msra.mxu0 0.0
  %3286 = vmatpush.msra.mxu0 0.0
  %3287 = vmatpush.msra.mxu0 0.0
  %3288 = vmatpush.msra.mxu0 0.0
  %3289 = vmatpush.msra.mxu0 0.0
  %3290 = vmatpush.msra.mxu0 0.0
  %3291 = vmatpush.msra.mxu0 %v3131
  %3292 = vmatpush.msra.mxu0 %v3128
  %3293 = vmatpush.msra.mxu0 %v3125
  %3294 = vmatpush.msra.mxu0 %v3122
  %3295 = vmatpush.msra.mxu0 %v3119
  %3296 = vmatpush.msra.mxu0 %v3116
  %3297 = vmatpush.msra.mxu0 %v3113
  %3298 = vmatpush.msra.mxu0 %v3110
  %3299 = vmatpush.msra.mxu0 %v3107
  %3300 = vmatpush.msra.mxu0 %v3104
  %3301 = vmatmul.f32.gmra.mxu0 %v3149
  %v3302 = vpop.f32.mrf.mxu0
  %v3303 = vadd.f32 %v3277, %v3302
  %3304 = vmatmul.f32.gmra.mxu0 %v3151
  %v3305 = vpop.f32.mrf.mxu0
  %v3306 = vadd.f32 %v3280, %v3305
  %3307 = vmatmul.f32.gmra.mxu0 %v3153
  %v3308 = vpop.f32.mrf.mxu0
  %v3309 = vadd.f32 %v3283, %v3308
  %3310 = vdwg.mxu0
  %v3311 = vadd.f32 %v2938, %v3199
  %v3312 = vadd.f32 %v2990, %v3251
  %v3313 = vadd.f32 %v3042, %v3303
  %v3314 = vadd.f32 %v2941, %v3202
  %v3315 = vadd.f32 %v2993, %v3254
  %v3316 = vadd.f32 %v3045, %v3306
  %v3317 = vadd.f32 %v2944, %v3205
  %v3318 = vadd.f32 %v2996, %v3257
  %v3319 = vadd.f32 %v3048, %v3309
  %v3320 = vld [vmem:[%s674] sm:$0xf8]
  %v3321 = vld [vmem:[%s674 + $0x8] sm:$0xf8]
  %v3322 = vld [vmem:[%s674 + $0x10] sm:$0xff]
  %v3323 = vld [vmem:[%s674 + $0x18] sm:$0xff]
  %v3324 = vld [vmem:[%s674 + $0x20] sm:$0xff]
  %v3325 = vld [vmem:[%s674 + $0x28] sm:$0xff]
  %v3326 = vld [vmem:[%s674 + $0x30] sm:$0x1]
  %v3327 = vld [vmem:[%s674 + $0x38] sm:$0x1]
  %v3328 = vld [vmem:[%s1904] sm:$0xff]
  %v3329 = vld [vmem:[%s1904 + $0x8] sm:$0xff]
  %v3330 = vld [vmem:[%s1904 + $0x10] sm:$0xff]
  %v3331 = vld [vmem:[%s1904 + $0x18] sm:$0xff]
  %v3332 = vld [vmem:[%s1904 + $0x20] sm:$0xff]
  %v3333 = vld [vmem:[%s1904 + $0x28] sm:$0xff]
  %v3334 = vld [vmem:[%s1904 + $0x30] sm:$0xff]
  %v3335 = vld [vmem:[%s1904 + $0x38] sm:$0xff]
  %v3336 = vld [vmem:[%s1904 + $0x40] sm:$0xff]
  %v3337 = vld [vmem:[%s1904 + $0x48] sm:$0xff]
  %v3338 = vld [vmem:[%s1904 + $0x50] sm:$0xff]
  %v3339 = vld [vmem:[%s1904 + $0x58] sm:$0xff]
  %v3340 = vld [vmem:[%s1904 + $0x60] sm:$0xff]
  %v3341 = vld [vmem:[%s1904 + $0x68] sm:$0xff]
  %v3342 = vld [vmem:[%s1904 + $0x70] sm:$0xff]
  %v3343 = vld [vmem:[%s1904 + $0x78] sm:$0xff]
  %v3344 = vld [vmem:[%s1904 + $0x80] sm:$0xff]
  %v3345 = vld [vmem:[%s1904 + $0x88] sm:$0xff]
  %v3346 = vld [vmem:[%s1904 + $0x90] sm:$0xff]
  %v3347 = vld [vmem:[%s1904 + $0x98] sm:$0xff]
  %v3348 = vld [vmem:[%s1904 + $0xa0] sm:$0xff]
  %v3349 = vld [vmem:[%s1904 + $0xa8] sm:$0xff]
  %v3350 = vld [vmem:[%s1904 + $0xb0] sm:$0xff]
  %v3351 = vld [vmem:[%s1904 + $0xb8] sm:$0xff]
  %v3352 = vld [vmem:[%s1904 + $0xc0] sm:$0xff]
  %v3353 = vld [vmem:[%s1904 + $0xc8] sm:$0xff]
  %v3354 = vld [vmem:[%s1904 + $0xd0] sm:$0xff]
  %v3355 = vld [vmem:[%s1904 + $0xd8] sm:$0xff]
  %v3356 = vld [vmem:[%s1904 + $0xe0] sm:$0xff]
  %v3357 = vld [vmem:[%s1904 + $0xe8] sm:$0xff]
  %v3358 = vld [vmem:[%s1904 + $0xf0] sm:$0xff]
  %v3359 = vld [vmem:[%s1904 + $0xf8] sm:$0xff]
  %v3360 = vld [vmem:[%s1904 + $0x100] sm:$0xff]
  %v3361 = vld [vmem:[%s1904 + $0x108] sm:$0xff]
  %v3362 = vld [vmem:[%s1904 + $0x110] sm:$0xff]
  %v3363 = vld [vmem:[%s1904 + $0x118] sm:$0xff]
  %v3364 = vld [vmem:[%s1904 + $0x120] sm:$0xff]
  %v3365 = vld [vmem:[%s1904 + $0x128] sm:$0xff]
  %v3366 = vld [vmem:[%s1904 + $0x130] sm:$0xff]
  %v3367 = vld [vmem:[%s1904 + $0x138] sm:$0xff]
  %v3368 = vld [vmem:[%s1904 + $0x140] sm:$0xff]
  %v3369 = vld [vmem:[%s1904 + $0x148] sm:$0xff]
  %v3370 = vld [vmem:[%s1904 + $0x150] sm:$0xff]
  %v3371 = vld [vmem:[%s1904 + $0x158] sm:$0xff]
  %v3372 = vld [vmem:[%s1904 + $0x160] sm:$0xff]
  %v3373 = vld [vmem:[%s1904 + $0x168] sm:$0xff]
  %v3374 = vld [vmem:[%s1904 + $0x170] sm:$0xff]
  %v3375 = vld [vmem:[%s1904 + $0x178] sm:$0xff]
  %v3376 = vld [vmem:[%s1904 + $0x180] sm:$0xff]
  %v3377 = vld [vmem:[%s1904 + $0x188] sm:$0xff]
  %v3378 = vld [vmem:[%s1904 + $0x190] sm:$0xff]
  %v3379 = vld [vmem:[%s1904 + $0x198] sm:$0xff]
  %v3380 = vld [vmem:[%s1904 + $0x1a0] sm:$0xff]
  %v3381 = vld [vmem:[%s1904 + $0x1a8] sm:$0xff]
  %v3382 = vld [vmem:[%s1904 + $0x1b0] sm:$0xff]
  %v3383 = vld [vmem:[%s1904 + $0x1b8] sm:$0xff]
  %v3384 = vld [vmem:[%s1904 + $0x1c0] sm:$0xff]
  %v3385 = vld [vmem:[%s1904 + $0x1c8] sm:$0xff]
  %v3386 = vld [vmem:[%s1904 + $0x1d0] sm:$0xff]
  %v3387 = vld [vmem:[%s1904 + $0x1d8] sm:$0xff]
  %v3388 = vld [vmem:[%s1904 + $0x1e0] sm:$0xff]
  %v3389 = vld [vmem:[%s1904 + $0x1e8] sm:$0xff]
  %v3390 = vld [vmem:[%s1904 + $0x1f0] sm:$0xff]
  %v3391 = vld [vmem:[%s1904 + $0x1f8] sm:$0xff]
  %v3392 = vld [vmem:[%s1904 + $0x200] sm:$0xff]
  %v3393 = vld [vmem:[%s1904 + $0x208] sm:$0xff]
  %v3394 = vld [vmem:[%s1904 + $0x210] sm:$0xff]
  %v3395 = vld [vmem:[%s1904 + $0x218] sm:$0xff]
  %v3396 = vld [vmem:[%s1904 + $0x220] sm:$0xff]
  %v3397 = vld [vmem:[%s1904 + $0x228] sm:$0xff]
  %v3398 = vld [vmem:[%s1904 + $0x230] sm:$0xff]
  %v3399 = vld [vmem:[%s1904 + $0x238] sm:$0xff]
  %v3400 = vld [vmem:[%s1904 + $0x240] sm:$0xff]
  %v3401 = vld [vmem:[%s1904 + $0x248] sm:$0xff]
  %v3402 = vld [vmem:[%s1904 + $0x250] sm:$0xff]
  %v3403 = vld [vmem:[%s1904 + $0x258] sm:$0xff]
  %v3404 = vld [vmem:[%s1904 + $0x260] sm:$0xff]
  %v3405 = vld [vmem:[%s1904 + $0x268] sm:$0xff]
  %v3414 = vrot.slane %v3320, 3
  %v3415 = vrot.slane %v3322, 3
  %v3416 = vsel %vm1991, %v3414, %v3415
  %v3417 = vrot.slane %v3321, 3
  %v3418 = vrot.slane %v3323, 3
  %v3419 = vsel %vm1991, %v3417, %v3418
  %v3420 = vrot.slane %v3324, 3
  %v3421 = vsel %vm1991, %v3415, %v3420
  %v3422 = vrot.slane %v3325, 3
  %v3423 = vsel %vm1991, %v3418, %v3422
  %v3424 = vrot.slane %v3326, 3
  %v3425 = vsel %vm1991, %v3420, %v3424
  %v3426 = vrot.slane %v3327, 3
  %v3427 = vsel %vm1991, %v3422, %v3426
  %v3431 = vsel %vm333, %v3419, 0
  %v3433 = vsel %vm333, %v3423, 0
  %v3435 = vsel %vm333, %v3427, 0
  %3437 = vmatpush.msra.mxu0 %v3373
  %3438 = vmatpush.msra.mxu0 %v3370
  %3439 = vmatpush.msra.mxu0 %v3367
  %3440 = vmatpush.msra.mxu0 %v3364
  %3441 = vmatpush.msra.mxu0 %v3361
  %3442 = vmatpush.msra.mxu0 %v3358
  %3443 = vmatpush.msra.mxu0 %v3355
  %3444 = vmatpush.msra.mxu0 %v3352
  %3445 = vmatpush.msra.mxu0 %v3349
  %3446 = vmatpush.msra.mxu0 %v3346
  %3447 = vmatpush.msra.mxu0 %v3343
  %3448 = vmatpush.msra.mxu0 %v3340
  %3449 = vmatpush.msra.mxu0 %v3337
  %3450 = vmatpush.msra.mxu0 %v3334
  %3451 = vmatpush.msra.mxu0 %v3331
  %3452 = vmatpush.msra.mxu0 %v3328
  %3453 = vmatmul.f32.gmra.mxu0 %v3416
  %v3454 = vpop.f32.mrf.mxu0
  %v3455 = vadd.f32 0.0, %v3454
  %3456 = vmatmul.f32.gmra.mxu0 %v3421
  %v3457 = vpop.f32.mrf.mxu0
  %v3458 = vadd.f32 0.0, %v3457
  %3459 = vmatmul.f32.gmra.mxu0 %v3425
  %v3460 = vpop.f32.mrf.mxu0
  %v3461 = vadd.f32 0.0, %v3460
  %3462 = vdwg.mxu0
  %3463 = vmatpush.msra.mxu0 0.0
  %3464 = vmatpush.msra.mxu0 0.0
  %3465 = vmatpush.msra.mxu0 0.0
  %3466 = vmatpush.msra.mxu0 0.0
  %3467 = vmatpush.msra.mxu0 0.0
  %3468 = vmatpush.msra.mxu0 0.0
  %3469 = vmatpush.msra.mxu0 %v3403
  %3470 = vmatpush.msra.mxu0 %v3400
  %3471 = vmatpush.msra.mxu0 %v3397
  %3472 = vmatpush.msra.mxu0 %v3394
  %3473 = vmatpush.msra.mxu0 %v3391
  %3474 = vmatpush.msra.mxu0 %v3388
  %3475 = vmatpush.msra.mxu0 %v3385
  %3476 = vmatpush.msra.mxu0 %v3382
  %3477 = vmatpush.msra.mxu0 %v3379
  %3478 = vmatpush.msra.mxu0 %v3376
  %3479 = vmatmul.f32.gmra.mxu0 %v3431
  %v3480 = vpop.f32.mrf.mxu0
  %v3481 = vadd.f32 %v3455, %v3480
  %3482 = vmatmul.f32.gmra.mxu0 %v3433
  %v3483 = vpop.f32.mrf.mxu0
  %v3484 = vadd.f32 %v3458, %v3483
  %3485 = vmatmul.f32.gmra.mxu0 %v3435
  %v3486 = vpop.f32.mrf.mxu0
  %v3487 = vadd.f32 %v3461, %v3486
  %3488 = vdwg.mxu0
  %3489 = vmatpush.msra.mxu0 %v3374
  %3490 = vmatpush.msra.mxu0 %v3371
  %3491 = vmatpush.msra.mxu0 %v3368
  %3492 = vmatpush.msra.mxu0 %v3365
  %3493 = vmatpush.msra.mxu0 %v3362
  %3494 = vmatpush.msra.mxu0 %v3359
  %3495 = vmatpush.msra.mxu0 %v3356
  %3496 = vmatpush.msra.mxu0 %v3353
  %3497 = vmatpush.msra.mxu0 %v3350
  %3498 = vmatpush.msra.mxu0 %v3347
  %3499 = vmatpush.msra.mxu0 %v3344
  %3500 = vmatpush.msra.mxu0 %v3341
  %3501 = vmatpush.msra.mxu0 %v3338
  %3502 = vmatpush.msra.mxu0 %v3335
  %3503 = vmatpush.msra.mxu0 %v3332
  %3504 = vmatpush.msra.mxu0 %v3329
  %3505 = vmatmul.f32.gmra.mxu0 %v3416
  %v3506 = vpop.f32.mrf.mxu0
  %v3507 = vadd.f32 0.0, %v3506
  %3508 = vmatmul.f32.gmra.mxu0 %v3421
  %v3509 = vpop.f32.mrf.mxu0
  %v3510 = vadd.f32 0.0, %v3509
  %3511 = vmatmul.f32.gmra.mxu0 %v3425
  %v3512 = vpop.f32.mrf.mxu0
  %v3513 = vadd.f32 0.0, %v3512
  %3514 = vdwg.mxu0
  %3515 = vmatpush.msra.mxu0 0.0
  %3516 = vmatpush.msra.mxu0 0.0
  %3517 = vmatpush.msra.mxu0 0.0
  %3518 = vmatpush.msra.mxu0 0.0
  %3519 = vmatpush.msra.mxu0 0.0
  %3520 = vmatpush.msra.mxu0 0.0
  %3521 = vmatpush.msra.mxu0 %v3404
  %3522 = vmatpush.msra.mxu0 %v3401
  %3523 = vmatpush.msra.mxu0 %v3398
  %3524 = vmatpush.msra.mxu0 %v3395
  %3525 = vmatpush.msra.mxu0 %v3392
  %3526 = vmatpush.msra.mxu0 %v3389
  %3527 = vmatpush.msra.mxu0 %v3386
  %3528 = vmatpush.msra.mxu0 %v3383
  %3529 = vmatpush.msra.mxu0 %v3380
  %3530 = vmatpush.msra.mxu0 %v3377
  %3531 = vmatmul.f32.gmra.mxu0 %v3431
  %v3532 = vpop.f32.mrf.mxu0
  %v3533 = vadd.f32 %v3507, %v3532
  %3534 = vmatmul.f32.gmra.mxu0 %v3433
  %v3535 = vpop.f32.mrf.mxu0
  %v3536 = vadd.f32 %v3510, %v3535
  %3537 = vmatmul.f32.gmra.mxu0 %v3435
  %v3538 = vpop.f32.mrf.mxu0
  %v3539 = vadd.f32 %v3513, %v3538
  %3540 = vdwg.mxu0
  %3541 = vmatpush.msra.mxu0 %v3375
  %3542 = vmatpush.msra.mxu0 %v3372
  %3543 = vmatpush.msra.mxu0 %v3369
  %3544 = vmatpush.msra.mxu0 %v3366
  %3545 = vmatpush.msra.mxu0 %v3363
  %3546 = vmatpush.msra.mxu0 %v3360
  %3547 = vmatpush.msra.mxu0 %v3357
  %3548 = vmatpush.msra.mxu0 %v3354
  %3549 = vmatpush.msra.mxu0 %v3351
  %3550 = vmatpush.msra.mxu0 %v3348
  %3551 = vmatpush.msra.mxu0 %v3345
  %3552 = vmatpush.msra.mxu0 %v3342
  %3553 = vmatpush.msra.mxu0 %v3339
  %3554 = vmatpush.msra.mxu0 %v3336
  %3555 = vmatpush.msra.mxu0 %v3333
  %3556 = vmatpush.msra.mxu0 %v3330
  %3557 = vmatmul.f32.gmra.mxu0 %v3416
  %v3558 = vpop.f32.mrf.mxu0
  %v3559 = vadd.f32 0.0, %v3558
  %3560 = vmatmul.f32.gmra.mxu0 %v3421
  %v3561 = vpop.f32.mrf.mxu0
  %v3562 = vadd.f32 0.0, %v3561
  %3563 = vmatmul.f32.gmra.mxu0 %v3425
  %v3564 = vpop.f32.mrf.mxu0
  %v3565 = vadd.f32 0.0, %v3564
  %3566 = vdwg.mxu0
  %3567 = vmatpush.msra.mxu0 0.0
  %3568 = vmatpush.msra.mxu0 0.0
  %3569 = vmatpush.msra.mxu0 0.0
  %3570 = vmatpush.msra.mxu0 0.0
  %3571 = vmatpush.msra.mxu0 0.0
  %3572 = vmatpush.msra.mxu0 0.0
  %3573 = vmatpush.msra.mxu0 %v3405
  %3574 = vmatpush.msra.mxu0 %v3402
  %3575 = vmatpush.msra.mxu0 %v3399
  %3576 = vmatpush.msra.mxu0 %v3396
  %3577 = vmatpush.msra.mxu0 %v3393
  %3578 = vmatpush.msra.mxu0 %v3390
  %3579 = vmatpush.msra.mxu0 %v3387
  %3580 = vmatpush.msra.mxu0 %v3384
  %3581 = vmatpush.msra.mxu0 %v3381
  %3582 = vmatpush.msra.mxu0 %v3378
  %3583 = vmatmul.f32.gmra.mxu0 %v3431
  %v3584 = vpop.f32.mrf.mxu0
  %v3585 = vadd.f32 %v3559, %v3584
  %3586 = vmatmul.f32.gmra.mxu0 %v3433
  %v3587 = vpop.f32.mrf.mxu0
  %v3588 = vadd.f32 %v3562, %v3587
  %3589 = vmatmul.f32.gmra.mxu0 %v3435
  %v3590 = vpop.f32.mrf.mxu0
  %v3591 = vadd.f32 %v3565, %v3590
  %3592 = vdwg.mxu0
  %v3593 = vadd.f32 %v3311, %v3481
  %v3594 = vadd.f32 %v3312, %v3533
  %v3595 = vadd.f32 %v3313, %v3585
  %v3596 = vadd.f32 %v3314, %v3484
  %v3597 = vadd.f32 %v3315, %v3536
  %v3598 = vadd.f32 %v3316, %v3588
  %v3599 = vadd.f32 %v3317, %v3487
  %v3600 = vadd.f32 %v3318, %v3539
  %v3601 = vadd.f32 %v3319, %v3591
  %v3602 = vld [vmem:[%s674] sm:$0xf0]
  %v3603 = vld [vmem:[%s674 + $0x8] sm:$0xf0]
  %v3604 = vld [vmem:[%s674 + $0x30] sm:$0x3]
  %v3605 = vld [vmem:[%s674 + $0x38] sm:$0x3]
  %v3606 = vld [vmem:[%s2184] sm:$0xff]
  %v3607 = vld [vmem:[%s2184 + $0x8] sm:$0xff]
  %v3608 = vld [vmem:[%s2184 + $0x10] sm:$0xff]
  %v3609 = vld [vmem:[%s2184 + $0x18] sm:$0xff]
  %v3610 = vld [vmem:[%s2184 + $0x20] sm:$0xff]
  %v3611 = vld [vmem:[%s2184 + $0x28] sm:$0xff]
  %v3612 = vld [vmem:[%s2184 + $0x30] sm:$0xff]
  %v3613 = vld [vmem:[%s2184 + $0x38] sm:$0xff]
  %v3614 = vld [vmem:[%s2184 + $0x40] sm:$0xff]
  %v3615 = vld [vmem:[%s2184 + $0x48] sm:$0xff]
  %v3616 = vld [vmem:[%s2184 + $0x50] sm:$0xff]
  %v3617 = vld [vmem:[%s2184 + $0x58] sm:$0xff]
  %v3618 = vld [vmem:[%s2184 + $0x60] sm:$0xff]
  %v3619 = vld [vmem:[%s2184 + $0x68] sm:$0xff]
  %v3620 = vld [vmem:[%s2184 + $0x70] sm:$0xff]
  %v3621 = vld [vmem:[%s2184 + $0x78] sm:$0xff]
  %v3622 = vld [vmem:[%s2184 + $0x80] sm:$0xff]
  %v3623 = vld [vmem:[%s2184 + $0x88] sm:$0xff]
  %v3624 = vld [vmem:[%s2184 + $0x90] sm:$0xff]
  %v3625 = vld [vmem:[%s2184 + $0x98] sm:$0xff]
  %v3626 = vld [vmem:[%s2184 + $0xa0] sm:$0xff]
  %v3627 = vld [vmem:[%s2184 + $0xa8] sm:$0xff]
  %v3628 = vld [vmem:[%s2184 + $0xb0] sm:$0xff]
  %v3629 = vld [vmem:[%s2184 + $0xb8] sm:$0xff]
  %v3630 = vld [vmem:[%s2184 + $0xc0] sm:$0xff]
  %v3631 = vld [vmem:[%s2184 + $0xc8] sm:$0xff]
  %v3632 = vld [vmem:[%s2184 + $0xd0] sm:$0xff]
  %v3633 = vld [vmem:[%s2184 + $0xd8] sm:$0xff]
  %v3634 = vld [vmem:[%s2184 + $0xe0] sm:$0xff]
  %v3635 = vld [vmem:[%s2184 + $0xe8] sm:$0xff]
  %v3636 = vld [vmem:[%s2184 + $0xf0] sm:$0xff]
  %v3637 = vld [vmem:[%s2184 + $0xf8] sm:$0xff]
  %v3638 = vld [vmem:[%s2184 + $0x100] sm:$0xff]
  %v3639 = vld [vmem:[%s2184 + $0x108] sm:$0xff]
  %v3640 = vld [vmem:[%s2184 + $0x110] sm:$0xff]
  %v3641 = vld [vmem:[%s2184 + $0x118] sm:$0xff]
  %v3642 = vld [vmem:[%s2184 + $0x120] sm:$0xff]
  %v3643 = vld [vmem:[%s2184 + $0x128] sm:$0xff]
  %v3644 = vld [vmem:[%s2184 + $0x130] sm:$0xff]
  %v3645 = vld [vmem:[%s2184 + $0x138] sm:$0xff]
  %v3646 = vld [vmem:[%s2184 + $0x140] sm:$0xff]
  %v3647 = vld [vmem:[%s2184 + $0x148] sm:$0xff]
  %v3648 = vld [vmem:[%s2184 + $0x150] sm:$0xff]
  %v3649 = vld [vmem:[%s2184 + $0x158] sm:$0xff]
  %v3650 = vld [vmem:[%s2184 + $0x160] sm:$0xff]
  %v3651 = vld [vmem:[%s2184 + $0x168] sm:$0xff]
  %v3652 = vld [vmem:[%s2184 + $0x170] sm:$0xff]
  %v3653 = vld [vmem:[%s2184 + $0x178] sm:$0xff]
  %v3654 = vld [vmem:[%s2184 + $0x180] sm:$0xff]
  %v3655 = vld [vmem:[%s2184 + $0x188] sm:$0xff]
  %v3656 = vld [vmem:[%s2184 + $0x190] sm:$0xff]
  %v3657 = vld [vmem:[%s2184 + $0x198] sm:$0xff]
  %v3658 = vld [vmem:[%s2184 + $0x1a0] sm:$0xff]
  %v3659 = vld [vmem:[%s2184 + $0x1a8] sm:$0xff]
  %v3660 = vld [vmem:[%s2184 + $0x1b0] sm:$0xff]
  %v3661 = vld [vmem:[%s2184 + $0x1b8] sm:$0xff]
  %v3662 = vld [vmem:[%s2184 + $0x1c0] sm:$0xff]
  %v3663 = vld [vmem:[%s2184 + $0x1c8] sm:$0xff]
  %v3664 = vld [vmem:[%s2184 + $0x1d0] sm:$0xff]
  %v3665 = vld [vmem:[%s2184 + $0x1d8] sm:$0xff]
  %v3666 = vld [vmem:[%s2184 + $0x1e0] sm:$0xff]
  %v3667 = vld [vmem:[%s2184 + $0x1e8] sm:$0xff]
  %v3668 = vld [vmem:[%s2184 + $0x1f0] sm:$0xff]
  %v3669 = vld [vmem:[%s2184 + $0x1f8] sm:$0xff]
  %v3670 = vld [vmem:[%s2184 + $0x200] sm:$0xff]
  %v3671 = vld [vmem:[%s2184 + $0x208] sm:$0xff]
  %v3672 = vld [vmem:[%s2184 + $0x210] sm:$0xff]
  %v3673 = vld [vmem:[%s2184 + $0x218] sm:$0xff]
  %v3674 = vld [vmem:[%s2184 + $0x220] sm:$0xff]
  %v3675 = vld [vmem:[%s2184 + $0x228] sm:$0xff]
  %v3676 = vld [vmem:[%s2184 + $0x230] sm:$0xff]
  %v3677 = vld [vmem:[%s2184 + $0x238] sm:$0xff]
  %v3678 = vld [vmem:[%s2184 + $0x240] sm:$0xff]
  %v3679 = vld [vmem:[%s2184 + $0x248] sm:$0xff]
  %v3680 = vld [vmem:[%s2184 + $0x250] sm:$0xff]
  %v3681 = vld [vmem:[%s2184 + $0x258] sm:$0xff]
  %v3682 = vld [vmem:[%s2184 + $0x260] sm:$0xff]
  %v3683 = vld [vmem:[%s2184 + $0x268] sm:$0xff]
  %v3688 = vrot.slane %v3602, 4
  %v3689 = vrot.slane %v3322, 4
  %v3690 = vsel %vm94, %v3688, %v3689
  %v3691 = vrot.slane %v3603, 4
  %v3692 = vrot.slane %v3323, 4
  %v3693 = vsel %vm94, %v3691, %v3692
  %v3694 = vrot.slane %v3324, 4
  %v3695 = vsel %vm94, %v3689, %v3694
  %v3696 = vrot.slane %v3325, 4
  %v3697 = vsel %vm94, %v3692, %v3696
  %v3698 = vrot.slane %v3604, 4
  %v3699 = vsel %vm94, %v3694, %v3698
  %v3700 = vrot.slane %v3605, 4
  %v3701 = vsel %vm94, %v3696, %v3700
  %v3705 = vsel %vm333, %v3693, 0
  %v3707 = vsel %vm333, %v3697, 0
  %v3709 = vsel %vm333, %v3701, 0
  %3711 = vmatpush.msra.mxu0 %v3651
  %3712 = vmatpush.msra.mxu0 %v3648
  %3713 = vmatpush.msra.mxu0 %v3645
  %3714 = vmatpush.msra.mxu0 %v3642
  %3715 = vmatpush.msra.mxu0 %v3639
  %3716 = vmatpush.msra.mxu0 %v3636
  %3717 = vmatpush.msra.mxu0 %v3633
  %3718 = vmatpush.msra.mxu0 %v3630
  %3719 = vmatpush.msra.mxu0 %v3627
  %3720 = vmatpush.msra.mxu0 %v3624
  %3721 = vmatpush.msra.mxu0 %v3621
  %3722 = vmatpush.msra.mxu0 %v3618
  %3723 = vmatpush.msra.mxu0 %v3615
  %3724 = vmatpush.msra.mxu0 %v3612
  %3725 = vmatpush.msra.mxu0 %v3609
  %3726 = vmatpush.msra.mxu0 %v3606
  %3727 = vmatmul.f32.gmra.mxu0 %v3690
  %v3728 = vpop.f32.mrf.mxu0
  %v3729 = vadd.f32 0.0, %v3728
  %3730 = vmatmul.f32.gmra.mxu0 %v3695
  %v3731 = vpop.f32.mrf.mxu0
  %v3732 = vadd.f32 0.0, %v3731
  %3733 = vmatmul.f32.gmra.mxu0 %v3699
  %v3734 = vpop.f32.mrf.mxu0
  %v3735 = vadd.f32 0.0, %v3734
  %3736 = vdwg.mxu0
  %3737 = vmatpush.msra.mxu0 0.0
  %3738 = vmatpush.msra.mxu0 0.0
  %3739 = vmatpush.msra.mxu0 0.0
  %3740 = vmatpush.msra.mxu0 0.0
  %3741 = vmatpush.msra.mxu0 0.0
  %3742 = vmatpush.msra.mxu0 0.0
  %3743 = vmatpush.msra.mxu0 %v3681
  %3744 = vmatpush.msra.mxu0 %v3678
  %3745 = vmatpush.msra.mxu0 %v3675
  %3746 = vmatpush.msra.mxu0 %v3672
  %3747 = vmatpush.msra.mxu0 %v3669
  %3748 = vmatpush.msra.mxu0 %v3666
  %3749 = vmatpush.msra.mxu0 %v3663
  %3750 = vmatpush.msra.mxu0 %v3660
  %3751 = vmatpush.msra.mxu0 %v3657
  %3752 = vmatpush.msra.mxu0 %v3654
  %3753 = vmatmul.f32.gmra.mxu0 %v3705
  %v3754 = vpop.f32.mrf.mxu0
  %v3755 = vadd.f32 %v3729, %v3754
  %3756 = vmatmul.f32.gmra.mxu0 %v3707
  %v3757 = vpop.f32.mrf.mxu0
  %v3758 = vadd.f32 %v3732, %v3757
  %3759 = vmatmul.f32.gmra.mxu0 %v3709
  %v3760 = vpop.f32.mrf.mxu0
  %v3761 = vadd.f32 %v3735, %v3760
  %3762 = vdwg.mxu0
  %3763 = vmatpush.msra.mxu0 %v3652
  %3764 = vmatpush.msra.mxu0 %v3649
  %3765 = vmatpush.msra.mxu0 %v3646
  %3766 = vmatpush.msra.mxu0 %v3643
  %3767 = vmatpush.msra.mxu0 %v3640
  %3768 = vmatpush.msra.mxu0 %v3637
  %3769 = vmatpush.msra.mxu0 %v3634
  %3770 = vmatpush.msra.mxu0 %v3631
  %3771 = vmatpush.msra.mxu0 %v3628
  %3772 = vmatpush.msra.mxu0 %v3625
  %3773 = vmatpush.msra.mxu0 %v3622
  %3774 = vmatpush.msra.mxu0 %v3619
  %3775 = vmatpush.msra.mxu0 %v3616
  %3776 = vmatpush.msra.mxu0 %v3613
  %3777 = vmatpush.msra.mxu0 %v3610
  %3778 = vmatpush.msra.mxu0 %v3607
  %3779 = vmatmul.f32.gmra.mxu0 %v3690
  %v3780 = vpop.f32.mrf.mxu0
  %v3781 = vadd.f32 0.0, %v3780
  %3782 = vmatmul.f32.gmra.mxu0 %v3695
  %v3783 = vpop.f32.mrf.mxu0
  %v3784 = vadd.f32 0.0, %v3783
  %3785 = vmatmul.f32.gmra.mxu0 %v3699
  %v3786 = vpop.f32.mrf.mxu0
  %v3787 = vadd.f32 0.0, %v3786
  %3788 = vdwg.mxu0
  %3789 = vmatpush.msra.mxu0 0.0
  %3790 = vmatpush.msra.mxu0 0.0
  %3791 = vmatpush.msra.mxu0 0.0
  %3792 = vmatpush.msra.mxu0 0.0
  %3793 = vmatpush.msra.mxu0 0.0
  %3794 = vmatpush.msra.mxu0 0.0
  %3795 = vmatpush.msra.mxu0 %v3682
  %3796 = vmatpush.msra.mxu0 %v3679
  %3797 = vmatpush.msra.mxu0 %v3676
  %3798 = vmatpush.msra.mxu0 %v3673
  %3799 = vmatpush.msra.mxu0 %v3670
  %3800 = vmatpush.msra.mxu0 %v3667
  %3801 = vmatpush.msra.mxu0 %v3664
  %3802 = vmatpush.msra.mxu0 %v3661
  %3803 = vmatpush.msra.mxu0 %v3658
  %3804 = vmatpush.msra.mxu0 %v3655
  %3805 = vmatmul.f32.gmra.mxu0 %v3705
  %v3806 = vpop.f32.mrf.mxu0
  %v3807 = vadd.f32 %v3781, %v3806
  %3808 = vmatmul.f32.gmra.mxu0 %v3707
  %v3809 = vpop.f32.mrf.mxu0
  %v3810 = vadd.f32 %v3784, %v3809
  %3811 = vmatmul.f32.gmra.mxu0 %v3709
  %v3812 = vpop.f32.mrf.mxu0
  %v3813 = vadd.f32 %v3787, %v3812
  %3814 = vdwg.mxu0
  %3815 = vmatpush.msra.mxu0 %v3653
  %3816 = vmatpush.msra.mxu0 %v3650
  %3817 = vmatpush.msra.mxu0 %v3647
  %3818 = vmatpush.msra.mxu0 %v3644
  %3819 = vmatpush.msra.mxu0 %v3641
  %3820 = vmatpush.msra.mxu0 %v3638
  %3821 = vmatpush.msra.mxu0 %v3635
  %3822 = vmatpush.msra.mxu0 %v3632
  %3823 = vmatpush.msra.mxu0 %v3629
  %3824 = vmatpush.msra.mxu0 %v3626
  %3825 = vmatpush.msra.mxu0 %v3623
  %3826 = vmatpush.msra.mxu0 %v3620
  %3827 = vmatpush.msra.mxu0 %v3617
  %3828 = vmatpush.msra.mxu0 %v3614
  %3829 = vmatpush.msra.mxu0 %v3611
  %3830 = vmatpush.msra.mxu0 %v3608
  %3831 = vmatmul.f32.gmra.mxu0 %v3690
  %v3832 = vpop.f32.mrf.mxu0
  %v3833 = vadd.f32 0.0, %v3832
  %3834 = vmatmul.f32.gmra.mxu0 %v3695
  %v3835 = vpop.f32.mrf.mxu0
  %v3836 = vadd.f32 0.0, %v3835
  %3837 = vmatmul.f32.gmra.mxu0 %v3699
  %v3838 = vpop.f32.mrf.mxu0
  %v3839 = vadd.f32 0.0, %v3838
  %3840 = vdwg.mxu0
  %3841 = vmatpush.msra.mxu0 0.0
  %3842 = vmatpush.msra.mxu0 0.0
  %3843 = vmatpush.msra.mxu0 0.0
  %3844 = vmatpush.msra.mxu0 0.0
  %3845 = vmatpush.msra.mxu0 0.0
  %3846 = vmatpush.msra.mxu0 0.0
  %3847 = vmatpush.msra.mxu0 %v3683
  %3848 = vmatpush.msra.mxu0 %v3680
  %3849 = vmatpush.msra.mxu0 %v3677
  %3850 = vmatpush.msra.mxu0 %v3674
  %3851 = vmatpush.msra.mxu0 %v3671
  %3852 = vmatpush.msra.mxu0 %v3668
  %3853 = vmatpush.msra.mxu0 %v3665
  %3854 = vmatpush.msra.mxu0 %v3662
  %3855 = vmatpush.msra.mxu0 %v3659
  %3856 = vmatpush.msra.mxu0 %v3656
  %3857 = vmatmul.f32.gmra.mxu0 %v3705
  %v3858 = vpop.f32.mrf.mxu0
  %v3859 = vadd.f32 %v3833, %v3858
  %3860 = vmatmul.f32.gmra.mxu0 %v3707
  %v3861 = vpop.f32.mrf.mxu0
  %v3862 = vadd.f32 %v3836, %v3861
  %3863 = vmatmul.f32.gmra.mxu0 %v3709
  %v3864 = vpop.f32.mrf.mxu0
  %v3865 = vadd.f32 %v3839, %v3864
  %3866 = vdwg.mxu0
  %v3867 = vadd.f32 %v3593, %v3755
  %v3868 = vadd.f32 %v3594, %v3807
  %v3869 = vadd.f32 %v3595, %v3859
  %v3870 = vadd.f32 %v3596, %v3758
  %v3871 = vadd.f32 %v3597, %v3810
  %v3872 = vadd.f32 %v3598, %v3862
  %v3873 = vadd.f32 %v3599, %v3761
  %v3874 = vadd.f32 %v3600, %v3813
  %v3875 = vadd.f32 %v3601, %v3865
  %s3876 = scalar_lea.vmem [#allocation3], 72
  %3877 = vst [vmem:[%s3876] sm:$0xff] %v3867
  %3878 = vst [vmem:[%s3876 + $0x8] sm:$0xff] %v3868
  %3879 = vst.msk [vmem:[%s3876 + $0x10] sm:$0xff] %vm2457, %v3869
  %3880 = vst [vmem:[%s3876 + $0x18] sm:$0xff] %v3870
  %3881 = vst [vmem:[%s3876 + $0x20] sm:$0xff] %v3871
  %3882 = vst.msk [vmem:[%s3876 + $0x28] sm:$0xff] %vm2457, %v3872
  %3883 = vst [vmem:[%s3876 + $0x30] sm:$0x3f] %v3873
  %3884 = vst [vmem:[%s3876 + $0x38] sm:$0x3f] %v3874
  %3885 = vst.msk [vmem:[%s3876 + $0x40] sm:$0x3f] %vm2464, %v3875
  %v3886 = vadd.f32 %v3867, %v3870
  %v3887 = vsel %vm1711, %v3873, 0.0
  %v3888 = vadd.f32 %v3886, %v3887
  %v3889 = vrot.slane %v3888, 4
  %v3890 = vadd.f32 %v3888, %v3889
  %v3891 = vrot.slane %v3890, 2
  %v3892 = vadd.f32 %v3890, %v3891
  %v3893 = vrot.slane %v3892, 1
  %v3894 = vadd.f32 %v3892, %v3893
  %v3895 = vadd.f32 %v3868, %v3871
  %v3896 = vsel %vm1711, %v3874, 0.0
  %v3897 = vadd.f32 %v3895, %v3896
  %v3898 = vrot.slane %v3897, 4
  %v3899 = vadd.f32 %v3897, %v3898
  %v3900 = vrot.slane %v3899, 2
  %v3901 = vadd.f32 %v3899, %v3900
  %v3902 = vrot.slane %v3901, 1
  %v3903 = vadd.f32 %v3901, %v3902
  %v3904 = vsel %vm2457, %v3869, 0.0
  %v3905 = vsel %vm2457, %v3872, 0.0
  %v3906 = vadd.f32 %v3904, %v3905
  %v3907 = vsel %vm2464, %v3875, 0.0
  %v3908 = vadd.f32 %v3906, %v3907
  %v3909 = vrot.slane %v3908, 4
  %v3910 = vadd.f32 %v3908, %v3909
  %v3911 = vrot.slane %v3910, 2
  %v3912 = vadd.f32 %v3910, %v3911
  %v3913 = vrot.slane %v3912, 1
  %v3914 = vadd.f32 %v3912, %v3913
  %v3915 = vadd.f32 %v2495, %v3894
  %v3916 = vadd.f32 %v2496, %v3903
  %v3917 = vadd.f32 %v2497, %v3914
  %v3918 = vmul.f32 %v3867, %v3867
  %v3919 = vmul.f32 %v3868, %v3868
  %v3920 = vmul.f32 %v3869, %v3869
  %v3921 = vmul.f32 %v3870, %v3870
  %v3922 = vmul.f32 %v3871, %v3871
  %v3923 = vmul.f32 %v3872, %v3872
  %v3924 = vmul.f32 %v3873, %v3873
  %v3925 = vmul.f32 %v3874, %v3874
  %v3926 = vmul.f32 %v3875, %v3875
  %v3927 = vadd.f32 %v3918, %v3921
  %v3928 = vsel %vm1711, %v3924, 0.0
  %v3929 = vadd.f32 %v3927, %v3928
  %v3930 = vrot.slane %v3929, 4
  %v3931 = vadd.f32 %v3929, %v3930
  %v3932 = vrot.slane %v3931, 2
  %v3933 = vadd.f32 %v3931, %v3932
  %v3934 = vrot.slane %v3933, 1
  %v3935 = vadd.f32 %v3933, %v3934
  %v3936 = vadd.f32 %v3919, %v3922
  %v3937 = vsel %vm1711, %v3925, 0.0
  %v3938 = vadd.f32 %v3936, %v3937
  %v3939 = vrot.slane %v3938, 4
  %v3940 = vadd.f32 %v3938, %v3939
  %v3941 = vrot.slane %v3940, 2
  %v3942 = vadd.f32 %v3940, %v3941
  %v3943 = vrot.slane %v3942, 1
  %v3944 = vadd.f32 %v3942, %v3943
  %v3945 = vsel %vm2457, %v3920, 0.0
  %v3946 = vsel %vm2457, %v3923, 0.0
  %v3947 = vadd.f32 %v3945, %v3946
  %v3948 = vsel %vm2464, %v3926, 0.0
  %v3949 = vadd.f32 %v3947, %v3948
  %v3950 = vrot.slane %v3949, 4
  %v3951 = vadd.f32 %v3949, %v3950
  %v3952 = vrot.slane %v3951, 2
  %v3953 = vadd.f32 %v3951, %v3952
  %v3954 = vrot.slane %v3953, 1
  %v3955 = vadd.f32 %v3953, %v3954
  %v3956 = vadd.f32 %v2536, %v3935
  %v3957 = vadd.f32 %v2537, %v3944
  %v3958 = vadd.f32 %v2538, %v3955
  %v3959 = vld [vmem:[%s9] sm:$0xff]
  %v3960 = vld [vmem:[%s9 + $0x8] sm:$0xff]
  %v3961 = vld [vmem:[%s9 + $0x10] sm:$0xff]
  %v3962 = vld [vmem:[%s9 + $0x18] sm:$0xff]
  %v3963 = vld [vmem:[%s9 + $0x20] sm:$0xff]
  %v3964 = vld [vmem:[%s9 + $0x28] sm:$0xff]
  %v3965 = vld [vmem:[%s9 + $0x30] sm:$0xff]
  %v3966 = vld [vmem:[%s9 + $0x38] sm:$0xff]
  %v3967 = vld [vmem:[%s9 + $0x40] sm:$0xff]
  %v3968 = vld [vmem:[%s9 + $0x48] sm:$0xff]
  %v3969 = vld [vmem:[%s9 + $0x50] sm:$0xff]
  %v3970 = vld [vmem:[%s9 + $0x58] sm:$0xff]
  %v3971 = vld [vmem:[%s9 + $0x60] sm:$0xff]
  %v3972 = vld [vmem:[%s9 + $0x68] sm:$0xff]
  %v3973 = vld [vmem:[%s9 + $0x70] sm:$0xff]
  %v3974 = vld [vmem:[%s9 + $0x78] sm:$0xff]
  %v3975 = vld [vmem:[%s9 + $0x80] sm:$0xff]
  %v3976 = vld [vmem:[%s9 + $0x88] sm:$0xff]
  %v3977 = vld [vmem:[%s9 + $0x90] sm:$0xff]
  %v3978 = vld [vmem:[%s9 + $0x98] sm:$0xff]
  %v3979 = vld [vmem:[%s9 + $0xa0] sm:$0xff]
  %v3980 = vld [vmem:[%s9 + $0xa8] sm:$0xff]
  %v3981 = vld [vmem:[%s9 + $0xb0] sm:$0xff]
  %v3982 = vld [vmem:[%s9 + $0xb8] sm:$0xff]
  %v3983 = vld [vmem:[%s9 + $0xc0] sm:$0xff]
  %v3984 = vld [vmem:[%s9 + $0xc8] sm:$0xff]
  %v3985 = vld [vmem:[%s9 + $0xd0] sm:$0xff]
  %v3986 = vld [vmem:[%s9 + $0xd8] sm:$0xff]
  %v3987 = vld [vmem:[%s9 + $0xe0] sm:$0xff]
  %v3988 = vld [vmem:[%s9 + $0xe8] sm:$0xff]
  %v3989 = vld [vmem:[%s9 + $0xf0] sm:$0xff]
  %v3990 = vld [vmem:[%s9 + $0xf8] sm:$0xff]
  %v3991 = vld [vmem:[%s9 + $0x100] sm:$0xff]
  %v3992 = vld [vmem:[%s9 + $0x108] sm:$0xff]
  %v3993 = vld [vmem:[%s9 + $0x110] sm:$0xff]
  %v3994 = vld [vmem:[%s9 + $0x118] sm:$0xff]
  %v3995 = vld [vmem:[%s9 + $0x120] sm:$0xff]
  %v3996 = vld [vmem:[%s9 + $0x128] sm:$0xff]
  %v3997 = vld [vmem:[%s9 + $0x130] sm:$0xff]
  %v3998 = vld [vmem:[%s9 + $0x138] sm:$0xff]
  %v3999 = vld [vmem:[%s9 + $0x140] sm:$0xff]
  %v4000 = vld [vmem:[%s9 + $0x148] sm:$0xff]
  %v4001 = vld [vmem:[%s9 + $0x150] sm:$0xff]
  %v4002 = vld [vmem:[%s9 + $0x158] sm:$0xff]
  %v4004 = vsel %vm2457, %v3917, 0
  %4006 = vmatpush.msra.mxu0 %v3974
  %4007 = vmatpush.msra.mxu0 %v3973
  %4008 = vmatpush.msra.mxu0 %v3972
  %4009 = vmatpush.msra.mxu0 %v3971
  %4010 = vmatpush.msra.mxu0 %v3970
  %4011 = vmatpush.msra.mxu0 %v3969
  %4012 = vmatpush.msra.mxu0 %v3968
  %4013 = vmatpush.msra.mxu0 %v3967
  %4014 = vmatpush.msra.mxu0 %v3966
  %4015 = vmatpush.msra.mxu0 %v3965
  %4016 = vmatpush.msra.mxu0 %v3964
  %4017 = vmatpush.msra.mxu0 %v3963
  %4018 = vmatpush.msra.mxu0 %v3962
  %4019 = vmatpush.msra.mxu0 %v3961
  %4020 = vmatpush.msra.mxu0 %v3960
  %4021 = vmatpush.msra.mxu0 %v3959
  %4022 = vmatmul.f32.gmra.mxu0 %v3915
  %v4023 = vpop.f32.mrf.mxu0
  %v4024 = vadd.f32 0.0, %v4023
  %4025 = vdwg.mxu0
  %4026 = vmatpush.msra.mxu0 %v3990
  %4027 = vmatpush.msra.mxu0 %v3989
  %4028 = vmatpush.msra.mxu0 %v3988
  %4029 = vmatpush.msra.mxu0 %v3987
  %4030 = vmatpush.msra.mxu0 %v3986
  %4031 = vmatpush.msra.mxu0 %v3985
  %4032 = vmatpush.msra.mxu0 %v3984
  %4033 = vmatpush.msra.mxu0 %v3983
  %4034 = vmatpush.msra.mxu0 %v3982
  %4035 = vmatpush.msra.mxu0 %v3981
  %4036 = vmatpush.msra.mxu0 %v3980
  %4037 = vmatpush.msra.mxu0 %v3979
  %4038 = vmatpush.msra.mxu0 %v3978
  %4039 = vmatpush.msra.mxu0 %v3977
  %4040 = vmatpush.msra.mxu0 %v3976
  %4041 = vmatpush.msra.mxu0 %v3975
  %4042 = vmatmul.f32.gmra.mxu0 %v3916
  %v4043 = vpop.f32.mrf.mxu0
  %v4044 = vadd.f32 %v4024, %v4043
  %4045 = vdwg.mxu0
  %4046 = vmatpush.msra.mxu0 0.0
  %4047 = vmatpush.msra.mxu0 0.0
  %4048 = vmatpush.msra.mxu0 0.0
  %4049 = vmatpush.msra.mxu0 0.0
  %4050 = vmatpush.msra.mxu0 %v4002
  %4051 = vmatpush.msra.mxu0 %v4001
  %4052 = vmatpush.msra.mxu0 %v4000
  %4053 = vmatpush.msra.mxu0 %v3999
  %4054 = vmatpush.msra.mxu0 %v3998
  %4055 = vmatpush.msra.mxu0 %v3997
  %4056 = vmatpush.msra.mxu0 %v3996
  %4057 = vmatpush.msra.mxu0 %v3995
  %4058 = vmatpush.msra.mxu0 %v3994
  %4059 = vmatpush.msra.mxu0 %v3993
  %4060 = vmatpush.msra.mxu0 %v3992
  %4061 = vmatpush.msra.mxu0 %v3991
  %4062 = vmatmul.f32.gmra.mxu0 %v4004
  %v4063 = vpop.f32.mrf.mxu0
  %v4064 = vadd.f32 %v4044, %v4063
  %4065 = vdwg.mxu0
  %v4067 = vsel %vm2457, %v3958, 0
  %4069 = vmatpush.msra.mxu0 %v3974
  %4070 = vmatpush.msra.mxu0 %v3973
  %4071 = vmatpush.msra.mxu0 %v3972
  %4072 = vmatpush.msra.mxu0 %v3971
  %4073 = vmatpush.msra.mxu0 %v3970
  %4074 = vmatpush.msra.mxu0 %v3969
  %4075 = vmatpush.msra.mxu0 %v3968
  %4076 = vmatpush.msra.mxu0 %v3967
  %4077 = vmatpush.msra.mxu0 %v3966
  %4078 = vmatpush.msra.mxu0 %v3965
  %4079 = vmatpush.msra.mxu0 %v3964
  %4080 = vmatpush.msra.mxu0 %v3963
  %4081 = vmatpush.msra.mxu0 %v3962
  %4082 = vmatpush.msra.mxu0 %v3961
  %4083 = vmatpush.msra.mxu0 %v3960
  %4084 = vmatpush.msra.mxu0 %v3959
  %4085 = vmatmul.f32.gmra.mxu0 %v3956
  %v4086 = vpop.f32.mrf.mxu0
  %v4087 = vadd.f32 0.0, %v4086
  %4088 = vdwg.mxu0
  %4089 = vmatpush.msra.mxu0 %v3990
  %4090 = vmatpush.msra.mxu0 %v3989
  %4091 = vmatpush.msra.mxu0 %v3988
  %4092 = vmatpush.msra.mxu0 %v3987
  %4093 = vmatpush.msra.mxu0 %v3986
  %4094 = vmatpush.msra.mxu0 %v3985
  %4095 = vmatpush.msra.mxu0 %v3984
  %4096 = vmatpush.msra.mxu0 %v3983
  %4097 = vmatpush.msra.mxu0 %v3982
  %4098 = vmatpush.msra.mxu0 %v3981
  %4099 = vmatpush.msra.mxu0 %v3980
  %4100 = vmatpush.msra.mxu0 %v3979
  %4101 = vmatpush.msra.mxu0 %v3978
  %4102 = vmatpush.msra.mxu0 %v3977
  %4103 = vmatpush.msra.mxu0 %v3976
  %4104 = vmatpush.msra.mxu0 %v3975
  %4105 = vmatmul.f32.gmra.mxu0 %v3957
  %v4106 = vpop.f32.mrf.mxu0
  %v4107 = vadd.f32 %v4087, %v4106
  %4108 = vdwg.mxu0
  %4109 = vmatpush.msra.mxu0 0.0
  %4110 = vmatpush.msra.mxu0 0.0
  %4111 = vmatpush.msra.mxu0 0.0
  %4112 = vmatpush.msra.mxu0 0.0
  %4113 = vmatpush.msra.mxu0 %v4002
  %4114 = vmatpush.msra.mxu0 %v4001
  %4115 = vmatpush.msra.mxu0 %v4000
  %4116 = vmatpush.msra.mxu0 %v3999
  %4117 = vmatpush.msra.mxu0 %v3998
  %4118 = vmatpush.msra.mxu0 %v3997
  %4119 = vmatpush.msra.mxu0 %v3996
  %4120 = vmatpush.msra.mxu0 %v3995
  %4121 = vmatpush.msra.mxu0 %v3994
  %4122 = vmatpush.msra.mxu0 %v3993
  %4123 = vmatpush.msra.mxu0 %v3992
  %4124 = vmatpush.msra.mxu0 %v3991
  %4125 = vmatmul.f32.gmra.mxu0 %v4067
  %v4126 = vpop.f32.mrf.mxu0
  %v4127 = vadd.f32 %v4107, %v4126
  %4128 = vdwg.mxu0
  %v4129 = vld [vmem:[%s10] sm:$0xff]
  %v4130 = vld [vmem:[%s10 + $0x8] sm:$0xff]
  %v4131 = vld [vmem:[%s10 + $0x10] sm:$0xff]
  %v4132 = vld [vmem:[%s10 + $0x18] sm:$0xff]
  %v4133 = vld [vmem:[%s10 + $0x20] sm:$0xff]
  %v4134 = vld [vmem:[%s10 + $0x28] sm:$0xff]
  %vm4135 = vcmask 130048
  %v4137 = vsel %vm4135, %v4064, 0
  %4139 = vmatpush.msra.mxu0 0.0
  %4140 = vmatpush.msra.mxu0 0.0
  %4141 = vmatpush.msra.mxu0 0.0
  %4142 = vmatpush.msra.mxu0 0.0
  %4143 = vmatpush.msra.mxu0 0.0
  %4144 = vmatpush.msra.mxu0 0.0
  %4145 = vmatpush.msra.mxu0 0.0
  %4146 = vmatpush.msra.mxu0 0.0
  %4147 = vmatpush.msra.mxu0 0.0
  %4148 = vmatpush.msra.mxu0 0.0
  %4149 = vmatpush.msra.mxu0 0.0
  %4150 = vmatpush.msra.mxu0 0.0
  %4151 = vmatpush.msra.mxu0 0.0
  %4152 = vmatpush.msra.mxu0 0.0
  %4153 = vmatpush.msra.mxu0 %v4132
  %4154 = vmatpush.msra.mxu0 %v4129
  %4155 = vmatmul.f32.gmra.mxu0 %v4137
  %v4156 = vpop.f32.mrf.mxu0
  %v4157 = vadd.f32 0.0, %v4156
  %4158 = vdwg.mxu0
  %4159 = vmatpush.msra.mxu0 0.0
  %4160 = vmatpush.msra.mxu0 0.0
  %4161 = vmatpush.msra.mxu0 0.0
  %4162 = vmatpush.msra.mxu0 0.0
  %4163 = vmatpush.msra.mxu0 0.0
  %4164 = vmatpush.msra.mxu0 0.0
  %4165 = vmatpush.msra.mxu0 0.0
  %4166 = vmatpush.msra.mxu0 0.0
  %4167 = vmatpush.msra.mxu0 0.0
  %4168 = vmatpush.msra.mxu0 0.0
  %4169 = vmatpush.msra.mxu0 0.0
  %4170 = vmatpush.msra.mxu0 0.0
  %4171 = vmatpush.msra.mxu0 0.0
  %4172 = vmatpush.msra.mxu0 0.0
  %4173 = vmatpush.msra.mxu0 %v4133
  %4174 = vmatpush.msra.mxu0 %v4130
  %4175 = vmatmul.f32.gmra.mxu0 %v4137
  %v4176 = vpop.f32.mrf.mxu0
  %v4177 = vadd.f32 0.0, %v4176
  %4178 = vdwg.mxu0
  %4179 = vmatpush.msra.mxu0 0.0
  %4180 = vmatpush.msra.mxu0 0.0
  %4181 = vmatpush.msra.mxu0 0.0
  %4182 = vmatpush.msra.mxu0 0.0
  %4183 = vmatpush.msra.mxu0 0.0
  %4184 = vmatpush.msra.mxu0 0.0
  %4185 = vmatpush.msra.mxu0 0.0
  %4186 = vmatpush.msra.mxu0 0.0
  %4187 = vmatpush.msra.mxu0 0.0
  %4188 = vmatpush.msra.mxu0 0.0
  %4189 = vmatpush.msra.mxu0 0.0
  %4190 = vmatpush.msra.mxu0 0.0
  %4191 = vmatpush.msra.mxu0 0.0
  %4192 = vmatpush.msra.mxu0 0.0
  %4193 = vmatpush.msra.mxu0 %v4134
  %4194 = vmatpush.msra.mxu0 %v4131
  %4195 = vmatmul.f32.gmra.mxu0 %v4137
  %v4196 = vpop.f32.mrf.mxu0
  %v4197 = vadd.f32 0.0, %v4196
  %4198 = vdwg.mxu0
  %v4199 = vmul.f32 %v4157, 0.0010330578
  %v4200 = vmul.f32 %v4177, 0.0010330578
  %v4201 = vmul.f32 %v4197, 0.0010330578
  %v4203 = vsel %vm4135, %v4127, 0
  %4205 = vmatpush.msra.mxu0 0.0
  %4206 = vmatpush.msra.mxu0 0.0
  %4207 = vmatpush.msra.mxu0 0.0
  %4208 = vmatpush.msra.mxu0 0.0
  %4209 = vmatpush.msra.mxu0 0.0
  %4210 = vmatpush.msra.mxu0 0.0
  %4211 = vmatpush.msra.mxu0 0.0
  %4212 = vmatpush.msra.mxu0 0.0
  %4213 = vmatpush.msra.mxu0 0.0
  %4214 = vmatpush.msra.mxu0 0.0
  %4215 = vmatpush.msra.mxu0 0.0
  %4216 = vmatpush.msra.mxu0 0.0
  %4217 = vmatpush.msra.mxu0 0.0
  %4218 = vmatpush.msra.mxu0 0.0
  %4219 = vmatpush.msra.mxu0 %v4132
  %4220 = vmatpush.msra.mxu0 %v4129
  %4221 = vmatmul.f32.gmra.mxu0 %v4203
  %v4222 = vpop.f32.mrf.mxu0
  %v4223 = vadd.f32 0.0, %v4222
  %4224 = vdwg.mxu0
  %4225 = vmatpush.msra.mxu0 0.0
  %4226 = vmatpush.msra.mxu0 0.0
  %4227 = vmatpush.msra.mxu0 0.0
  %4228 = vmatpush.msra.mxu0 0.0
  %4229 = vmatpush.msra.mxu0 0.0
  %4230 = vmatpush.msra.mxu0 0.0
  %4231 = vmatpush.msra.mxu0 0.0
  %4232 = vmatpush.msra.mxu0 0.0
  %4233 = vmatpush.msra.mxu0 0.0
  %4234 = vmatpush.msra.mxu0 0.0
  %4235 = vmatpush.msra.mxu0 0.0
  %4236 = vmatpush.msra.mxu0 0.0
  %4237 = vmatpush.msra.mxu0 0.0
  %4238 = vmatpush.msra.mxu0 0.0
  %4239 = vmatpush.msra.mxu0 %v4133
  %4240 = vmatpush.msra.mxu0 %v4130
  %4241 = vmatmul.f32.gmra.mxu0 %v4203
  %v4242 = vpop.f32.mrf.mxu0
  %v4243 = vadd.f32 0.0, %v4242
  %4244 = vdwg.mxu0
  %4245 = vmatpush.msra.mxu0 0.0
  %4246 = vmatpush.msra.mxu0 0.0
  %4247 = vmatpush.msra.mxu0 0.0
  %4248 = vmatpush.msra.mxu0 0.0
  %4249 = vmatpush.msra.mxu0 0.0
  %4250 = vmatpush.msra.mxu0 0.0
  %4251 = vmatpush.msra.mxu0 0.0
  %4252 = vmatpush.msra.mxu0 0.0
  %4253 = vmatpush.msra.mxu0 0.0
  %4254 = vmatpush.msra.mxu0 0.0
  %4255 = vmatpush.msra.mxu0 0.0
  %4256 = vmatpush.msra.mxu0 0.0
  %4257 = vmatpush.msra.mxu0 0.0
  %4258 = vmatpush.msra.mxu0 0.0
  %4259 = vmatpush.msra.mxu0 %v4134
  %4260 = vmatpush.msra.mxu0 %v4131
  %4261 = vmatmul.f32.gmra.mxu0 %v4203
  %v4262 = vpop.f32.mrf.mxu0
  %v4263 = vadd.f32 0.0, %v4262
  %4264 = vdwg.mxu0
  %v4265 = vmul.f32 %v4223, 0.0010330578
  %v4266 = vmul.f32 %v4243, 0.0010330578
  %v4267 = vmul.f32 %v4263, 0.0010330578
  %v4268 = vmul.f32 %v4199, %v4199
  %v4269 = vmul.f32 %v4200, %v4200
  %v4270 = vmul.f32 %v4201, %v4201
  %v4271 = vsub.f32 %v4265, %v4268
  %v4272 = vsub.f32 %v4266, %v4269
  %v4273 = vsub.f32 %v4267, %v4270
  %v4274 = vld [vmem:[%s11] sm:$0x7]
  %v4275 = vadd.f32 %v4271, 1e-05
  %v4276 = vadd.f32 %v4272, 1e-05
  %v4277 = vadd.f32 %v4273, 1e-05
  %v4278 = vrsqrt.pop %v4275
  %v4279 = vmul.f32 %v4278, %v4275
  %v4280 = vmul.f32 %v4279, %v4278
  %v4281 = vmul.f32 0.5, %v4280
  %v4282 = vsub.f32 1.5, %v4281
  %v4283 = vmul.f32 %v4278, %v4282
  %vm4284 = vweird.f32 %v4275
  %vm4285 = vweird.f32 %v4278
  %vm4286 = vmor %vm4284, %vm4285
  %v4287 = vsel %vm4286, %v4278, %v4283
  %v4288 = vrsqrt.pop %v4276
  %v4289 = vmul.f32 %v4288, %v4276
  %v4290 = vmul.f32 %v4289, %v4288
  %v4291 = vmul.f32 0.5, %v4290
  %v4292 = vsub.f32 1.5, %v4291
  %v4293 = vmul.f32 %v4288, %v4292
  %vm4294 = vweird.f32 %v4276
  %vm4295 = vweird.f32 %v4288
  %vm4296 = vmor %vm4294, %vm4295
  %v4297 = vsel %vm4296, %v4288, %v4293
  %v4298 = vrsqrt.pop %v4277
  %v4299 = vmul.f32 %v4298, %v4277
  %v4300 = vmul.f32 %v4299, %v4298
  %v4301 = vmul.f32 0.5, %v4300
  %v4302 = vsub.f32 1.5, %v4301
  %v4303 = vmul.f32 %v4298, %v4302
  %vm4304 = vweird.f32 %v4277
  %vm4305 = vweird.f32 %v4298
  %vm4306 = vmor %vm4304, %vm4305
  %v4307 = vsel %vm4306, %v4298, %v4303
  %v4311 = vrot.slane %v4297, 7
  %v4312 = vrot.slane %v4307, 6
  %v4313 = vsel %vm976, %v4287, %v4311
  %v4314 = vsel %vm344, %v4313, %v4312
  %v4316 = vmul.f32 %v4274, %v4314
  %v4317 = vld [vmem:[%s12] sm:$0x7]
  %v4319 = vperm.slane %v4316, 0
  %v4320 = vperm.slane %v4316, 1
  %v4321 = vperm.slane %v4316, 2
  %v4325 = vmul.f32 %v4199, %v4319
  %v4326 = vmul.f32 %v4200, %v4320
  %v4327 = vmul.f32 %v4201, %v4321
  %v4331 = vrot.slane %v4326, 7
  %v4332 = vrot.slane %v4327, 6
  %v4333 = vsel %vm976, %v4325, %v4331
  %v4334 = vsel %vm344, %v4333, %v4332
  %v4336 = vsub.f32 %v4317, %v4334
  %v4337 = vld [vmem:[#allocation3] sm:$0xff]
  %v4338 = vld [vmem:[#allocation3 + $0x8] sm:$0xff]
  %v4339 = vld [vmem:[#allocation3 + $0x10] sm:$0xff]
  %v4340 = vld [vmem:[#allocation3 + $0x18] sm:$0xff]
  %v4341 = vld [vmem:[#allocation3 + $0x20] sm:$0xff]
  %v4342 = vld [vmem:[#allocation3 + $0x28] sm:$0xff]
  %v4343 = vld [vmem:[#allocation3 + $0x30] sm:$0x3f]
  %v4344 = vld [vmem:[#allocation3 + $0x38] sm:$0x3f]
  %v4345 = vld [vmem:[#allocation3 + $0x40] sm:$0x3f]
  %v4346 = vmul.f32 %v4337, %v4319
  %v4347 = vmul.f32 %v4338, %v4320
  %v4348 = vmul.f32 %v4339, %v4321
  %v4349 = vmul.f32 %v4340, %v4319
  %v4350 = vmul.f32 %v4341, %v4320
  %v4351 = vmul.f32 %v4342, %v4321
  %v4352 = vmul.f32 %v4343, %v4319
  %v4353 = vmul.f32 %v4344, %v4320
  %v4354 = vmul.f32 %v4345, %v4321
  %v4356 = vperm.slane %v4336, 0
  %v4357 = vperm.slane %v4336, 1
  %v4358 = vperm.slane %v4336, 2
  %v4362 = vadd.f32 %v4346, %v4356
  %v4363 = vadd.f32 %v4347, %v4357
  %v4364 = vadd.f32 %v4348, %v4358
  %v4365 = vadd.f32 %v4349, %v4356
  %v4366 = vadd.f32 %v4350, %v4357
  %v4367 = vadd.f32 %v4351, %v4358
  %v4368 = vadd.f32 %v4352, %v4356
  %v4369 = vadd.f32 %v4353, %v4357
  %v4370 = vadd.f32 %v4354, %v4358
  %vm4371 = vcmp.gt.f32.partialorder %v4362, 0.0
  %vm4372 = vcmp.gt.f32.partialorder %v4363, 0.0
  %vm4373 = vcmp.gt.f32.partialorder %v4364, 0.0
  %vm4374 = vcmp.gt.f32.partialorder %v4365, 0.0
  %vm4375 = vcmp.gt.f32.partialorder %v4366, 0.0
  %vm4376 = vcmp.gt.f32.partialorder %v4367, 0.0
  %vm4377 = vcmp.gt.f32.partialorder %v4368, 0.0
  %vm4378 = vcmp.gt.f32.partialorder %v4369, 0.0
  %vm4379 = vcmp.gt.f32.partialorder %v4370, 0.0
  %v4380 = vmul.f32 %v4362, 0.2
  %v4381 = vmul.f32 %v4363, 0.2
  %v4382 = vmul.f32 %v4364, 0.2
  %v4383 = vmul.f32 %v4365, 0.2
  %v4384 = vmul.f32 %v4366, 0.2
  %v4385 = vmul.f32 %v4367, 0.2
  %v4386 = vmul.f32 %v4368, 0.2
  %v4387 = vmul.f32 %v4369, 0.2
  %v4388 = vmul.f32 %v4370, 0.2
  %v4389 = vsel %vm4371, %v4362, %v4380
  %v4390 = vsel %vm4372, %v4363, %v4381
  %v4391 = vsel %vm4373, %v4364, %v4382
  %v4392 = vsel %vm4374, %v4365, %v4383
  %v4393 = vsel %vm4375, %v4366, %v4384
  %v4394 = vsel %vm4376, %v4367, %v4385
  %v4395 = vsel %vm4377, %v4368, %v4386
  %v4396 = vsel %vm4378, %v4369, %v4387
  %v4397 = vsel %vm4379, %v4370, %v4388
  %4398 = vst [vmem:[#allocation3] sm:$0xff] %v4389
  %4399 = vst [vmem:[#allocation3 + $0x8] sm:$0xff] %v4390
  %4400 = vst.msk [vmem:[#allocation3 + $0x10] sm:$0xff] %vm2457, %v4391
  %4401 = vst [vmem:[#allocation3 + $0x18] sm:$0xff] %v4392
  %4402 = vst [vmem:[#allocation3 + $0x20] sm:$0xff] %v4393
  %4403 = vst.msk [vmem:[#allocation3 + $0x28] sm:$0xff] %vm2457, %v4394
  %4404 = vst [vmem:[#allocation3 + $0x30] sm:$0x3f] %v4395
  %4405 = vst [vmem:[#allocation3 + $0x38] sm:$0x3f] %v4396
  %4406 = vst.msk [vmem:[#allocation3 + $0x40] sm:$0x3f] %vm2464, %v4397
  %v4407 = vld [vmem:[%s3876] sm:$0xff]
  %v4408 = vld [vmem:[%s3876 + $0x8] sm:$0xff]
  %v4409 = vld [vmem:[%s3876 + $0x10] sm:$0xff]
  %v4410 = vld [vmem:[%s3876 + $0x18] sm:$0xff]
  %v4411 = vld [vmem:[%s3876 + $0x20] sm:$0xff]
  %v4412 = vld [vmem:[%s3876 + $0x28] sm:$0xff]
  %v4413 = vld [vmem:[%s3876 + $0x30] sm:$0x3f]
  %v4414 = vld [vmem:[%s3876 + $0x38] sm:$0x3f]
  %v4415 = vld [vmem:[%s3876 + $0x40] sm:$0x3f]
  %v4416 = vmul.f32 %v4407, %v4319
  %v4417 = vmul.f32 %v4408, %v4320
  %v4418 = vmul.f32 %v4409, %v4321
  %v4419 = vmul.f32 %v4410, %v4319
  %v4420 = vmul.f32 %v4411, %v4320
  %v4421 = vmul.f32 %v4412, %v4321
  %v4422 = vmul.f32 %v4413, %v4319
  %v4423 = vmul.f32 %v4414, %v4320
  %v4424 = vmul.f32 %v4415, %v4321
  %v4425 = vadd.f32 %v4416, %v4356
  %v4426 = vadd.f32 %v4417, %v4357
  %v4427 = vadd.f32 %v4418, %v4358
  %v4428 = vadd.f32 %v4419, %v4356
  %v4429 = vadd.f32 %v4420, %v4357
  %v4430 = vadd.f32 %v4421, %v4358
  %v4431 = vadd.f32 %v4422, %v4356
  %v4432 = vadd.f32 %v4423, %v4357
  %v4433 = vadd.f32 %v4424, %v4358
  %vm4434 = vcmp.gt.f32.partialorder %v4425, 0.0
  %vm4435 = vcmp.gt.f32.partialorder %v4426, 0.0
  %vm4436 = vcmp.gt.f32.partialorder %v4427, 0.0
  %vm4437 = vcmp.gt.f32.partialorder %v4428, 0.0
  %vm4438 = vcmp.gt.f32.partialorder %v4429, 0.0
  %vm4439 = vcmp.gt.f32.partialorder %v4430, 0.0
  %vm4440 = vcmp.gt.f32.partialorder %v4431, 0.0
  %vm4441 = vcmp.gt.f32.partialorder %v4432, 0.0
  %vm4442 = vcmp.gt.f32.partialorder %v4433, 0.0
  %v4443 = vmul.f32 %v4425, 0.2
  %v4444 = vmul.f32 %v4426, 0.2
  %v4445 = vmul.f32 %v4427, 0.2
  %v4446 = vmul.f32 %v4428, 0.2
  %v4447 = vmul.f32 %v4429, 0.2
  %v4448 = vmul.f32 %v4430, 0.2
  %v4449 = vmul.f32 %v4431, 0.2
  %v4450 = vmul.f32 %v4432, 0.2
  %v4451 = vmul.f32 %v4433, 0.2
  %v4452 = vsel %vm4434, %v4425, %v4443
  %v4453 = vsel %vm4435, %v4426, %v4444
  %v4454 = vsel %vm4436, %v4427, %v4445
  %v4455 = vsel %vm4437, %v4428, %v4446
  %v4456 = vsel %vm4438, %v4429, %v4447
  %v4457 = vsel %vm4439, %v4430, %v4448
  %v4458 = vsel %vm4440, %v4431, %v4449
  %v4459 = vsel %vm4441, %v4432, %v4450
  %v4460 = vsel %vm4442, %v4433, %v4451
  %4461 = vst [vmem:[%s3876] sm:$0xff] %v4452
  %4462 = vst [vmem:[%s3876 + $0x8] sm:$0xff] %v4453
  %4463 = vst.msk [vmem:[%s3876 + $0x10] sm:$0xff] %vm2457, %v4454
  %4464 = vst [vmem:[%s3876 + $0x18] sm:$0xff] %v4455
  %4465 = vst [vmem:[%s3876 + $0x20] sm:$0xff] %v4456
  %4466 = vst.msk [vmem:[%s3876 + $0x28] sm:$0xff] %vm2457, %v4457
  %4467 = vst [vmem:[%s3876 + $0x30] sm:$0x3f] %v4458
  %4468 = vst [vmem:[%s3876 + $0x38] sm:$0x3f] %v4459
  %4469 = vst.msk [vmem:[%s3876 + $0x40] sm:$0x3f] %vm2464, %v4460
  %v4470 = vld [vmem:[#allocation3] sm:$0xff]
  %v4471 = vld [vmem:[#allocation3 + $0x8] sm:$0xff]
  %v4472 = vld [vmem:[#allocation3 + $0x10] sm:$0xff]
  %v4473 = vld [vmem:[#allocation3 + $0x18] sm:$0xff]
  %v4474 = vld [vmem:[#allocation3 + $0x20] sm:$0xff]
  %v4475 = vld [vmem:[#allocation3 + $0x28] sm:$0xff]
  %v4476 = vld [vmem:[#allocation3 + $0x30] sm:$0x3f]
  %v4477 = vld [vmem:[#allocation3 + $0x38] sm:$0x3f]
  %v4478 = vld [vmem:[#allocation3 + $0x40] sm:$0x3f]
  %v4479 = vld [vmem:[%s4] sm:$0xff]
  %v4480 = vld [vmem:[%s4 + $0x8] sm:$0x1]
  %vm4481 = vcmask 179200
  %v4483 = vsel %vm4481, %v4479, 0
  %v4486 = vsel %vm4481, %v4480, 0
  %v4489 = vsel %vm1711, %v4476, 0
  %v4492 = vsel %vm1711, %v4477, 0
  %v4495 = vsel %vm1711, %v4478, 0
  %4497 = vmatpush.msra.mxu0 0.0
  %4498 = vmatpush.msra.mxu0 0.0
  %4499 = vmatpush.msra.mxu0 0.0
  %4500 = vmatpush.msra.mxu0 0.0
  %4501 = vmatpush.msra.mxu0 0.0
  %4502 = vmatpush.msra.mxu0 0.0
  %4503 = vmatpush.msra.mxu0 0.0
  %4504 = vmatpush.msra.mxu0 0.0
  %4505 = vmatpush.msra.mxu0 0.0
  %4506 = vmatpush.msra.mxu0 0.0
  %4507 = vmatpush.msra.mxu0 0.0
  %4508 = vmatpush.msra.mxu0 0.0
  %4509 = vmatpush.msra.mxu0 0.0
  %4510 = vmatpush.msra.mxu0 %v4489
  %4511 = vmatpush.msra.mxu0 %v4473
  %4512 = vmatpush.msra.mxu0 %v4470
  %4513 = vmatmul.f32.gmra.mxu0 %v4483
  %v4514 = vpop.f32.mrf.mxu0
  %v4515 = vadd.f32 0.0, %v4514
  %4516 = vmatmul.f32.gmra.mxu0 %v4486
  %v4517 = vpop.f32.mrf.mxu0
  %v4518 = vadd.f32 0.0, %v4517
  %4519 = vdwg.mxu0
  %4520 = vmatpush.msra.mxu0 0.0
  %4521 = vmatpush.msra.mxu0 0.0
  %4522 = vmatpush.msra.mxu0 0.0
  %4523 = vmatpush.msra.mxu0 0.0
  %4524 = vmatpush.msra.mxu0 0.0
  %4525 = vmatpush.msra.mxu0 0.0
  %4526 = vmatpush.msra.mxu0 0.0
  %4527 = vmatpush.msra.mxu0 0.0
  %4528 = vmatpush.msra.mxu0 0.0
  %4529 = vmatpush.msra.mxu0 0.0
  %4530 = vmatpush.msra.mxu0 0.0
  %4531 = vmatpush.msra.mxu0 0.0
  %4532 = vmatpush.msra.mxu0 0.0
  %4533 = vmatpush.msra.mxu0 %v4492
  %4534 = vmatpush.msra.mxu0 %v4474
  %4535 = vmatpush.msra.mxu0 %v4471
  %4536 = vmatmul.f32.gmra.mxu0 %v4483
  %v4537 = vpop.f32.mrf.mxu0
  %v4538 = vadd.f32 0.0, %v4537
  %4539 = vmatmul.f32.gmra.mxu0 %v4486
  %v4540 = vpop.f32.mrf.mxu0
  %v4541 = vadd.f32 0.0, %v4540
  %4542 = vdwg.mxu0
  %4543 = vmatpush.msra.mxu0 0.0
  %4544 = vmatpush.msra.mxu0 0.0
  %4545 = vmatpush.msra.mxu0 0.0
  %4546 = vmatpush.msra.mxu0 0.0
  %4547 = vmatpush.msra.mxu0 0.0
  %4548 = vmatpush.msra.mxu0 0.0
  %4549 = vmatpush.msra.mxu0 0.0
  %4550 = vmatpush.msra.mxu0 0.0
  %4551 = vmatpush.msra.mxu0 0.0
  %4552 = vmatpush.msra.mxu0 0.0
  %4553 = vmatpush.msra.mxu0 0.0
  %4554 = vmatpush.msra.mxu0 0.0
  %4555 = vmatpush.msra.mxu0 0.0
  %4556 = vmatpush.msra.mxu0 %v4495
  %4557 = vmatpush.msra.mxu0 %v4475
  %4558 = vmatpush.msra.mxu0 %v4472
  %4559 = vmatmul.f32.gmra.mxu0 %v4483
  %v4560 = vpop.f32.mrf.mxu0
  %v4561 = vadd.f32 0.0, %v4560
  %4562 = vmatmul.f32.gmra.mxu0 %v4486
  %v4563 = vpop.f32.mrf.mxu0
  %v4564 = vadd.f32 0.0, %v4563
  %4565 = vdwg.mxu0
  %v4566 = vld [vmem:[%s3] sm:$0xff]
  %v4567 = vld [vmem:[%s3 + $0x8] sm:$0xff]
  %v4568 = vld [vmem:[%s3 + $0x10] sm:$0xff]
  %v4569 = vld [vmem:[%s3 + $0x18] sm:$0xff]
  %v4570 = vld [vmem:[%s3 + $0x20] sm:$0xff]
  %v4571 = vld [vmem:[%s3 + $0x28] sm:$0xff]
  %v4572 = vld [vmem:[%s3 + $0x30] sm:$0xff]
  %v4573 = vld [vmem:[%s3 + $0x38] sm:$0xff]
  %v4574 = vld [vmem:[%s3 + $0x40] sm:$0xff]
  %v4575 = vld [vmem:[%s3 + $0x48] sm:$0xff]
  %v4576 = vld [vmem:[%s3 + $0x50] sm:$0xff]
  %v4577 = vld [vmem:[%s3 + $0x58] sm:$0xff]
  %v4578 = vld [vmem:[%s3 + $0x60] sm:$0xff]
  %v4579 = vld [vmem:[%s3 + $0x68] sm:$0xff]
  %v4580 = vld [vmem:[%s3 + $0x70] sm:$0xff]
  %v4581 = vld [vmem:[%s3 + $0x78] sm:$0xff]
  %v4582 = vld [vmem:[%s3 + $0x80] sm:$0xff]
  %v4583 = vld [vmem:[%s3 + $0x88] sm:$0xff]
  %v4584 = vld [vmem:[%s3 + $0x90] sm:$0xff]
  %v4585 = vld [vmem:[%s3 + $0x98] sm:$0xff]
  %v4586 = vld [vmem:[%s3 + $0xa0] sm:$0xff]
  %v4587 = vld [vmem:[%s3 + $0xa8] sm:$0xff]
  %v4588 = vld [vmem:[%s3 + $0xb0] sm:$0xff]
  %v4589 = vld [vmem:[%s3 + $0xb8] sm:$0xff]
  %v4590 = vld [vmem:[%s3 + $0xc0] sm:$0xff]
  %v4591 = vld [vmem:[%s3 + $0xc8] sm:$0xff]
  %v4592 = vld [vmem:[%s3 + $0xd0] sm:$0xff]
  %v4593 = vld [vmem:[%s3 + $0xd8] sm:$0xff]
  %v4594 = vld [vmem:[%s3 + $0xe0] sm:$0xff]
  %v4595 = vld [vmem:[%s3 + $0xe8] sm:$0xff]
  %v4596 = vld [vmem:[%s3 + $0xf0] sm:$0xff]
  %v4597 = vld [vmem:[%s3 + $0xf8] sm:$0xff]
  %v4598 = vld [vmem:[%s3 + $0x100] sm:$0xff]
  %v4599 = vld [vmem:[%s3 + $0x108] sm:$0xff]
  %v4600 = vld [vmem:[%s3 + $0x110] sm:$0xff]
  %v4601 = vld [vmem:[%s3 + $0x118] sm:$0xff]
  %v4602 = vld [vmem:[%s3 + $0x120] sm:$0xff]
  %v4603 = vld [vmem:[%s3 + $0x128] sm:$0xff]
  %v4604 = vld [vmem:[%s3 + $0x130] sm:$0xff]
  %v4605 = vld [vmem:[%s3 + $0x138] sm:$0xff]
  %v4606 = vld [vmem:[%s3 + $0x140] sm:$0xff]
  %v4607 = vld [vmem:[%s3 + $0x148] sm:$0xff]
  %v4608 = vld [vmem:[%s3 + $0x150] sm:$0xff]
  %v4609 = vld [vmem:[%s3 + $0x158] sm:$0xff]
  %v4610 = vld [vmem:[%s3 + $0x160] sm:$0xff]
  %v4611 = vld [vmem:[%s3 + $0x168] sm:$0xff]
  %v4612 = vld [vmem:[%s3 + $0x170] sm:$0xff]
  %v4613 = vld [vmem:[%s3 + $0x178] sm:$0xff]
  %v4614 = vld [vmem:[%s3 + $0x180] sm:$0xff]
  %v4615 = vld [vmem:[%s3 + $0x188] sm:$0xff]
  %v4616 = vld [vmem:[%s3 + $0x190] sm:$0xff]
  %v4617 = vld [vmem:[%s3 + $0x198] sm:$0xff]
  %v4618 = vld [vmem:[%s3 + $0x1a0] sm:$0xff]
  %v4619 = vld [vmem:[%s3 + $0x1a8] sm:$0xff]
  %v4620 = vld [vmem:[%s3 + $0x1b0] sm:$0xff]
  %v4621 = vld [vmem:[%s3 + $0x1b8] sm:$0xff]
  %v4622 = vld [vmem:[%s3 + $0x1c0] sm:$0xff]
  %v4623 = vld [vmem:[%s3 + $0x1c8] sm:$0xff]
  %v4624 = vld [vmem:[%s3 + $0x1d0] sm:$0xff]
  %v4625 = vld [vmem:[%s3 + $0x1d8] sm:$0xff]
  %v4626 = vld [vmem:[%s3 + $0x1e0] sm:$0xff]
  %v4627 = vld [vmem:[%s3 + $0x1e8] sm:$0xff]
  %v4628 = vld [vmem:[%s3 + $0x1f0] sm:$0xff]
  %v4629 = vld [vmem:[%s3 + $0x1f8] sm:$0xff]
  %v4630 = vld [vmem:[%s3 + $0x200] sm:$0xff]
  %v4631 = vld [vmem:[%s3 + $0x208] sm:$0xff]
  %v4632 = vld [vmem:[%s3 + $0x210] sm:$0xff]
  %v4633 = vld [vmem:[%s3 + $0x218] sm:$0xff]
  %v4634 = vld [vmem:[%s3 + $0x220] sm:$0xff]
  %v4635 = vld [vmem:[%s3 + $0x228] sm:$0xff]
  %v4636 = vld [vmem:[%s3 + $0x230] sm:$0xff]
  %v4637 = vld [vmem:[%s3 + $0x238] sm:$0xff]
  %v4638 = vld [vmem:[%s3 + $0x240] sm:$0xff]
  %v4639 = vld [vmem:[%s3 + $0x248] sm:$0xff]
  %v4640 = vld [vmem:[%s3 + $0x250] sm:$0xff]
  %v4641 = vld [vmem:[%s3 + $0x258] sm:$0xff]
  %v4642 = vld [vmem:[%s3 + $0x260] sm:$0xff]
  %v4643 = vld [vmem:[%s3 + $0x268] sm:$0xff]
  %v4644 = vld [vmem:[%s3 + $0x270] sm:$0xff]
  %v4645 = vld [vmem:[%s3 + $0x278] sm:$0xff]
  %v4646 = vld [vmem:[%s3 + $0x280] sm:$0xff]
  %v4647 = vld [vmem:[%s3 + $0x288] sm:$0xff]
  %v4648 = vld [vmem:[%s3 + $0x290] sm:$0xff]
  %v4649 = vld [vmem:[%s3 + $0x298] sm:$0xff]
  %v4650 = vld [vmem:[%s3 + $0x2a0] sm:$0xff]
  %v4651 = vld [vmem:[%s3 + $0x2a8] sm:$0xff]
  %v4652 = vld [vmem:[%s3 + $0x2b0] sm:$0xff]
  %v4653 = vld [vmem:[%s3 + $0x2b8] sm:$0xff]
  %s4654 = scalar_lea.vmem %s4, 16
  %v4655 = vld [vmem:[%s4654] sm:$0xff]
  %v4656 = vld [vmem:[%s4654 + $0x8] sm:$0x1]
  %v4658 = vsel %vm4481, %v4655, 0
  %v4661 = vsel %vm4481, %v4656, 0
  %4663 = vmatpush.msra.mxu0 0.0
  %4664 = vmatpush.msra.mxu0 0.0
  %4665 = vmatpush.msra.mxu0 0.0
  %4666 = vmatpush.msra.mxu0 0.0
  %4667 = vmatpush.msra.mxu0 0.0
  %4668 = vmatpush.msra.mxu0 0.0
  %4669 = vmatpush.msra.mxu0 0.0
  %4670 = vmatpush.msra.mxu0 0.0
  %4671 = vmatpush.msra.mxu0 0.0
  %4672 = vmatpush.msra.mxu0 0.0
  %4673 = vmatpush.msra.mxu0 0.0
  %4674 = vmatpush.msra.mxu0 0.0
  %4675 = vmatpush.msra.mxu0 0.0
  %4676 = vmatpush.msra.mxu0 %v4489
  %4677 = vmatpush.msra.mxu0 %v4473
  %4678 = vmatpush.msra.mxu0 %v4470
  %4679 = vmatmul.f32.gmra.mxu0 %v4658
  %v4680 = vpop.f32.mrf.mxu0
  %v4681 = vadd.f32 0.0, %v4680
  %4682 = vmatmul.f32.gmra.mxu0 %v4661
  %v4683 = vpop.f32.mrf.mxu0
  %v4684 = vadd.f32 0.0, %v4683
  %4685 = vdwg.mxu0
  %4686 = vmatpush.msra.mxu0 0.0
  %4687 = vmatpush.msra.mxu0 0.0
  %4688 = vmatpush.msra.mxu0 0.0
  %4689 = vmatpush.msra.mxu0 0.0
  %4690 = vmatpush.msra.mxu0 0.0
  %4691 = vmatpush.msra.mxu0 0.0
  %4692 = vmatpush.msra.mxu0 0.0
  %4693 = vmatpush.msra.mxu0 0.0
  %4694 = vmatpush.msra.mxu0 0.0
  %4695 = vmatpush.msra.mxu0 0.0
  %4696 = vmatpush.msra.mxu0 0.0
  %4697 = vmatpush.msra.mxu0 0.0
  %4698 = vmatpush.msra.mxu0 0.0
  %4699 = vmatpush.msra.mxu0 %v4492
  %4700 = vmatpush.msra.mxu0 %v4474
  %4701 = vmatpush.msra.mxu0 %v4471
  %4702 = vmatmul.f32.gmra.mxu0 %v4658
  %v4703 = vpop.f32.mrf.mxu0
  %v4704 = vadd.f32 0.0, %v4703
  %4705 = vmatmul.f32.gmra.mxu0 %v4661
  %v4706 = vpop.f32.mrf.mxu0
  %v4707 = vadd.f32 0.0, %v4706
  %4708 = vdwg.mxu0
  %4709 = vmatpush.msra.mxu0 0.0
  %4710 = vmatpush.msra.mxu0 0.0
  %4711 = vmatpush.msra.mxu0 0.0
  %4712 = vmatpush.msra.mxu0 0.0
  %4713 = vmatpush.msra.mxu0 0.0
  %4714 = vmatpush.msra.mxu0 0.0
  %4715 = vmatpush.msra.mxu0 0.0
  %4716 = vmatpush.msra.mxu0 0.0
  %4717 = vmatpush.msra.mxu0 0.0
  %4718 = vmatpush.msra.mxu0 0.0
  %4719 = vmatpush.msra.mxu0 0.0
  %4720 = vmatpush.msra.mxu0 0.0
  %4721 = vmatpush.msra.mxu0 0.0
  %4722 = vmatpush.msra.mxu0 %v4495
  %4723 = vmatpush.msra.mxu0 %v4475
  %4724 = vmatpush.msra.mxu0 %v4472
  %4725 = vmatmul.f32.gmra.mxu0 %v4658
  %v4726 = vpop.f32.mrf.mxu0
  %v4727 = vadd.f32 0.0, %v4726
  %4728 = vmatmul.f32.gmra.mxu0 %v4661
  %v4729 = vpop.f32.mrf.mxu0
  %v4730 = vadd.f32 0.0, %v4729
  %4731 = vdwg.mxu0
  %s4732 = scalar_lea.vmem %s3, 704
  %v4733 = vld [vmem:[%s4732] sm:$0xff]
  %v4734 = vld [vmem:[%s4732 + $0x8] sm:$0xff]
  %v4735 = vld [vmem:[%s4732 + $0x10] sm:$0xff]
  %v4736 = vld [vmem:[%s4732 + $0x18] sm:$0xff]
  %v4737 = vld [vmem:[%s4732 + $0x20] sm:$0xff]
  %v4738 = vld [vmem:[%s4732 + $0x28] sm:$0xff]
  %v4739 = vld [vmem:[%s4732 + $0x30] sm:$0xff]
  %v4740 = vld [vmem:[%s4732 + $0x38] sm:$0xff]
  %v4741 = vld [vmem:[%s4732 + $0x40] sm:$0xff]
  %v4742 = vld [vmem:[%s4732 + $0x48] sm:$0xff]
  %v4743 = vld [vmem:[%s4732 + $0x50] sm:$0xff]
  %v4744 = vld [vmem:[%s4732 + $0x58] sm:$0xff]
  %v4745 = vld [vmem:[%s4732 + $0x60] sm:$0xff]
  %v4746 = vld [vmem:[%s4732 + $0x68] sm:$0xff]
  %v4747 = vld [vmem:[%s4732 + $0x70] sm:$0xff]
  %v4748 = vld [vmem:[%s4732 + $0x78] sm:$0xff]
  %v4749 = vld [vmem:[%s4732 + $0x80] sm:$0xff]
  %v4750 = vld [vmem:[%s4732 + $0x88] sm:$0xff]
  %v4751 = vld [vmem:[%s4732 + $0x90] sm:$0xff]
  %v4752 = vld [vmem:[%s4732 + $0x98] sm:$0xff]
  %v4753 = vld [vmem:[%s4732 + $0xa0] sm:$0xff]
  %v4754 = vld [vmem:[%s4732 + $0xa8] sm:$0xff]
  %v4755 = vld [vmem:[%s4732 + $0xb0] sm:$0xff]
  %v4756 = vld [vmem:[%s4732 + $0xb8] sm:$0xff]
  %v4757 = vld [vmem:[%s4732 + $0xc0] sm:$0xff]
  %v4758 = vld [vmem:[%s4732 + $0xc8] sm:$0xff]
  %v4759 = vld [vmem:[%s4732 + $0xd0] sm:$0xff]
  %v4760 = vld [vmem:[%s4732 + $0xd8] sm:$0xff]
  %v4761 = vld [vmem:[%s4732 + $0xe0] sm:$0xff]
  %v4762 = vld [vmem:[%s4732 + $0xe8] sm:$0xff]
  %v4763 = vld [vmem:[%s4732 + $0xf0] sm:$0xff]
  %v4764 = vld [vmem:[%s4732 + $0xf8] sm:$0xff]
  %v4765 = vld [vmem:[%s4732 + $0x100] sm:$0xff]
  %v4766 = vld [vmem:[%s4732 + $0x108] sm:$0xff]
  %v4767 = vld [vmem:[%s4732 + $0x110] sm:$0xff]
  %v4768 = vld [vmem:[%s4732 + $0x118] sm:$0xff]
  %v4769 = vld [vmem:[%s4732 + $0x120] sm:$0xff]
  %v4770 = vld [vmem:[%s4732 + $0x128] sm:$0xff]
  %v4771 = vld [vmem:[%s4732 + $0x130] sm:$0xff]
  %v4772 = vld [vmem:[%s4732 + $0x138] sm:$0xff]
  %v4773 = vld [vmem:[%s4732 + $0x140] sm:$0xff]
  %v4774 = vld [vmem:[%s4732 + $0x148] sm:$0xff]
  %v4775 = vld [vmem:[%s4732 + $0x150] sm:$0xff]
  %v4776 = vld [vmem:[%s4732 + $0x158] sm:$0xff]
  %v4777 = vld [vmem:[%s4732 + $0x160] sm:$0xff]
  %v4778 = vld [vmem:[%s4732 + $0x168] sm:$0xff]
  %v4779 = vld [vmem:[%s4732 + $0x170] sm:$0xff]
  %v4780 = vld [vmem:[%s4732 + $0x178] sm:$0xff]
  %v4781 = vld [vmem:[%s4732 + $0x180] sm:$0xff]
  %v4782 = vld [vmem:[%s4732 + $0x188] sm:$0xff]
  %v4783 = vld [vmem:[%s4732 + $0x190] sm:$0xff]
  %v4784 = vld [vmem:[%s4732 + $0x198] sm:$0xff]
  %v4785 = vld [vmem:[%s4732 + $0x1a0] sm:$0xff]
  %v4786 = vld [vmem:[%s4732 + $0x1a8] sm:$0xff]
  %v4787 = vld [vmem:[%s4732 + $0x1b0] sm:$0xff]
  %v4788 = vld [vmem:[%s4732 + $0x1b8] sm:$0xff]
  %v4789 = vld [vmem:[%s4732 + $0x1c0] sm:$0xff]
  %v4790 = vld [vmem:[%s4732 + $0x1c8] sm:$0xff]
  %v4791 = vld [vmem:[%s4732 + $0x1d0] sm:$0xff]
  %v4792 = vld [vmem:[%s4732 + $0x1d8] sm:$0xff]
  %v4793 = vld [vmem:[%s4732 + $0x1e0] sm:$0xff]
  %v4794 = vld [vmem:[%s4732 + $0x1e8] sm:$0xff]
  %v4795 = vld [vmem:[%s4732 + $0x1f0] sm:$0xff]
  %v4796 = vld [vmem:[%s4732 + $0x1f8] sm:$0xff]
  %v4797 = vld [vmem:[%s4732 + $0x200] sm:$0xff]
  %v4798 = vld [vmem:[%s4732 + $0x208] sm:$0xff]
  %v4799 = vld [vmem:[%s4732 + $0x210] sm:$0xff]
  %v4800 = vld [vmem:[%s4732 + $0x218] sm:$0xff]
  %v4801 = vld [vmem:[%s4732 + $0x220] sm:$0xff]
  %v4802 = vld [vmem:[%s4732 + $0x228] sm:$0xff]
  %v4803 = vld [vmem:[%s4732 + $0x230] sm:$0xff]
  %v4804 = vld [vmem:[%s4732 + $0x238] sm:$0xff]
  %v4805 = vld [vmem:[%s4732 + $0x240] sm:$0xff]
  %v4806 = vld [vmem:[%s4732 + $0x248] sm:$0xff]
  %v4807 = vld [vmem:[%s4732 + $0x250] sm:$0xff]
  %v4808 = vld [vmem:[%s4732 + $0x258] sm:$0xff]
  %v4809 = vld [vmem:[%s4732 + $0x260] sm:$0xff]
  %v4810 = vld [vmem:[%s4732 + $0x268] sm:$0xff]
  %v4811 = vld [vmem:[%s4732 + $0x270] sm:$0xff]
  %v4812 = vld [vmem:[%s4732 + $0x278] sm:$0xff]
  %v4813 = vld [vmem:[%s4732 + $0x280] sm:$0xff]
  %v4814 = vld [vmem:[%s4732 + $0x288] sm:$0xff]
  %v4815 = vld [vmem:[%s4732 + $0x290] sm:$0xff]
  %v4816 = vld [vmem:[%s4732 + $0x298] sm:$0xff]
  %v4817 = vld [vmem:[%s4732 + $0x2a0] sm:$0xff]
  %v4818 = vld [vmem:[%s4732 + $0x2a8] sm:$0xff]
  %v4819 = vld [vmem:[%s4732 + $0x2b0] sm:$0xff]
  %v4820 = vld [vmem:[%s4732 + $0x2b8] sm:$0xff]
  %v4822 = vsel %vm2457, %v4727, 0
  %v4825 = vsel %vm2457, %v4730, 0
  %4827 = vmatpush.msra.mxu0 %v4763
  %4828 = vmatpush.msra.mxu0 %v4761
  %4829 = vmatpush.msra.mxu0 %v4759
  %4830 = vmatpush.msra.mxu0 %v4757
  %4831 = vmatpush.msra.mxu0 %v4755
  %4832 = vmatpush.msra.mxu0 %v4753
  %4833 = vmatpush.msra.mxu0 %v4751
  %4834 = vmatpush.msra.mxu0 %v4749
  %4835 = vmatpush.msra.mxu0 %v4747
  %4836 = vmatpush.msra.mxu0 %v4745
  %4837 = vmatpush.msra.mxu0 %v4743
  %4838 = vmatpush.msra.mxu0 %v4741
  %4839 = vmatpush.msra.mxu0 %v4739
  %4840 = vmatpush.msra.mxu0 %v4737
  %4841 = vmatpush.msra.mxu0 %v4735
  %4842 = vmatpush.msra.mxu0 %v4733
  %4843 = vmatmul.f32.gmra.mxu0 %v4681
  %v4844 = vpop.f32.mrf.mxu0
  %v4845 = vadd.f32 0.0, %v4844
  %4846 = vmatmul.f32.gmra.mxu0 %v4684
  %v4847 = vpop.f32.mrf.mxu0
  %v4848 = vadd.f32 0.0, %v4847
  %4849 = vdwg.mxu0
  %4850 = vmatpush.msra.mxu0 %v4795
  %4851 = vmatpush.msra.mxu0 %v4793
  %4852 = vmatpush.msra.mxu0 %v4791
  %4853 = vmatpush.msra.mxu0 %v4789
  %4854 = vmatpush.msra.mxu0 %v4787
  %4855 = vmatpush.msra.mxu0 %v4785
  %4856 = vmatpush.msra.mxu0 %v4783
  %4857 = vmatpush.msra.mxu0 %v4781
  %4858 = vmatpush.msra.mxu0 %v4779
  %4859 = vmatpush.msra.mxu0 %v4777
  %4860 = vmatpush.msra.mxu0 %v4775
  %4861 = vmatpush.msra.mxu0 %v4773
  %4862 = vmatpush.msra.mxu0 %v4771
  %4863 = vmatpush.msra.mxu0 %v4769
  %4864 = vmatpush.msra.mxu0 %v4767
  %4865 = vmatpush.msra.mxu0 %v4765
  %4866 = vmatmul.f32.gmra.mxu0 %v4704
  %v4867 = vpop.f32.mrf.mxu0
  %v4868 = vadd.f32 %v4845, %v4867
  %4869 = vmatmul.f32.gmra.mxu0 %v4707
  %v4870 = vpop.f32.mrf.mxu0
  %v4871 = vadd.f32 %v4848, %v4870
  %4872 = vdwg.mxu0
  %4873 = vmatpush.msra.mxu0 0.0
  %4874 = vmatpush.msra.mxu0 0.0
  %4875 = vmatpush.msra.mxu0 0.0
  %4876 = vmatpush.msra.mxu0 0.0
  %4877 = vmatpush.msra.mxu0 %v4819
  %4878 = vmatpush.msra.mxu0 %v4817
  %4879 = vmatpush.msra.mxu0 %v4815
  %4880 = vmatpush.msra.mxu0 %v4813
  %4881 = vmatpush.msra.mxu0 %v4811
  %4882 = vmatpush.msra.mxu0 %v4809
  %4883 = vmatpush.msra.mxu0 %v4807
  %4884 = vmatpush.msra.mxu0 %v4805
  %4885 = vmatpush.msra.mxu0 %v4803
  %4886 = vmatpush.msra.mxu0 %v4801
  %4887 = vmatpush.msra.mxu0 %v4799
  %4888 = vmatpush.msra.mxu0 %v4797
  %4889 = vmatmul.f32.gmra.mxu0 %v4822
  %v4890 = vpop.f32.mrf.mxu0
  %v4891 = vadd.f32 %v4868, %v4890
  %4892 = vmatmul.f32.gmra.mxu0 %v4825
  %v4893 = vpop.f32.mrf.mxu0
  %v4894 = vadd.f32 %v4871, %v4893
  %4895 = vdwg.mxu0
  %4896 = vmatpush.msra.mxu0 %v4764
  %4897 = vmatpush.msra.mxu0 %v4762
  %4898 = vmatpush.msra.mxu0 %v4760
  %4899 = vmatpush.msra.mxu0 %v4758
  %4900 = vmatpush.msra.mxu0 %v4756
  %4901 = vmatpush.msra.mxu0 %v4754
  %4902 = vmatpush.msra.mxu0 %v4752
  %4903 = vmatpush.msra.mxu0 %v4750
  %4904 = vmatpush.msra.mxu0 %v4748
  %4905 = vmatpush.msra.mxu0 %v4746
  %4906 = vmatpush.msra.mxu0 %v4744
  %4907 = vmatpush.msra.mxu0 %v4742
  %4908 = vmatpush.msra.mxu0 %v4740
  %4909 = vmatpush.msra.mxu0 %v4738
  %4910 = vmatpush.msra.mxu0 %v4736
  %4911 = vmatpush.msra.mxu0 %v4734
  %4912 = vmatmul.f32.gmra.mxu0 %v4681
  %v4913 = vpop.f32.mrf.mxu0
  %v4914 = vadd.f32 0.0, %v4913
  %4915 = vmatmul.f32.gmra.mxu0 %v4684
  %v4916 = vpop.f32.mrf.mxu0
  %v4917 = vadd.f32 0.0, %v4916
  %4918 = vdwg.mxu0
  %4919 = vmatpush.msra.mxu0 %v4796
  %4920 = vmatpush.msra.mxu0 %v4794
  %4921 = vmatpush.msra.mxu0 %v4792
  %4922 = vmatpush.msra.mxu0 %v4790
  %4923 = vmatpush.msra.mxu0 %v4788
  %4924 = vmatpush.msra.mxu0 %v4786
  %4925 = vmatpush.msra.mxu0 %v4784
  %4926 = vmatpush.msra.mxu0 %v4782
  %4927 = vmatpush.msra.mxu0 %v4780
  %4928 = vmatpush.msra.mxu0 %v4778
  %4929 = vmatpush.msra.mxu0 %v4776
  %4930 = vmatpush.msra.mxu0 %v4774
  %4931 = vmatpush.msra.mxu0 %v4772
  %4932 = vmatpush.msra.mxu0 %v4770
  %4933 = vmatpush.msra.mxu0 %v4768
  %4934 = vmatpush.msra.mxu0 %v4766
  %4935 = vmatmul.f32.gmra.mxu0 %v4704
  %v4936 = vpop.f32.mrf.mxu0
  %v4937 = vadd.f32 %v4914, %v4936
  %4938 = vmatmul.f32.gmra.mxu0 %v4707
  %v4939 = vpop.f32.mrf.mxu0
  %v4940 = vadd.f32 %v4917, %v4939
  %4941 = vdwg.mxu0
  %4942 = vmatpush.msra.mxu0 0.0
  %4943 = vmatpush.msra.mxu0 0.0
  %4944 = vmatpush.msra.mxu0 0.0
  %4945 = vmatpush.msra.mxu0 0.0
  %4946 = vmatpush.msra.mxu0 %v4820
  %4947 = vmatpush.msra.mxu0 %v4818
  %4948 = vmatpush.msra.mxu0 %v4816
  %4949 = vmatpush.msra.mxu0 %v4814
  %4950 = vmatpush.msra.mxu0 %v4812
  %4951 = vmatpush.msra.mxu0 %v4810
  %4952 = vmatpush.msra.mxu0 %v4808
  %4953 = vmatpush.msra.mxu0 %v4806
  %4954 = vmatpush.msra.mxu0 %v4804
  %4955 = vmatpush.msra.mxu0 %v4802
  %4956 = vmatpush.msra.mxu0 %v4800
  %4957 = vmatpush.msra.mxu0 %v4798
  %4958 = vmatmul.f32.gmra.mxu0 %v4822
  %v4959 = vpop.f32.mrf.mxu0
  %v4960 = vadd.f32 %v4937, %v4959
  %4961 = vmatmul.f32.gmra.mxu0 %v4825
  %v4962 = vpop.f32.mrf.mxu0
  %v4963 = vadd.f32 %v4940, %v4962
  %4964 = vdwg.mxu0
  %v4966 = vsel %vm2457, %v4561, 0
  %v4969 = vsel %vm2457, %v4564, 0
  %4971 = vmatpush.msra.mxu0 %v4596
  %4972 = vmatpush.msra.mxu0 %v4594
  %4973 = vmatpush.msra.mxu0 %v4592
  %4974 = vmatpush.msra.mxu0 %v4590
  %4975 = vmatpush.msra.mxu0 %v4588
  %4976 = vmatpush.msra.mxu0 %v4586
  %4977 = vmatpush.msra.mxu0 %v4584
  %4978 = vmatpush.msra.mxu0 %v4582
  %4979 = vmatpush.msra.mxu0 %v4580
  %4980 = vmatpush.msra.mxu0 %v4578
  %4981 = vmatpush.msra.mxu0 %v4576
  %4982 = vmatpush.msra.mxu0 %v4574
  %4983 = vmatpush.msra.mxu0 %v4572
  %4984 = vmatpush.msra.mxu0 %v4570
  %4985 = vmatpush.msra.mxu0 %v4568
  %4986 = vmatpush.msra.mxu0 %v4566
  %4987 = vmatmul.f32.gmra.mxu0 %v4515
  %v4988 = vpop.f32.mrf.mxu0
  %v4989 = vadd.f32 %v4891, %v4988
  %4990 = vmatmul.f32.gmra.mxu0 %v4518
  %v4991 = vpop.f32.mrf.mxu0
  %v4992 = vadd.f32 %v4894, %v4991
  %4993 = vdwg.mxu0
  %4994 = vmatpush.msra.mxu0 %v4628
  %4995 = vmatpush.msra.mxu0 %v4626
  %4996 = vmatpush.msra.mxu0 %v4624
  %4997 = vmatpush.msra.mxu0 %v4622
  %4998 = vmatpush.msra.mxu0 %v4620
  %4999 = vmatpush.msra.mxu0 %v4618
  %5000 = vmatpush.msra.mxu0 %v4616
  %5001 = vmatpush.msra.mxu0 %v4614
  %5002 = vmatpush.msra.mxu0 %v4612
  %5003 = vmatpush.msra.mxu0 %v4610
  %5004 = vmatpush.msra.mxu0 %v4608
  %5005 = vmatpush.msra.mxu0 %v4606
  %5006 = vmatpush.msra.mxu0 %v4604
  %5007 = vmatpush.msra.mxu0 %v4602
  %5008 = vmatpush.msra.mxu0 %v4600
  %5009 = vmatpush.msra.mxu0 %v4598
  %5010 = vmatmul.f32.gmra.mxu0 %v4538
  %v5011 = vpop.f32.mrf.mxu0
  %v5012 = vadd.f32 %v4989, %v5011
  %5013 = vmatmul.f32.gmra.mxu0 %v4541
  %v5014 = vpop.f32.mrf.mxu0
  %v5015 = vadd.f32 %v4992, %v5014
  %5016 = vdwg.mxu0
  %5017 = vmatpush.msra.mxu0 0.0
  %5018 = vmatpush.msra.mxu0 0.0
  %5019 = vmatpush.msra.mxu0 0.0
  %5020 = vmatpush.msra.mxu0 0.0
  %5021 = vmatpush.msra.mxu0 %v4652
  %5022 = vmatpush.msra.mxu0 %v4650
  %5023 = vmatpush.msra.mxu0 %v4648
  %5024 = vmatpush.msra.mxu0 %v4646
  %5025 = vmatpush.msra.mxu0 %v4644
  %5026 = vmatpush.msra.mxu0 %v4642
  %5027 = vmatpush.msra.mxu0 %v4640
  %5028 = vmatpush.msra.mxu0 %v4638
  %5029 = vmatpush.msra.mxu0 %v4636
  %5030 = vmatpush.msra.mxu0 %v4634
  %5031 = vmatpush.msra.mxu0 %v4632
  %5032 = vmatpush.msra.mxu0 %v4630
  %5033 = vmatmul.f32.gmra.mxu0 %v4966
  %v5034 = vpop.f32.mrf.mxu0
  %v5035 = vadd.f32 %v5012, %v5034
  %5036 = vmatmul.f32.gmra.mxu0 %v4969
  %v5037 = vpop.f32.mrf.mxu0
  %v5038 = vadd.f32 %v5015, %v5037
  %5039 = vdwg.mxu0
  %5040 = vmatpush.msra.mxu0 %v4597
  %5041 = vmatpush.msra.mxu0 %v4595
  %5042 = vmatpush.msra.mxu0 %v4593
  %5043 = vmatpush.msra.mxu0 %v4591
  %5044 = vmatpush.msra.mxu0 %v4589
  %5045 = vmatpush.msra.mxu0 %v4587
  %5046 = vmatpush.msra.mxu0 %v4585
  %5047 = vmatpush.msra.mxu0 %v4583
  %5048 = vmatpush.msra.mxu0 %v4581
  %5049 = vmatpush.msra.mxu0 %v4579
  %5050 = vmatpush.msra.mxu0 %v4577
  %5051 = vmatpush.msra.mxu0 %v4575
  %5052 = vmatpush.msra.mxu0 %v4573
  %5053 = vmatpush.msra.mxu0 %v4571
  %5054 = vmatpush.msra.mxu0 %v4569
  %5055 = vmatpush.msra.mxu0 %v4567
  %5056 = vmatmul.f32.gmra.mxu0 %v4515
  %v5057 = vpop.f32.mrf.mxu0
  %v5058 = vadd.f32 %v4960, %v5057
  %5059 = vmatmul.f32.gmra.mxu0 %v4518
  %v5060 = vpop.f32.mrf.mxu0
  %v5061 = vadd.f32 %v4963, %v5060
  %5062 = vdwg.mxu0
  %5063 = vmatpush.msra.mxu0 %v4629
  %5064 = vmatpush.msra.mxu0 %v4627
  %5065 = vmatpush.msra.mxu0 %v4625
  %5066 = vmatpush.msra.mxu0 %v4623
  %5067 = vmatpush.msra.mxu0 %v4621
  %5068 = vmatpush.msra.mxu0 %v4619
  %5069 = vmatpush.msra.mxu0 %v4617
  %5070 = vmatpush.msra.mxu0 %v4615
  %5071 = vmatpush.msra.mxu0 %v4613
  %5072 = vmatpush.msra.mxu0 %v4611
  %5073 = vmatpush.msra.mxu0 %v4609
  %5074 = vmatpush.msra.mxu0 %v4607
  %5075 = vmatpush.msra.mxu0 %v4605
  %5076 = vmatpush.msra.mxu0 %v4603
  %5077 = vmatpush.msra.mxu0 %v4601
  %5078 = vmatpush.msra.mxu0 %v4599
  %5079 = vmatmul.f32.gmra.mxu0 %v4538
  %v5080 = vpop.f32.mrf.mxu0
  %v5081 = vadd.f32 %v5058, %v5080
  %5082 = vmatmul.f32.gmra.mxu0 %v4541
  %v5083 = vpop.f32.mrf.mxu0
  %v5084 = vadd.f32 %v5061, %v5083
  %5085 = vdwg.mxu0
  %5086 = vmatpush.msra.mxu0 0.0
  %5087 = vmatpush.msra.mxu0 0.0
  %5088 = vmatpush.msra.mxu0 0.0
  %5089 = vmatpush.msra.mxu0 0.0
  %5090 = vmatpush.msra.mxu0 %v4653
  %5091 = vmatpush.msra.mxu0 %v4651
  %5092 = vmatpush.msra.mxu0 %v4649
  %5093 = vmatpush.msra.mxu0 %v4647
  %5094 = vmatpush.msra.mxu0 %v4645
  %5095 = vmatpush.msra.mxu0 %v4643
  %5096 = vmatpush.msra.mxu0 %v4641
  %5097 = vmatpush.msra.mxu0 %v4639
  %5098 = vmatpush.msra.mxu0 %v4637
  %5099 = vmatpush.msra.mxu0 %v4635
  %5100 = vmatpush.msra.mxu0 %v4633
  %5101 = vmatpush.msra.mxu0 %v4631
  %5102 = vmatmul.f32.gmra.mxu0 %v4966
  %v5103 = vpop.f32.mrf.mxu0
  %v5104 = vadd.f32 %v5081, %v5103
  %5105 = vmatmul.f32.gmra.mxu0 %v4969
  %v5106 = vpop.f32.mrf.mxu0
  %v5107 = vadd.f32 %v5084, %v5106
  %5108 = vdwg.mxu0
  %s5109 = scalar_lea.vmem %s4, 32
  %v5110 = vld [vmem:[%s5109] sm:$0xff]
  %v5111 = vld [vmem:[%s5109 + $0x8] sm:$0x1]
  %v5113 = vsel %vm4481, %v5110, 0
  %v5116 = vsel %vm4481, %v5111, 0
  %5118 = vmatpush.msra.mxu0 0.0
  %5119 = vmatpush.msra.mxu0 0.0
  %5120 = vmatpush.msra.mxu0 0.0
  %5121 = vmatpush.msra.mxu0 0.0
  %5122 = vmatpush.msra.mxu0 0.0
  %5123 = vmatpush.msra.mxu0 0.0
  %5124 = vmatpush.msra.mxu0 0.0
  %5125 = vmatpush.msra.mxu0 0.0
  %5126 = vmatpush.msra.mxu0 0.0
  %5127 = vmatpush.msra.mxu0 0.0
  %5128 = vmatpush.msra.mxu0 0.0
  %5129 = vmatpush.msra.mxu0 0.0
  %5130 = vmatpush.msra.mxu0 0.0
  %5131 = vmatpush.msra.mxu0 %v4489
  %5132 = vmatpush.msra.mxu0 %v4473
  %5133 = vmatpush.msra.mxu0 %v4470
  %5134 = vmatmul.f32.gmra.mxu0 %v5113
  %v5135 = vpop.f32.mrf.mxu0
  %v5136 = vadd.f32 0.0, %v5135
  %5137 = vmatmul.f32.gmra.mxu0 %v5116
  %v5138 = vpop.f32.mrf.mxu0
  %v5139 = vadd.f32 0.0, %v5138
  %5140 = vdwg.mxu0
  %5141 = vmatpush.msra.mxu0 0.0
  %5142 = vmatpush.msra.mxu0 0.0
  %5143 = vmatpush.msra.mxu0 0.0
  %5144 = vmatpush.msra.mxu0 0.0
  %5145 = vmatpush.msra.mxu0 0.0
  %5146 = vmatpush.msra.mxu0 0.0
  %5147 = vmatpush.msra.mxu0 0.0
  %5148 = vmatpush.msra.mxu0 0.0
  %5149 = vmatpush.msra.mxu0 0.0
  %5150 = vmatpush.msra.mxu0 0.0
  %5151 = vmatpush.msra.mxu0 0.0
  %5152 = vmatpush.msra.mxu0 0.0
  %5153 = vmatpush.msra.mxu0 0.0
  %5154 = vmatpush.msra.mxu0 %v4492
  %5155 = vmatpush.msra.mxu0 %v4474
  %5156 = vmatpush.msra.mxu0 %v4471
  %5157 = vmatmul.f32.gmra.mxu0 %v5113
  %v5158 = vpop.f32.mrf.mxu0
  %v5159 = vadd.f32 0.0, %v5158
  %5160 = vmatmul.f32.gmra.mxu0 %v5116
  %v5161 = vpop.f32.mrf.mxu0
  %v5162 = vadd.f32 0.0, %v5161
  %5163 = vdwg.mxu0
  %5164 = vmatpush.msra.mxu0 0.0
  %5165 = vmatpush.msra.mxu0 0.0
  %5166 = vmatpush.msra.mxu0 0.0
  %5167 = vmatpush.msra.mxu0 0.0
  %5168 = vmatpush.msra.mxu0 0.0
  %5169 = vmatpush.msra.mxu0 0.0
  %5170 = vmatpush.msra.mxu0 0.0
  %5171 = vmatpush.msra.mxu0 0.0
  %5172 = vmatpush.msra.mxu0 0.0
  %5173 = vmatpush.msra.mxu0 0.0
  %5174 = vmatpush.msra.mxu0 0.0
  %5175 = vmatpush.msra.mxu0 0.0
  %5176 = vmatpush.msra.mxu0 0.0
  %5177 = vmatpush.msra.mxu0 %v4495
  %5178 = vmatpush.msra.mxu0 %v4475
  %5179 = vmatpush.msra.mxu0 %v4472
  %5180 = vmatmul.f32.gmra.mxu0 %v5113
  %v5181 = vpop.f32.mrf.mxu0
  %v5182 = vadd.f32 0.0, %v5181
  %5183 = vmatmul.f32.gmra.mxu0 %v5116
  %v5184 = vpop.f32.mrf.mxu0
  %v5185 = vadd.f32 0.0, %v5184
  %5186 = vdwg.mxu0
  %s5187 = scalar_lea.vmem %s3, 1408
  %v5188 = vld [vmem:[%s5187] sm:$0xff]
  %v5189 = vld [vmem:[%s5187 + $0x8] sm:$0xff]
  %v5190 = vld [vmem:[%s5187 + $0x10] sm:$0xff]
  %v5191 = vld [vmem:[%s5187 + $0x18] sm:$0xff]
  %v5192 = vld [vmem:[%s5187 + $0x20] sm:$0xff]
  %v5193 = vld [vmem:[%s5187 + $0x28] sm:$0xff]
  %v5194 = vld [vmem:[%s5187 + $0x30] sm:$0xff]
  %v5195 = vld [vmem:[%s5187 + $0x38] sm:$0xff]
  %v5196 = vld [vmem:[%s5187 + $0x40] sm:$0xff]
  %v5197 = vld [vmem:[%s5187 + $0x48] sm:$0xff]
  %v5198 = vld [vmem:[%s5187 + $0x50] sm:$0xff]
  %v5199 = vld [vmem:[%s5187 + $0x58] sm:$0xff]
  %v5200 = vld [vmem:[%s5187 + $0x60] sm:$0xff]
  %v5201 = vld [vmem:[%s5187 + $0x68] sm:$0xff]
  %v5202 = vld [vmem:[%s5187 + $0x70] sm:$0xff]
  %v5203 = vld [vmem:[%s5187 + $0x78] sm:$0xff]
  %v5204 = vld [vmem:[%s5187 + $0x80] sm:$0xff]
  %v5205 = vld [vmem:[%s5187 + $0x88] sm:$0xff]
  %v5206 = vld [vmem:[%s5187 + $0x90] sm:$0xff]
  %v5207 = vld [vmem:[%s5187 + $0x98] sm:$0xff]
  %v5208 = vld [vmem:[%s5187 + $0xa0] sm:$0xff]
  %v5209 = vld [vmem:[%s5187 + $0xa8] sm:$0xff]
  %v5210 = vld [vmem:[%s5187 + $0xb0] sm:$0xff]
  %v5211 = vld [vmem:[%s5187 + $0xb8] sm:$0xff]
  %v5212 = vld [vmem:[%s5187 + $0xc0] sm:$0xff]
  %v5213 = vld [vmem:[%s5187 + $0xc8] sm:$0xff]
  %v5214 = vld [vmem:[%s5187 + $0xd0] sm:$0xff]
  %v5215 = vld [vmem:[%s5187 + $0xd8] sm:$0xff]
  %v5216 = vld [vmem:[%s5187 + $0xe0] sm:$0xff]
  %v5217 = vld [vmem:[%s5187 + $0xe8] sm:$0xff]
  %v5218 = vld [vmem:[%s5187 + $0xf0] sm:$0xff]
  %v5219 = vld [vmem:[%s5187 + $0xf8] sm:$0xff]
  %v5220 = vld [vmem:[%s5187 + $0x100] sm:$0xff]
  %v5221 = vld [vmem:[%s5187 + $0x108] sm:$0xff]
  %v5222 = vld [vmem:[%s5187 + $0x110] sm:$0xff]
  %v5223 = vld [vmem:[%s5187 + $0x118] sm:$0xff]
  %v5224 = vld [vmem:[%s5187 + $0x120] sm:$0xff]
  %v5225 = vld [vmem:[%s5187 + $0x128] sm:$0xff]
  %v5226 = vld [vmem:[%s5187 + $0x130] sm:$0xff]
  %v5227 = vld [vmem:[%s5187 + $0x138] sm:$0xff]
  %v5228 = vld [vmem:[%s5187 + $0x140] sm:$0xff]
  %v5229 = vld [vmem:[%s5187 + $0x148] sm:$0xff]
  %v5230 = vld [vmem:[%s5187 + $0x150] sm:$0xff]
  %v5231 = vld [vmem:[%s5187 + $0x158] sm:$0xff]
  %v5232 = vld [vmem:[%s5187 + $0x160] sm:$0xff]
  %v5233 = vld [vmem:[%s5187 + $0x168] sm:$0xff]
  %v5234 = vld [vmem:[%s5187 + $0x170] sm:$0xff]
  %v5235 = vld [vmem:[%s5187 + $0x178] sm:$0xff]
  %v5236 = vld [vmem:[%s5187 + $0x180] sm:$0xff]
  %v5237 = vld [vmem:[%s5187 + $0x188] sm:$0xff]
  %v5238 = vld [vmem:[%s5187 + $0x190] sm:$0xff]
  %v5239 = vld [vmem:[%s5187 + $0x198] sm:$0xff]
  %v5240 = vld [vmem:[%s5187 + $0x1a0] sm:$0xff]
  %v5241 = vld [vmem:[%s5187 + $0x1a8] sm:$0xff]
  %v5242 = vld [vmem:[%s5187 + $0x1b0] sm:$0xff]
  %v5243 = vld [vmem:[%s5187 + $0x1b8] sm:$0xff]
  %v5244 = vld [vmem:[%s5187 + $0x1c0] sm:$0xff]
  %v5245 = vld [vmem:[%s5187 + $0x1c8] sm:$0xff]
  %v5246 = vld [vmem:[%s5187 + $0x1d0] sm:$0xff]
  %v5247 = vld [vmem:[%s5187 + $0x1d8] sm:$0xff]
  %v5248 = vld [vmem:[%s5187 + $0x1e0] sm:$0xff]
  %v5249 = vld [vmem:[%s5187 + $0x1e8] sm:$0xff]
  %v5250 = vld [vmem:[%s5187 + $0x1f0] sm:$0xff]
  %v5251 = vld [vmem:[%s5187 + $0x1f8] sm:$0xff]
  %v5252 = vld [vmem:[%s5187 + $0x200] sm:$0xff]
  %v5253 = vld [vmem:[%s5187 + $0x208] sm:$0xff]
  %v5254 = vld [vmem:[%s5187 + $0x210] sm:$0xff]
  %v5255 = vld [vmem:[%s5187 + $0x218] sm:$0xff]
  %v5256 = vld [vmem:[%s5187 + $0x220] sm:$0xff]
  %v5257 = vld [vmem:[%s5187 + $0x228] sm:$0xff]
  %v5258 = vld [vmem:[%s5187 + $0x230] sm:$0xff]
  %v5259 = vld [vmem:[%s5187 + $0x238] sm:$0xff]
  %v5260 = vld [vmem:[%s5187 + $0x240] sm:$0xff]
  %v5261 = vld [vmem:[%s5187 + $0x248] sm:$0xff]
  %v5262 = vld [vmem:[%s5187 + $0x250] sm:$0xff]
  %v5263 = vld [vmem:[%s5187 + $0x258] sm:$0xff]
  %v5264 = vld [vmem:[%s5187 + $0x260] sm:$0xff]
  %v5265 = vld [vmem:[%s5187 + $0x268] sm:$0xff]
  %v5266 = vld [vmem:[%s5187 + $0x270] sm:$0xff]
  %v5267 = vld [vmem:[%s5187 + $0x278] sm:$0xff]
  %v5268 = vld [vmem:[%s5187 + $0x280] sm:$0xff]
  %v5269 = vld [vmem:[%s5187 + $0x288] sm:$0xff]
  %v5270 = vld [vmem:[%s5187 + $0x290] sm:$0xff]
  %v5271 = vld [vmem:[%s5187 + $0x298] sm:$0xff]
  %v5272 = vld [vmem:[%s5187 + $0x2a0] sm:$0xff]
  %v5273 = vld [vmem:[%s5187 + $0x2a8] sm:$0xff]
  %v5274 = vld [vmem:[%s5187 + $0x2b0] sm:$0xff]
  %v5275 = vld [vmem:[%s5187 + $0x2b8] sm:$0xff]
  %v5277 = vsel %vm2457, %v5182, 0
  %v5280 = vsel %vm2457, %v5185, 0
  %5282 = vmatpush.msra.mxu0 %v5218
  %5283 = vmatpush.msra.mxu0 %v5216
  %5284 = vmatpush.msra.mxu0 %v5214
  %5285 = vmatpush.msra.mxu0 %v5212
  %5286 = vmatpush.msra.mxu0 %v5210
  %5287 = vmatpush.msra.mxu0 %v5208
  %5288 = vmatpush.msra.mxu0 %v5206
  %5289 = vmatpush.msra.mxu0 %v5204
  %5290 = vmatpush.msra.mxu0 %v5202
  %5291 = vmatpush.msra.mxu0 %v5200
  %5292 = vmatpush.msra.mxu0 %v5198
  %5293 = vmatpush.msra.mxu0 %v5196
  %5294 = vmatpush.msra.mxu0 %v5194
  %5295 = vmatpush.msra.mxu0 %v5192
  %5296 = vmatpush.msra.mxu0 %v5190
  %5297 = vmatpush.msra.mxu0 %v5188
  %5298 = vmatmul.f32.gmra.mxu0 %v5136
  %v5299 = vpop.f32.mrf.mxu0
  %v5300 = vadd.f32 0.0, %v5299
  %5301 = vmatmul.f32.gmra.mxu0 %v5139
  %v5302 = vpop.f32.mrf.mxu0
  %v5303 = vadd.f32 0.0, %v5302
  %5304 = vdwg.mxu0
  %5305 = vmatpush.msra.mxu0 %v5250
  %5306 = vmatpush.msra.mxu0 %v5248
  %5307 = vmatpush.msra.mxu0 %v5246
  %5308 = vmatpush.msra.mxu0 %v5244
  %5309 = vmatpush.msra.mxu0 %v5242
  %5310 = vmatpush.msra.mxu0 %v5240
  %5311 = vmatpush.msra.mxu0 %v5238
  %5312 = vmatpush.msra.mxu0 %v5236
  %5313 = vmatpush.msra.mxu0 %v5234
  %5314 = vmatpush.msra.mxu0 %v5232
  %5315 = vmatpush.msra.mxu0 %v5230
  %5316 = vmatpush.msra.mxu0 %v5228
  %5317 = vmatpush.msra.mxu0 %v5226
  %5318 = vmatpush.msra.mxu0 %v5224
  %5319 = vmatpush.msra.mxu0 %v5222
  %5320 = vmatpush.msra.mxu0 %v5220
  %5321 = vmatmul.f32.gmra.mxu0 %v5159
  %v5322 = vpop.f32.mrf.mxu0
  %v5323 = vadd.f32 %v5300, %v5322
  %5324 = vmatmul.f32.gmra.mxu0 %v5162
  %v5325 = vpop.f32.mrf.mxu0
  %v5326 = vadd.f32 %v5303, %v5325
  %5327 = vdwg.mxu0
  %5328 = vmatpush.msra.mxu0 0.0
  %5329 = vmatpush.msra.mxu0 0.0
  %5330 = vmatpush.msra.mxu0 0.0
  %5331 = vmatpush.msra.mxu0 0.0
  %5332 = vmatpush.msra.mxu0 %v5274
  %5333 = vmatpush.msra.mxu0 %v5272
  %5334 = vmatpush.msra.mxu0 %v5270
  %5335 = vmatpush.msra.mxu0 %v5268
  %5336 = vmatpush.msra.mxu0 %v5266
  %5337 = vmatpush.msra.mxu0 %v5264
  %5338 = vmatpush.msra.mxu0 %v5262
  %5339 = vmatpush.msra.mxu0 %v5260
  %5340 = vmatpush.msra.mxu0 %v5258
  %5341 = vmatpush.msra.mxu0 %v5256
  %5342 = vmatpush.msra.mxu0 %v5254
  %5343 = vmatpush.msra.mxu0 %v5252
  %5344 = vmatmul.f32.gmra.mxu0 %v5277
  %v5345 = vpop.f32.mrf.mxu0
  %v5346 = vadd.f32 %v5323, %v5345
  %5347 = vmatmul.f32.gmra.mxu0 %v5280
  %v5348 = vpop.f32.mrf.mxu0
  %v5349 = vadd.f32 %v5326, %v5348
  %5350 = vdwg.mxu0
  %5351 = vmatpush.msra.mxu0 %v5219
  %5352 = vmatpush.msra.mxu0 %v5217
  %5353 = vmatpush.msra.mxu0 %v5215
  %5354 = vmatpush.msra.mxu0 %v5213
  %5355 = vmatpush.msra.mxu0 %v5211
  %5356 = vmatpush.msra.mxu0 %v5209
  %5357 = vmatpush.msra.mxu0 %v5207
  %5358 = vmatpush.msra.mxu0 %v5205
  %5359 = vmatpush.msra.mxu0 %v5203
  %5360 = vmatpush.msra.mxu0 %v5201
  %5361 = vmatpush.msra.mxu0 %v5199
  %5362 = vmatpush.msra.mxu0 %v5197
  %5363 = vmatpush.msra.mxu0 %v5195
  %5364 = vmatpush.msra.mxu0 %v5193
  %5365 = vmatpush.msra.mxu0 %v5191
  %5366 = vmatpush.msra.mxu0 %v5189
  %5367 = vmatmul.f32.gmra.mxu0 %v5136
  %v5368 = vpop.f32.mrf.mxu0
  %v5369 = vadd.f32 0.0, %v5368
  %5370 = vmatmul.f32.gmra.mxu0 %v5139
  %v5371 = vpop.f32.mrf.mxu0
  %v5372 = vadd.f32 0.0, %v5371
  %5373 = vdwg.mxu0
  %5374 = vmatpush.msra.mxu0 %v5251
  %5375 = vmatpush.msra.mxu0 %v5249
  %5376 = vmatpush.msra.mxu0 %v5247
  %5377 = vmatpush.msra.mxu0 %v5245
  %5378 = vmatpush.msra.mxu0 %v5243
  %5379 = vmatpush.msra.mxu0 %v5241
  %5380 = vmatpush.msra.mxu0 %v5239
  %5381 = vmatpush.msra.mxu0 %v5237
  %5382 = vmatpush.msra.mxu0 %v5235
  %5383 = vmatpush.msra.mxu0 %v5233
  %5384 = vmatpush.msra.mxu0 %v5231
  %5385 = vmatpush.msra.mxu0 %v5229
  %5386 = vmatpush.msra.mxu0 %v5227
  %5387 = vmatpush.msra.mxu0 %v5225
  %5388 = vmatpush.msra.mxu0 %v5223
  %5389 = vmatpush.msra.mxu0 %v5221
  %5390 = vmatmul.f32.gmra.mxu0 %v5159
  %v5391 = vpop.f32.mrf.mxu0
  %v5392 = vadd.f32 %v5369, %v5391
  %5393 = vmatmul.f32.gmra.mxu0 %v5162
  %v5394 = vpop.f32.mrf.mxu0
  %v5395 = vadd.f32 %v5372, %v5394
  %5396 = vdwg.mxu0
  %5397 = vmatpush.msra.mxu0 0.0
  %5398 = vmatpush.msra.mxu0 0.0
  %5399 = vmatpush.msra.mxu0 0.0
  %5400 = vmatpush.msra.mxu0 0.0
  %5401 = vmatpush.msra.mxu0 %v5275
  %5402 = vmatpush.msra.mxu0 %v5273
  %5403 = vmatpush.msra.mxu0 %v5271
  %5404 = vmatpush.msra.mxu0 %v5269
  %5405 = vmatpush.msra.mxu0 %v5267
  %5406 = vmatpush.msra.mxu0 %v5265
  %5407 = vmatpush.msra.mxu0 %v5263
  %5408 = vmatpush.msra.mxu0 %v5261
  %5409 = vmatpush.msra.mxu0 %v5259
  %5410 = vmatpush.msra.mxu0 %v5257
  %5411 = vmatpush.msra.mxu0 %v5255
  %5412 = vmatpush.msra.mxu0 %v5253
  %5413 = vmatmul.f32.gmra.mxu0 %v5277
  %v5414 = vpop.f32.mrf.mxu0
  %v5415 = vadd.f32 %v5392, %v5414
  %5416 = vmatmul.f32.gmra.mxu0 %v5280
  %v5417 = vpop.f32.mrf.mxu0
  %v5418 = vadd.f32 %v5395, %v5417
  %5419 = vdwg.mxu0
  %v5420 = vadd.f32 %v5035, %v5346
  %v5421 = vadd.f32 %v5104, %v5415
  %v5422 = vadd.f32 %v5038, %v5349
  %v5423 = vadd.f32 %v5107, %v5418
  %s5424 = scalar_lea.vmem %s4, 48
  %v5425 = vld [vmem:[%s5424] sm:$0xff]
  %v5426 = vld [vmem:[%s5424 + $0x8] sm:$0x1]
  %v5428 = vsel %vm4481, %v5425, 0
  %v5431 = vsel %vm4481, %v5426, 0
  %5433 = vmatpush.msra.mxu0 0.0
  %5434 = vmatpush.msra.mxu0 0.0
  %5435 = vmatpush.msra.mxu0 0.0
  %5436 = vmatpush.msra.mxu0 0.0
  %5437 = vmatpush.msra.mxu0 0.0
  %5438 = vmatpush.msra.mxu0 0.0
  %5439 = vmatpush.msra.mxu0 0.0
  %5440 = vmatpush.msra.mxu0 0.0
  %5441 = vmatpush.msra.mxu0 0.0
  %5442 = vmatpush.msra.mxu0 0.0
  %5443 = vmatpush.msra.mxu0 0.0
  %5444 = vmatpush.msra.mxu0 0.0
  %5445 = vmatpush.msra.mxu0 0.0
  %5446 = vmatpush.msra.mxu0 %v4489
  %5447 = vmatpush.msra.mxu0 %v4473
  %5448 = vmatpush.msra.mxu0 %v4470
  %5449 = vmatmul.f32.gmra.mxu0 %v5428
  %v5450 = vpop.f32.mrf.mxu0
  %v5451 = vadd.f32 0.0, %v5450
  %5452 = vmatmul.f32.gmra.mxu0 %v5431
  %v5453 = vpop.f32.mrf.mxu0
  %v5454 = vadd.f32 0.0, %v5453
  %5455 = vdwg.mxu0
  %5456 = vmatpush.msra.mxu0 0.0
  %5457 = vmatpush.msra.mxu0 0.0
  %5458 = vmatpush.msra.mxu0 0.0
  %5459 = vmatpush.msra.mxu0 0.0
  %5460 = vmatpush.msra.mxu0 0.0
  %5461 = vmatpush.msra.mxu0 0.0
  %5462 = vmatpush.msra.mxu0 0.0
  %5463 = vmatpush.msra.mxu0 0.0
  %5464 = vmatpush.msra.mxu0 0.0
  %5465 = vmatpush.msra.mxu0 0.0
  %5466 = vmatpush.msra.mxu0 0.0
  %5467 = vmatpush.msra.mxu0 0.0
  %5468 = vmatpush.msra.mxu0 0.0
  %5469 = vmatpush.msra.mxu0 %v4492
  %5470 = vmatpush.msra.mxu0 %v4474
  %5471 = vmatpush.msra.mxu0 %v4471
  %5472 = vmatmul.f32.gmra.mxu0 %v5428
  %v5473 = vpop.f32.mrf.mxu0
  %v5474 = vadd.f32 0.0, %v5473
  %5475 = vmatmul.f32.gmra.mxu0 %v5431
  %v5476 = vpop.f32.mrf.mxu0
  %v5477 = vadd.f32 0.0, %v5476
  %5478 = vdwg.mxu0
  %5479 = vmatpush.msra.mxu0 0.0
  %5480 = vmatpush.msra.mxu0 0.0
  %5481 = vmatpush.msra.mxu0 0.0
  %5482 = vmatpush.msra.mxu0 0.0
  %5483 = vmatpush.msra.mxu0 0.0
  %5484 = vmatpush.msra.mxu0 0.0
  %5485 = vmatpush.msra.mxu0 0.0
  %5486 = vmatpush.msra.mxu0 0.0
  %5487 = vmatpush.msra.mxu0 0.0
  %5488 = vmatpush.msra.mxu0 0.0
  %5489 = vmatpush.msra.mxu0 0.0
  %5490 = vmatpush.msra.mxu0 0.0
  %5491 = vmatpush.msra.mxu0 0.0
  %5492 = vmatpush.msra.mxu0 %v4495
  %5493 = vmatpush.msra.mxu0 %v4475
  %5494 = vmatpush.msra.mxu0 %v4472
  %5495 = vmatmul.f32.gmra.mxu0 %v5428
  %v5496 = vpop.f32.mrf.mxu0
  %v5497 = vadd.f32 0.0, %v5496
  %5498 = vmatmul.f32.gmra.mxu0 %v5431
  %v5499 = vpop.f32.mrf.mxu0
  %v5500 = vadd.f32 0.0, %v5499
  %5501 = vdwg.mxu0
  %s5502 = scalar_lea.vmem %s3, 2112
  %v5503 = vld [vmem:[%s5502] sm:$0xff]
  %v5504 = vld [vmem:[%s5502 + $0x8] sm:$0xff]
  %v5505 = vld [vmem:[%s5502 + $0x10] sm:$0xff]
  %v5506 = vld [vmem:[%s5502 + $0x18] sm:$0xff]
  %v5507 = vld [vmem:[%s5502 + $0x20] sm:$0xff]
  %v5508 = vld [vmem:[%s5502 + $0x28] sm:$0xff]
  %v5509 = vld [vmem:[%s5502 + $0x30] sm:$0xff]
  %v5510 = vld [vmem:[%s5502 + $0x38] sm:$0xff]
  %v5511 = vld [vmem:[%s5502 + $0x40] sm:$0xff]
  %v5512 = vld [vmem:[%s5502 + $0x48] sm:$0xff]
  %v5513 = vld [vmem:[%s5502 + $0x50] sm:$0xff]
  %v5514 = vld [vmem:[%s5502 + $0x58] sm:$0xff]
  %v5515 = vld [vmem:[%s5502 + $0x60] sm:$0xff]
  %v5516 = vld [vmem:[%s5502 + $0x68] sm:$0xff]
  %v5517 = vld [vmem:[%s5502 + $0x70] sm:$0xff]
  %v5518 = vld [vmem:[%s5502 + $0x78] sm:$0xff]
  %v5519 = vld [vmem:[%s5502 + $0x80] sm:$0xff]
  %v5520 = vld [vmem:[%s5502 + $0x88] sm:$0xff]
  %v5521 = vld [vmem:[%s5502 + $0x90] sm:$0xff]
  %v5522 = vld [vmem:[%s5502 + $0x98] sm:$0xff]
  %v5523 = vld [vmem:[%s5502 + $0xa0] sm:$0xff]
  %v5524 = vld [vmem:[%s5502 + $0xa8] sm:$0xff]
  %v5525 = vld [vmem:[%s5502 + $0xb0] sm:$0xff]
  %v5526 = vld [vmem:[%s5502 + $0xb8] sm:$0xff]
  %v5527 = vld [vmem:[%s5502 + $0xc0] sm:$0xff]
  %v5528 = vld [vmem:[%s5502 + $0xc8] sm:$0xff]
  %v5529 = vld [vmem:[%s5502 + $0xd0] sm:$0xff]
  %v5530 = vld [vmem:[%s5502 + $0xd8] sm:$0xff]
  %v5531 = vld [vmem:[%s5502 + $0xe0] sm:$0xff]
  %v5532 = vld [vmem:[%s5502 + $0xe8] sm:$0xff]
  %v5533 = vld [vmem:[%s5502 + $0xf0] sm:$0xff]
  %v5534 = vld [vmem:[%s5502 + $0xf8] sm:$0xff]
  %v5535 = vld [vmem:[%s5502 + $0x100] sm:$0xff]
  %v5536 = vld [vmem:[%s5502 + $0x108] sm:$0xff]
  %v5537 = vld [vmem:[%s5502 + $0x110] sm:$0xff]
  %v5538 = vld [vmem:[%s5502 + $0x118] sm:$0xff]
  %v5539 = vld [vmem:[%s5502 + $0x120] sm:$0xff]
  %v5540 = vld [vmem:[%s5502 + $0x128] sm:$0xff]
  %v5541 = vld [vmem:[%s5502 + $0x130] sm:$0xff]
  %v5542 = vld [vmem:[%s5502 + $0x138] sm:$0xff]
  %v5543 = vld [vmem:[%s5502 + $0x140] sm:$0xff]
  %v5544 = vld [vmem:[%s5502 + $0x148] sm:$0xff]
  %v5545 = vld [vmem:[%s5502 + $0x150] sm:$0xff]
  %v5546 = vld [vmem:[%s5502 + $0x158] sm:$0xff]
  %v5547 = vld [vmem:[%s5502 + $0x160] sm:$0xff]
  %v5548 = vld [vmem:[%s5502 + $0x168] sm:$0xff]
  %v5549 = vld [vmem:[%s5502 + $0x170] sm:$0xff]
  %v5550 = vld [vmem:[%s5502 + $0x178] sm:$0xff]
  %v5551 = vld [vmem:[%s5502 + $0x180] sm:$0xff]
  %v5552 = vld [vmem:[%s5502 + $0x188] sm:$0xff]
  %v5553 = vld [vmem:[%s5502 + $0x190] sm:$0xff]
  %v5554 = vld [vmem:[%s5502 + $0x198] sm:$0xff]
  %v5555 = vld [vmem:[%s5502 + $0x1a0] sm:$0xff]
  %v5556 = vld [vmem:[%s5502 + $0x1a8] sm:$0xff]
  %v5557 = vld [vmem:[%s5502 + $0x1b0] sm:$0xff]
  %v5558 = vld [vmem:[%s5502 + $0x1b8] sm:$0xff]
  %v5559 = vld [vmem:[%s5502 + $0x1c0] sm:$0xff]
  %v5560 = vld [vmem:[%s5502 + $0x1c8] sm:$0xff]
  %v5561 = vld [vmem:[%s5502 + $0x1d0] sm:$0xff]
  %v5562 = vld [vmem:[%s5502 + $0x1d8] sm:$0xff]
  %v5563 = vld [vmem:[%s5502 + $0x1e0] sm:$0xff]
  %v5564 = vld [vmem:[%s5502 + $0x1e8] sm:$0xff]
  %v5565 = vld [vmem:[%s5502 + $0x1f0] sm:$0xff]
  %v5566 = vld [vmem:[%s5502 + $0x1f8] sm:$0xff]
  %v5567 = vld [vmem:[%s5502 + $0x200] sm:$0xff]
  %v5568 = vld [vmem:[%s5502 + $0x208] sm:$0xff]
  %v5569 = vld [vmem:[%s5502 + $0x210] sm:$0xff]
  %v5570 = vld [vmem:[%s5502 + $0x218] sm:$0xff]
  %v5571 = vld [vmem:[%s5502 + $0x220] sm:$0xff]
  %v5572 = vld [vmem:[%s5502 + $0x228] sm:$0xff]
  %v5573 = vld [vmem:[%s5502 + $0x230] sm:$0xff]
  %v5574 = vld [vmem:[%s5502 + $0x238] sm:$0xff]
  %v5575 = vld [vmem:[%s5502 + $0x240] sm:$0xff]
  %v5576 = vld [vmem:[%s5502 + $0x248] sm:$0xff]
  %v5577 = vld [vmem:[%s5502 + $0x250] sm:$0xff]
  %v5578 = vld [vmem:[%s5502 + $0x258] sm:$0xff]
  %v5579 = vld [vmem:[%s5502 + $0x260] sm:$0xff]
  %v5580 = vld [vmem:[%s5502 + $0x268] sm:$0xff]
  %v5581 = vld [vmem:[%s5502 + $0x270] sm:$0xff]
  %v5582 = vld [vmem:[%s5502 + $0x278] sm:$0xff]
  %v5583 = vld [vmem:[%s5502 + $0x280] sm:$0xff]
  %v5584 = vld [vmem:[%s5502 + $0x288] sm:$0xff]
  %v5585 = vld [vmem:[%s5502 + $0x290] sm:$0xff]
  %v5586 = vld [vmem:[%s5502 + $0x298] sm:$0xff]
  %v5587 = vld [vmem:[%s5502 + $0x2a0] sm:$0xff]
  %v5588 = vld [vmem:[%s5502 + $0x2a8] sm:$0xff]
  %v5589 = vld [vmem:[%s5502 + $0x2b0] sm:$0xff]
  %v5590 = vld [vmem:[%s5502 + $0x2b8] sm:$0xff]
  %v5592 = vsel %vm2457, %v5497, 0
  %v5595 = vsel %vm2457, %v5500, 0
  %5597 = vmatpush.msra.mxu0 %v5533
  %5598 = vmatpush.msra.mxu0 %v5531
  %5599 = vmatpush.msra.mxu0 %v5529
  %5600 = vmatpush.msra.mxu0 %v5527
  %5601 = vmatpush.msra.mxu0 %v5525
  %5602 = vmatpush.msra.mxu0 %v5523
  %5603 = vmatpush.msra.mxu0 %v5521
  %5604 = vmatpush.msra.mxu0 %v5519
  %5605 = vmatpush.msra.mxu0 %v5517
  %5606 = vmatpush.msra.mxu0 %v5515
  %5607 = vmatpush.msra.mxu0 %v5513
  %5608 = vmatpush.msra.mxu0 %v5511
  %5609 = vmatpush.msra.mxu0 %v5509
  %5610 = vmatpush.msra.mxu0 %v5507
  %5611 = vmatpush.msra.mxu0 %v5505
  %5612 = vmatpush.msra.mxu0 %v5503
  %5613 = vmatmul.f32.gmra.mxu0 %v5451
  %v5614 = vpop.f32.mrf.mxu0
  %v5615 = vadd.f32 0.0, %v5614
  %5616 = vmatmul.f32.gmra.mxu0 %v5454
  %v5617 = vpop.f32.mrf.mxu0
  %v5618 = vadd.f32 0.0, %v5617
  %5619 = vdwg.mxu0
  %5620 = vmatpush.msra.mxu0 %v5565
  %5621 = vmatpush.msra.mxu0 %v5563
  %5622 = vmatpush.msra.mxu0 %v5561
  %5623 = vmatpush.msra.mxu0 %v5559
  %5624 = vmatpush.msra.mxu0 %v5557
  %5625 = vmatpush.msra.mxu0 %v5555
  %5626 = vmatpush.msra.mxu0 %v5553
  %5627 = vmatpush.msra.mxu0 %v5551
  %5628 = vmatpush.msra.mxu0 %v5549
  %5629 = vmatpush.msra.mxu0 %v5547
  %5630 = vmatpush.msra.mxu0 %v5545
  %5631 = vmatpush.msra.mxu0 %v5543
  %5632 = vmatpush.msra.mxu0 %v5541
  %5633 = vmatpush.msra.mxu0 %v5539
  %5634 = vmatpush.msra.mxu0 %v5537
  %5635 = vmatpush.msra.mxu0 %v5535
  %5636 = vmatmul.f32.gmra.mxu0 %v5474
  %v5637 = vpop.f32.mrf.mxu0
  %v5638 = vadd.f32 %v5615, %v5637
  %5639 = vmatmul.f32.gmra.mxu0 %v5477
  %v5640 = vpop.f32.mrf.mxu0
  %v5641 = vadd.f32 %v5618, %v5640
  %5642 = vdwg.mxu0
  %5643 = vmatpush.msra.mxu0 0.0
  %5644 = vmatpush.msra.mxu0 0.0
  %5645 = vmatpush.msra.mxu0 0.0
  %5646 = vmatpush.msra.mxu0 0.0
  %5647 = vmatpush.msra.mxu0 %v5589
  %5648 = vmatpush.msra.mxu0 %v5587
  %5649 = vmatpush.msra.mxu0 %v5585
  %5650 = vmatpush.msra.mxu0 %v5583
  %5651 = vmatpush.msra.mxu0 %v5581
  %5652 = vmatpush.msra.mxu0 %v5579
  %5653 = vmatpush.msra.mxu0 %v5577
  %5654 = vmatpush.msra.mxu0 %v5575
  %5655 = vmatpush.msra.mxu0 %v5573
  %5656 = vmatpush.msra.mxu0 %v5571
  %5657 = vmatpush.msra.mxu0 %v5569
  %5658 = vmatpush.msra.mxu0 %v5567
  %5659 = vmatmul.f32.gmra.mxu0 %v5592
  %v5660 = vpop.f32.mrf.mxu0
  %v5661 = vadd.f32 %v5638, %v5660
  %5662 = vmatmul.f32.gmra.mxu0 %v5595
  %v5663 = vpop.f32.mrf.mxu0
  %v5664 = vadd.f32 %v5641, %v5663
  %5665 = vdwg.mxu0
  %5666 = vmatpush.msra.mxu0 %v5534
  %5667 = vmatpush.msra.mxu0 %v5532
  %5668 = vmatpush.msra.mxu0 %v5530
  %5669 = vmatpush.msra.mxu0 %v5528
  %5670 = vmatpush.msra.mxu0 %v5526
  %5671 = vmatpush.msra.mxu0 %v5524
  %5672 = vmatpush.msra.mxu0 %v5522
  %5673 = vmatpush.msra.mxu0 %v5520
  %5674 = vmatpush.msra.mxu0 %v5518
  %5675 = vmatpush.msra.mxu0 %v5516
  %5676 = vmatpush.msra.mxu0 %v5514
  %5677 = vmatpush.msra.mxu0 %v5512
  %5678 = vmatpush.msra.mxu0 %v5510
  %5679 = vmatpush.msra.mxu0 %v5508
  %5680 = vmatpush.msra.mxu0 %v5506
  %5681 = vmatpush.msra.mxu0 %v5504
  %5682 = vmatmul.f32.gmra.mxu0 %v5451
  %v5683 = vpop.f32.mrf.mxu0
  %v5684 = vadd.f32 0.0, %v5683
  %5685 = vmatmul.f32.gmra.mxu0 %v5454
  %v5686 = vpop.f32.mrf.mxu0
  %v5687 = vadd.f32 0.0, %v5686
  %5688 = vdwg.mxu0
  %5689 = vmatpush.msra.mxu0 %v5566
  %5690 = vmatpush.msra.mxu0 %v5564
  %5691 = vmatpush.msra.mxu0 %v5562
  %5692 = vmatpush.msra.mxu0 %v5560
  %5693 = vmatpush.msra.mxu0 %v5558
  %5694 = vmatpush.msra.mxu0 %v5556
  %5695 = vmatpush.msra.mxu0 %v5554
  %5696 = vmatpush.msra.mxu0 %v5552
  %5697 = vmatpush.msra.mxu0 %v5550
  %5698 = vmatpush.msra.mxu0 %v5548
  %5699 = vmatpush.msra.mxu0 %v5546
  %5700 = vmatpush.msra.mxu0 %v5544
  %5701 = vmatpush.msra.mxu0 %v5542
  %5702 = vmatpush.msra.mxu0 %v5540
  %5703 = vmatpush.msra.mxu0 %v5538
  %5704 = vmatpush.msra.mxu0 %v5536
  %5705 = vmatmul.f32.gmra.mxu0 %v5474
  %v5706 = vpop.f32.mrf.mxu0
  %v5707 = vadd.f32 %v5684, %v5706
  %5708 = vmatmul.f32.gmra.mxu0 %v5477
  %v5709 = vpop.f32.mrf.mxu0
  %v5710 = vadd.f32 %v5687, %v5709
  %5711 = vdwg.mxu0
  %5712 = vmatpush.msra.mxu0 0.0
  %5713 = vmatpush.msra.mxu0 0.0
  %5714 = vmatpush.msra.mxu0 0.0
  %5715 = vmatpush.msra.mxu0 0.0
  %5716 = vmatpush.msra.mxu0 %v5590
  %5717 = vmatpush.msra.mxu0 %v5588
  %5718 = vmatpush.msra.mxu0 %v5586
  %5719 = vmatpush.msra.mxu0 %v5584
  %5720 = vmatpush.msra.mxu0 %v5582
  %5721 = vmatpush.msra.mxu0 %v5580
  %5722 = vmatpush.msra.mxu0 %v5578
  %5723 = vmatpush.msra.mxu0 %v5576
  %5724 = vmatpush.msra.mxu0 %v5574
  %5725 = vmatpush.msra.mxu0 %v5572
  %5726 = vmatpush.msra.mxu0 %v5570
  %5727 = vmatpush.msra.mxu0 %v5568
  %5728 = vmatmul.f32.gmra.mxu0 %v5592
  %v5729 = vpop.f32.mrf.mxu0
  %v5730 = vadd.f32 %v5707, %v5729
  %5731 = vmatmul.f32.gmra.mxu0 %v5595
  %v5732 = vpop.f32.mrf.mxu0
  %v5733 = vadd.f32 %v5710, %v5732
  %5734 = vdwg.mxu0
  %v5735 = vadd.f32 %v5420, %v5661
  %v5736 = vadd.f32 %v5421, %v5730
  %v5737 = vadd.f32 %v5422, %v5664
  %v5738 = vadd.f32 %v5423, %v5733
  %s5739 = scalar_lea.vmem %s4, 64
  %v5740 = vld [vmem:[%s5739] sm:$0xff]
  %v5741 = vld [vmem:[%s5739 + $0x8] sm:$0x1]
  %v5743 = vsel %vm4481, %v5740, 0
  %v5746 = vsel %vm4481, %v5741, 0
  %5748 = vmatpush.msra.mxu0 0.0
  %5749 = vmatpush.msra.mxu0 0.0
  %5750 = vmatpush.msra.mxu0 0.0
  %5751 = vmatpush.msra.mxu0 0.0
  %5752 = vmatpush.msra.mxu0 0.0
  %5753 = vmatpush.msra.mxu0 0.0
  %5754 = vmatpush.msra.mxu0 0.0
  %5755 = vmatpush.msra.mxu0 0.0
  %5756 = vmatpush.msra.mxu0 0.0
  %5757 = vmatpush.msra.mxu0 0.0
  %5758 = vmatpush.msra.mxu0 0.0
  %5759 = vmatpush.msra.mxu0 0.0
  %5760 = vmatpush.msra.mxu0 0.0
  %5761 = vmatpush.msra.mxu0 %v4489
  %5762 = vmatpush.msra.mxu0 %v4473
  %5763 = vmatpush.msra.mxu0 %v4470
  %5764 = vmatmul.f32.gmra.mxu0 %v5743
  %v5765 = vpop.f32.mrf.mxu0
  %v5766 = vadd.f32 0.0, %v5765
  %5767 = vmatmul.f32.gmra.mxu0 %v5746
  %v5768 = vpop.f32.mrf.mxu0
  %v5769 = vadd.f32 0.0, %v5768
  %5770 = vdwg.mxu0
  %5771 = vmatpush.msra.mxu0 0.0
  %5772 = vmatpush.msra.mxu0 0.0
  %5773 = vmatpush.msra.mxu0 0.0
  %5774 = vmatpush.msra.mxu0 0.0
  %5775 = vmatpush.msra.mxu0 0.0
  %5776 = vmatpush.msra.mxu0 0.0
  %5777 = vmatpush.msra.mxu0 0.0
  %5778 = vmatpush.msra.mxu0 0.0
  %5779 = vmatpush.msra.mxu0 0.0
  %5780 = vmatpush.msra.mxu0 0.0
  %5781 = vmatpush.msra.mxu0 0.0
  %5782 = vmatpush.msra.mxu0 0.0
  %5783 = vmatpush.msra.mxu0 0.0
  %5784 = vmatpush.msra.mxu0 %v4492
  %5785 = vmatpush.msra.mxu0 %v4474
  %5786 = vmatpush.msra.mxu0 %v4471
  %5787 = vmatmul.f32.gmra.mxu0 %v5743
  %v5788 = vpop.f32.mrf.mxu0
  %v5789 = vadd.f32 0.0, %v5788
  %5790 = vmatmul.f32.gmra.mxu0 %v5746
  %v5791 = vpop.f32.mrf.mxu0
  %v5792 = vadd.f32 0.0, %v5791
  %5793 = vdwg.mxu0
  %5794 = vmatpush.msra.mxu0 0.0
  %5795 = vmatpush.msra.mxu0 0.0
  %5796 = vmatpush.msra.mxu0 0.0
  %5797 = vmatpush.msra.mxu0 0.0
  %5798 = vmatpush.msra.mxu0 0.0
  %5799 = vmatpush.msra.mxu0 0.0
  %5800 = vmatpush.msra.mxu0 0.0
  %5801 = vmatpush.msra.mxu0 0.0
  %5802 = vmatpush.msra.mxu0 0.0
  %5803 = vmatpush.msra.mxu0 0.0
  %5804 = vmatpush.msra.mxu0 0.0
  %5805 = vmatpush.msra.mxu0 0.0
  %5806 = vmatpush.msra.mxu0 0.0
  %5807 = vmatpush.msra.mxu0 %v4495
  %5808 = vmatpush.msra.mxu0 %v4475
  %5809 = vmatpush.msra.mxu0 %v4472
  %5810 = vmatmul.f32.gmra.mxu0 %v5743
  %v5811 = vpop.f32.mrf.mxu0
  %v5812 = vadd.f32 0.0, %v5811
  %5813 = vmatmul.f32.gmra.mxu0 %v5746
  %v5814 = vpop.f32.mrf.mxu0
  %v5815 = vadd.f32 0.0, %v5814
  %5816 = vdwg.mxu0
  %s5817 = scalar_lea.vmem %s3, 2816
  %v5818 = vld [vmem:[%s5817] sm:$0xff]
  %v5819 = vld [vmem:[%s5817 + $0x8] sm:$0xff]
  %v5820 = vld [vmem:[%s5817 + $0x10] sm:$0xff]
  %v5821 = vld [vmem:[%s5817 + $0x18] sm:$0xff]
  %v5822 = vld [vmem:[%s5817 + $0x20] sm:$0xff]
  %v5823 = vld [vmem:[%s5817 + $0x28] sm:$0xff]
  %v5824 = vld [vmem:[%s5817 + $0x30] sm:$0xff]
  %v5825 = vld [vmem:[%s5817 + $0x38] sm:$0xff]
  %v5826 = vld [vmem:[%s5817 + $0x40] sm:$0xff]
  %v5827 = vld [vmem:[%s5817 + $0x48] sm:$0xff]
  %v5828 = vld [vmem:[%s5817 + $0x50] sm:$0xff]
  %v5829 = vld [vmem:[%s5817 + $0x58] sm:$0xff]
  %v5830 = vld [vmem:[%s5817 + $0x60] sm:$0xff]
  %v5831 = vld [vmem:[%s5817 + $0x68] sm:$0xff]
  %v5832 = vld [vmem:[%s5817 + $0x70] sm:$0xff]
  %v5833 = vld [vmem:[%s5817 + $0x78] sm:$0xff]
  %v5834 = vld [vmem:[%s5817 + $0x80] sm:$0xff]
  %v5835 = vld [vmem:[%s5817 + $0x88] sm:$0xff]
  %v5836 = vld [vmem:[%s5817 + $0x90] sm:$0xff]
  %v5837 = vld [vmem:[%s5817 + $0x98] sm:$0xff]
  %v5838 = vld [vmem:[%s5817 + $0xa0] sm:$0xff]
  %v5839 = vld [vmem:[%s5817 + $0xa8] sm:$0xff]
  %v5840 = vld [vmem:[%s5817 + $0xb0] sm:$0xff]
  %v5841 = vld [vmem:[%s5817 + $0xb8] sm:$0xff]
  %v5842 = vld [vmem:[%s5817 + $0xc0] sm:$0xff]
  %v5843 = vld [vmem:[%s5817 + $0xc8] sm:$0xff]
  %v5844 = vld [vmem:[%s5817 + $0xd0] sm:$0xff]
  %v5845 = vld [vmem:[%s5817 + $0xd8] sm:$0xff]
  %v5846 = vld [vmem:[%s5817 + $0xe0] sm:$0xff]
  %v5847 = vld [vmem:[%s5817 + $0xe8] sm:$0xff]
  %v5848 = vld [vmem:[%s5817 + $0xf0] sm:$0xff]
  %v5849 = vld [vmem:[%s5817 + $0xf8] sm:$0xff]
  %v5850 = vld [vmem:[%s5817 + $0x100] sm:$0xff]
  %v5851 = vld [vmem:[%s5817 + $0x108] sm:$0xff]
  %v5852 = vld [vmem:[%s5817 + $0x110] sm:$0xff]
  %v5853 = vld [vmem:[%s5817 + $0x118] sm:$0xff]
  %v5854 = vld [vmem:[%s5817 + $0x120] sm:$0xff]
  %v5855 = vld [vmem:[%s5817 + $0x128] sm:$0xff]
  %v5856 = vld [vmem:[%s5817 + $0x130] sm:$0xff]
  %v5857 = vld [vmem:[%s5817 + $0x138] sm:$0xff]
  %v5858 = vld [vmem:[%s5817 + $0x140] sm:$0xff]
  %v5859 = vld [vmem:[%s5817 + $0x148] sm:$0xff]
  %v5860 = vld [vmem:[%s5817 + $0x150] sm:$0xff]
  %v5861 = vld [vmem:[%s5817 + $0x158] sm:$0xff]
  %v5862 = vld [vmem:[%s5817 + $0x160] sm:$0xff]
  %v5863 = vld [vmem:[%s5817 + $0x168] sm:$0xff]
  %v5864 = vld [vmem:[%s5817 + $0x170] sm:$0xff]
  %v5865 = vld [vmem:[%s5817 + $0x178] sm:$0xff]
  %v5866 = vld [vmem:[%s5817 + $0x180] sm:$0xff]
  %v5867 = vld [vmem:[%s5817 + $0x188] sm:$0xff]
  %v5868 = vld [vmem:[%s5817 + $0x190] sm:$0xff]
  %v5869 = vld [vmem:[%s5817 + $0x198] sm:$0xff]
  %v5870 = vld [vmem:[%s5817 + $0x1a0] sm:$0xff]
  %v5871 = vld [vmem:[%s5817 + $0x1a8] sm:$0xff]
  %v5872 = vld [vmem:[%s5817 + $0x1b0] sm:$0xff]
  %v5873 = vld [vmem:[%s5817 + $0x1b8] sm:$0xff]
  %v5874 = vld [vmem:[%s5817 + $0x1c0] sm:$0xff]
  %v5875 = vld [vmem:[%s5817 + $0x1c8] sm:$0xff]
  %v5876 = vld [vmem:[%s5817 + $0x1d0] sm:$0xff]
  %v5877 = vld [vmem:[%s5817 + $0x1d8] sm:$0xff]
  %v5878 = vld [vmem:[%s5817 + $0x1e0] sm:$0xff]
  %v5879 = vld [vmem:[%s5817 + $0x1e8] sm:$0xff]
  %v5880 = vld [vmem:[%s5817 + $0x1f0] sm:$0xff]
  %v5881 = vld [vmem:[%s5817 + $0x1f8] sm:$0xff]
  %v5882 = vld [vmem:[%s5817 + $0x200] sm:$0xff]
  %v5883 = vld [vmem:[%s5817 + $0x208] sm:$0xff]
  %v5884 = vld [vmem:[%s5817 + $0x210] sm:$0xff]
  %v5885 = vld [vmem:[%s5817 + $0x218] sm:$0xff]
  %v5886 = vld [vmem:[%s5817 + $0x220] sm:$0xff]
  %v5887 = vld [vmem:[%s5817 + $0x228] sm:$0xff]
  %v5888 = vld [vmem:[%s5817 + $0x230] sm:$0xff]
  %v5889 = vld [vmem:[%s5817 + $0x238] sm:$0xff]
  %v5890 = vld [vmem:[%s5817 + $0x240] sm:$0xff]
  %v5891 = vld [vmem:[%s5817 + $0x248] sm:$0xff]
  %v5892 = vld [vmem:[%s5817 + $0x250] sm:$0xff]
  %v5893 = vld [vmem:[%s5817 + $0x258] sm:$0xff]
  %v5894 = vld [vmem:[%s5817 + $0x260] sm:$0xff]
  %v5895 = vld [vmem:[%s5817 + $0x268] sm:$0xff]
  %v5896 = vld [vmem:[%s5817 + $0x270] sm:$0xff]
  %v5897 = vld [vmem:[%s5817 + $0x278] sm:$0xff]
  %v5898 = vld [vmem:[%s5817 + $0x280] sm:$0xff]
  %v5899 = vld [vmem:[%s5817 + $0x288] sm:$0xff]
  %v5900 = vld [vmem:[%s5817 + $0x290] sm:$0xff]
  %v5901 = vld [vmem:[%s5817 + $0x298] sm:$0xff]
  %v5902 = vld [vmem:[%s5817 + $0x2a0] sm:$0xff]
  %v5903 = vld [vmem:[%s5817 + $0x2a8] sm:$0xff]
  %v5904 = vld [vmem:[%s5817 + $0x2b0] sm:$0xff]
  %v5905 = vld [vmem:[%s5817 + $0x2b8] sm:$0xff]
  %v5907 = vsel %vm2457, %v5812, 0
  %v5910 = vsel %vm2457, %v5815, 0
  %5912 = vmatpush.msra.mxu0 %v5848
  %5913 = vmatpush.msra.mxu0 %v5846
  %5914 = vmatpush.msra.mxu0 %v5844
  %5915 = vmatpush.msra.mxu0 %v5842
  %5916 = vmatpush.msra.mxu0 %v5840
  %5917 = vmatpush.msra.mxu0 %v5838
  %5918 = vmatpush.msra.mxu0 %v5836
  %5919 = vmatpush.msra.mxu0 %v5834
  %5920 = vmatpush.msra.mxu0 %v5832
  %5921 = vmatpush.msra.mxu0 %v5830
  %5922 = vmatpush.msra.mxu0 %v5828
  %5923 = vmatpush.msra.mxu0 %v5826
  %5924 = vmatpush.msra.mxu0 %v5824
  %5925 = vmatpush.msra.mxu0 %v5822
  %5926 = vmatpush.msra.mxu0 %v5820
  %5927 = vmatpush.msra.mxu0 %v5818
  %5928 = vmatmul.f32.gmra.mxu0 %v5766
  %v5929 = vpop.f32.mrf.mxu0
  %v5930 = vadd.f32 0.0, %v5929
  %5931 = vmatmul.f32.gmra.mxu0 %v5769
  %v5932 = vpop.f32.mrf.mxu0
  %v5933 = vadd.f32 0.0, %v5932
  %5934 = vdwg.mxu0
  %5935 = vmatpush.msra.mxu0 %v5880
  %5936 = vmatpush.msra.mxu0 %v5878
  %5937 = vmatpush.msra.mxu0 %v5876
  %5938 = vmatpush.msra.mxu0 %v5874
  %5939 = vmatpush.msra.mxu0 %v5872
  %5940 = vmatpush.msra.mxu0 %v5870
  %5941 = vmatpush.msra.mxu0 %v5868
  %5942 = vmatpush.msra.mxu0 %v5866
  %5943 = vmatpush.msra.mxu0 %v5864
  %5944 = vmatpush.msra.mxu0 %v5862
  %5945 = vmatpush.msra.mxu0 %v5860
  %5946 = vmatpush.msra.mxu0 %v5858
  %5947 = vmatpush.msra.mxu0 %v5856
  %5948 = vmatpush.msra.mxu0 %v5854
  %5949 = vmatpush.msra.mxu0 %v5852
  %5950 = vmatpush.msra.mxu0 %v5850
  %5951 = vmatmul.f32.gmra.mxu0 %v5789
  %v5952 = vpop.f32.mrf.mxu0
  %v5953 = vadd.f32 %v5930, %v5952
  %5954 = vmatmul.f32.gmra.mxu0 %v5792
  %v5955 = vpop.f32.mrf.mxu0
  %v5956 = vadd.f32 %v5933, %v5955
  %5957 = vdwg.mxu0
  %5958 = vmatpush.msra.mxu0 0.0
  %5959 = vmatpush.msra.mxu0 0.0
  %5960 = vmatpush.msra.mxu0 0.0
  %5961 = vmatpush.msra.mxu0 0.0
  %5962 = vmatpush.msra.mxu0 %v5904
  %5963 = vmatpush.msra.mxu0 %v5902
  %5964 = vmatpush.msra.mxu0 %v5900
  %5965 = vmatpush.msra.mxu0 %v5898
  %5966 = vmatpush.msra.mxu0 %v5896
  %5967 = vmatpush.msra.mxu0 %v5894
  %5968 = vmatpush.msra.mxu0 %v5892
  %5969 = vmatpush.msra.mxu0 %v5890
  %5970 = vmatpush.msra.mxu0 %v5888
  %5971 = vmatpush.msra.mxu0 %v5886
  %5972 = vmatpush.msra.mxu0 %v5884
  %5973 = vmatpush.msra.mxu0 %v5882
  %5974 = vmatmul.f32.gmra.mxu0 %v5907
  %v5975 = vpop.f32.mrf.mxu0
  %v5976 = vadd.f32 %v5953, %v5975
  %5977 = vmatmul.f32.gmra.mxu0 %v5910
  %v5978 = vpop.f32.mrf.mxu0
  %v5979 = vadd.f32 %v5956, %v5978
  %5980 = vdwg.mxu0
  %5981 = vmatpush.msra.mxu0 %v5849
  %5982 = vmatpush.msra.mxu0 %v5847
  %5983 = vmatpush.msra.mxu0 %v5845
  %5984 = vmatpush.msra.mxu0 %v5843
  %5985 = vmatpush.msra.mxu0 %v5841
  %5986 = vmatpush.msra.mxu0 %v5839
  %5987 = vmatpush.msra.mxu0 %v5837
  %5988 = vmatpush.msra.mxu0 %v5835
  %5989 = vmatpush.msra.mxu0 %v5833
  %5990 = vmatpush.msra.mxu0 %v5831
  %5991 = vmatpush.msra.mxu0 %v5829
  %5992 = vmatpush.msra.mxu0 %v5827
  %5993 = vmatpush.msra.mxu0 %v5825
  %5994 = vmatpush.msra.mxu0 %v5823
  %5995 = vmatpush.msra.mxu0 %v5821
  %5996 = vmatpush.msra.mxu0 %v5819
  %5997 = vmatmul.f32.gmra.mxu0 %v5766
  %v5998 = vpop.f32.mrf.mxu0
  %v5999 = vadd.f32 0.0, %v5998
  %6000 = vmatmul.f32.gmra.mxu0 %v5769
  %v6001 = vpop.f32.mrf.mxu0
  %v6002 = vadd.f32 0.0, %v6001
  %6003 = vdwg.mxu0
  %6004 = vmatpush.msra.mxu0 %v5881
  %6005 = vmatpush.msra.mxu0 %v5879
  %6006 = vmatpush.msra.mxu0 %v5877
  %6007 = vmatpush.msra.mxu0 %v5875
  %6008 = vmatpush.msra.mxu0 %v5873
  %6009 = vmatpush.msra.mxu0 %v5871
  %6010 = vmatpush.msra.mxu0 %v5869
  %6011 = vmatpush.msra.mxu0 %v5867
  %6012 = vmatpush.msra.mxu0 %v5865
  %6013 = vmatpush.msra.mxu0 %v5863
  %6014 = vmatpush.msra.mxu0 %v5861
  %6015 = vmatpush.msra.mxu0 %v5859
  %6016 = vmatpush.msra.mxu0 %v5857
  %6017 = vmatpush.msra.mxu0 %v5855
  %6018 = vmatpush.msra.mxu0 %v5853
  %6019 = vmatpush.msra.mxu0 %v5851
  %6020 = vmatmul.f32.gmra.mxu0 %v5789
  %v6021 = vpop.f32.mrf.mxu0
  %v6022 = vadd.f32 %v5999, %v6021
  %6023 = vmatmul.f32.gmra.mxu0 %v5792
  %v6024 = vpop.f32.mrf.mxu0
  %v6025 = vadd.f32 %v6002, %v6024
  %6026 = vdwg.mxu0
  %6027 = vmatpush.msra.mxu0 0.0
  %6028 = vmatpush.msra.mxu0 0.0
  %6029 = vmatpush.msra.mxu0 0.0
  %6030 = vmatpush.msra.mxu0 0.0
  %6031 = vmatpush.msra.mxu0 %v5905
  %6032 = vmatpush.msra.mxu0 %v5903
  %6033 = vmatpush.msra.mxu0 %v5901
  %6034 = vmatpush.msra.mxu0 %v5899
  %6035 = vmatpush.msra.mxu0 %v5897
  %6036 = vmatpush.msra.mxu0 %v5895
  %6037 = vmatpush.msra.mxu0 %v5893
  %6038 = vmatpush.msra.mxu0 %v5891
  %6039 = vmatpush.msra.mxu0 %v5889
  %6040 = vmatpush.msra.mxu0 %v5887
  %6041 = vmatpush.msra.mxu0 %v5885
  %6042 = vmatpush.msra.mxu0 %v5883
  %6043 = vmatmul.f32.gmra.mxu0 %v5907
  %v6044 = vpop.f32.mrf.mxu0
  %v6045 = vadd.f32 %v6022, %v6044
  %6046 = vmatmul.f32.gmra.mxu0 %v5910
  %v6047 = vpop.f32.mrf.mxu0
  %v6048 = vadd.f32 %v6025, %v6047
  %6049 = vdwg.mxu0
  %v6050 = vadd.f32 %v5735, %v5976
  %v6051 = vadd.f32 %v5736, %v6045
  %v6052 = vadd.f32 %v5737, %v5979
  %v6053 = vadd.f32 %v5738, %v6048
  %6054 = vst [vmem:[%s17] sm:$0xff] %v6050
  %6055 = vst.msk [vmem:[%s17 + $0x8] sm:$0xff] %vm4135, %v6051
  %6056 = vst [vmem:[%s17 + $0x10] sm:$0x1] %v6052
  %vm6057 = vcmask 122880
  %6058 = vst.msk [vmem:[%s17 + $0x18] sm:$0x1] %vm6057, %v6053
  %v6059 = vsel %vm976, %v6052, 0.0
  %v6060 = vadd.f32 %v6050, %v6059
  %v6061 = vrot.slane %v6060, 4
  %v6062 = vadd.f32 %v6060, %v6061
  %v6063 = vrot.slane %v6062, 2
  %v6064 = vadd.f32 %v6062, %v6063
  %v6065 = vrot.slane %v6064, 1
  %v6066 = vadd.f32 %v6064, %v6065
  %v6067 = vsel %vm4135, %v6051, 0.0
  %v6068 = vsel %vm6057, %v6053, 0.0
  %v6069 = vadd.f32 %v6067, %v6068
  %v6070 = vrot.slane %v6069, 4
  %v6071 = vadd.f32 %v6069, %v6070
  %v6072 = vrot.slane %v6071, 2
  %v6073 = vadd.f32 %v6071, %v6072
  %v6074 = vrot.slane %v6073, 1
  %v6075 = vadd.f32 %v6073, %v6074
  %v6076 = vadd.f32 %v6066, 0.0
  %v6077 = vadd.f32 %v6075, 0.0
  %v6078 = vmul.f32 %v6050, %v6050
  %v6079 = vmul.f32 %v6051, %v6051
  %v6080 = vmul.f32 %v6052, %v6052
  %v6081 = vmul.f32 %v6053, %v6053
  %v6082 = vsel %vm976, %v6080, 0.0
  %v6083 = vadd.f32 %v6078, %v6082
  %v6084 = vrot.slane %v6083, 4
  %v6085 = vadd.f32 %v6083, %v6084
  %v6086 = vrot.slane %v6085, 2
  %v6087 = vadd.f32 %v6085, %v6086
  %v6088 = vrot.slane %v6087, 1
  %v6089 = vadd.f32 %v6087, %v6088
  %v6090 = vsel %vm4135, %v6079, 0.0
  %v6091 = vsel %vm6057, %v6081, 0.0
  %v6092 = vadd.f32 %v6090, %v6091
  %v6093 = vrot.slane %v6092, 4
  %v6094 = vadd.f32 %v6092, %v6093
  %v6095 = vrot.slane %v6094, 2
  %v6096 = vadd.f32 %v6094, %v6095
  %v6097 = vrot.slane %v6096, 1
  %v6098 = vadd.f32 %v6096, %v6097
  %v6099 = vadd.f32 %v6089, 0.0
  %v6100 = vadd.f32 %v6098, 0.0
  %v6101 = vld [vmem:[%s3876] sm:$0xff]
  %v6102 = vld [vmem:[%s3876 + $0x8] sm:$0xff]
  %v6103 = vld [vmem:[%s3876 + $0x10] sm:$0xff]
  %v6104 = vld [vmem:[%s3876 + $0x18] sm:$0xff]
  %v6105 = vld [vmem:[%s3876 + $0x20] sm:$0xff]
  %v6106 = vld [vmem:[%s3876 + $0x28] sm:$0xff]
  %v6107 = vld [vmem:[%s3876 + $0x30] sm:$0x3f]
  %v6108 = vld [vmem:[%s3876 + $0x38] sm:$0x3f]
  %v6109 = vld [vmem:[%s3876 + $0x40] sm:$0x3f]
  %v6110 = vld [vmem:[%s4] sm:$0xff]
  %v6111 = vld [vmem:[%s4 + $0x8] sm:$0x1]
  %v6113 = vsel %vm4481, %v6110, 0
  %v6116 = vsel %vm4481, %v6111, 0
  %v6119 = vsel %vm1711, %v6107, 0
  %v6122 = vsel %vm1711, %v6108, 0
  %v6125 = vsel %vm1711, %v6109, 0
  %6127 = vmatpush.msra.mxu0 0.0
  %6128 = vmatpush.msra.mxu0 0.0
  %6129 = vmatpush.msra.mxu0 0.0
  %6130 = vmatpush.msra.mxu0 0.0
  %6131 = vmatpush.msra.mxu0 0.0
  %6132 = vmatpush.msra.mxu0 0.0
  %6133 = vmatpush.msra.mxu0 0.0
  %6134 = vmatpush.msra.mxu0 0.0
  %6135 = vmatpush.msra.mxu0 0.0
  %6136 = vmatpush.msra.mxu0 0.0
  %6137 = vmatpush.msra.mxu0 0.0
  %6138 = vmatpush.msra.mxu0 0.0
  %6139 = vmatpush.msra.mxu0 0.0
  %6140 = vmatpush.msra.mxu0 %v6119
  %6141 = vmatpush.msra.mxu0 %v6104
  %6142 = vmatpush.msra.mxu0 %v6101
  %6143 = vmatmul.f32.gmra.mxu0 %v6113
  %v6144 = vpop.f32.mrf.mxu0
  %v6145 = vadd.f32 0.0, %v6144
  %6146 = vmatmul.f32.gmra.mxu0 %v6116
  %v6147 = vpop.f32.mrf.mxu0
  %v6148 = vadd.f32 0.0, %v6147
  %6149 = vdwg.mxu0
  %6150 = vmatpush.msra.mxu0 0.0
  %6151 = vmatpush.msra.mxu0 0.0
  %6152 = vmatpush.msra.mxu0 0.0
  %6153 = vmatpush.msra.mxu0 0.0
  %6154 = vmatpush.msra.mxu0 0.0
  %6155 = vmatpush.msra.mxu0 0.0
  %6156 = vmatpush.msra.mxu0 0.0
  %6157 = vmatpush.msra.mxu0 0.0
  %6158 = vmatpush.msra.mxu0 0.0
  %6159 = vmatpush.msra.mxu0 0.0
  %6160 = vmatpush.msra.mxu0 0.0
  %6161 = vmatpush.msra.mxu0 0.0
  %6162 = vmatpush.msra.mxu0 0.0
  %6163 = vmatpush.msra.mxu0 %v6122
  %6164 = vmatpush.msra.mxu0 %v6105
  %6165 = vmatpush.msra.mxu0 %v6102
  %6166 = vmatmul.f32.gmra.mxu0 %v6113
  %v6167 = vpop.f32.mrf.mxu0
  %v6168 = vadd.f32 0.0, %v6167
  %6169 = vmatmul.f32.gmra.mxu0 %v6116
  %v6170 = vpop.f32.mrf.mxu0
  %v6171 = vadd.f32 0.0, %v6170
  %6172 = vdwg.mxu0
  %6173 = vmatpush.msra.mxu0 0.0
  %6174 = vmatpush.msra.mxu0 0.0
  %6175 = vmatpush.msra.mxu0 0.0
  %6176 = vmatpush.msra.mxu0 0.0
  %6177 = vmatpush.msra.mxu0 0.0
  %6178 = vmatpush.msra.mxu0 0.0
  %6179 = vmatpush.msra.mxu0 0.0
  %6180 = vmatpush.msra.mxu0 0.0
  %6181 = vmatpush.msra.mxu0 0.0
  %6182 = vmatpush.msra.mxu0 0.0
  %6183 = vmatpush.msra.mxu0 0.0
  %6184 = vmatpush.msra.mxu0 0.0
  %6185 = vmatpush.msra.mxu0 0.0
  %6186 = vmatpush.msra.mxu0 %v6125
  %6187 = vmatpush.msra.mxu0 %v6106
  %6188 = vmatpush.msra.mxu0 %v6103
  %6189 = vmatmul.f32.gmra.mxu0 %v6113
  %v6190 = vpop.f32.mrf.mxu0
  %v6191 = vadd.f32 0.0, %v6190
  %6192 = vmatmul.f32.gmra.mxu0 %v6116
  %v6193 = vpop.f32.mrf.mxu0
  %v6194 = vadd.f32 0.0, %v6193
  %6195 = vdwg.mxu0
  %v6196 = vld [vmem:[%s3] sm:$0xff]
  %v6197 = vld [vmem:[%s3 + $0x8] sm:$0xff]
  %v6198 = vld [vmem:[%s3 + $0x10] sm:$0xff]
  %v6199 = vld [vmem:[%s3 + $0x18] sm:$0xff]
  %v6200 = vld [vmem:[%s3 + $0x20] sm:$0xff]
  %v6201 = vld [vmem:[%s3 + $0x28] sm:$0xff]
  %v6202 = vld [vmem:[%s3 + $0x30] sm:$0xff]
  %v6203 = vld [vmem:[%s3 + $0x38] sm:$0xff]
  %v6204 = vld [vmem:[%s3 + $0x40] sm:$0xff]
  %v6205 = vld [vmem:[%s3 + $0x48] sm:$0xff]
  %v6206 = vld [vmem:[%s3 + $0x50] sm:$0xff]
  %v6207 = vld [vmem:[%s3 + $0x58] sm:$0xff]
  %v6208 = vld [vmem:[%s3 + $0x60] sm:$0xff]
  %v6209 = vld [vmem:[%s3 + $0x68] sm:$0xff]
  %v6210 = vld [vmem:[%s3 + $0x70] sm:$0xff]
  %v6211 = vld [vmem:[%s3 + $0x78] sm:$0xff]
  %v6212 = vld [vmem:[%s3 + $0x80] sm:$0xff]
  %v6213 = vld [vmem:[%s3 + $0x88] sm:$0xff]
  %v6214 = vld [vmem:[%s3 + $0x90] sm:$0xff]
  %v6215 = vld [vmem:[%s3 + $0x98] sm:$0xff]
  %v6216 = vld [vmem:[%s3 + $0xa0] sm:$0xff]
  %v6217 = vld [vmem:[%s3 + $0xa8] sm:$0xff]
  %v6218 = vld [vmem:[%s3 + $0xb0] sm:$0xff]
  %v6219 = vld [vmem:[%s3 + $0xb8] sm:$0xff]
  %v6220 = vld [vmem:[%s3 + $0xc0] sm:$0xff]
  %v6221 = vld [vmem:[%s3 + $0xc8] sm:$0xff]
  %v6222 = vld [vmem:[%s3 + $0xd0] sm:$0xff]
  %v6223 = vld [vmem:[%s3 + $0xd8] sm:$0xff]
  %v6224 = vld [vmem:[%s3 + $0xe0] sm:$0xff]
  %v6225 = vld [vmem:[%s3 + $0xe8] sm:$0xff]
  %v6226 = vld [vmem:[%s3 + $0xf0] sm:$0xff]
  %v6227 = vld [vmem:[%s3 + $0xf8] sm:$0xff]
  %v6228 = vld [vmem:[%s3 + $0x100] sm:$0xff]
  %v6229 = vld [vmem:[%s3 + $0x108] sm:$0xff]
  %v6230 = vld [vmem:[%s3 + $0x110] sm:$0xff]
  %v6231 = vld [vmem:[%s3 + $0x118] sm:$0xff]
  %v6232 = vld [vmem:[%s3 + $0x120] sm:$0xff]
  %v6233 = vld [vmem:[%s3 + $0x128] sm:$0xff]
  %v6234 = vld [vmem:[%s3 + $0x130] sm:$0xff]
  %v6235 = vld [vmem:[%s3 + $0x138] sm:$0xff]
  %v6236 = vld [vmem:[%s3 + $0x140] sm:$0xff]
  %v6237 = vld [vmem:[%s3 + $0x148] sm:$0xff]
  %v6238 = vld [vmem:[%s3 + $0x150] sm:$0xff]
  %v6239 = vld [vmem:[%s3 + $0x158] sm:$0xff]
  %v6240 = vld [vmem:[%s3 + $0x160] sm:$0xff]
  %v6241 = vld [vmem:[%s3 + $0x168] sm:$0xff]
  %v6242 = vld [vmem:[%s3 + $0x170] sm:$0xff]
  %v6243 = vld [vmem:[%s3 + $0x178] sm:$0xff]
  %v6244 = vld [vmem:[%s3 + $0x180] sm:$0xff]
  %v6245 = vld [vmem:[%s3 + $0x188] sm:$0xff]
  %v6246 = vld [vmem:[%s3 + $0x190] sm:$0xff]
  %v6247 = vld [vmem:[%s3 + $0x198] sm:$0xff]
  %v6248 = vld [vmem:[%s3 + $0x1a0] sm:$0xff]
  %v6249 = vld [vmem:[%s3 + $0x1a8] sm:$0xff]
  %v6250 = vld [vmem:[%s3 + $0x1b0] sm:$0xff]
  %v6251 = vld [vmem:[%s3 + $0x1b8] sm:$0xff]
  %v6252 = vld [vmem:[%s3 + $0x1c0] sm:$0xff]
  %v6253 = vld [vmem:[%s3 + $0x1c8] sm:$0xff]
  %v6254 = vld [vmem:[%s3 + $0x1d0] sm:$0xff]
  %v6255 = vld [vmem:[%s3 + $0x1d8] sm:$0xff]
  %v6256 = vld [vmem:[%s3 + $0x1e0] sm:$0xff]
  %v6257 = vld [vmem:[%s3 + $0x1e8] sm:$0xff]
  %v6258 = vld [vmem:[%s3 + $0x1f0] sm:$0xff]
  %v6259 = vld [vmem:[%s3 + $0x1f8] sm:$0xff]
  %v6260 = vld [vmem:[%s3 + $0x200] sm:$0xff]
  %v6261 = vld [vmem:[%s3 + $0x208] sm:$0xff]
  %v6262 = vld [vmem:[%s3 + $0x210] sm:$0xff]
  %v6263 = vld [vmem:[%s3 + $0x218] sm:$0xff]
  %v6264 = vld [vmem:[%s3 + $0x220] sm:$0xff]
  %v6265 = vld [vmem:[%s3 + $0x228] sm:$0xff]
  %v6266 = vld [vmem:[%s3 + $0x230] sm:$0xff]
  %v6267 = vld [vmem:[%s3 + $0x238] sm:$0xff]
  %v6268 = vld [vmem:[%s3 + $0x240] sm:$0xff]
  %v6269 = vld [vmem:[%s3 + $0x248] sm:$0xff]
  %v6270 = vld [vmem:[%s3 + $0x250] sm:$0xff]
  %v6271 = vld [vmem:[%s3 + $0x258] sm:$0xff]
  %v6272 = vld [vmem:[%s3 + $0x260] sm:$0xff]
  %v6273 = vld [vmem:[%s3 + $0x268] sm:$0xff]
  %v6274 = vld [vmem:[%s3 + $0x270] sm:$0xff]
  %v6275 = vld [vmem:[%s3 + $0x278] sm:$0xff]
  %v6276 = vld [vmem:[%s3 + $0x280] sm:$0xff]
  %v6277 = vld [vmem:[%s3 + $0x288] sm:$0xff]
  %v6278 = vld [vmem:[%s3 + $0x290] sm:$0xff]
  %v6279 = vld [vmem:[%s3 + $0x298] sm:$0xff]
  %v6280 = vld [vmem:[%s3 + $0x2a0] sm:$0xff]
  %v6281 = vld [vmem:[%s3 + $0x2a8] sm:$0xff]
  %v6282 = vld [vmem:[%s3 + $0x2b0] sm:$0xff]
  %v6283 = vld [vmem:[%s3 + $0x2b8] sm:$0xff]
  %v6284 = vld [vmem:[%s4654] sm:$0xff]
  %v6285 = vld [vmem:[%s4654 + $0x8] sm:$0x1]
  %v6287 = vsel %vm4481, %v6284, 0
  %v6290 = vsel %vm4481, %v6285, 0
  %6292 = vmatpush.msra.mxu0 0.0
  %6293 = vmatpush.msra.mxu0 0.0
  %6294 = vmatpush.msra.mxu0 0.0
  %6295 = vmatpush.msra.mxu0 0.0
  %6296 = vmatpush.msra.mxu0 0.0
  %6297 = vmatpush.msra.mxu0 0.0
  %6298 = vmatpush.msra.mxu0 0.0
  %6299 = vmatpush.msra.mxu0 0.0
  %6300 = vmatpush.msra.mxu0 0.0
  %6301 = vmatpush.msra.mxu0 0.0
  %6302 = vmatpush.msra.mxu0 0.0
  %6303 = vmatpush.msra.mxu0 0.0
  %6304 = vmatpush.msra.mxu0 0.0
  %6305 = vmatpush.msra.mxu0 %v6119
  %6306 = vmatpush.msra.mxu0 %v6104
  %6307 = vmatpush.msra.mxu0 %v6101
  %6308 = vmatmul.f32.gmra.mxu0 %v6287
  %v6309 = vpop.f32.mrf.mxu0
  %v6310 = vadd.f32 0.0, %v6309
  %6311 = vmatmul.f32.gmra.mxu0 %v6290
  %v6312 = vpop.f32.mrf.mxu0
  %v6313 = vadd.f32 0.0, %v6312
  %6314 = vdwg.mxu0
  %6315 = vmatpush.msra.mxu0 0.0
  %6316 = vmatpush.msra.mxu0 0.0
  %6317 = vmatpush.msra.mxu0 0.0
  %6318 = vmatpush.msra.mxu0 0.0
  %6319 = vmatpush.msra.mxu0 0.0
  %6320 = vmatpush.msra.mxu0 0.0
  %6321 = vmatpush.msra.mxu0 0.0
  %6322 = vmatpush.msra.mxu0 0.0
  %6323 = vmatpush.msra.mxu0 0.0
  %6324 = vmatpush.msra.mxu0 0.0
  %6325 = vmatpush.msra.mxu0 0.0
  %6326 = vmatpush.msra.mxu0 0.0
  %6327 = vmatpush.msra.mxu0 0.0
  %6328 = vmatpush.msra.mxu0 %v6122
  %6329 = vmatpush.msra.mxu0 %v6105
  %6330 = vmatpush.msra.mxu0 %v6102
  %6331 = vmatmul.f32.gmra.mxu0 %v6287
  %v6332 = vpop.f32.mrf.mxu0
  %v6333 = vadd.f32 0.0, %v6332
  %6334 = vmatmul.f32.gmra.mxu0 %v6290
  %v6335 = vpop.f32.mrf.mxu0
  %v6336 = vadd.f32 0.0, %v6335
  %6337 = vdwg.mxu0
  %6338 = vmatpush.msra.mxu0 0.0
  %6339 = vmatpush.msra.mxu0 0.0
  %6340 = vmatpush.msra.mxu0 0.0
  %6341 = vmatpush.msra.mxu0 0.0
  %6342 = vmatpush.msra.mxu0 0.0
  %6343 = vmatpush.msra.mxu0 0.0
  %6344 = vmatpush.msra.mxu0 0.0
  %6345 = vmatpush.msra.mxu0 0.0
  %6346 = vmatpush.msra.mxu0 0.0
  %6347 = vmatpush.msra.mxu0 0.0
  %6348 = vmatpush.msra.mxu0 0.0
  %6349 = vmatpush.msra.mxu0 0.0
  %6350 = vmatpush.msra.mxu0 0.0
  %6351 = vmatpush.msra.mxu0 %v6125
  %6352 = vmatpush.msra.mxu0 %v6106
  %6353 = vmatpush.msra.mxu0 %v6103
  %6354 = vmatmul.f32.gmra.mxu0 %v6287
  %v6355 = vpop.f32.mrf.mxu0
  %v6356 = vadd.f32 0.0, %v6355
  %6357 = vmatmul.f32.gmra.mxu0 %v6290
  %v6358 = vpop.f32.mrf.mxu0
  %v6359 = vadd.f32 0.0, %v6358
  %6360 = vdwg.mxu0
  %v6361 = vld [vmem:[%s4732] sm:$0xff]
  %v6362 = vld [vmem:[%s4732 + $0x8] sm:$0xff]
  %v6363 = vld [vmem:[%s4732 + $0x10] sm:$0xff]
  %v6364 = vld [vmem:[%s4732 + $0x18] sm:$0xff]
  %v6365 = vld [vmem:[%s4732 + $0x20] sm:$0xff]
  %v6366 = vld [vmem:[%s4732 + $0x28] sm:$0xff]
  %v6367 = vld [vmem:[%s4732 + $0x30] sm:$0xff]
  %v6368 = vld [vmem:[%s4732 + $0x38] sm:$0xff]
  %v6369 = vld [vmem:[%s4732 + $0x40] sm:$0xff]
  %v6370 = vld [vmem:[%s4732 + $0x48] sm:$0xff]
  %v6371 = vld [vmem:[%s4732 + $0x50] sm:$0xff]
  %v6372 = vld [vmem:[%s4732 + $0x58] sm:$0xff]
  %v6373 = vld [vmem:[%s4732 + $0x60] sm:$0xff]
  %v6374 = vld [vmem:[%s4732 + $0x68] sm:$0xff]
  %v6375 = vld [vmem:[%s4732 + $0x70] sm:$0xff]
  %v6376 = vld [vmem:[%s4732 + $0x78] sm:$0xff]
  %v6377 = vld [vmem:[%s4732 + $0x80] sm:$0xff]
  %v6378 = vld [vmem:[%s4732 + $0x88] sm:$0xff]
  %v6379 = vld [vmem:[%s4732 + $0x90] sm:$0xff]
  %v6380 = vld [vmem:[%s4732 + $0x98] sm:$0xff]
  %v6381 = vld [vmem:[%s4732 + $0xa0] sm:$0xff]
  %v6382 = vld [vmem:[%s4732 + $0xa8] sm:$0xff]
  %v6383 = vld [vmem:[%s4732 + $0xb0] sm:$0xff]
  %v6384 = vld [vmem:[%s4732 + $0xb8] sm:$0xff]
  %v6385 = vld [vmem:[%s4732 + $0xc0] sm:$0xff]
  %v6386 = vld [vmem:[%s4732 + $0xc8] sm:$0xff]
  %v6387 = vld [vmem:[%s4732 + $0xd0] sm:$0xff]
  %v6388 = vld [vmem:[%s4732 + $0xd8] sm:$0xff]
  %v6389 = vld [vmem:[%s4732 + $0xe0] sm:$0xff]
  %v6390 = vld [vmem:[%s4732 + $0xe8] sm:$0xff]
  %v6391 = vld [vmem:[%s4732 + $0xf0] sm:$0xff]
  %v6392 = vld [vmem:[%s4732 + $0xf8] sm:$0xff]
  %v6393 = vld [vmem:[%s4732 + $0x100] sm:$0xff]
  %v6394 = vld [vmem:[%s4732 + $0x108] sm:$0xff]
  %v6395 = vld [vmem:[%s4732 + $0x110] sm:$0xff]
  %v6396 = vld [vmem:[%s4732 + $0x118] sm:$0xff]
  %v6397 = vld [vmem:[%s4732 + $0x120] sm:$0xff]
  %v6398 = vld [vmem:[%s4732 + $0x128] sm:$0xff]
  %v6399 = vld [vmem:[%s4732 + $0x130] sm:$0xff]
  %v6400 = vld [vmem:[%s4732 + $0x138] sm:$0xff]
  %v6401 = vld [vmem:[%s4732 + $0x140] sm:$0xff]
  %v6402 = vld [vmem:[%s4732 + $0x148] sm:$0xff]
  %v6403 = vld [vmem:[%s4732 + $0x150] sm:$0xff]
  %v6404 = vld [vmem:[%s4732 + $0x158] sm:$0xff]
  %v6405 = vld [vmem:[%s4732 + $0x160] sm:$0xff]
  %v6406 = vld [vmem:[%s4732 + $0x168] sm:$0xff]
  %v6407 = vld [vmem:[%s4732 + $0x170] sm:$0xff]
  %v6408 = vld [vmem:[%s4732 + $0x178] sm:$0xff]
  %v6409 = vld [vmem:[%s4732 + $0x180] sm:$0xff]
  %v6410 = vld [vmem:[%s4732 + $0x188] sm:$0xff]
  %v6411 = vld [vmem:[%s4732 + $0x190] sm:$0xff]
  %v6412 = vld [vmem:[%s4732 + $0x198] sm:$0xff]
  %v6413 = vld [vmem:[%s4732 + $0x1a0] sm:$0xff]
  %v6414 = vld [vmem:[%s4732 + $0x1a8] sm:$0xff]
  %v6415 = vld [vmem:[%s4732 + $0x1b0] sm:$0xff]
  %v6416 = vld [vmem:[%s4732 + $0x1b8] sm:$0xff]
  %v6417 = vld [vmem:[%s4732 + $0x1c0] sm:$0xff]
  %v6418 = vld [vmem:[%s4732 + $0x1c8] sm:$0xff]
  %v6419 = vld [vmem:[%s4732 + $0x1d0] sm:$0xff]
  %v6420 = vld [vmem:[%s4732 + $0x1d8] sm:$0xff]
  %v6421 = vld [vmem:[%s4732 + $0x1e0] sm:$0xff]
  %v6422 = vld [vmem:[%s4732 + $0x1e8] sm:$0xff]
  %v6423 = vld [vmem:[%s4732 + $0x1f0] sm:$0xff]
  %v6424 = vld [vmem:[%s4732 + $0x1f8] sm:$0xff]
  %v6425 = vld [vmem:[%s4732 + $0x200] sm:$0xff]
  %v6426 = vld [vmem:[%s4732 + $0x208] sm:$0xff]
  %v6427 = vld [vmem:[%s4732 + $0x210] sm:$0xff]
  %v6428 = vld [vmem:[%s4732 + $0x218] sm:$0xff]
  %v6429 = vld [vmem:[%s4732 + $0x220] sm:$0xff]
  %v6430 = vld [vmem:[%s4732 + $0x228] sm:$0xff]
  %v6431 = vld [vmem:[%s4732 + $0x230] sm:$0xff]
  %v6432 = vld [vmem:[%s4732 + $0x238] sm:$0xff]
  %v6433 = vld [vmem:[%s4732 + $0x240] sm:$0xff]
  %v6434 = vld [vmem:[%s4732 + $0x248] sm:$0xff]
  %v6435 = vld [vmem:[%s4732 + $0x250] sm:$0xff]
  %v6436 = vld [vmem:[%s4732 + $0x258] sm:$0xff]
  %v6437 = vld [vmem:[%s4732 + $0x260] sm:$0xff]
  %v6438 = vld [vmem:[%s4732 + $0x268] sm:$0xff]
  %v6439 = vld [vmem:[%s4732 + $0x270] sm:$0xff]
  %v6440 = vld [vmem:[%s4732 + $0x278] sm:$0xff]
  %v6441 = vld [vmem:[%s4732 + $0x280] sm:$0xff]
  %v6442 = vld [vmem:[%s4732 + $0x288] sm:$0xff]
  %v6443 = vld [vmem:[%s4732 + $0x290] sm:$0xff]
  %v6444 = vld [vmem:[%s4732 + $0x298] sm:$0xff]
  %v6445 = vld [vmem:[%s4732 + $0x2a0] sm:$0xff]
  %v6446 = vld [vmem:[%s4732 + $0x2a8] sm:$0xff]
  %v6447 = vld [vmem:[%s4732 + $0x2b0] sm:$0xff]
  %v6448 = vld [vmem:[%s4732 + $0x2b8] sm:$0xff]
  %v6450 = vsel %vm2457, %v6356, 0
  %v6453 = vsel %vm2457, %v6359, 0
  %6455 = vmatpush.msra.mxu0 %v6391
  %6456 = vmatpush.msra.mxu0 %v6389
  %6457 = vmatpush.msra.mxu0 %v6387
  %6458 = vmatpush.msra.mxu0 %v6385
  %6459 = vmatpush.msra.mxu0 %v6383
  %6460 = vmatpush.msra.mxu0 %v6381
  %6461 = vmatpush.msra.mxu0 %v6379
  %6462 = vmatpush.msra.mxu0 %v6377
  %6463 = vmatpush.msra.mxu0 %v6375
  %6464 = vmatpush.msra.mxu0 %v6373
  %6465 = vmatpush.msra.mxu0 %v6371
  %6466 = vmatpush.msra.mxu0 %v6369
  %6467 = vmatpush.msra.mxu0 %v6367
  %6468 = vmatpush.msra.mxu0 %v6365
  %6469 = vmatpush.msra.mxu0 %v6363
  %6470 = vmatpush.msra.mxu0 %v6361
  %6471 = vmatmul.f32.gmra.mxu0 %v6310
  %v6472 = vpop.f32.mrf.mxu0
  %v6473 = vadd.f32 0.0, %v6472
  %6474 = vmatmul.f32.gmra.mxu0 %v6313
  %v6475 = vpop.f32.mrf.mxu0
  %v6476 = vadd.f32 0.0, %v6475
  %6477 = vdwg.mxu0
  %6478 = vmatpush.msra.mxu0 %v6423
  %6479 = vmatpush.msra.mxu0 %v6421
  %6480 = vmatpush.msra.mxu0 %v6419
  %6481 = vmatpush.msra.mxu0 %v6417
  %6482 = vmatpush.msra.mxu0 %v6415
  %6483 = vmatpush.msra.mxu0 %v6413
  %6484 = vmatpush.msra.mxu0 %v6411
  %6485 = vmatpush.msra.mxu0 %v6409
  %6486 = vmatpush.msra.mxu0 %v6407
  %6487 = vmatpush.msra.mxu0 %v6405
  %6488 = vmatpush.msra.mxu0 %v6403
  %6489 = vmatpush.msra.mxu0 %v6401
  %6490 = vmatpush.msra.mxu0 %v6399
  %6491 = vmatpush.msra.mxu0 %v6397
  %6492 = vmatpush.msra.mxu0 %v6395
  %6493 = vmatpush.msra.mxu0 %v6393
  %6494 = vmatmul.f32.gmra.mxu0 %v6333
  %v6495 = vpop.f32.mrf.mxu0
  %v6496 = vadd.f32 %v6473, %v6495
  %6497 = vmatmul.f32.gmra.mxu0 %v6336
  %v6498 = vpop.f32.mrf.mxu0
  %v6499 = vadd.f32 %v6476, %v6498
  %6500 = vdwg.mxu0
  %6501 = vmatpush.msra.mxu0 0.0
  %6502 = vmatpush.msra.mxu0 0.0
  %6503 = vmatpush.msra.mxu0 0.0
  %6504 = vmatpush.msra.mxu0 0.0
  %6505 = vmatpush.msra.mxu0 %v6447
  %6506 = vmatpush.msra.mxu0 %v6445
  %6507 = vmatpush.msra.mxu0 %v6443
  %6508 = vmatpush.msra.mxu0 %v6441
  %6509 = vmatpush.msra.mxu0 %v6439
  %6510 = vmatpush.msra.mxu0 %v6437
  %6511 = vmatpush.msra.mxu0 %v6435
  %6512 = vmatpush.msra.mxu0 %v6433
  %6513 = vmatpush.msra.mxu0 %v6431
  %6514 = vmatpush.msra.mxu0 %v6429
  %6515 = vmatpush.msra.mxu0 %v6427
  %6516 = vmatpush.msra.mxu0 %v6425
  %6517 = vmatmul.f32.gmra.mxu0 %v6450
  %v6518 = vpop.f32.mrf.mxu0
  %v6519 = vadd.f32 %v6496, %v6518
  %6520 = vmatmul.f32.gmra.mxu0 %v6453
  %v6521 = vpop.f32.mrf.mxu0
  %v6522 = vadd.f32 %v6499, %v6521
  %6523 = vdwg.mxu0
  %6524 = vmatpush.msra.mxu0 %v6392
  %6525 = vmatpush.msra.mxu0 %v6390
  %6526 = vmatpush.msra.mxu0 %v6388
  %6527 = vmatpush.msra.mxu0 %v6386
  %6528 = vmatpush.msra.mxu0 %v6384
  %6529 = vmatpush.msra.mxu0 %v6382
  %6530 = vmatpush.msra.mxu0 %v6380
  %6531 = vmatpush.msra.mxu0 %v6378
  %6532 = vmatpush.msra.mxu0 %v6376
  %6533 = vmatpush.msra.mxu0 %v6374
  %6534 = vmatpush.msra.mxu0 %v6372
  %6535 = vmatpush.msra.mxu0 %v6370
  %6536 = vmatpush.msra.mxu0 %v6368
  %6537 = vmatpush.msra.mxu0 %v6366
  %6538 = vmatpush.msra.mxu0 %v6364
  %6539 = vmatpush.msra.mxu0 %v6362
  %6540 = vmatmul.f32.gmra.mxu0 %v6310
  %v6541 = vpop.f32.mrf.mxu0
  %v6542 = vadd.f32 0.0, %v6541
  %6543 = vmatmul.f32.gmra.mxu0 %v6313
  %v6544 = vpop.f32.mrf.mxu0
  %v6545 = vadd.f32 0.0, %v6544
  %6546 = vdwg.mxu0
  %6547 = vmatpush.msra.mxu0 %v6424
  %6548 = vmatpush.msra.mxu0 %v6422
  %6549 = vmatpush.msra.mxu0 %v6420
  %6550 = vmatpush.msra.mxu0 %v6418
  %6551 = vmatpush.msra.mxu0 %v6416
  %6552 = vmatpush.msra.mxu0 %v6414
  %6553 = vmatpush.msra.mxu0 %v6412
  %6554 = vmatpush.msra.mxu0 %v6410
  %6555 = vmatpush.msra.mxu0 %v6408
  %6556 = vmatpush.msra.mxu0 %v6406
  %6557 = vmatpush.msra.mxu0 %v6404
  %6558 = vmatpush.msra.mxu0 %v6402
  %6559 = vmatpush.msra.mxu0 %v6400
  %6560 = vmatpush.msra.mxu0 %v6398
  %6561 = vmatpush.msra.mxu0 %v6396
  %6562 = vmatpush.msra.mxu0 %v6394
  %6563 = vmatmul.f32.gmra.mxu0 %v6333
  %v6564 = vpop.f32.mrf.mxu0
  %v6565 = vadd.f32 %v6542, %v6564
  %6566 = vmatmul.f32.gmra.mxu0 %v6336
  %v6567 = vpop.f32.mrf.mxu0
  %v6568 = vadd.f32 %v6545, %v6567
  %6569 = vdwg.mxu0
  %6570 = vmatpush.msra.mxu0 0.0
  %6571 = vmatpush.msra.mxu0 0.0
  %6572 = vmatpush.msra.mxu0 0.0
  %6573 = vmatpush.msra.mxu0 0.0
  %6574 = vmatpush.msra.mxu0 %v6448
  %6575 = vmatpush.msra.mxu0 %v6446
  %6576 = vmatpush.msra.mxu0 %v6444
  %6577 = vmatpush.msra.mxu0 %v6442
  %6578 = vmatpush.msra.mxu0 %v6440
  %6579 = vmatpush.msra.mxu0 %v6438
  %6580 = vmatpush.msra.mxu0 %v6436
  %6581 = vmatpush.msra.mxu0 %v6434
  %6582 = vmatpush.msra.mxu0 %v6432
  %6583 = vmatpush.msra.mxu0 %v6430
  %6584 = vmatpush.msra.mxu0 %v6428
  %6585 = vmatpush.msra.mxu0 %v6426
  %6586 = vmatmul.f32.gmra.mxu0 %v6450
  %v6587 = vpop.f32.mrf.mxu0
  %v6588 = vadd.f32 %v6565, %v6587
  %6589 = vmatmul.f32.gmra.mxu0 %v6453
  %v6590 = vpop.f32.mrf.mxu0
  %v6591 = vadd.f32 %v6568, %v6590
  %6592 = vdwg.mxu0
  %v6594 = vsel %vm2457, %v6191, 0
  %v6597 = vsel %vm2457, %v6194, 0
  %6599 = vmatpush.msra.mxu0 %v6226
  %6600 = vmatpush.msra.mxu0 %v6224
  %6601 = vmatpush.msra.mxu0 %v6222
  %6602 = vmatpush.msra.mxu0 %v6220
  %6603 = vmatpush.msra.mxu0 %v6218
  %6604 = vmatpush.msra.mxu0 %v6216
  %6605 = vmatpush.msra.mxu0 %v6214
  %6606 = vmatpush.msra.mxu0 %v6212
  %6607 = vmatpush.msra.mxu0 %v6210
  %6608 = vmatpush.msra.mxu0 %v6208
  %6609 = vmatpush.msra.mxu0 %v6206
  %6610 = vmatpush.msra.mxu0 %v6204
  %6611 = vmatpush.msra.mxu0 %v6202
  %6612 = vmatpush.msra.mxu0 %v6200
  %6613 = vmatpush.msra.mxu0 %v6198
  %6614 = vmatpush.msra.mxu0 %v6196
  %6615 = vmatmul.f32.gmra.mxu0 %v6145
  %v6616 = vpop.f32.mrf.mxu0
  %v6617 = vadd.f32 %v6519, %v6616
  %6618 = vmatmul.f32.gmra.mxu0 %v6148
  %v6619 = vpop.f32.mrf.mxu0
  %v6620 = vadd.f32 %v6522, %v6619
  %6621 = vdwg.mxu0
  %6622 = vmatpush.msra.mxu0 %v6258
  %6623 = vmatpush.msra.mxu0 %v6256
  %6624 = vmatpush.msra.mxu0 %v6254
  %6625 = vmatpush.msra.mxu0 %v6252
  %6626 = vmatpush.msra.mxu0 %v6250
  %6627 = vmatpush.msra.mxu0 %v6248
  %6628 = vmatpush.msra.mxu0 %v6246
  %6629 = vmatpush.msra.mxu0 %v6244
  %6630 = vmatpush.msra.mxu0 %v6242
  %6631 = vmatpush.msra.mxu0 %v6240
  %6632 = vmatpush.msra.mxu0 %v6238
  %6633 = vmatpush.msra.mxu0 %v6236
  %6634 = vmatpush.msra.mxu0 %v6234
  %6635 = vmatpush.msra.mxu0 %v6232
  %6636 = vmatpush.msra.mxu0 %v6230
  %6637 = vmatpush.msra.mxu0 %v6228
  %6638 = vmatmul.f32.gmra.mxu0 %v6168
  %v6639 = vpop.f32.mrf.mxu0
  %v6640 = vadd.f32 %v6617, %v6639
  %6641 = vmatmul.f32.gmra.mxu0 %v6171
  %v6642 = vpop.f32.mrf.mxu0
  %v6643 = vadd.f32 %v6620, %v6642
  %6644 = vdwg.mxu0
  %6645 = vmatpush.msra.mxu0 0.0
  %6646 = vmatpush.msra.mxu0 0.0
  %6647 = vmatpush.msra.mxu0 0.0
  %6648 = vmatpush.msra.mxu0 0.0
  %6649 = vmatpush.msra.mxu0 %v6282
  %6650 = vmatpush.msra.mxu0 %v6280
  %6651 = vmatpush.msra.mxu0 %v6278
  %6652 = vmatpush.msra.mxu0 %v6276
  %6653 = vmatpush.msra.mxu0 %v6274
  %6654 = vmatpush.msra.mxu0 %v6272
  %6655 = vmatpush.msra.mxu0 %v6270
  %6656 = vmatpush.msra.mxu0 %v6268
  %6657 = vmatpush.msra.mxu0 %v6266
  %6658 = vmatpush.msra.mxu0 %v6264
  %6659 = vmatpush.msra.mxu0 %v6262
  %6660 = vmatpush.msra.mxu0 %v6260
  %6661 = vmatmul.f32.gmra.mxu0 %v6594
  %v6662 = vpop.f32.mrf.mxu0
  %v6663 = vadd.f32 %v6640, %v6662
  %6664 = vmatmul.f32.gmra.mxu0 %v6597
  %v6665 = vpop.f32.mrf.mxu0
  %v6666 = vadd.f32 %v6643, %v6665
  %6667 = vdwg.mxu0
  %6668 = vmatpush.msra.mxu0 %v6227
  %6669 = vmatpush.msra.mxu0 %v6225
  %6670 = vmatpush.msra.mxu0 %v6223
  %6671 = vmatpush.msra.mxu0 %v6221
  %6672 = vmatpush.msra.mxu0 %v6219
  %6673 = vmatpush.msra.mxu0 %v6217
  %6674 = vmatpush.msra.mxu0 %v6215
  %6675 = vmatpush.msra.mxu0 %v6213
  %6676 = vmatpush.msra.mxu0 %v6211
  %6677 = vmatpush.msra.mxu0 %v6209
  %6678 = vmatpush.msra.mxu0 %v6207
  %6679 = vmatpush.msra.mxu0 %v6205
  %6680 = vmatpush.msra.mxu0 %v6203
  %6681 = vmatpush.msra.mxu0 %v6201
  %6682 = vmatpush.msra.mxu0 %v6199
  %6683 = vmatpush.msra.mxu0 %v6197
  %6684 = vmatmul.f32.gmra.mxu0 %v6145
  %v6685 = vpop.f32.mrf.mxu0
  %v6686 = vadd.f32 %v6588, %v6685
  %6687 = vmatmul.f32.gmra.mxu0 %v6148
  %v6688 = vpop.f32.mrf.mxu0
  %v6689 = vadd.f32 %v6591, %v6688
  %6690 = vdwg.mxu0
  %6691 = vmatpush.msra.mxu0 %v6259
  %6692 = vmatpush.msra.mxu0 %v6257
  %6693 = vmatpush.msra.mxu0 %v6255
  %6694 = vmatpush.msra.mxu0 %v6253
  %6695 = vmatpush.msra.mxu0 %v6251
  %6696 = vmatpush.msra.mxu0 %v6249
  %6697 = vmatpush.msra.mxu0 %v6247
  %6698 = vmatpush.msra.mxu0 %v6245
  %6699 = vmatpush.msra.mxu0 %v6243
  %6700 = vmatpush.msra.mxu0 %v6241
  %6701 = vmatpush.msra.mxu0 %v6239
  %6702 = vmatpush.msra.mxu0 %v6237
  %6703 = vmatpush.msra.mxu0 %v6235
  %6704 = vmatpush.msra.mxu0 %v6233
  %6705 = vmatpush.msra.mxu0 %v6231
  %6706 = vmatpush.msra.mxu0 %v6229
  %6707 = vmatmul.f32.gmra.mxu0 %v6168
  %v6708 = vpop.f32.mrf.mxu0
  %v6709 = vadd.f32 %v6686, %v6708
  %6710 = vmatmul.f32.gmra.mxu0 %v6171
  %v6711 = vpop.f32.mrf.mxu0
  %v6712 = vadd.f32 %v6689, %v6711
  %6713 = vdwg.mxu0
  %6714 = vmatpush.msra.mxu0 0.0
  %6715 = vmatpush.msra.mxu0 0.0
  %6716 = vmatpush.msra.mxu0 0.0
  %6717 = vmatpush.msra.mxu0 0.0
  %6718 = vmatpush.msra.mxu0 %v6283
  %6719 = vmatpush.msra.mxu0 %v6281
  %6720 = vmatpush.msra.mxu0 %v6279
  %6721 = vmatpush.msra.mxu0 %v6277
  %6722 = vmatpush.msra.mxu0 %v6275
  %6723 = vmatpush.msra.mxu0 %v6273
  %6724 = vmatpush.msra.mxu0 %v6271
  %6725 = vmatpush.msra.mxu0 %v6269
  %6726 = vmatpush.msra.mxu0 %v6267
  %6727 = vmatpush.msra.mxu0 %v6265
  %6728 = vmatpush.msra.mxu0 %v6263
  %6729 = vmatpush.msra.mxu0 %v6261
  %6730 = vmatmul.f32.gmra.mxu0 %v6594
  %v6731 = vpop.f32.mrf.mxu0
  %v6732 = vadd.f32 %v6709, %v6731
  %6733 = vmatmul.f32.gmra.mxu0 %v6597
  %v6734 = vpop.f32.mrf.mxu0
  %v6735 = vadd.f32 %v6712, %v6734
  %6736 = vdwg.mxu0
  %v6737 = vld [vmem:[%s5109] sm:$0xff]
  %v6738 = vld [vmem:[%s5109 + $0x8] sm:$0x1]
  %v6740 = vsel %vm4481, %v6737, 0
  %v6743 = vsel %vm4481, %v6738, 0
  %6745 = vmatpush.msra.mxu0 0.0
  %6746 = vmatpush.msra.mxu0 0.0
  %6747 = vmatpush.msra.mxu0 0.0
  %6748 = vmatpush.msra.mxu0 0.0
  %6749 = vmatpush.msra.mxu0 0.0
  %6750 = vmatpush.msra.mxu0 0.0
  %6751 = vmatpush.msra.mxu0 0.0
  %6752 = vmatpush.msra.mxu0 0.0
  %6753 = vmatpush.msra.mxu0 0.0
  %6754 = vmatpush.msra.mxu0 0.0
  %6755 = vmatpush.msra.mxu0 0.0
  %6756 = vmatpush.msra.mxu0 0.0
  %6757 = vmatpush.msra.mxu0 0.0
  %6758 = vmatpush.msra.mxu0 %v6119
  %6759 = vmatpush.msra.mxu0 %v6104
  %6760 = vmatpush.msra.mxu0 %v6101
  %6761 = vmatmul.f32.gmra.mxu0 %v6740
  %v6762 = vpop.f32.mrf.mxu0
  %v6763 = vadd.f32 0.0, %v6762
  %6764 = vmatmul.f32.gmra.mxu0 %v6743
  %v6765 = vpop.f32.mrf.mxu0
  %v6766 = vadd.f32 0.0, %v6765
  %6767 = vdwg.mxu0
  %6768 = vmatpush.msra.mxu0 0.0
  %6769 = vmatpush.msra.mxu0 0.0
  %6770 = vmatpush.msra.mxu0 0.0
  %6771 = vmatpush.msra.mxu0 0.0
  %6772 = vmatpush.msra.mxu0 0.0
  %6773 = vmatpush.msra.mxu0 0.0
  %6774 = vmatpush.msra.mxu0 0.0
  %6775 = vmatpush.msra.mxu0 0.0
  %6776 = vmatpush.msra.mxu0 0.0
  %6777 = vmatpush.msra.mxu0 0.0
  %6778 = vmatpush.msra.mxu0 0.0
  %6779 = vmatpush.msra.mxu0 0.0
  %6780 = vmatpush.msra.mxu0 0.0
  %6781 = vmatpush.msra.mxu0 %v6122
  %6782 = vmatpush.msra.mxu0 %v6105
  %6783 = vmatpush.msra.mxu0 %v6102
  %6784 = vmatmul.f32.gmra.mxu0 %v6740
  %v6785 = vpop.f32.mrf.mxu0
  %v6786 = vadd.f32 0.0, %v6785
  %6787 = vmatmul.f32.gmra.mxu0 %v6743
  %v6788 = vpop.f32.mrf.mxu0
  %v6789 = vadd.f32 0.0, %v6788
  %6790 = vdwg.mxu0
  %6791 = vmatpush.msra.mxu0 0.0
  %6792 = vmatpush.msra.mxu0 0.0
  %6793 = vmatpush.msra.mxu0 0.0
  %6794 = vmatpush.msra.mxu0 0.0
  %6795 = vmatpush.msra.mxu0 0.0
  %6796 = vmatpush.msra.mxu0 0.0
  %6797 = vmatpush.msra.mxu0 0.0
  %6798 = vmatpush.msra.mxu0 0.0
  %6799 = vmatpush.msra.mxu0 0.0
  %6800 = vmatpush.msra.mxu0 0.0
  %6801 = vmatpush.msra.mxu0 0.0
  %6802 = vmatpush.msra.mxu0 0.0
  %6803 = vmatpush.msra.mxu0 0.0
  %6804 = vmatpush.msra.mxu0 %v6125
  %6805 = vmatpush.msra.mxu0 %v6106
  %6806 = vmatpush.msra.mxu0 %v6103
  %6807 = vmatmul.f32.gmra.mxu0 %v6740
  %v6808 = vpop.f32.mrf.mxu0
  %v6809 = vadd.f32 0.0, %v6808
  %6810 = vmatmul.f32.gmra.mxu0 %v6743
  %v6811 = vpop.f32.mrf.mxu0
  %v6812 = vadd.f32 0.0, %v6811
  %6813 = vdwg.mxu0
  %v6814 = vld [vmem:[%s5187] sm:$0xff]
  %v6815 = vld [vmem:[%s5187 + $0x8] sm:$0xff]
  %v6816 = vld [vmem:[%s5187 + $0x10] sm:$0xff]
  %v6817 = vld [vmem:[%s5187 + $0x18] sm:$0xff]
  %v6818 = vld [vmem:[%s5187 + $0x20] sm:$0xff]
  %v6819 = vld [vmem:[%s5187 + $0x28] sm:$0xff]
  %v6820 = vld [vmem:[%s5187 + $0x30] sm:$0xff]
  %v6821 = vld [vmem:[%s5187 + $0x38] sm:$0xff]
  %v6822 = vld [vmem:[%s5187 + $0x40] sm:$0xff]
  %v6823 = vld [vmem:[%s5187 + $0x48] sm:$0xff]
  %v6824 = vld [vmem:[%s5187 + $0x50] sm:$0xff]
  %v6825 = vld [vmem:[%s5187 + $0x58] sm:$0xff]
  %v6826 = vld [vmem:[%s5187 + $0x60] sm:$0xff]
  %v6827 = vld [vmem:[%s5187 + $0x68] sm:$0xff]
  %v6828 = vld [vmem:[%s5187 + $0x70] sm:$0xff]
  %v6829 = vld [vmem:[%s5187 + $0x78] sm:$0xff]
  %v6830 = vld [vmem:[%s5187 + $0x80] sm:$0xff]
  %v6831 = vld [vmem:[%s5187 + $0x88] sm:$0xff]
  %v6832 = vld [vmem:[%s5187 + $0x90] sm:$0xff]
  %v6833 = vld [vmem:[%s5187 + $0x98] sm:$0xff]
  %v6834 = vld [vmem:[%s5187 + $0xa0] sm:$0xff]
  %v6835 = vld [vmem:[%s5187 + $0xa8] sm:$0xff]
  %v6836 = vld [vmem:[%s5187 + $0xb0] sm:$0xff]
  %v6837 = vld [vmem:[%s5187 + $0xb8] sm:$0xff]
  %v6838 = vld [vmem:[%s5187 + $0xc0] sm:$0xff]
  %v6839 = vld [vmem:[%s5187 + $0xc8] sm:$0xff]
  %v6840 = vld [vmem:[%s5187 + $0xd0] sm:$0xff]
  %v6841 = vld [vmem:[%s5187 + $0xd8] sm:$0xff]
  %v6842 = vld [vmem:[%s5187 + $0xe0] sm:$0xff]
  %v6843 = vld [vmem:[%s5187 + $0xe8] sm:$0xff]
  %v6844 = vld [vmem:[%s5187 + $0xf0] sm:$0xff]
  %v6845 = vld [vmem:[%s5187 + $0xf8] sm:$0xff]
  %v6846 = vld [vmem:[%s5187 + $0x100] sm:$0xff]
  %v6847 = vld [vmem:[%s5187 + $0x108] sm:$0xff]
  %v6848 = vld [vmem:[%s5187 + $0x110] sm:$0xff]
  %v6849 = vld [vmem:[%s5187 + $0x118] sm:$0xff]
  %v6850 = vld [vmem:[%s5187 + $0x120] sm:$0xff]
  %v6851 = vld [vmem:[%s5187 + $0x128] sm:$0xff]
  %v6852 = vld [vmem:[%s5187 + $0x130] sm:$0xff]
  %v6853 = vld [vmem:[%s5187 + $0x138] sm:$0xff]
  %v6854 = vld [vmem:[%s5187 + $0x140] sm:$0xff]
  %v6855 = vld [vmem:[%s5187 + $0x148] sm:$0xff]
  %v6856 = vld [vmem:[%s5187 + $0x150] sm:$0xff]
  %v6857 = vld [vmem:[%s5187 + $0x158] sm:$0xff]
  %v6858 = vld [vmem:[%s5187 + $0x160] sm:$0xff]
  %v6859 = vld [vmem:[%s5187 + $0x168] sm:$0xff]
  %v6860 = vld [vmem:[%s5187 + $0x170] sm:$0xff]
  %v6861 = vld [vmem:[%s5187 + $0x178] sm:$0xff]
  %v6862 = vld [vmem:[%s5187 + $0x180] sm:$0xff]
  %v6863 = vld [vmem:[%s5187 + $0x188] sm:$0xff]
  %v6864 = vld [vmem:[%s5187 + $0x190] sm:$0xff]
  %v6865 = vld [vmem:[%s5187 + $0x198] sm:$0xff]
  %v6866 = vld [vmem:[%s5187 + $0x1a0] sm:$0xff]
  %v6867 = vld [vmem:[%s5187 + $0x1a8] sm:$0xff]
  %v6868 = vld [vmem:[%s5187 + $0x1b0] sm:$0xff]
  %v6869 = vld [vmem:[%s5187 + $0x1b8] sm:$0xff]
  %v6870 = vld [vmem:[%s5187 + $0x1c0] sm:$0xff]
  %v6871 = vld [vmem:[%s5187 + $0x1c8] sm:$0xff]
  %v6872 = vld [vmem:[%s5187 + $0x1d0] sm:$0xff]
  %v6873 = vld [vmem:[%s5187 + $0x1d8] sm:$0xff]
  %v6874 = vld [vmem:[%s5187 + $0x1e0] sm:$0xff]
  %v6875 = vld [vmem:[%s5187 + $0x1e8] sm:$0xff]
  %v6876 = vld [vmem:[%s5187 + $0x1f0] sm:$0xff]
  %v6877 = vld [vmem:[%s5187 + $0x1f8] sm:$0xff]
  %v6878 = vld [vmem:[%s5187 + $0x200] sm:$0xff]
  %v6879 = vld [vmem:[%s5187 + $0x208] sm:$0xff]
  %v6880 = vld [vmem:[%s5187 + $0x210] sm:$0xff]
  %v6881 = vld [vmem:[%s5187 + $0x218] sm:$0xff]
  %v6882 = vld [vmem:[%s5187 + $0x220] sm:$0xff]
  %v6883 = vld [vmem:[%s5187 + $0x228] sm:$0xff]
  %v6884 = vld [vmem:[%s5187 + $0x230] sm:$0xff]
  %v6885 = vld [vmem:[%s5187 + $0x238] sm:$0xff]
  %v6886 = vld [vmem:[%s5187 + $0x240] sm:$0xff]
  %v6887 = vld [vmem:[%s5187 + $0x248] sm:$0xff]
  %v6888 = vld [vmem:[%s5187 + $0x250] sm:$0xff]
  %v6889 = vld [vmem:[%s5187 + $0x258] sm:$0xff]
  %v6890 = vld [vmem:[%s5187 + $0x260] sm:$0xff]
  %v6891 = vld [vmem:[%s5187 + $0x268] sm:$0xff]
  %v6892 = vld [vmem:[%s5187 + $0x270] sm:$0xff]
  %v6893 = vld [vmem:[%s5187 + $0x278] sm:$0xff]
  %v6894 = vld [vmem:[%s5187 + $0x280] sm:$0xff]
  %v6895 = vld [vmem:[%s5187 + $0x288] sm:$0xff]
  %v6896 = vld [vmem:[%s5187 + $0x290] sm:$0xff]
  %v6897 = vld [vmem:[%s5187 + $0x298] sm:$0xff]
  %v6898 = vld [vmem:[%s5187 + $0x2a0] sm:$0xff]
  %v6899 = vld [vmem:[%s5187 + $0x2a8] sm:$0xff]
  %v6900 = vld [vmem:[%s5187 + $0x2b0] sm:$0xff]
  %v6901 = vld [vmem:[%s5187 + $0x2b8] sm:$0xff]
  %v6903 = vsel %vm2457, %v6809, 0
  %v6906 = vsel %vm2457, %v6812, 0
  %6908 = vmatpush.msra.mxu0 %v6844
  %6909 = vmatpush.msra.mxu0 %v6842
  %6910 = vmatpush.msra.mxu0 %v6840
  %6911 = vmatpush.msra.mxu0 %v6838
  %6912 = vmatpush.msra.mxu0 %v6836
  %6913 = vmatpush.msra.mxu0 %v6834
  %6914 = vmatpush.msra.mxu0 %v6832
  %6915 = vmatpush.msra.mxu0 %v6830
  %6916 = vmatpush.msra.mxu0 %v6828
  %6917 = vmatpush.msra.mxu0 %v6826
  %6918 = vmatpush.msra.mxu0 %v6824
  %6919 = vmatpush.msra.mxu0 %v6822
  %6920 = vmatpush.msra.mxu0 %v6820
  %6921 = vmatpush.msra.mxu0 %v6818
  %6922 = vmatpush.msra.mxu0 %v6816
  %6923 = vmatpush.msra.mxu0 %v6814
  %6924 = vmatmul.f32.gmra.mxu0 %v6763
  %v6925 = vpop.f32.mrf.mxu0
  %v6926 = vadd.f32 0.0, %v6925
  %6927 = vmatmul.f32.gmra.mxu0 %v6766
  %v6928 = vpop.f32.mrf.mxu0
  %v6929 = vadd.f32 0.0, %v6928
  %6930 = vdwg.mxu0
  %6931 = vmatpush.msra.mxu0 %v6876
  %6932 = vmatpush.msra.mxu0 %v6874
  %6933 = vmatpush.msra.mxu0 %v6872
  %6934 = vmatpush.msra.mxu0 %v6870
  %6935 = vmatpush.msra.mxu0 %v6868
  %6936 = vmatpush.msra.mxu0 %v6866
  %6937 = vmatpush.msra.mxu0 %v6864
  %6938 = vmatpush.msra.mxu0 %v6862
  %6939 = vmatpush.msra.mxu0 %v6860
  %6940 = vmatpush.msra.mxu0 %v6858
  %6941 = vmatpush.msra.mxu0 %v6856
  %6942 = vmatpush.msra.mxu0 %v6854
  %6943 = vmatpush.msra.mxu0 %v6852
  %6944 = vmatpush.msra.mxu0 %v6850
  %6945 = vmatpush.msra.mxu0 %v6848
  %6946 = vmatpush.msra.mxu0 %v6846
  %6947 = vmatmul.f32.gmra.mxu0 %v6786
  %v6948 = vpop.f32.mrf.mxu0
  %v6949 = vadd.f32 %v6926, %v6948
  %6950 = vmatmul.f32.gmra.mxu0 %v6789
  %v6951 = vpop.f32.mrf.mxu0
  %v6952 = vadd.f32 %v6929, %v6951
  %6953 = vdwg.mxu0
  %6954 = vmatpush.msra.mxu0 0.0
  %6955 = vmatpush.msra.mxu0 0.0
  %6956 = vmatpush.msra.mxu0 0.0
  %6957 = vmatpush.msra.mxu0 0.0
  %6958 = vmatpush.msra.mxu0 %v6900
  %6959 = vmatpush.msra.mxu0 %v6898
  %6960 = vmatpush.msra.mxu0 %v6896
  %6961 = vmatpush.msra.mxu0 %v6894
  %6962 = vmatpush.msra.mxu0 %v6892
  %6963 = vmatpush.msra.mxu0 %v6890
  %6964 = vmatpush.msra.mxu0 %v6888
  %6965 = vmatpush.msra.mxu0 %v6886
  %6966 = vmatpush.msra.mxu0 %v6884
  %6967 = vmatpush.msra.mxu0 %v6882
  %6968 = vmatpush.msra.mxu0 %v6880
  %6969 = vmatpush.msra.mxu0 %v6878
  %6970 = vmatmul.f32.gmra.mxu0 %v6903
  %v6971 = vpop.f32.mrf.mxu0
  %v6972 = vadd.f32 %v6949, %v6971
  %6973 = vmatmul.f32.gmra.mxu0 %v6906
  %v6974 = vpop.f32.mrf.mxu0
  %v6975 = vadd.f32 %v6952, %v6974
  %6976 = vdwg.mxu0
  %6977 = vmatpush.msra.mxu0 %v6845
  %6978 = vmatpush.msra.mxu0 %v6843
  %6979 = vmatpush.msra.mxu0 %v6841
  %6980 = vmatpush.msra.mxu0 %v6839
  %6981 = vmatpush.msra.mxu0 %v6837
  %6982 = vmatpush.msra.mxu0 %v6835
  %6983 = vmatpush.msra.mxu0 %v6833
  %6984 = vmatpush.msra.mxu0 %v6831
  %6985 = vmatpush.msra.mxu0 %v6829
  %6986 = vmatpush.msra.mxu0 %v6827
  %6987 = vmatpush.msra.mxu0 %v6825
  %6988 = vmatpush.msra.mxu0 %v6823
  %6989 = vmatpush.msra.mxu0 %v6821
  %6990 = vmatpush.msra.mxu0 %v6819
  %6991 = vmatpush.msra.mxu0 %v6817
  %6992 = vmatpush.msra.mxu0 %v6815
  %6993 = vmatmul.f32.gmra.mxu0 %v6763
  %v6994 = vpop.f32.mrf.mxu0
  %v6995 = vadd.f32 0.0, %v6994
  %6996 = vmatmul.f32.gmra.mxu0 %v6766
  %v6997 = vpop.f32.mrf.mxu0
  %v6998 = vadd.f32 0.0, %v6997
  %6999 = vdwg.mxu0
  %7000 = vmatpush.msra.mxu0 %v6877
  %7001 = vmatpush.msra.mxu0 %v6875
  %7002 = vmatpush.msra.mxu0 %v6873
  %7003 = vmatpush.msra.mxu0 %v6871
  %7004 = vmatpush.msra.mxu0 %v6869
  %7005 = vmatpush.msra.mxu0 %v6867
  %7006 = vmatpush.msra.mxu0 %v6865
  %7007 = vmatpush.msra.mxu0 %v6863
  %7008 = vmatpush.msra.mxu0 %v6861
  %7009 = vmatpush.msra.mxu0 %v6859
  %7010 = vmatpush.msra.mxu0 %v6857
  %7011 = vmatpush.msra.mxu0 %v6855
  %7012 = vmatpush.msra.mxu0 %v6853
  %7013 = vmatpush.msra.mxu0 %v6851
  %7014 = vmatpush.msra.mxu0 %v6849
  %7015 = vmatpush.msra.mxu0 %v6847
  %7016 = vmatmul.f32.gmra.mxu0 %v6786
  %v7017 = vpop.f32.mrf.mxu0
  %v7018 = vadd.f32 %v6995, %v7017
  %7019 = vmatmul.f32.gmra.mxu0 %v6789
  %v7020 = vpop.f32.mrf.mxu0
  %v7021 = vadd.f32 %v6998, %v7020
  %7022 = vdwg.mxu0
  %7023 = vmatpush.msra.mxu0 0.0
  %7024 = vmatpush.msra.mxu0 0.0
  %7025 = vmatpush.msra.mxu0 0.0
  %7026 = vmatpush.msra.mxu0 0.0
  %7027 = vmatpush.msra.mxu0 %v6901
  %7028 = vmatpush.msra.mxu0 %v6899
  %7029 = vmatpush.msra.mxu0 %v6897
  %7030 = vmatpush.msra.mxu0 %v6895
  %7031 = vmatpush.msra.mxu0 %v6893
  %7032 = vmatpush.msra.mxu0 %v6891
  %7033 = vmatpush.msra.mxu0 %v6889
  %7034 = vmatpush.msra.mxu0 %v6887
  %7035 = vmatpush.msra.mxu0 %v6885
  %7036 = vmatpush.msra.mxu0 %v6883
  %7037 = vmatpush.msra.mxu0 %v6881
  %7038 = vmatpush.msra.mxu0 %v6879
  %7039 = vmatmul.f32.gmra.mxu0 %v6903
  %v7040 = vpop.f32.mrf.mxu0
  %v7041 = vadd.f32 %v7018, %v7040
  %7042 = vmatmul.f32.gmra.mxu0 %v6906
  %v7043 = vpop.f32.mrf.mxu0
  %v7044 = vadd.f32 %v7021, %v7043
  %7045 = vdwg.mxu0
  %v7046 = vadd.f32 %v6663, %v6972
  %v7047 = vadd.f32 %v6732, %v7041
  %v7048 = vadd.f32 %v6666, %v6975
  %v7049 = vadd.f32 %v6735, %v7044
  %v7050 = vld [vmem:[%s5424] sm:$0xff]
  %v7051 = vld [vmem:[%s5424 + $0x8] sm:$0x1]
  %v7053 = vsel %vm4481, %v7050, 0
  %v7056 = vsel %vm4481, %v7051, 0
  %7058 = vmatpush.msra.mxu0 0.0
  %7059 = vmatpush.msra.mxu0 0.0
  %7060 = vmatpush.msra.mxu0 0.0
  %7061 = vmatpush.msra.mxu0 0.0
  %7062 = vmatpush.msra.mxu0 0.0
  %7063 = vmatpush.msra.mxu0 0.0
  %7064 = vmatpush.msra.mxu0 0.0
  %7065 = vmatpush.msra.mxu0 0.0
  %7066 = vmatpush.msra.mxu0 0.0
  %7067 = vmatpush.msra.mxu0 0.0
  %7068 = vmatpush.msra.mxu0 0.0
  %7069 = vmatpush.msra.mxu0 0.0
  %7070 = vmatpush.msra.mxu0 0.0
  %7071 = vmatpush.msra.mxu0 %v6119
  %7072 = vmatpush.msra.mxu0 %v6104
  %7073 = vmatpush.msra.mxu0 %v6101
  %7074 = vmatmul.f32.gmra.mxu0 %v7053
  %v7075 = vpop.f32.mrf.mxu0
  %v7076 = vadd.f32 0.0, %v7075
  %7077 = vmatmul.f32.gmra.mxu0 %v7056
  %v7078 = vpop.f32.mrf.mxu0
  %v7079 = vadd.f32 0.0, %v7078
  %7080 = vdwg.mxu0
  %7081 = vmatpush.msra.mxu0 0.0
  %7082 = vmatpush.msra.mxu0 0.0
  %7083 = vmatpush.msra.mxu0 0.0
  %7084 = vmatpush.msra.mxu0 0.0
  %7085 = vmatpush.msra.mxu0 0.0
  %7086 = vmatpush.msra.mxu0 0.0
  %7087 = vmatpush.msra.mxu0 0.0
  %7088 = vmatpush.msra.mxu0 0.0
  %7089 = vmatpush.msra.mxu0 0.0
  %7090 = vmatpush.msra.mxu0 0.0
  %7091 = vmatpush.msra.mxu0 0.0
  %7092 = vmatpush.msra.mxu0 0.0
  %7093 = vmatpush.msra.mxu0 0.0
  %7094 = vmatpush.msra.mxu0 %v6122
  %7095 = vmatpush.msra.mxu0 %v6105
  %7096 = vmatpush.msra.mxu0 %v6102
  %7097 = vmatmul.f32.gmra.mxu0 %v7053
  %v7098 = vpop.f32.mrf.mxu0
  %v7099 = vadd.f32 0.0, %v7098
  %7100 = vmatmul.f32.gmra.mxu0 %v7056
  %v7101 = vpop.f32.mrf.mxu0
  %v7102 = vadd.f32 0.0, %v7101
  %7103 = vdwg.mxu0
  %7104 = vmatpush.msra.mxu0 0.0
  %7105 = vmatpush.msra.mxu0 0.0
  %7106 = vmatpush.msra.mxu0 0.0
  %7107 = vmatpush.msra.mxu0 0.0
  %7108 = vmatpush.msra.mxu0 0.0
  %7109 = vmatpush.msra.mxu0 0.0
  %7110 = vmatpush.msra.mxu0 0.0
  %7111 = vmatpush.msra.mxu0 0.0
  %7112 = vmatpush.msra.mxu0 0.0
  %7113 = vmatpush.msra.mxu0 0.0
  %7114 = vmatpush.msra.mxu0 0.0
  %7115 = vmatpush.msra.mxu0 0.0
  %7116 = vmatpush.msra.mxu0 0.0
  %7117 = vmatpush.msra.mxu0 %v6125
  %7118 = vmatpush.msra.mxu0 %v6106
  %7119 = vmatpush.msra.mxu0 %v6103
  %7120 = vmatmul.f32.gmra.mxu0 %v7053
  %v7121 = vpop.f32.mrf.mxu0
  %v7122 = vadd.f32 0.0, %v7121
  %7123 = vmatmul.f32.gmra.mxu0 %v7056
  %v7124 = vpop.f32.mrf.mxu0
  %v7125 = vadd.f32 0.0, %v7124
  %7126 = vdwg.mxu0
  %v7127 = vld [vmem:[%s5502] sm:$0xff]
  %v7128 = vld [vmem:[%s5502 + $0x8] sm:$0xff]
  %v7129 = vld [vmem:[%s5502 + $0x10] sm:$0xff]
  %v7130 = vld [vmem:[%s5502 + $0x18] sm:$0xff]
  %v7131 = vld [vmem:[%s5502 + $0x20] sm:$0xff]
  %v7132 = vld [vmem:[%s5502 + $0x28] sm:$0xff]
  %v7133 = vld [vmem:[%s5502 + $0x30] sm:$0xff]
  %v7134 = vld [vmem:[%s5502 + $0x38] sm:$0xff]
  %v7135 = vld [vmem:[%s5502 + $0x40] sm:$0xff]
  %v7136 = vld [vmem:[%s5502 + $0x48] sm:$0xff]
  %v7137 = vld [vmem:[%s5502 + $0x50] sm:$0xff]
  %v7138 = vld [vmem:[%s5502 + $0x58] sm:$0xff]
  %v7139 = vld [vmem:[%s5502 + $0x60] sm:$0xff]
  %v7140 = vld [vmem:[%s5502 + $0x68] sm:$0xff]
  %v7141 = vld [vmem:[%s5502 + $0x70] sm:$0xff]
  %v7142 = vld [vmem:[%s5502 + $0x78] sm:$0xff]
  %v7143 = vld [vmem:[%s5502 + $0x80] sm:$0xff]
  %v7144 = vld [vmem:[%s5502 + $0x88] sm:$0xff]
  %v7145 = vld [vmem:[%s5502 + $0x90] sm:$0xff]
  %v7146 = vld [vmem:[%s5502 + $0x98] sm:$0xff]
  %v7147 = vld [vmem:[%s5502 + $0xa0] sm:$0xff]
  %v7148 = vld [vmem:[%s5502 + $0xa8] sm:$0xff]
  %v7149 = vld [vmem:[%s5502 + $0xb0] sm:$0xff]
  %v7150 = vld [vmem:[%s5502 + $0xb8] sm:$0xff]
  %v7151 = vld [vmem:[%s5502 + $0xc0] sm:$0xff]
  %v7152 = vld [vmem:[%s5502 + $0xc8] sm:$0xff]
  %v7153 = vld [vmem:[%s5502 + $0xd0] sm:$0xff]
  %v7154 = vld [vmem:[%s5502 + $0xd8] sm:$0xff]
  %v7155 = vld [vmem:[%s5502 + $0xe0] sm:$0xff]
  %v7156 = vld [vmem:[%s5502 + $0xe8] sm:$0xff]
  %v7157 = vld [vmem:[%s5502 + $0xf0] sm:$0xff]
  %v7158 = vld [vmem:[%s5502 + $0xf8] sm:$0xff]
  %v7159 = vld [vmem:[%s5502 + $0x100] sm:$0xff]
  %v7160 = vld [vmem:[%s5502 + $0x108] sm:$0xff]
  %v7161 = vld [vmem:[%s5502 + $0x110] sm:$0xff]
  %v7162 = vld [vmem:[%s5502 + $0x118] sm:$0xff]
  %v7163 = vld [vmem:[%s5502 + $0x120] sm:$0xff]
  %v7164 = vld [vmem:[%s5502 + $0x128] sm:$0xff]
  %v7165 = vld [vmem:[%s5502 + $0x130] sm:$0xff]
  %v7166 = vld [vmem:[%s5502 + $0x138] sm:$0xff]
  %v7167 = vld [vmem:[%s5502 + $0x140] sm:$0xff]
  %v7168 = vld [vmem:[%s5502 + $0x148] sm:$0xff]
  %v7169 = vld [vmem:[%s5502 + $0x150] sm:$0xff]
  %v7170 = vld [vmem:[%s5502 + $0x158] sm:$0xff]
  %v7171 = vld [vmem:[%s5502 + $0x160] sm:$0xff]
  %v7172 = vld [vmem:[%s5502 + $0x168] sm:$0xff]
  %v7173 = vld [vmem:[%s5502 + $0x170] sm:$0xff]
  %v7174 = vld [vmem:[%s5502 + $0x178] sm:$0xff]
  %v7175 = vld [vmem:[%s5502 + $0x180] sm:$0xff]
  %v7176 = vld [vmem:[%s5502 + $0x188] sm:$0xff]
  %v7177 = vld [vmem:[%s5502 + $0x190] sm:$0xff]
  %v7178 = vld [vmem:[%s5502 + $0x198] sm:$0xff]
  %v7179 = vld [vmem:[%s5502 + $0x1a0] sm:$0xff]
  %v7180 = vld [vmem:[%s5502 + $0x1a8] sm:$0xff]
  %v7181 = vld [vmem:[%s5502 + $0x1b0] sm:$0xff]
  %v7182 = vld [vmem:[%s5502 + $0x1b8] sm:$0xff]
  %v7183 = vld [vmem:[%s5502 + $0x1c0] sm:$0xff]
  %v7184 = vld [vmem:[%s5502 + $0x1c8] sm:$0xff]
  %v7185 = vld [vmem:[%s5502 + $0x1d0] sm:$0xff]
  %v7186 = vld [vmem:[%s5502 + $0x1d8] sm:$0xff]
  %v7187 = vld [vmem:[%s5502 + $0x1e0] sm:$0xff]
  %v7188 = vld [vmem:[%s5502 + $0x1e8] sm:$0xff]
  %v7189 = vld [vmem:[%s5502 + $0x1f0] sm:$0xff]
  %v7190 = vld [vmem:[%s5502 + $0x1f8] sm:$0xff]
  %v7191 = vld [vmem:[%s5502 + $0x200] sm:$0xff]
  %v7192 = vld [vmem:[%s5502 + $0x208] sm:$0xff]
  %v7193 = vld [vmem:[%s5502 + $0x210] sm:$0xff]
  %v7194 = vld [vmem:[%s5502 + $0x218] sm:$0xff]
  %v7195 = vld [vmem:[%s5502 + $0x220] sm:$0xff]
  %v7196 = vld [vmem:[%s5502 + $0x228] sm:$0xff]
  %v7197 = vld [vmem:[%s5502 + $0x230] sm:$0xff]
  %v7198 = vld [vmem:[%s5502 + $0x238] sm:$0xff]
  %v7199 = vld [vmem:[%s5502 + $0x240] sm:$0xff]
  %v7200 = vld [vmem:[%s5502 + $0x248] sm:$0xff]
  %v7201 = vld [vmem:[%s5502 + $0x250] sm:$0xff]
  %v7202 = vld [vmem:[%s5502 + $0x258] sm:$0xff]
  %v7203 = vld [vmem:[%s5502 + $0x260] sm:$0xff]
  %v7204 = vld [vmem:[%s5502 + $0x268] sm:$0xff]
  %v7205 = vld [vmem:[%s5502 + $0x270] sm:$0xff]
  %v7206 = vld [vmem:[%s5502 + $0x278] sm:$0xff]
  %v7207 = vld [vmem:[%s5502 + $0x280] sm:$0xff]
  %v7208 = vld [vmem:[%s5502 + $0x288] sm:$0xff]
  %v7209 = vld [vmem:[%s5502 + $0x290] sm:$0xff]
  %v7210 = vld [vmem:[%s5502 + $0x298] sm:$0xff]
  %v7211 = vld [vmem:[%s5502 + $0x2a0] sm:$0xff]
  %v7212 = vld [vmem:[%s5502 + $0x2a8] sm:$0xff]
  %v7213 = vld [vmem:[%s5502 + $0x2b0] sm:$0xff]
  %v7214 = vld [vmem:[%s5502 + $0x2b8] sm:$0xff]
  %v7216 = vsel %vm2457, %v7122, 0
  %v7219 = vsel %vm2457, %v7125, 0
  %7221 = vmatpush.msra.mxu0 %v7157
  %7222 = vmatpush.msra.mxu0 %v7155
  %7223 = vmatpush.msra.mxu0 %v7153
  %7224 = vmatpush.msra.mxu0 %v7151
  %7225 = vmatpush.msra.mxu0 %v7149
  %7226 = vmatpush.msra.mxu0 %v7147
  %7227 = vmatpush.msra.mxu0 %v7145
  %7228 = vmatpush.msra.mxu0 %v7143
  %7229 = vmatpush.msra.mxu0 %v7141
  %7230 = vmatpush.msra.mxu0 %v7139
  %7231 = vmatpush.msra.mxu0 %v7137
  %7232 = vmatpush.msra.mxu0 %v7135
  %7233 = vmatpush.msra.mxu0 %v7133
  %7234 = vmatpush.msra.mxu0 %v7131
  %7235 = vmatpush.msra.mxu0 %v7129
  %7236 = vmatpush.msra.mxu0 %v7127
  %7237 = vmatmul.f32.gmra.mxu0 %v7076
  %v7238 = vpop.f32.mrf.mxu0
  %v7239 = vadd.f32 0.0, %v7238
  %7240 = vmatmul.f32.gmra.mxu0 %v7079
  %v7241 = vpop.f32.mrf.mxu0
  %v7242 = vadd.f32 0.0, %v7241
  %7243 = vdwg.mxu0
  %7244 = vmatpush.msra.mxu0 %v7189
  %7245 = vmatpush.msra.mxu0 %v7187
  %7246 = vmatpush.msra.mxu0 %v7185
  %7247 = vmatpush.msra.mxu0 %v7183
  %7248 = vmatpush.msra.mxu0 %v7181
  %7249 = vmatpush.msra.mxu0 %v7179
  %7250 = vmatpush.msra.mxu0 %v7177
  %7251 = vmatpush.msra.mxu0 %v7175
  %7252 = vmatpush.msra.mxu0 %v7173
  %7253 = vmatpush.msra.mxu0 %v7171
  %7254 = vmatpush.msra.mxu0 %v7169
  %7255 = vmatpush.msra.mxu0 %v7167
  %7256 = vmatpush.msra.mxu0 %v7165
  %7257 = vmatpush.msra.mxu0 %v7163
  %7258 = vmatpush.msra.mxu0 %v7161
  %7259 = vmatpush.msra.mxu0 %v7159
  %7260 = vmatmul.f32.gmra.mxu0 %v7099
  %v7261 = vpop.f32.mrf.mxu0
  %v7262 = vadd.f32 %v7239, %v7261
  %7263 = vmatmul.f32.gmra.mxu0 %v7102
  %v7264 = vpop.f32.mrf.mxu0
  %v7265 = vadd.f32 %v7242, %v7264
  %7266 = vdwg.mxu0
  %7267 = vmatpush.msra.mxu0 0.0
  %7268 = vmatpush.msra.mxu0 0.0
  %7269 = vmatpush.msra.mxu0 0.0
  %7270 = vmatpush.msra.mxu0 0.0
  %7271 = vmatpush.msra.mxu0 %v7213
  %7272 = vmatpush.msra.mxu0 %v7211
  %7273 = vmatpush.msra.mxu0 %v7209
  %7274 = vmatpush.msra.mxu0 %v7207
  %7275 = vmatpush.msra.mxu0 %v7205
  %7276 = vmatpush.msra.mxu0 %v7203
  %7277 = vmatpush.msra.mxu0 %v7201
  %7278 = vmatpush.msra.mxu0 %v7199
  %7279 = vmatpush.msra.mxu0 %v7197
  %7280 = vmatpush.msra.mxu0 %v7195
  %7281 = vmatpush.msra.mxu0 %v7193
  %7282 = vmatpush.msra.mxu0 %v7191
  %7283 = vmatmul.f32.gmra.mxu0 %v7216
  %v7284 = vpop.f32.mrf.mxu0
  %v7285 = vadd.f32 %v7262, %v7284
  %7286 = vmatmul.f32.gmra.mxu0 %v7219
  %v7287 = vpop.f32.mrf.mxu0
  %v7288 = vadd.f32 %v7265, %v7287
  %7289 = vdwg.mxu0
  %7290 = vmatpush.msra.mxu0 %v7158
  %7291 = vmatpush.msra.mxu0 %v7156
  %7292 = vmatpush.msra.mxu0 %v7154
  %7293 = vmatpush.msra.mxu0 %v7152
  %7294 = vmatpush.msra.mxu0 %v7150
  %7295 = vmatpush.msra.mxu0 %v7148
  %7296 = vmatpush.msra.mxu0 %v7146
  %7297 = vmatpush.msra.mxu0 %v7144
  %7298 = vmatpush.msra.mxu0 %v7142
  %7299 = vmatpush.msra.mxu0 %v7140
  %7300 = vmatpush.msra.mxu0 %v7138
  %7301 = vmatpush.msra.mxu0 %v7136
  %7302 = vmatpush.msra.mxu0 %v7134
  %7303 = vmatpush.msra.mxu0 %v7132
  %7304 = vmatpush.msra.mxu0 %v7130
  %7305 = vmatpush.msra.mxu0 %v7128
  %7306 = vmatmul.f32.gmra.mxu0 %v7076
  %v7307 = vpop.f32.mrf.mxu0
  %v7308 = vadd.f32 0.0, %v7307
  %7309 = vmatmul.f32.gmra.mxu0 %v7079
  %v7310 = vpop.f32.mrf.mxu0
  %v7311 = vadd.f32 0.0, %v7310
  %7312 = vdwg.mxu0
  %7313 = vmatpush.msra.mxu0 %v7190
  %7314 = vmatpush.msra.mxu0 %v7188
  %7315 = vmatpush.msra.mxu0 %v7186
  %7316 = vmatpush.msra.mxu0 %v7184
  %7317 = vmatpush.msra.mxu0 %v7182
  %7318 = vmatpush.msra.mxu0 %v7180
  %7319 = vmatpush.msra.mxu0 %v7178
  %7320 = vmatpush.msra.mxu0 %v7176
  %7321 = vmatpush.msra.mxu0 %v7174
  %7322 = vmatpush.msra.mxu0 %v7172
  %7323 = vmatpush.msra.mxu0 %v7170
  %7324 = vmatpush.msra.mxu0 %v7168
  %7325 = vmatpush.msra.mxu0 %v7166
  %7326 = vmatpush.msra.mxu0 %v7164
  %7327 = vmatpush.msra.mxu0 %v7162
  %7328 = vmatpush.msra.mxu0 %v7160
  %7329 = vmatmul.f32.gmra.mxu0 %v7099
  %v7330 = vpop.f32.mrf.mxu0
  %v7331 = vadd.f32 %v7308, %v7330
  %7332 = vmatmul.f32.gmra.mxu0 %v7102
  %v7333 = vpop.f32.mrf.mxu0
  %v7334 = vadd.f32 %v7311, %v7333
  %7335 = vdwg.mxu0
  %7336 = vmatpush.msra.mxu0 0.0
  %7337 = vmatpush.msra.mxu0 0.0
  %7338 = vmatpush.msra.mxu0 0.0
  %7339 = vmatpush.msra.mxu0 0.0
  %7340 = vmatpush.msra.mxu0 %v7214
  %7341 = vmatpush.msra.mxu0 %v7212
  %7342 = vmatpush.msra.mxu0 %v7210
  %7343 = vmatpush.msra.mxu0 %v7208
  %7344 = vmatpush.msra.mxu0 %v7206
  %7345 = vmatpush.msra.mxu0 %v7204
  %7346 = vmatpush.msra.mxu0 %v7202
  %7347 = vmatpush.msra.mxu0 %v7200
  %7348 = vmatpush.msra.mxu0 %v7198
  %7349 = vmatpush.msra.mxu0 %v7196
  %7350 = vmatpush.msra.mxu0 %v7194
  %7351 = vmatpush.msra.mxu0 %v7192
  %7352 = vmatmul.f32.gmra.mxu0 %v7216
  %v7353 = vpop.f32.mrf.mxu0
  %v7354 = vadd.f32 %v7331, %v7353
  %7355 = vmatmul.f32.gmra.mxu0 %v7219
  %v7356 = vpop.f32.mrf.mxu0
  %v7357 = vadd.f32 %v7334, %v7356
  %7358 = vdwg.mxu0
  %v7359 = vadd.f32 %v7046, %v7285
  %v7360 = vadd.f32 %v7047, %v7354
  %v7361 = vadd.f32 %v7048, %v7288
  %v7362 = vadd.f32 %v7049, %v7357
  %v7363 = vld [vmem:[%s5739] sm:$0xff]
  %v7364 = vld [vmem:[%s5739 + $0x8] sm:$0x1]
  %v7366 = vsel %vm4481, %v7363, 0
  %v7369 = vsel %vm4481, %v7364, 0
  %7371 = vmatpush.msra.mxu0 0.0
  %7372 = vmatpush.msra.mxu0 0.0
  %7373 = vmatpush.msra.mxu0 0.0
  %7374 = vmatpush.msra.mxu0 0.0
  %7375 = vmatpush.msra.mxu0 0.0
  %7376 = vmatpush.msra.mxu0 0.0
  %7377 = vmatpush.msra.mxu0 0.0
  %7378 = vmatpush.msra.mxu0 0.0
  %7379 = vmatpush.msra.mxu0 0.0
  %7380 = vmatpush.msra.mxu0 0.0
  %7381 = vmatpush.msra.mxu0 0.0
  %7382 = vmatpush.msra.mxu0 0.0
  %7383 = vmatpush.msra.mxu0 0.0
  %7384 = vmatpush.msra.mxu0 %v6119
  %7385 = vmatpush.msra.mxu0 %v6104
  %7386 = vmatpush.msra.mxu0 %v6101
  %7387 = vmatmul.f32.gmra.mxu0 %v7366
  %v7388 = vpop.f32.mrf.mxu0
  %v7389 = vadd.f32 0.0, %v7388
  %7390 = vmatmul.f32.gmra.mxu0 %v7369
  %v7391 = vpop.f32.mrf.mxu0
  %v7392 = vadd.f32 0.0, %v7391
  %7393 = vdwg.mxu0
  %7394 = vmatpush.msra.mxu0 0.0
  %7395 = vmatpush.msra.mxu0 0.0
  %7396 = vmatpush.msra.mxu0 0.0
  %7397 = vmatpush.msra.mxu0 0.0
  %7398 = vmatpush.msra.mxu0 0.0
  %7399 = vmatpush.msra.mxu0 0.0
  %7400 = vmatpush.msra.mxu0 0.0
  %7401 = vmatpush.msra.mxu0 0.0
  %7402 = vmatpush.msra.mxu0 0.0
  %7403 = vmatpush.msra.mxu0 0.0
  %7404 = vmatpush.msra.mxu0 0.0
  %7405 = vmatpush.msra.mxu0 0.0
  %7406 = vmatpush.msra.mxu0 0.0
  %7407 = vmatpush.msra.mxu0 %v6122
  %7408 = vmatpush.msra.mxu0 %v6105
  %7409 = vmatpush.msra.mxu0 %v6102
  %7410 = vmatmul.f32.gmra.mxu0 %v7366
  %v7411 = vpop.f32.mrf.mxu0
  %v7412 = vadd.f32 0.0, %v7411
  %7413 = vmatmul.f32.gmra.mxu0 %v7369
  %v7414 = vpop.f32.mrf.mxu0
  %v7415 = vadd.f32 0.0, %v7414
  %7416 = vdwg.mxu0
  %7417 = vmatpush.msra.mxu0 0.0
  %7418 = vmatpush.msra.mxu0 0.0
  %7419 = vmatpush.msra.mxu0 0.0
  %7420 = vmatpush.msra.mxu0 0.0
  %7421 = vmatpush.msra.mxu0 0.0
  %7422 = vmatpush.msra.mxu0 0.0
  %7423 = vmatpush.msra.mxu0 0.0
  %7424 = vmatpush.msra.mxu0 0.0
  %7425 = vmatpush.msra.mxu0 0.0
  %7426 = vmatpush.msra.mxu0 0.0
  %7427 = vmatpush.msra.mxu0 0.0
  %7428 = vmatpush.msra.mxu0 0.0
  %7429 = vmatpush.msra.mxu0 0.0
  %7430 = vmatpush.msra.mxu0 %v6125
  %7431 = vmatpush.msra.mxu0 %v6106
  %7432 = vmatpush.msra.mxu0 %v6103
  %7433 = vmatmul.f32.gmra.mxu0 %v7366
  %v7434 = vpop.f32.mrf.mxu0
  %v7435 = vadd.f32 0.0, %v7434
  %7436 = vmatmul.f32.gmra.mxu0 %v7369
  %v7437 = vpop.f32.mrf.mxu0
  %v7438 = vadd.f32 0.0, %v7437
  %7439 = vdwg.mxu0
  %v7440 = vld [vmem:[%s5817] sm:$0xff]
  %v7441 = vld [vmem:[%s5817 + $0x8] sm:$0xff]
  %v7442 = vld [vmem:[%s5817 + $0x10] sm:$0xff]
  %v7443 = vld [vmem:[%s5817 + $0x18] sm:$0xff]
  %v7444 = vld [vmem:[%s5817 + $0x20] sm:$0xff]
  %v7445 = vld [vmem:[%s5817 + $0x28] sm:$0xff]
  %v7446 = vld [vmem:[%s5817 + $0x30] sm:$0xff]
  %v7447 = vld [vmem:[%s5817 + $0x38] sm:$0xff]
  %v7448 = vld [vmem:[%s5817 + $0x40] sm:$0xff]
  %v7449 = vld [vmem:[%s5817 + $0x48] sm:$0xff]
  %v7450 = vld [vmem:[%s5817 + $0x50] sm:$0xff]
  %v7451 = vld [vmem:[%s5817 + $0x58] sm:$0xff]
  %v7452 = vld [vmem:[%s5817 + $0x60] sm:$0xff]
  %v7453 = vld [vmem:[%s5817 + $0x68] sm:$0xff]
  %v7454 = vld [vmem:[%s5817 + $0x70] sm:$0xff]
  %v7455 = vld [vmem:[%s5817 + $0x78] sm:$0xff]
  %v7456 = vld [vmem:[%s5817 + $0x80] sm:$0xff]
  %v7457 = vld [vmem:[%s5817 + $0x88] sm:$0xff]
  %v7458 = vld [vmem:[%s5817 + $0x90] sm:$0xff]
  %v7459 = vld [vmem:[%s5817 + $0x98] sm:$0xff]
  %v7460 = vld [vmem:[%s5817 + $0xa0] sm:$0xff]
  %v7461 = vld [vmem:[%s5817 + $0xa8] sm:$0xff]
  %v7462 = vld [vmem:[%s5817 + $0xb0] sm:$0xff]
  %v7463 = vld [vmem:[%s5817 + $0xb8] sm:$0xff]
  %v7464 = vld [vmem:[%s5817 + $0xc0] sm:$0xff]
  %v7465 = vld [vmem:[%s5817 + $0xc8] sm:$0xff]
  %v7466 = vld [vmem:[%s5817 + $0xd0] sm:$0xff]
  %v7467 = vld [vmem:[%s5817 + $0xd8] sm:$0xff]
  %v7468 = vld [vmem:[%s5817 + $0xe0] sm:$0xff]
  %v7469 = vld [vmem:[%s5817 + $0xe8] sm:$0xff]
  %v7470 = vld [vmem:[%s5817 + $0xf0] sm:$0xff]
  %v7471 = vld [vmem:[%s5817 + $0xf8] sm:$0xff]
  %v7472 = vld [vmem:[%s5817 + $0x100] sm:$0xff]
  %v7473 = vld [vmem:[%s5817 + $0x108] sm:$0xff]
  %v7474 = vld [vmem:[%s5817 + $0x110] sm:$0xff]
  %v7475 = vld [vmem:[%s5817 + $0x118] sm:$0xff]
  %v7476 = vld [vmem:[%s5817 + $0x120] sm:$0xff]
  %v7477 = vld [vmem:[%s5817 + $0x128] sm:$0xff]
  %v7478 = vld [vmem:[%s5817 + $0x130] sm:$0xff]
  %v7479 = vld [vmem:[%s5817 + $0x138] sm:$0xff]
  %v7480 = vld [vmem:[%s5817 + $0x140] sm:$0xff]
  %v7481 = vld [vmem:[%s5817 + $0x148] sm:$0xff]
  %v7482 = vld [vmem:[%s5817 + $0x150] sm:$0xff]
  %v7483 = vld [vmem:[%s5817 + $0x158] sm:$0xff]
  %v7484 = vld [vmem:[%s5817 + $0x160] sm:$0xff]
  %v7485 = vld [vmem:[%s5817 + $0x168] sm:$0xff]
  %v7486 = vld [vmem:[%s5817 + $0x170] sm:$0xff]
  %v7487 = vld [vmem:[%s5817 + $0x178] sm:$0xff]
  %v7488 = vld [vmem:[%s5817 + $0x180] sm:$0xff]
  %v7489 = vld [vmem:[%s5817 + $0x188] sm:$0xff]
  %v7490 = vld [vmem:[%s5817 + $0x190] sm:$0xff]
  %v7491 = vld [vmem:[%s5817 + $0x198] sm:$0xff]
  %v7492 = vld [vmem:[%s5817 + $0x1a0] sm:$0xff]
  %v7493 = vld [vmem:[%s5817 + $0x1a8] sm:$0xff]
  %v7494 = vld [vmem:[%s5817 + $0x1b0] sm:$0xff]
  %v7495 = vld [vmem:[%s5817 + $0x1b8] sm:$0xff]
  %v7496 = vld [vmem:[%s5817 + $0x1c0] sm:$0xff]
  %v7497 = vld [vmem:[%s5817 + $0x1c8] sm:$0xff]
  %v7498 = vld [vmem:[%s5817 + $0x1d0] sm:$0xff]
  %v7499 = vld [vmem:[%s5817 + $0x1d8] sm:$0xff]
  %v7500 = vld [vmem:[%s5817 + $0x1e0] sm:$0xff]
  %v7501 = vld [vmem:[%s5817 + $0x1e8] sm:$0xff]
  %v7502 = vld [vmem:[%s5817 + $0x1f0] sm:$0xff]
  %v7503 = vld [vmem:[%s5817 + $0x1f8] sm:$0xff]
  %v7504 = vld [vmem:[%s5817 + $0x200] sm:$0xff]
  %v7505 = vld [vmem:[%s5817 + $0x208] sm:$0xff]
  %v7506 = vld [vmem:[%s5817 + $0x210] sm:$0xff]
  %v7507 = vld [vmem:[%s5817 + $0x218] sm:$0xff]
  %v7508 = vld [vmem:[%s5817 + $0x220] sm:$0xff]
  %v7509 = vld [vmem:[%s5817 + $0x228] sm:$0xff]
  %v7510 = vld [vmem:[%s5817 + $0x230] sm:$0xff]
  %v7511 = vld [vmem:[%s5817 + $0x238] sm:$0xff]
  %v7512 = vld [vmem:[%s5817 + $0x240] sm:$0xff]
  %v7513 = vld [vmem:[%s5817 + $0x248] sm:$0xff]
  %v7514 = vld [vmem:[%s5817 + $0x250] sm:$0xff]
  %v7515 = vld [vmem:[%s5817 + $0x258] sm:$0xff]
  %v7516 = vld [vmem:[%s5817 + $0x260] sm:$0xff]
  %v7517 = vld [vmem:[%s5817 + $0x268] sm:$0xff]
  %v7518 = vld [vmem:[%s5817 + $0x270] sm:$0xff]
  %v7519 = vld [vmem:[%s5817 + $0x278] sm:$0xff]
  %v7520 = vld [vmem:[%s5817 + $0x280] sm:$0xff]
  %v7521 = vld [vmem:[%s5817 + $0x288] sm:$0xff]
  %v7522 = vld [vmem:[%s5817 + $0x290] sm:$0xff]
  %v7523 = vld [vmem:[%s5817 + $0x298] sm:$0xff]
  %v7524 = vld [vmem:[%s5817 + $0x2a0] sm:$0xff]
  %v7525 = vld [vmem:[%s5817 + $0x2a8] sm:$0xff]
  %v7526 = vld [vmem:[%s5817 + $0x2b0] sm:$0xff]
  %v7527 = vld [vmem:[%s5817 + $0x2b8] sm:$0xff]
  %v7529 = vsel %vm2457, %v7435, 0
  %v7532 = vsel %vm2457, %v7438, 0
  %7534 = vmatpush.msra.mxu0 %v7470
  %7535 = vmatpush.msra.mxu0 %v7468
  %7536 = vmatpush.msra.mxu0 %v7466
  %7537 = vmatpush.msra.mxu0 %v7464
  %7538 = vmatpush.msra.mxu0 %v7462
  %7539 = vmatpush.msra.mxu0 %v7460
  %7540 = vmatpush.msra.mxu0 %v7458
  %7541 = vmatpush.msra.mxu0 %v7456
  %7542 = vmatpush.msra.mxu0 %v7454
  %7543 = vmatpush.msra.mxu0 %v7452
  %7544 = vmatpush.msra.mxu0 %v7450
  %7545 = vmatpush.msra.mxu0 %v7448
  %7546 = vmatpush.msra.mxu0 %v7446
  %7547 = vmatpush.msra.mxu0 %v7444
  %7548 = vmatpush.msra.mxu0 %v7442
  %7549 = vmatpush.msra.mxu0 %v7440
  %7550 = vmatmul.f32.gmra.mxu0 %v7389
  %v7551 = vpop.f32.mrf.mxu0
  %v7552 = vadd.f32 0.0, %v7551
  %7553 = vmatmul.f32.gmra.mxu0 %v7392
  %v7554 = vpop.f32.mrf.mxu0
  %v7555 = vadd.f32 0.0, %v7554
  %7556 = vdwg.mxu0
  %7557 = vmatpush.msra.mxu0 %v7502
  %7558 = vmatpush.msra.mxu0 %v7500
  %7559 = vmatpush.msra.mxu0 %v7498
  %7560 = vmatpush.msra.mxu0 %v7496
  %7561 = vmatpush.msra.mxu0 %v7494
  %7562 = vmatpush.msra.mxu0 %v7492
  %7563 = vmatpush.msra.mxu0 %v7490
  %7564 = vmatpush.msra.mxu0 %v7488
  %7565 = vmatpush.msra.mxu0 %v7486
  %7566 = vmatpush.msra.mxu0 %v7484
  %7567 = vmatpush.msra.mxu0 %v7482
  %7568 = vmatpush.msra.mxu0 %v7480
  %7569 = vmatpush.msra.mxu0 %v7478
  %7570 = vmatpush.msra.mxu0 %v7476
  %7571 = vmatpush.msra.mxu0 %v7474
  %7572 = vmatpush.msra.mxu0 %v7472
  %7573 = vmatmul.f32.gmra.mxu0 %v7412
  %v7574 = vpop.f32.mrf.mxu0
  %v7575 = vadd.f32 %v7552, %v7574
  %7576 = vmatmul.f32.gmra.mxu0 %v7415
  %v7577 = vpop.f32.mrf.mxu0
  %v7578 = vadd.f32 %v7555, %v7577
  %7579 = vdwg.mxu0
  %7580 = vmatpush.msra.mxu0 0.0
  %7581 = vmatpush.msra.mxu0 0.0
  %7582 = vmatpush.msra.mxu0 0.0
  %7583 = vmatpush.msra.mxu0 0.0
  %7584 = vmatpush.msra.mxu0 %v7526
  %7585 = vmatpush.msra.mxu0 %v7524
  %7586 = vmatpush.msra.mxu0 %v7522
  %7587 = vmatpush.msra.mxu0 %v7520
  %7588 = vmatpush.msra.mxu0 %v7518
  %7589 = vmatpush.msra.mxu0 %v7516
  %7590 = vmatpush.msra.mxu0 %v7514
  %7591 = vmatpush.msra.mxu0 %v7512
  %7592 = vmatpush.msra.mxu0 %v7510
  %7593 = vmatpush.msra.mxu0 %v7508
  %7594 = vmatpush.msra.mxu0 %v7506
  %7595 = vmatpush.msra.mxu0 %v7504
  %7596 = vmatmul.f32.gmra.mxu0 %v7529
  %v7597 = vpop.f32.mrf.mxu0
  %v7598 = vadd.f32 %v7575, %v7597
  %7599 = vmatmul.f32.gmra.mxu0 %v7532
  %v7600 = vpop.f32.mrf.mxu0
  %v7601 = vadd.f32 %v7578, %v7600
  %7602 = vdwg.mxu0
  %7603 = vmatpush.msra.mxu0 %v7471
  %7604 = vmatpush.msra.mxu0 %v7469
  %7605 = vmatpush.msra.mxu0 %v7467
  %7606 = vmatpush.msra.mxu0 %v7465
  %7607 = vmatpush.msra.mxu0 %v7463
  %7608 = vmatpush.msra.mxu0 %v7461
  %7609 = vmatpush.msra.mxu0 %v7459
  %7610 = vmatpush.msra.mxu0 %v7457
  %7611 = vmatpush.msra.mxu0 %v7455
  %7612 = vmatpush.msra.mxu0 %v7453
  %7613 = vmatpush.msra.mxu0 %v7451
  %7614 = vmatpush.msra.mxu0 %v7449
  %7615 = vmatpush.msra.mxu0 %v7447
  %7616 = vmatpush.msra.mxu0 %v7445
  %7617 = vmatpush.msra.mxu0 %v7443
  %7618 = vmatpush.msra.mxu0 %v7441
  %7619 = vmatmul.f32.gmra.mxu0 %v7389
  %v7620 = vpop.f32.mrf.mxu0
  %v7621 = vadd.f32 0.0, %v7620
  %7622 = vmatmul.f32.gmra.mxu0 %v7392
  %v7623 = vpop.f32.mrf.mxu0
  %v7624 = vadd.f32 0.0, %v7623
  %7625 = vdwg.mxu0
  %7626 = vmatpush.msra.mxu0 %v7503
  %7627 = vmatpush.msra.mxu0 %v7501
  %7628 = vmatpush.msra.mxu0 %v7499
  %7629 = vmatpush.msra.mxu0 %v7497
  %7630 = vmatpush.msra.mxu0 %v7495
  %7631 = vmatpush.msra.mxu0 %v7493
  %7632 = vmatpush.msra.mxu0 %v7491
  %7633 = vmatpush.msra.mxu0 %v7489
  %7634 = vmatpush.msra.mxu0 %v7487
  %7635 = vmatpush.msra.mxu0 %v7485
  %7636 = vmatpush.msra.mxu0 %v7483
  %7637 = vmatpush.msra.mxu0 %v7481
  %7638 = vmatpush.msra.mxu0 %v7479
  %7639 = vmatpush.msra.mxu0 %v7477
  %7640 = vmatpush.msra.mxu0 %v7475
  %7641 = vmatpush.msra.mxu0 %v7473
  %7642 = vmatmul.f32.gmra.mxu0 %v7412
  %v7643 = vpop.f32.mrf.mxu0
  %v7644 = vadd.f32 %v7621, %v7643
  %7645 = vmatmul.f32.gmra.mxu0 %v7415
  %v7646 = vpop.f32.mrf.mxu0
  %v7647 = vadd.f32 %v7624, %v7646
  %7648 = vdwg.mxu0
  %7649 = vmatpush.msra.mxu0 0.0
  %7650 = vmatpush.msra.mxu0 0.0
  %7651 = vmatpush.msra.mxu0 0.0
  %7652 = vmatpush.msra.mxu0 0.0
  %7653 = vmatpush.msra.mxu0 %v7527
  %7654 = vmatpush.msra.mxu0 %v7525
  %7655 = vmatpush.msra.mxu0 %v7523
  %7656 = vmatpush.msra.mxu0 %v7521
  %7657 = vmatpush.msra.mxu0 %v7519
  %7658 = vmatpush.msra.mxu0 %v7517
  %7659 = vmatpush.msra.mxu0 %v7515
  %7660 = vmatpush.msra.mxu0 %v7513
  %7661 = vmatpush.msra.mxu0 %v7511
  %7662 = vmatpush.msra.mxu0 %v7509
  %7663 = vmatpush.msra.mxu0 %v7507
  %7664 = vmatpush.msra.mxu0 %v7505
  %7665 = vmatmul.f32.gmra.mxu0 %v7529
  %v7666 = vpop.f32.mrf.mxu0
  %v7667 = vadd.f32 %v7644, %v7666
  %7668 = vmatmul.f32.gmra.mxu0 %v7532
  %v7669 = vpop.f32.mrf.mxu0
  %v7670 = vadd.f32 %v7647, %v7669
  %7671 = vdwg.mxu0
  %v7672 = vadd.f32 %v7359, %v7598
  %v7673 = vadd.f32 %v7360, %v7667
  %v7674 = vadd.f32 %v7361, %v7601
  %v7675 = vadd.f32 %v7362, %v7670
  %s7676 = scalar_lea.vmem %s17, 32
  %7677 = vst [vmem:[%s7676] sm:$0xff] %v7672
  %7678 = vst.msk [vmem:[%s7676 + $0x8] sm:$0xff] %vm4135, %v7673
  %7679 = vst [vmem:[%s7676 + $0x10] sm:$0x1] %v7674
  %7680 = vst.msk [vmem:[%s7676 + $0x18] sm:$0x1] %vm6057, %v7675
  %v7681 = vsel %vm976, %v7674, 0.0
  %v7682 = vadd.f32 %v7672, %v7681
  %v7683 = vrot.slane %v7682, 4
  %v7684 = vadd.f32 %v7682, %v7683
  %v7685 = vrot.slane %v7684, 2
  %v7686 = vadd.f32 %v7684, %v7685
  %v7687 = vrot.slane %v7686, 1
  %v7688 = vadd.f32 %v7686, %v7687
  %v7689 = vsel %vm4135, %v7673, 0.0
  %v7690 = vsel %vm6057, %v7675, 0.0
  %v7691 = vadd.f32 %v7689, %v7690
  %v7692 = vrot.slane %v7691, 4
  %v7693 = vadd.f32 %v7691, %v7692
  %v7694 = vrot.slane %v7693, 2
  %v7695 = vadd.f32 %v7693, %v7694
  %v7696 = vrot.slane %v7695, 1
  %v7697 = vadd.f32 %v7695, %v7696
  %v7698 = vadd.f32 %v6076, %v7688
  %v7699 = vadd.f32 %v6077, %v7697
  %v7700 = vmul.f32 %v7672, %v7672
  %v7701 = vmul.f32 %v7673, %v7673
  %v7702 = vmul.f32 %v7674, %v7674
  %v7703 = vmul.f32 %v7675, %v7675
  %v7704 = vsel %vm976, %v7702, 0.0
  %v7705 = vadd.f32 %v7700, %v7704
  %v7706 = vrot.slane %v7705, 4
  %v7707 = vadd.f32 %v7705, %v7706
  %v7708 = vrot.slane %v7707, 2
  %v7709 = vadd.f32 %v7707, %v7708
  %v7710 = vrot.slane %v7709, 1
  %v7711 = vadd.f32 %v7709, %v7710
  %v7712 = vsel %vm4135, %v7701, 0.0
  %v7713 = vsel %vm6057, %v7703, 0.0
  %v7714 = vadd.f32 %v7712, %v7713
  %v7715 = vrot.slane %v7714, 4
  %v7716 = vadd.f32 %v7714, %v7715
  %v7717 = vrot.slane %v7716, 2
  %v7718 = vadd.f32 %v7716, %v7717
  %v7719 = vrot.slane %v7718, 1
  %v7720 = vadd.f32 %v7718, %v7719
  %v7721 = vadd.f32 %v6099, %v7711
  %v7722 = vadd.f32 %v6100, %v7720
  %v7723 = vld [vmem:[%s13] sm:$0xff]
  %v7724 = vld [vmem:[%s13 + $0x8] sm:$0xff]
  %v7725 = vld [vmem:[%s13 + $0x10] sm:$0xff]
  %v7726 = vld [vmem:[%s13 + $0x18] sm:$0xff]
  %v7727 = vld [vmem:[%s13 + $0x20] sm:$0xff]
  %v7728 = vld [vmem:[%s13 + $0x28] sm:$0xff]
  %v7729 = vld [vmem:[%s13 + $0x30] sm:$0xff]
  %v7730 = vld [vmem:[%s13 + $0x38] sm:$0xff]
  %v7731 = vld [vmem:[%s13 + $0x40] sm:$0xff]
  %v7732 = vld [vmem:[%s13 + $0x48] sm:$0xff]
  %v7733 = vld [vmem:[%s13 + $0x50] sm:$0xff]
  %v7734 = vld [vmem:[%s13 + $0x58] sm:$0xff]
  %v7735 = vld [vmem:[%s13 + $0x60] sm:$0xff]
  %v7736 = vld [vmem:[%s13 + $0x68] sm:$0xff]
  %v7737 = vld [vmem:[%s13 + $0x70] sm:$0xff]
  %v7738 = vld [vmem:[%s13 + $0x78] sm:$0xff]
  %v7739 = vld [vmem:[%s13 + $0x80] sm:$0xff]
  %v7740 = vld [vmem:[%s13 + $0x88] sm:$0xff]
  %v7742 = vsel %vm4135, %v7699, 0
  %7744 = vmatpush.msra.mxu0 %v7738
  %7745 = vmatpush.msra.mxu0 %v7737
  %7746 = vmatpush.msra.mxu0 %v7736
  %7747 = vmatpush.msra.mxu0 %v7735
  %7748 = vmatpush.msra.mxu0 %v7734
  %7749 = vmatpush.msra.mxu0 %v7733
  %7750 = vmatpush.msra.mxu0 %v7732
  %7751 = vmatpush.msra.mxu0 %v7731
  %7752 = vmatpush.msra.mxu0 %v7730
  %7753 = vmatpush.msra.mxu0 %v7729
  %7754 = vmatpush.msra.mxu0 %v7728
  %7755 = vmatpush.msra.mxu0 %v7727
  %7756 = vmatpush.msra.mxu0 %v7726
  %7757 = vmatpush.msra.mxu0 %v7725
  %7758 = vmatpush.msra.mxu0 %v7724
  %7759 = vmatpush.msra.mxu0 %v7723
  %7760 = vmatmul.f32.gmra.mxu0 %v7698
  %v7761 = vpop.f32.mrf.mxu0
  %v7762 = vadd.f32 0.0, %v7761
  %7763 = vdwg.mxu0
  %7764 = vmatpush.msra.mxu0 0.0
  %7765 = vmatpush.msra.mxu0 0.0
  %7766 = vmatpush.msra.mxu0 0.0
  %7767 = vmatpush.msra.mxu0 0.0
  %7768 = vmatpush.msra.mxu0 0.0
  %7769 = vmatpush.msra.mxu0 0.0
  %7770 = vmatpush.msra.mxu0 0.0
  %7771 = vmatpush.msra.mxu0 0.0
  %7772 = vmatpush.msra.mxu0 0.0
  %7773 = vmatpush.msra.mxu0 0.0
  %7774 = vmatpush.msra.mxu0 0.0
  %7775 = vmatpush.msra.mxu0 0.0
  %7776 = vmatpush.msra.mxu0 0.0
  %7777 = vmatpush.msra.mxu0 0.0
  %7778 = vmatpush.msra.mxu0 %v7740
  %7779 = vmatpush.msra.mxu0 %v7739
  %7780 = vmatmul.f32.gmra.mxu0 %v7742
  %v7781 = vpop.f32.mrf.mxu0
  %v7782 = vadd.f32 %v7762, %v7781
  %7783 = vdwg.mxu0
  %v7785 = vsel %vm4135, %v7722, 0
  %7787 = vmatpush.msra.mxu0 %v7738
  %7788 = vmatpush.msra.mxu0 %v7737
  %7789 = vmatpush.msra.mxu0 %v7736
  %7790 = vmatpush.msra.mxu0 %v7735
  %7791 = vmatpush.msra.mxu0 %v7734
  %7792 = vmatpush.msra.mxu0 %v7733
  %7793 = vmatpush.msra.mxu0 %v7732
  %7794 = vmatpush.msra.mxu0 %v7731
  %7795 = vmatpush.msra.mxu0 %v7730
  %7796 = vmatpush.msra.mxu0 %v7729
  %7797 = vmatpush.msra.mxu0 %v7728
  %7798 = vmatpush.msra.mxu0 %v7727
  %7799 = vmatpush.msra.mxu0 %v7726
  %7800 = vmatpush.msra.mxu0 %v7725
  %7801 = vmatpush.msra.mxu0 %v7724
  %7802 = vmatpush.msra.mxu0 %v7723
  %7803 = vmatmul.f32.gmra.mxu0 %v7721
  %v7804 = vpop.f32.mrf.mxu0
  %v7805 = vadd.f32 0.0, %v7804
  %7806 = vdwg.mxu0
  %7807 = vmatpush.msra.mxu0 0.0
  %7808 = vmatpush.msra.mxu0 0.0
  %7809 = vmatpush.msra.mxu0 0.0
  %7810 = vmatpush.msra.mxu0 0.0
  %7811 = vmatpush.msra.mxu0 0.0
  %7812 = vmatpush.msra.mxu0 0.0
  %7813 = vmatpush.msra.mxu0 0.0
  %7814 = vmatpush.msra.mxu0 0.0
  %7815 = vmatpush.msra.mxu0 0.0
  %7816 = vmatpush.msra.mxu0 0.0
  %7817 = vmatpush.msra.mxu0 0.0
  %7818 = vmatpush.msra.mxu0 0.0
  %7819 = vmatpush.msra.mxu0 0.0
  %7820 = vmatpush.msra.mxu0 0.0
  %7821 = vmatpush.msra.mxu0 %v7740
  %7822 = vmatpush.msra.mxu0 %v7739
  %7823 = vmatmul.f32.gmra.mxu0 %v7785
  %v7824 = vpop.f32.mrf.mxu0
  %v7825 = vadd.f32 %v7805, %v7824
  %7826 = vdwg.mxu0
  %v7827 = vld [vmem:[%s14] sm:$0xff]
  %v7828 = vld [vmem:[%s14 + $0x8] sm:$0xff]
  %v7829 = vld [vmem:[%s14 + $0x10] sm:$0xff]
  %v7830 = vld [vmem:[%s14 + $0x18] sm:$0xff]
  %v7832 = vsel %vm4135, %v7782, 0
  %7834 = vmatpush.msra.mxu0 0.0
  %7835 = vmatpush.msra.mxu0 0.0
  %7836 = vmatpush.msra.mxu0 0.0
  %7837 = vmatpush.msra.mxu0 0.0
  %7838 = vmatpush.msra.mxu0 0.0
  %7839 = vmatpush.msra.mxu0 0.0
  %7840 = vmatpush.msra.mxu0 0.0
  %7841 = vmatpush.msra.mxu0 0.0
  %7842 = vmatpush.msra.mxu0 0.0
  %7843 = vmatpush.msra.mxu0 0.0
  %7844 = vmatpush.msra.mxu0 0.0
  %7845 = vmatpush.msra.mxu0 0.0
  %7846 = vmatpush.msra.mxu0 0.0
  %7847 = vmatpush.msra.mxu0 0.0
  %7848 = vmatpush.msra.mxu0 %v7829
  %7849 = vmatpush.msra.mxu0 %v7827
  %7850 = vmatmul.f32.gmra.mxu0 %v7832
  %v7851 = vpop.f32.mrf.mxu0
  %v7852 = vadd.f32 0.0, %v7851
  %7853 = vdwg.mxu0
  %7854 = vmatpush.msra.mxu0 0.0
  %7855 = vmatpush.msra.mxu0 0.0
  %7856 = vmatpush.msra.mxu0 0.0
  %7857 = vmatpush.msra.mxu0 0.0
  %7858 = vmatpush.msra.mxu0 0.0
  %7859 = vmatpush.msra.mxu0 0.0
  %7860 = vmatpush.msra.mxu0 0.0
  %7861 = vmatpush.msra.mxu0 0.0
  %7862 = vmatpush.msra.mxu0 0.0
  %7863 = vmatpush.msra.mxu0 0.0
  %7864 = vmatpush.msra.mxu0 0.0
  %7865 = vmatpush.msra.mxu0 0.0
  %7866 = vmatpush.msra.mxu0 0.0
  %7867 = vmatpush.msra.mxu0 0.0
  %7868 = vmatpush.msra.mxu0 %v7830
  %7869 = vmatpush.msra.mxu0 %v7828
  %7870 = vmatmul.f32.gmra.mxu0 %v7832
  %v7871 = vpop.f32.mrf.mxu0
  %v7872 = vadd.f32 0.0, %v7871
  %7873 = vdwg.mxu0
  %v7874 = vmul.f32 %v7852, 0.0061728396
  %v7875 = vmul.f32 %v7872, 0.0061728396
  %v7877 = vsel %vm4135, %v7825, 0
  %7879 = vmatpush.msra.mxu0 0.0
  %7880 = vmatpush.msra.mxu0 0.0
  %7881 = vmatpush.msra.mxu0 0.0
  %7882 = vmatpush.msra.mxu0 0.0
  %7883 = vmatpush.msra.mxu0 0.0
  %7884 = vmatpush.msra.mxu0 0.0
  %7885 = vmatpush.msra.mxu0 0.0
  %7886 = vmatpush.msra.mxu0 0.0
  %7887 = vmatpush.msra.mxu0 0.0
  %7888 = vmatpush.msra.mxu0 0.0
  %7889 = vmatpush.msra.mxu0 0.0
  %7890 = vmatpush.msra.mxu0 0.0
  %7891 = vmatpush.msra.mxu0 0.0
  %7892 = vmatpush.msra.mxu0 0.0
  %7893 = vmatpush.msra.mxu0 %v7829
  %7894 = vmatpush.msra.mxu0 %v7827
  %7895 = vmatmul.f32.gmra.mxu0 %v7877
  %v7896 = vpop.f32.mrf.mxu0
  %v7897 = vadd.f32 0.0, %v7896
  %7898 = vdwg.mxu0
  %7899 = vmatpush.msra.mxu0 0.0
  %7900 = vmatpush.msra.mxu0 0.0
  %7901 = vmatpush.msra.mxu0 0.0
  %7902 = vmatpush.msra.mxu0 0.0
  %7903 = vmatpush.msra.mxu0 0.0
  %7904 = vmatpush.msra.mxu0 0.0
  %7905 = vmatpush.msra.mxu0 0.0
  %7906 = vmatpush.msra.mxu0 0.0
  %7907 = vmatpush.msra.mxu0 0.0
  %7908 = vmatpush.msra.mxu0 0.0
  %7909 = vmatpush.msra.mxu0 0.0
  %7910 = vmatpush.msra.mxu0 0.0
  %7911 = vmatpush.msra.mxu0 0.0
  %7912 = vmatpush.msra.mxu0 0.0
  %7913 = vmatpush.msra.mxu0 %v7830
  %7914 = vmatpush.msra.mxu0 %v7828
  %7915 = vmatmul.f32.gmra.mxu0 %v7877
  %v7916 = vpop.f32.mrf.mxu0
  %v7917 = vadd.f32 0.0, %v7916
  %7918 = vdwg.mxu0
  %v7919 = vmul.f32 %v7897, 0.0061728396
  %v7920 = vmul.f32 %v7917, 0.0061728396
  %v7921 = vmul.f32 %v7874, %v7874
  %v7922 = vmul.f32 %v7875, %v7875
  %v7923 = vsub.f32 %v7919, %v7921
  %v7924 = vsub.f32 %v7920, %v7922
  %v7925 = vld [vmem:[%s15] sm:$0x3]
  %v7926 = vadd.f32 %v7923, 1e-05
  %v7927 = vadd.f32 %v7924, 1e-05
  %v7928 = vrsqrt.pop %v7926
  %v7929 = vmul.f32 %v7928, %v7926
  %v7930 = vmul.f32 %v7929, %v7928
  %v7931 = vmul.f32 0.5, %v7930
  %v7932 = vsub.f32 1.5, %v7931
  %v7933 = vmul.f32 %v7928, %v7932
  %vm7934 = vweird.f32 %v7926
  %vm7935 = vweird.f32 %v7928
  %vm7936 = vmor %vm7934, %vm7935
  %v7937 = vsel %vm7936, %v7928, %v7933
  %v7938 = vrsqrt.pop %v7927
  %v7939 = vmul.f32 %v7938, %v7927
  %v7940 = vmul.f32 %v7939, %v7938
  %v7941 = vmul.f32 0.5, %v7940
  %v7942 = vsub.f32 1.5, %v7941
  %v7943 = vmul.f32 %v7938, %v7942
  %vm7944 = vweird.f32 %v7927
  %vm7945 = vweird.f32 %v7938
  %vm7946 = vmor %vm7944, %vm7945
  %v7947 = vsel %vm7946, %v7938, %v7943
  %v7950 = vrot.slane %v7947, 7
  %v7951 = vsel %vm976, %v7937, %v7950
  %v7953 = vmul.f32 %v7925, %v7951
  %v7954 = vld [vmem:[%s16] sm:$0x3]
  %v7956 = vperm.slane %v7953, 0
  %v7957 = vperm.slane %v7953, 1
  %v7960 = vmul.f32 %v7874, %v7956
  %v7961 = vmul.f32 %v7875, %v7957
  %v7964 = vrot.slane %v7961, 7
  %v7965 = vsel %vm976, %v7960, %v7964
  %v7967 = vsub.f32 %v7954, %v7965
  %v7968 = vld [vmem:[%s17] sm:$0xff]
  %v7969 = vld [vmem:[%s17 + $0x8] sm:$0xff]
  %v7970 = vld [vmem:[%s17 + $0x10] sm:$0x1]
  %v7971 = vld [vmem:[%s17 + $0x18] sm:$0x1]
  %v7972 = vmul.f32 %v7968, %v7956
  %v7973 = vmul.f32 %v7969, %v7957
  %v7974 = vmul.f32 %v7970, %v7956
  %v7975 = vmul.f32 %v7971, %v7957
  %v7977 = vperm.slane %v7967, 0
  %v7978 = vperm.slane %v7967, 1
  %v7981 = vadd.f32 %v7972, %v7977
  %v7982 = vadd.f32 %v7973, %v7978
  %v7983 = vadd.f32 %v7974, %v7977
  %v7984 = vadd.f32 %v7975, %v7978
  %vm7985 = vcmp.gt.f32.partialorder %v7981, 0.0
  %vm7986 = vcmp.gt.f32.partialorder %v7982, 0.0
  %vm7987 = vcmp.gt.f32.partialorder %v7983, 0.0
  %vm7988 = vcmp.gt.f32.partialorder %v7984, 0.0
  %v7989 = vmul.f32 %v7981, 0.2
  %v7990 = vmul.f32 %v7982, 0.2
  %v7991 = vmul.f32 %v7983, 0.2
  %v7992 = vmul.f32 %v7984, 0.2
  %v7993 = vsel %vm7985, %v7981, %v7989
  %v7994 = vsel %vm7986, %v7982, %v7990
  %v7995 = vsel %vm7987, %v7983, %v7991
  %v7996 = vsel %vm7988, %v7984, %v7992
  %7997 = vst [vmem:[%s17] sm:$0xff] %v7993
  %7998 = vst.msk [vmem:[%s17 + $0x8] sm:$0xff] %vm4135, %v7994
  %7999 = vst [vmem:[%s17 + $0x10] sm:$0x1] %v7995
  %8000 = vst.msk [vmem:[%s17 + $0x18] sm:$0x1] %vm6057, %v7996
  %v8001 = vld [vmem:[%s7676] sm:$0xff]
  %v8002 = vld [vmem:[%s7676 + $0x8] sm:$0xff]
  %v8003 = vld [vmem:[%s7676 + $0x10] sm:$0x1]
  %v8004 = vld [vmem:[%s7676 + $0x18] sm:$0x1]
  %v8005 = vmul.f32 %v8001, %v7956
  %v8006 = vmul.f32 %v8002, %v7957
  %v8007 = vmul.f32 %v8003, %v7956
  %v8008 = vmul.f32 %v8004, %v7957
  %v8009 = vadd.f32 %v8005, %v7977
  %v8010 = vadd.f32 %v8006, %v7978
  %v8011 = vadd.f32 %v8007, %v7977
  %v8012 = vadd.f32 %v8008, %v7978
  %vm8013 = vcmp.gt.f32.partialorder %v8009, 0.0
  %vm8014 = vcmp.gt.f32.partialorder %v8010, 0.0
  %vm8015 = vcmp.gt.f32.partialorder %v8011, 0.0
  %vm8016 = vcmp.gt.f32.partialorder %v8012, 0.0
  %v8017 = vmul.f32 %v8009, 0.2
  %v8018 = vmul.f32 %v8010, 0.2
  %v8019 = vmul.f32 %v8011, 0.2
  %v8020 = vmul.f32 %v8012, 0.2
  %v8021 = vsel %vm8013, %v8009, %v8017
  %v8022 = vsel %vm8014, %v8010, %v8018
  %v8023 = vsel %vm8015, %v8011, %v8019
  %v8024 = vsel %vm8016, %v8012, %v8020
  %8025 = vst [vmem:[%s7676] sm:$0xff] %v8021
  %8026 = vst.msk [vmem:[%s7676 + $0x8] sm:$0xff] %vm4135, %v8022
  %8027 = vst [vmem:[%s7676 + $0x10] sm:$0x1] %v8023
  %8028 = vst.msk [vmem:[%s7676 + $0x18] sm:$0x1] %vm6057, %v8024
  // Predicated region
  $region70: #{tpu_custom_call.1} parent=0 // pred_check
    _
  $region71: #{tpu_custom_call.1} parent=0 // pred_check_branch
    %8030 = sbr.rel (0) target = $region73
  $region72: #{tpu_custom_call.1} parent=0 // pred_region
    _
  $region73: #{tpu_custom_call.1} parent=0 // pred_fallthru
    _
  // Predicated region
  $region74: #{tpu_custom_call.1} parent=0 // pred_check
    _
  $region75: #{tpu_custom_call.1} parent=0 // pred_check_branch
    %8032 = sbr.rel (0) target = $region77
  $region76: #{tpu_custom_call.1} parent=0 // pred_region
    _
  $region77: #{tpu_custom_call.1} parent=0 // pred_fallthru
    _

</llo_original>
